<compile_context>
chip_gen: v7x
topology: tpu7x:2x2x1
jax: 0.10.0
libtpu: 0.0.40
codegen_flags: <defaults>
</compile_context>

<pallas_src>
import jax
import jax.numpy as jnp
from jax.experimental import pallas as pl
from jax.experimental.pallas import tpu as pltpu


# ---------------------------------------------------------------------------
# Fused kernel: full Group2 forward for one image of the batch.
# ---------------------------------------------------------------------------
def group2_kernel(x_ref, w1_ref, b1_ref, w23_ref, b23_ref,
                  w45_ref, b45_ref, w6_ref, b6_ref,
                  o_ref, e1, e2, e3, e4):
    H, W, _ = x_ref.shape
    HW = H * W
    bf16 = jnp.bfloat16

    # Zero the width-expanded buffers once; they persist across grid steps.
    # Halo rows and out-of-range width strips are never written afterwards and
    # all in-range regions are rewritten every step, so this stays valid for
    # the whole (sequentially executed) batch.
    @pl.when(pl.program_id(0) == 0)
    def _():
        e1[...] = jnp.zeros_like(e1)
        e2[...] = jnp.zeros_like(e2)
        e3[...] = jnp.zeros_like(e3)
        e4[...] = jnp.zeros_like(e4)

    def scatter_width(exp, act, pad, kw_taps):
        """Write act (H, W, C) into exp (H+2*pad, W, kw_taps*C) so that
        exp[pad+h, w, kw*C + c] == padded_act[h + pad?, w + kw - pad, c]
        (zeros where the width index is out of range / in the row halo)."""
        C = act.shape[-1]
        for kw in range(kw_taps):
            s = kw - pad
            lo, hi = kw * C, (kw + 1) * C
            if s == 0:
                exp[pad:pad + H, :, lo:hi] = act
            elif s > 0:
                exp[pad:pad + H, 0:W - s, lo:hi] = act[:, s:W, :]
            else:
                w0 = -s
                exp[pad:pad + H, w0:W, lo:hi] = act[:, 0:W - w0, :]

    def conv_relu(exp, w_ref, b_ref):
        """KH MXU matmuls with the KW taps folded into the contraction dim,
        f32 accumulation, fused bias + ReLU.  Returns (H*W, Cout) f32."""
        KH, K, Cout = w_ref.shape
        acc = jnp.zeros((HW, Cout), jnp.float32)
        for kh in range(KH):                        # static unroll, KH <= 5
            slab = exp[kh:kh + H, :, :].reshape(HW, K)   # layout-trivial merge
            acc = acc + jnp.dot(slab, w_ref[kh],
                                preferred_element_type=jnp.float32)
        return jnp.maximum(acc + b_ref[...], 0.0)

    # conv1: 5x5, 64 -> 64, pad 2
    scatter_width(e1, x_ref[...], pad=2, kw_taps=5)
    y = conv_relu(e1, w1_ref, b1_ref)
    # conv2 || conv3 merged: 5x5, 64 -> 64 (48 real + 16 zero channels), pad 2
    scatter_width(e2, y.reshape(H, W, 64).astype(bf16), pad=2, kw_taps=5)
    y = conv_relu(e2, w23_ref, b23_ref)
    # conv4 || conv5 merged: 3x3, 64 -> 64 (48 real + 16 zero channels), pad 1
    scatter_width(e3, y.reshape(H, W, 64).astype(bf16), pad=1, kw_taps=3)
    y = conv_relu(e3, w45_ref, b45_ref)
    # conv6: 3x3, 64 (48 real) -> 64, pad 1
    scatter_width(e4, y.reshape(H, W, 64).astype(bf16), pad=1, kw_taps=3)
    y = conv_relu(e4, w6_ref, b6_ref)
    o_ref[...] = y.reshape(H, W, 64)


def group2_pallas(x_nhwc, fp):
    """x_nhwc: (N, H, W, 64) bfloat16. Returns (N, H, W, 64) float32."""
    N, H, W, Cin = x_nhwc.shape
    assert Cin == 64

    def full_spec(arr):
        zeros = (0,) * arr.ndim
        return pl.BlockSpec(arr.shape, lambda n, z=zeros: z)

    weight_args = (fp["w1"], fp["b1"], fp["w23"], fp["b23"],
                   fp["w45"], fp["b45"], fp["w6"], fp["b6"])

    grid_spec = pltpu.PrefetchScalarGridSpec(
        num_scalar_prefetch=0,
        grid=(N,),
        in_specs=[pl.BlockSpec((None, H, W, 64), lambda n: (n, 0, 0, 0))]
                 + [full_spec(a) for a in weight_args],
        out_specs=pl.BlockSpec((None, H, W, 64), lambda n: (n, 0, 0, 0)),
        scratch_shapes=[
            pltpu.VMEM((H + 4, W, 5 * 64), jnp.bfloat16),   # conv1 input, expanded
            pltpu.VMEM((H + 4, W, 5 * 64), jnp.bfloat16),   # conv2||3 input
            pltpu.VMEM((H + 2, W, 3 * 64), jnp.bfloat16),   # conv4||5 input
            pltpu.VMEM((H + 2, W, 3 * 64), jnp.bfloat16),   # conv6 input
        ],
    )
    return pl.pallas_call(
        group2_kernel,
        out_shape=jax.ShapeDtypeStruct((N, H, W, 64), jnp.float32),
        grid_spec=grid_spec,
        # "arbitrary": sequential grid, required for the zero-once scratch init.
        compiler_params=pltpu.CompilerParams(
            dimension_semantics=("arbitrary",)),
    )(x_nhwc, *weight_args)


# ---------------------------------------------------------------------------
# Parameters (HWIO weights, (1, Cout) biases) and weight packing / merging.
# ---------------------------------------------------------------------------
def init_conv(key, kh, kw, cin, cout, scale=0.05):
    kw_key, kb_key = jax.random.split(key)
    w = scale * jax.random.normal(kw_key, (kh, kw, cin, cout), jnp.float32)
    b = scale * jax.random.normal(kb_key, (1, cout), jnp.float32)
    return w, b


def init_group2_params(key):
    keys = jax.random.split(key, 6)
    return {
        "conv1": init_conv(keys[0], 5, 5, 64, 64),
        "conv2": init_conv(keys[1], 5, 5, 64, 16),
        "conv3": init_conv(keys[2], 3, 3, 64, 32),
        "conv4": init_conv(keys[3], 3, 3, 48, 16),
        "conv5": init_conv(keys[4], 1, 1, 48, 32),
        "conv6": init_conv(keys[5], 3, 3, 48, 64),
    }


def build_fused_params(params):
    """Merge sibling convs (preserving the torch.cat channel order), pad the
    48-channel intermediates to 64 with zero weight columns/rows, fold the KW
    taps into the contraction dim, and cast weights to bf16 for the MXU."""
    w1, b1 = params["conv1"]
    w2, b2 = params["conv2"]
    w3, b3 = params["conv3"]
    w4, b4 = params["conv4"]
    w5, b5 = params["conv5"]
    w6, b6 = params["conv6"]

    def fold(w):   # (KH, KW, Cin, Cout) -> (KH, KW*Cin, Cout) bf16
        kh, kw, ci, co = w.shape
        return w.reshape(kh, kw * ci, co).astype(jnp.bfloat16)

    # conv3 (3x3, pad=1) == 5x5 conv (pad=2) with the 3x3 taps in the center.
    w3_as5 = jnp.pad(w3, ((1, 1), (1, 1), (0, 0), (0, 0)))
    w23 = jnp.concatenate([w2, w3_as5], axis=-1)               # (5,5,64,48)
    w23 = jnp.pad(w23, ((0, 0), (0, 0), (0, 0), (0, 16)))      # Cout 48->64
    b23 = jnp.pad(jnp.concatenate([b2, b3], axis=-1), ((0, 0), (0, 16)))

    # conv5 (1x1, pad=0) == 3x3 conv (pad=1) with only the center tap non-zero.
    w5_as3 = jnp.pad(w5, ((1, 1), (1, 1), (0, 0), (0, 0)))
    w45 = jnp.concatenate([w4, w5_as3], axis=-1)                # (3,3,48,48)
    w45 = jnp.pad(w45, ((0, 0), (0, 0), (0, 16), (0, 16)))      # Cin/Cout -> 64
    b45 = jnp.pad(jnp.concatenate([b4, b5], axis=-1), ((0, 0), (0, 16)))

    w6p = jnp.pad(w6, ((0, 0), (0, 0), (0, 16), (0, 0)))        # Cin 48->64

    return {
        "w1": fold(w1), "b1": b1,
        "w23": fold(w23), "b23": b23,
        "w45": fold(w45), "b45": b45,
        "w6": fold(w6p), "b6": b6,
    }


@jax.jit
def group2_forward(x_nchw, fused_params):
    # NCHW f32 -> NHWC bf16 (bf16 at the pallas boundary halves input traffic).
    x = jnp.transpose(x_nchw.astype(jnp.bfloat16), (0, 2, 3, 1))
    y = group2_pallas(x, fused_params)               # one fused pallas_call
    return jnp.transpose(y, (0, 3, 1, 2))            # NHWC -> NCHW


# ---------------------------------------------------------------------------
# Pure-JAX reference (unmerged weights, f32) for correctness validation.
# ---------------------------------------------------------------------------
def _conv_ref(x, w, b, pad):
    y = jax.lax.conv_general_dilated(
        x, w, window_strides=(1, 1),
        padding=[(pad, pad), (pad, pad)],
        dimension_numbers=("NHWC", "HWIO", "NHWC"),
        precision=jax.lax.Precision.HIGHEST)
    return jnp.maximum(y + b.reshape(1, 1, 1, -1), 0.0)


def group2_reference(x_nchw, params):
    x = jnp.transpose(x_nchw, (0, 2, 3, 1))
    out = _conv_ref(x, *params["conv1"], 2)
    out = jnp.concatenate([_conv_ref(out, *params["conv2"], 2),
                           _conv_ref(out, *params["conv3"], 1)], axis=-1)
    out = jnp.concatenate([_conv_ref(out, *params["conv4"], 1),
                           _conv_ref(out, *params["conv5"], 0)], axis=-1)
    out = _conv_ref(out, *params["conv6"], 1)
    return jnp.transpose(out, (0, 3, 1, 2))


if __name__ == "__main__":
    key = jax.random.PRNGKey(0)
    k_params, k_x = jax.random.split(key)

    params = init_group2_params(k_params)
    fused = build_fused_params(params)
    # Small shapes consistent with the module: Conv2d in_channels=64 required.
    x = jax.random.normal(k_x, (2, 64, 16, 16), jnp.float32)

    y = group2_forward(x, fused)
    jax.block_until_ready(y)
    assert y.shape == (2, 64, 16, 16), y.shape

    # Correctness vs. f32 reference (bf16 MXU operands => small expected drift).
    y_ref = group2_reference(x, params)
    err = jnp.abs(y - y_ref)
    max_err = float(jnp.max(err))
    scale = float(jnp.max(jnp.abs(y_ref)))
    rel_rms = float(jnp.sqrt(jnp.mean(err ** 2) /
                             (jnp.mean(y_ref ** 2) + 1e-12)))
    assert rel_rms < 0.03, (rel_rms, max_err, scale)
    assert max_err <= 0.1 * scale + 0.02, (rel_rms, max_err, scale)

    print("KERNEL_OK")
</pallas_src>

<mosaic_0001>
module attributes {stable_mosaic.version = 11 : i64} {
  func.func @group2_kernel(%arg0: i32, %arg1: memref<1x16x16x64xbf16, #tpu.memory_space<vmem>>, %arg2: memref<5x320x64xbf16, #tpu.memory_space<vmem>>, %arg3: memref<1x64xf32, #tpu.memory_space<vmem>>, %arg4: memref<5x320x64xbf16, #tpu.memory_space<vmem>>, %arg5: memref<1x64xf32, #tpu.memory_space<vmem>>, %arg6: memref<3x192x64xbf16, #tpu.memory_space<vmem>>, %arg7: memref<1x64xf32, #tpu.memory_space<vmem>>, %arg8: memref<3x192x64xbf16, #tpu.memory_space<vmem>>, %arg9: memref<1x64xf32, #tpu.memory_space<vmem>>, %arg10: memref<1x16x16x64xf32, #tpu.memory_space<vmem>>, %arg11: memref<20x16x320xbf16, #tpu.memory_space<vmem>>, %arg12: memref<20x16x320xbf16, #tpu.memory_space<vmem>>, %arg13: memref<18x16x192xbf16, #tpu.memory_space<vmem>>, %arg14: memref<18x16x192xbf16, #tpu.memory_space<vmem>>) attributes {dimension_semantics = [#tpu.dimension_semantics<arbitrary>], iteration_bounds = array<i64: 2>, scalar_prefetch = 0 : i64, scratch_operands = 4 : i64, tpu.core_type = #tpu.core_type<tc>, window_params = [{transform_indices = @transform_0, window_bounds = array<i64: 1, 16, 16, 64>}, {pipeline_mode = #tpu.pipeline_mode<synchronous>, transform_indices = @transform_1, window_bounds = array<i64: 5, 320, 64>}, {pipeline_mode = #tpu.pipeline_mode<synchronous>, transform_indices = @transform_2, window_bounds = array<i64: 1, 64>}, {pipeline_mode = #tpu.pipeline_mode<synchronous>, transform_indices = @transform_3, window_bounds = array<i64: 5, 320, 64>}, {pipeline_mode = #tpu.pipeline_mode<synchronous>, transform_indices = @transform_4, window_bounds = array<i64: 1, 64>}, {pipeline_mode = #tpu.pipeline_mode<synchronous>, transform_indices = @transform_5, window_bounds = array<i64: 3, 192, 64>}, {pipeline_mode = #tpu.pipeline_mode<synchronous>, transform_indices = @transform_6, window_bounds = array<i64: 1, 64>}, {pipeline_mode = #tpu.pipeline_mode<synchronous>, transform_indices = @transform_7, window_bounds = array<i64: 3, 192, 64>}, {pipeline_mode = #tpu.pipeline_mode<synchronous>, transform_indices = @transform_8, window_bounds = array<i64: 1, 64>}, {transform_indices = @transform_9, window_bounds = array<i64: 1, 16, 16, 64>}]} {
    %c0_i32 = arith.constant 0 : i32
    %0 = arith.cmpi eq, %arg0, %c0_i32 : i32
    %1 = arith.extui %0 : i1 to i32
    %c0_i32_0 = arith.constant 0 : i32
    %2 = arith.cmpi ne, %1, %c0_i32_0 : i32
    scf.if %2 {
      %cst_175 = arith.constant 0.000000e+00 : bf16
      %163 = vector.broadcast %cst_175 : bf16 to vector<20x16x320xbf16>
      %c0_176 = arith.constant 0 : index
      %c0_177 = arith.constant 0 : index
      %c0_178 = arith.constant 0 : index
      %164 = vector.load %arg11[%c0_176, %c0_177, %c0_178] : memref<20x16x320xbf16, #tpu.memory_space<vmem>>, vector<20x16x320xbf16>
      tpu.vector_store %arg11[%c0_176, %c0_177, %c0_178], %163 {strides = array<i32>} : memref<20x16x320xbf16, #tpu.memory_space<vmem>>, vector<20x16x320xbf16>,
      %cst_179 = arith.constant 0.000000e+00 : bf16
      %165 = vector.broadcast %cst_179 : bf16 to vector<20x16x320xbf16>
      %c0_180 = arith.constant 0 : index
      %c0_181 = arith.constant 0 : index
      %c0_182 = arith.constant 0 : index
      %166 = vector.load %arg12[%c0_180, %c0_181, %c0_182] : memref<20x16x320xbf16, #tpu.memory_space<vmem>>, vector<20x16x320xbf16>
      tpu.vector_store %arg12[%c0_180, %c0_181, %c0_182], %165 {strides = array<i32>} : memref<20x16x320xbf16, #tpu.memory_space<vmem>>, vector<20x16x320xbf16>,
      %cst_183 = arith.constant 0.000000e+00 : bf16
      %167 = vector.broadcast %cst_183 : bf16 to vector<18x16x192xbf16>
      %c0_184 = arith.constant 0 : index
      %c0_185 = arith.constant 0 : index
      %c0_186 = arith.constant 0 : index
      %168 = vector.load %arg13[%c0_184, %c0_185, %c0_186] : memref<18x16x192xbf16, #tpu.memory_space<vmem>>, vector<18x16x192xbf16>
      tpu.vector_store %arg13[%c0_184, %c0_185, %c0_186], %167 {strides = array<i32>} : memref<18x16x192xbf16, #tpu.memory_space<vmem>>, vector<18x16x192xbf16>,
      %cst_187 = arith.constant 0.000000e+00 : bf16
      %169 = vector.broadcast %cst_187 : bf16 to vector<18x16x192xbf16>
      %c0_188 = arith.constant 0 : index
      %c0_189 = arith.constant 0 : index
      %c0_190 = arith.constant 0 : index
      %170 = vector.load %arg14[%c0_188, %c0_189, %c0_190] : memref<18x16x192xbf16, #tpu.memory_space<vmem>>, vector<18x16x192xbf16>
      tpu.vector_store %arg14[%c0_188, %c0_189, %c0_190], %169 {strides = array<i32>} : memref<18x16x192xbf16, #tpu.memory_space<vmem>>, vector<18x16x192xbf16>,
    } else {
    }
    %c0 = arith.constant 0 : index
    %c0_1 = arith.constant 0 : index
    %c0_2 = arith.constant 0 : index
    %c0_3 = arith.constant 0 : index
    %3 = vector.load %arg1[%c0, %c0_1, %c0_2, %c0_3] : memref<1x16x16x64xbf16, #tpu.memory_space<vmem>>, vector<1x16x16x64xbf16>
    %4 = vector.shape_cast %3 : vector<1x16x16x64xbf16> to vector<16x16x64xbf16>
    %5 = vector.extract_strided_slice %4 {offsets = [0, 0, 0], sizes = [16, 14, 64], strides = [1, 1, 1]} : vector<16x16x64xbf16> to vector<16x14x64xbf16>
    %c2 = arith.constant 2 : index
    %c2_4 = arith.constant 2 : index
    %c0_5 = arith.constant 0 : index
    %6 = vector.load %arg11[%c2, %c2_4, %c0_5] : memref<20x16x320xbf16, #tpu.memory_space<vmem>>, vector<16x14x64xbf16>
    tpu.vector_store %arg11[%c2, %c2_4, %c0_5], %5 {strides = array<i32>} : memref<20x16x320xbf16, #tpu.memory_space<vmem>>, vector<16x14x64xbf16>,
    %7 = vector.extract_strided_slice %4 {offsets = [0, 0, 0], sizes = [16, 15, 64], strides = [1, 1, 1]} : vector<16x16x64xbf16> to vector<16x15x64xbf16>
    %c2_6 = arith.constant 2 : index
    %c1 = arith.constant 1 : index
    %c64 = arith.constant 64 : index
    %8 = vector.load %arg11[%c2_6, %c1, %c64] : memref<20x16x320xbf16, #tpu.memory_space<vmem>>, vector<16x15x64xbf16>
    tpu.vector_store %arg11[%c2_6, %c1, %c64], %7 {strides = array<i32>} : memref<20x16x320xbf16, #tpu.memory_space<vmem>>, vector<16x15x64xbf16>,
    %c2_7 = arith.constant 2 : index
    %c0_8 = arith.constant 0 : index
    %c128 = arith.constant 128 : index
    %9 = vector.load %arg11[%c2_7, %c0_8, %c128] : memref<20x16x320xbf16, #tpu.memory_space<vmem>>, vector<16x16x64xbf16>
    tpu.vector_store %arg11[%c2_7, %c0_8, %c128], %4 {strides = array<i32>} : memref<20x16x320xbf16, #tpu.memory_space<vmem>>, vector<16x16x64xbf16>,
    %10 = vector.extract_strided_slice %4 {offsets = [0, 1, 0], sizes = [16, 15, 64], strides = [1, 1, 1]} : vector<16x16x64xbf16> to vector<16x15x64xbf16>
    %c2_9 = arith.constant 2 : index
    %c0_10 = arith.constant 0 : index
    %c192 = arith.constant 192 : index
    %11 = vector.load %arg11[%c2_9, %c0_10, %c192] : memref<20x16x320xbf16, #tpu.memory_space<vmem>>, vector<16x15x64xbf16>
    tpu.vector_store %arg11[%c2_9, %c0_10, %c192], %10 {strides = array<i32>} : memref<20x16x320xbf16, #tpu.memory_space<vmem>>, vector<16x15x64xbf16>,
    %12 = vector.extract_strided_slice %4 {offsets = [0, 2, 0], sizes = [16, 14, 64], strides = [1, 1, 1]} : vector<16x16x64xbf16> to vector<16x14x64xbf16>
    %c2_11 = arith.constant 2 : index
    %c0_12 = arith.constant 0 : index
    %c256 = arith.constant 256 : index
    %13 = vector.load %arg11[%c2_11, %c0_12, %c256] : memref<20x16x320xbf16, #tpu.memory_space<vmem>>, vector<16x14x64xbf16>
    tpu.vector_store %arg11[%c2_11, %c0_12, %c256], %12 {strides = array<i32>} : memref<20x16x320xbf16, #tpu.memory_space<vmem>>, vector<16x14x64xbf16>,
    %cst = arith.constant 0.000000e+00 : f32
    %14 = vector.broadcast %cst : f32 to vector<256x64xf32>
    %c0_13 = arith.constant 0 : index
    %c0_14 = arith.constant 0 : index
    %c0_15 = arith.constant 0 : index
    %15 = vector.load %arg11[%c0_13, %c0_14, %c0_15] : memref<20x16x320xbf16, #tpu.memory_space<vmem>>, vector<16x16x320xbf16>
    %16 = vector.shape_cast %15 : vector<16x16x320xbf16> to vector<256x320xbf16>
    %c0_16 = arith.constant 0 : index
    %c0_17 = arith.constant 0 : index
    %c0_18 = arith.constant 0 : index
    %17 = vector.load %arg2[%c0_16, %c0_17, %c0_18] : memref<5x320x64xbf16, #tpu.memory_space<vmem>>, vector<1x320x64xbf16>
    %18 = vector.shape_cast %17 : vector<1x320x64xbf16> to vector<320x64xbf16>
    %cst_19 = arith.constant dense<0.000000e+00> : vector<256x64xf32>
    %19 = tpu.matmul %16, %18, %cst_19 {dimension_numbers = #tpu.dot_dimension_numbers<[1], [0], [0], [1], [0, 0, 1, 1], [], []>} : vector<256x320xbf16>, vector<320x64xbf16>, vector<256x64xf32> -> vector<256x64xf32>
    %20 = arith.addf %14, %19 : vector<256x64xf32>
    %c1_20 = arith.constant 1 : index
    %c0_21 = arith.constant 0 : index
    %c0_22 = arith.constant 0 : index
    %21 = vector.load %arg11[%c1_20, %c0_21, %c0_22] : memref<20x16x320xbf16, #tpu.memory_space<vmem>>, vector<16x16x320xbf16>
    %22 = vector.shape_cast %21 : vector<16x16x320xbf16> to vector<256x320xbf16>
    %c1_23 = arith.constant 1 : index
    %c0_24 = arith.constant 0 : index
    %c0_25 = arith.constant 0 : index
    %23 = vector.load %arg2[%c1_23, %c0_24, %c0_25] : memref<5x320x64xbf16, #tpu.memory_space<vmem>>, vector<1x320x64xbf16>
    %24 = vector.shape_cast %23 : vector<1x320x64xbf16> to vector<320x64xbf16>
    %cst_26 = arith.constant dense<0.000000e+00> : vector<256x64xf32>
    %25 = tpu.matmul %22, %24, %cst_26 {dimension_numbers = #tpu.dot_dimension_numbers<[1], [0], [0], [1], [0, 0, 1, 1], [], []>} : vector<256x320xbf16>, vector<320x64xbf16>, vector<256x64xf32> -> vector<256x64xf32>
    %26 = arith.addf %20, %25 : vector<256x64xf32>
    %c2_27 = arith.constant 2 : index
    %c0_28 = arith.constant 0 : index
    %c0_29 = arith.constant 0 : index
    %27 = vector.load %arg11[%c2_27, %c0_28, %c0_29] : memref<20x16x320xbf16, #tpu.memory_space<vmem>>, vector<16x16x320xbf16>
    %28 = vector.shape_cast %27 : vector<16x16x320xbf16> to vector<256x320xbf16>
    %c2_30 = arith.constant 2 : index
    %c0_31 = arith.constant 0 : index
    %c0_32 = arith.constant 0 : index
    %29 = vector.load %arg2[%c2_30, %c0_31, %c0_32] : memref<5x320x64xbf16, #tpu.memory_space<vmem>>, vector<1x320x64xbf16>
    %30 = vector.shape_cast %29 : vector<1x320x64xbf16> to vector<320x64xbf16>
    %cst_33 = arith.constant dense<0.000000e+00> : vector<256x64xf32>
    %31 = tpu.matmul %28, %30, %cst_33 {dimension_numbers = #tpu.dot_dimension_numbers<[1], [0], [0], [1], [0, 0, 1, 1], [], []>} : vector<256x320xbf16>, vector<320x64xbf16>, vector<256x64xf32> -> vector<256x64xf32>
    %32 = arith.addf %26, %31 : vector<256x64xf32>
    %c3 = arith.constant 3 : index
    %c0_34 = arith.constant 0 : index
    %c0_35 = arith.constant 0 : index
    %33 = vector.load %arg11[%c3, %c0_34, %c0_35] : memref<20x16x320xbf16, #tpu.memory_space<vmem>>, vector<16x16x320xbf16>
    %34 = vector.shape_cast %33 : vector<16x16x320xbf16> to vector<256x320xbf16>
    %c3_36 = arith.constant 3 : index
    %c0_37 = arith.constant 0 : index
    %c0_38 = arith.constant 0 : index
    %35 = vector.load %arg2[%c3_36, %c0_37, %c0_38] : memref<5x320x64xbf16, #tpu.memory_space<vmem>>, vector<1x320x64xbf16>
    %36 = vector.shape_cast %35 : vector<1x320x64xbf16> to vector<320x64xbf16>
    %cst_39 = arith.constant dense<0.000000e+00> : vector<256x64xf32>
    %37 = tpu.matmul %34, %36, %cst_39 {dimension_numbers = #tpu.dot_dimension_numbers<[1], [0], [0], [1], [0, 0, 1, 1], [], []>} : vector<256x320xbf16>, vector<320x64xbf16>, vector<256x64xf32> -> vector<256x64xf32>
    %38 = arith.addf %32, %37 : vector<256x64xf32>
    %c4 = arith.constant 4 : index
    %c0_40 = arith.constant 0 : index
    %c0_41 = arith.constant 0 : index
    %39 = vector.load %arg11[%c4, %c0_40, %c0_41] : memref<20x16x320xbf16, #tpu.memory_space<vmem>>, vector<16x16x320xbf16>
    %40 = vector.shape_cast %39 : vector<16x16x320xbf16> to vector<256x320xbf16>
    %c4_42 = arith.constant 4 : index
    %c0_43 = arith.constant 0 : index
    %c0_44 = arith.constant 0 : index
    %41 = vector.load %arg2[%c4_42, %c0_43, %c0_44] : memref<5x320x64xbf16, #tpu.memory_space<vmem>>, vector<1x320x64xbf16>
    %42 = vector.shape_cast %41 : vector<1x320x64xbf16> to vector<320x64xbf16>
    %cst_45 = arith.constant dense<0.000000e+00> : vector<256x64xf32>
    %43 = tpu.matmul %40, %42, %cst_45 {dimension_numbers = #tpu.dot_dimension_numbers<[1], [0], [0], [1], [0, 0, 1, 1], [], []>} : vector<256x320xbf16>, vector<320x64xbf16>, vector<256x64xf32> -> vector<256x64xf32>
    %44 = arith.addf %38, %43 : vector<256x64xf32>
    %c0_46 = arith.constant 0 : index
    %c0_47 = arith.constant 0 : index
    %45 = vector.load %arg3[%c0_46, %c0_47] : memref<1x64xf32, #tpu.memory_space<vmem>>, vector<1x64xf32>
    %46 = vector.broadcast %45 : vector<1x64xf32> to vector<256x64xf32>
    %47 = arith.addf %44, %46 : vector<256x64xf32>
    %cst_48 = arith.constant 0.000000e+00 : f32
    %48 = vector.broadcast %cst_48 : f32 to vector<256x64xf32>
    %49 = arith.maximumf %47, %48 : vector<256x64xf32>
    %50 = vector.shape_cast %49 : vector<256x64xf32> to vector<16x16x64xf32>
    %51 = arith.truncf %50 : vector<16x16x64xf32> to vector<16x16x64xbf16>
    %52 = vector.extract_strided_slice %51 {offsets = [0, 0, 0], sizes = [16, 14, 64], strides = [1, 1, 1]} : vector<16x16x64xbf16> to vector<16x14x64xbf16>
    %c2_49 = arith.constant 2 : index
    %c2_50 = arith.constant 2 : index
    %c0_51 = arith.constant 0 : index
    %53 = vector.load %arg12[%c2_49, %c2_50, %c0_51] : memref<20x16x320xbf16, #tpu.memory_space<vmem>>, vector<16x14x64xbf16>
    tpu.vector_store %arg12[%c2_49, %c2_50, %c0_51], %52 {strides = array<i32>} : memref<20x16x320xbf16, #tpu.memory_space<vmem>>, vector<16x14x64xbf16>,
    %54 = vector.extract_strided_slice %51 {offsets = [0, 0, 0], sizes = [16, 15, 64], strides = [1, 1, 1]} : vector<16x16x64xbf16> to vector<16x15x64xbf16>
    %c2_52 = arith.constant 2 : index
    %c1_53 = arith.constant 1 : index
    %c64_54 = arith.constant 64 : index
    %55 = vector.load %arg12[%c2_52, %c1_53, %c64_54] : memref<20x16x320xbf16, #tpu.memory_space<vmem>>, vector<16x15x64xbf16>
    tpu.vector_store %arg12[%c2_52, %c1_53, %c64_54], %54 {strides = array<i32>} : memref<20x16x320xbf16, #tpu.memory_space<vmem>>, vector<16x15x64xbf16>,
    %c2_55 = arith.constant 2 : index
    %c0_56 = arith.constant 0 : index
    %c128_57 = arith.constant 128 : index
    %56 = vector.load %arg12[%c2_55, %c0_56, %c128_57] : memref<20x16x320xbf16, #tpu.memory_space<vmem>>, vector<16x16x64xbf16>
    tpu.vector_store %arg12[%c2_55, %c0_56, %c128_57], %51 {strides = array<i32>} : memref<20x16x320xbf16, #tpu.memory_space<vmem>>, vector<16x16x64xbf16>,
    %57 = vector.extract_strided_slice %51 {offsets = [0, 1, 0], sizes = [16, 15, 64], strides = [1, 1, 1]} : vector<16x16x64xbf16> to vector<16x15x64xbf16>
    %c2_58 = arith.constant 2 : index
    %c0_59 = arith.constant 0 : index
    %c192_60 = arith.constant 192 : index
    %58 = vector.load %arg12[%c2_58, %c0_59, %c192_60] : memref<20x16x320xbf16, #tpu.memory_space<vmem>>, vector<16x15x64xbf16>
    tpu.vector_store %arg12[%c2_58, %c0_59, %c192_60], %57 {strides = array<i32>} : memref<20x16x320xbf16, #tpu.memory_space<vmem>>, vector<16x15x64xbf16>,
    %59 = vector.extract_strided_slice %51 {offsets = [0, 2, 0], sizes = [16, 14, 64], strides = [1, 1, 1]} : vector<16x16x64xbf16> to vector<16x14x64xbf16>
    %c2_61 = arith.constant 2 : index
    %c0_62 = arith.constant 0 : index
    %c256_63 = arith.constant 256 : index
    %60 = vector.load %arg12[%c2_61, %c0_62, %c256_63] : memref<20x16x320xbf16, #tpu.memory_space<vmem>>, vector<16x14x64xbf16>
    tpu.vector_store %arg12[%c2_61, %c0_62, %c256_63], %59 {strides = array<i32>} : memref<20x16x320xbf16, #tpu.memory_space<vmem>>, vector<16x14x64xbf16>,
    %cst_64 = arith.constant 0.000000e+00 : f32
    %61 = vector.broadcast %cst_64 : f32 to vector<256x64xf32>
    %c0_65 = arith.constant 0 : index
    %c0_66 = arith.constant 0 : index
    %c0_67 = arith.constant 0 : index
    %62 = vector.load %arg12[%c0_65, %c0_66, %c0_67] : memref<20x16x320xbf16, #tpu.memory_space<vmem>>, vector<16x16x320xbf16>
    %63 = vector.shape_cast %62 : vector<16x16x320xbf16> to vector<256x320xbf16>
    %c0_68 = arith.constant 0 : index
    %c0_69 = arith.constant 0 : index
    %c0_70 = arith.constant 0 : index
    %64 = vector.load %arg4[%c0_68, %c0_69, %c0_70] : memref<5x320x64xbf16, #tpu.memory_space<vmem>>, vector<1x320x64xbf16>
    %65 = vector.shape_cast %64 : vector<1x320x64xbf16> to vector<320x64xbf16>
    %cst_71 = arith.constant dense<0.000000e+00> : vector<256x64xf32>
    %66 = tpu.matmul %63, %65, %cst_71 {dimension_numbers = #tpu.dot_dimension_numbers<[1], [0], [0], [1], [0, 0, 1, 1], [], []>} : vector<256x320xbf16>, vector<320x64xbf16>, vector<256x64xf32> -> vector<256x64xf32>
    %67 = arith.addf %61, %66 : vector<256x64xf32>
    %c1_72 = arith.constant 1 : index
    %c0_73 = arith.constant 0 : index
    %c0_74 = arith.constant 0 : index
    %68 = vector.load %arg12[%c1_72, %c0_73, %c0_74] : memref<20x16x320xbf16, #tpu.memory_space<vmem>>, vector<16x16x320xbf16>
    %69 = vector.shape_cast %68 : vector<16x16x320xbf16> to vector<256x320xbf16>
    %c1_75 = arith.constant 1 : index
    %c0_76 = arith.constant 0 : index
    %c0_77 = arith.constant 0 : index
    %70 = vector.load %arg4[%c1_75, %c0_76, %c0_77] : memref<5x320x64xbf16, #tpu.memory_space<vmem>>, vector<1x320x64xbf16>
    %71 = vector.shape_cast %70 : vector<1x320x64xbf16> to vector<320x64xbf16>
    %cst_78 = arith.constant dense<0.000000e+00> : vector<256x64xf32>
    %72 = tpu.matmul %69, %71, %cst_78 {dimension_numbers = #tpu.dot_dimension_numbers<[1], [0], [0], [1], [0, 0, 1, 1], [], []>} : vector<256x320xbf16>, vector<320x64xbf16>, vector<256x64xf32> -> vector<256x64xf32>
    %73 = arith.addf %67, %72 : vector<256x64xf32>
    %c2_79 = arith.constant 2 : index
    %c0_80 = arith.constant 0 : index
    %c0_81 = arith.constant 0 : index
    %74 = vector.load %arg12[%c2_79, %c0_80, %c0_81] : memref<20x16x320xbf16, #tpu.memory_space<vmem>>, vector<16x16x320xbf16>
    %75 = vector.shape_cast %74 : vector<16x16x320xbf16> to vector<256x320xbf16>
    %c2_82 = arith.constant 2 : index
    %c0_83 = arith.constant 0 : index
    %c0_84 = arith.constant 0 : index
    %76 = vector.load %arg4[%c2_82, %c0_83, %c0_84] : memref<5x320x64xbf16, #tpu.memory_space<vmem>>, vector<1x320x64xbf16>
    %77 = vector.shape_cast %76 : vector<1x320x64xbf16> to vector<320x64xbf16>
    %cst_85 = arith.constant dense<0.000000e+00> : vector<256x64xf32>
    %78 = tpu.matmul %75, %77, %cst_85 {dimension_numbers = #tpu.dot_dimension_numbers<[1], [0], [0], [1], [0, 0, 1, 1], [], []>} : vector<256x320xbf16>, vector<320x64xbf16>, vector<256x64xf32> -> vector<256x64xf32>
    %79 = arith.addf %73, %78 : vector<256x64xf32>
    %c3_86 = arith.constant 3 : index
    %c0_87 = arith.constant 0 : index
    %c0_88 = arith.constant 0 : index
    %80 = vector.load %arg12[%c3_86, %c0_87, %c0_88] : memref<20x16x320xbf16, #tpu.memory_space<vmem>>, vector<16x16x320xbf16>
    %81 = vector.shape_cast %80 : vector<16x16x320xbf16> to vector<256x320xbf16>
    %c3_89 = arith.constant 3 : index
    %c0_90 = arith.constant 0 : index
    %c0_91 = arith.constant 0 : index
    %82 = vector.load %arg4[%c3_89, %c0_90, %c0_91] : memref<5x320x64xbf16, #tpu.memory_space<vmem>>, vector<1x320x64xbf16>
    %83 = vector.shape_cast %82 : vector<1x320x64xbf16> to vector<320x64xbf16>
    %cst_92 = arith.constant dense<0.000000e+00> : vector<256x64xf32>
    %84 = tpu.matmul %81, %83, %cst_92 {dimension_numbers = #tpu.dot_dimension_numbers<[1], [0], [0], [1], [0, 0, 1, 1], [], []>} : vector<256x320xbf16>, vector<320x64xbf16>, vector<256x64xf32> -> vector<256x64xf32>
    %85 = arith.addf %79, %84 : vector<256x64xf32>
    %c4_93 = arith.constant 4 : index
    %c0_94 = arith.constant 0 : index
    %c0_95 = arith.constant 0 : index
    %86 = vector.load %arg12[%c4_93, %c0_94, %c0_95] : memref<20x16x320xbf16, #tpu.memory_space<vmem>>, vector<16x16x320xbf16>
    %87 = vector.shape_cast %86 : vector<16x16x320xbf16> to vector<256x320xbf16>
    %c4_96 = arith.constant 4 : index
    %c0_97 = arith.constant 0 : index
    %c0_98 = arith.constant 0 : index
    %88 = vector.load %arg4[%c4_96, %c0_97, %c0_98] : memref<5x320x64xbf16, #tpu.memory_space<vmem>>, vector<1x320x64xbf16>
    %89 = vector.shape_cast %88 : vector<1x320x64xbf16> to vector<320x64xbf16>
    %cst_99 = arith.constant dense<0.000000e+00> : vector<256x64xf32>
    %90 = tpu.matmul %87, %89, %cst_99 {dimension_numbers = #tpu.dot_dimension_numbers<[1], [0], [0], [1], [0, 0, 1, 1], [], []>} : vector<256x320xbf16>, vector<320x64xbf16>, vector<256x64xf32> -> vector<256x64xf32>
    %91 = arith.addf %85, %90 : vector<256x64xf32>
    %c0_100 = arith.constant 0 : index
    %c0_101 = arith.constant 0 : index
    %92 = vector.load %arg5[%c0_100, %c0_101] : memref<1x64xf32, #tpu.memory_space<vmem>>, vector<1x64xf32>
    %93 = vector.broadcast %92 : vector<1x64xf32> to vector<256x64xf32>
    %94 = arith.addf %91, %93 : vector<256x64xf32>
    %cst_102 = arith.constant 0.000000e+00 : f32
    %95 = vector.broadcast %cst_102 : f32 to vector<256x64xf32>
    %96 = arith.maximumf %94, %95 : vector<256x64xf32>
    %97 = vector.shape_cast %96 : vector<256x64xf32> to vector<16x16x64xf32>
    %98 = arith.truncf %97 : vector<16x16x64xf32> to vector<16x16x64xbf16>
    %99 = vector.extract_strided_slice %98 {offsets = [0, 0, 0], sizes = [16, 15, 64], strides = [1, 1, 1]} : vector<16x16x64xbf16> to vector<16x15x64xbf16>
    %c1_103 = arith.constant 1 : index
    %c1_104 = arith.constant 1 : index
    %c0_105 = arith.constant 0 : index
    %100 = vector.load %arg13[%c1_103, %c1_104, %c0_105] : memref<18x16x192xbf16, #tpu.memory_space<vmem>>, vector<16x15x64xbf16>
    tpu.vector_store %arg13[%c1_103, %c1_104, %c0_105], %99 {strides = array<i32>} : memref<18x16x192xbf16, #tpu.memory_space<vmem>>, vector<16x15x64xbf16>,
    %c1_106 = arith.constant 1 : index
    %c0_107 = arith.constant 0 : index
    %c64_108 = arith.constant 64 : index
    %101 = vector.load %arg13[%c1_106, %c0_107, %c64_108] : memref<18x16x192xbf16, #tpu.memory_space<vmem>>, vector<16x16x64xbf16>
    tpu.vector_store %arg13[%c1_106, %c0_107, %c64_108], %98 {strides = array<i32>} : memref<18x16x192xbf16, #tpu.memory_space<vmem>>, vector<16x16x64xbf16>,
    %102 = vector.extract_strided_slice %98 {offsets = [0, 1, 0], sizes = [16, 15, 64], strides = [1, 1, 1]} : vector<16x16x64xbf16> to vector<16x15x64xbf16>
    %c1_109 = arith.constant 1 : index
    %c0_110 = arith.constant 0 : index
    %c128_111 = arith.constant 128 : index
    %103 = vector.load %arg13[%c1_109, %c0_110, %c128_111] : memref<18x16x192xbf16, #tpu.memory_space<vmem>>, vector<16x15x64xbf16>
    tpu.vector_store %arg13[%c1_109, %c0_110, %c128_111], %102 {strides = array<i32>} : memref<18x16x192xbf16, #tpu.memory_space<vmem>>, vector<16x15x64xbf16>,
    %cst_112 = arith.constant 0.000000e+00 : f32
    %104 = vector.broadcast %cst_112 : f32 to vector<256x64xf32>
    %c0_113 = arith.constant 0 : index
    %c0_114 = arith.constant 0 : index
    %c0_115 = arith.constant 0 : index
    %105 = vector.load %arg13[%c0_113, %c0_114, %c0_115] : memref<18x16x192xbf16, #tpu.memory_space<vmem>>, vector<16x16x192xbf16>
    %106 = vector.shape_cast %105 : vector<16x16x192xbf16> to vector<256x192xbf16>
    %c0_116 = arith.constant 0 : index
    %c0_117 = arith.constant 0 : index
    %c0_118 = arith.constant 0 : index
    %107 = vector.load %arg6[%c0_116, %c0_117, %c0_118] : memref<3x192x64xbf16, #tpu.memory_space<vmem>>, vector<1x192x64xbf16>
    %108 = vector.shape_cast %107 : vector<1x192x64xbf16> to vector<192x64xbf16>
    %cst_119 = arith.constant dense<0.000000e+00> : vector<256x64xf32>
    %109 = tpu.matmul %106, %108, %cst_119 {dimension_numbers = #tpu.dot_dimension_numbers<[1], [0], [0], [1], [0, 0, 1, 1], [], []>} : vector<256x192xbf16>, vector<192x64xbf16>, vector<256x64xf32> -> vector<256x64xf32>
    %110 = arith.addf %104, %109 : vector<256x64xf32>
    %c1_120 = arith.constant 1 : index
    %c0_121 = arith.constant 0 : index
    %c0_122 = arith.constant 0 : index
    %111 = vector.load %arg13[%c1_120, %c0_121, %c0_122] : memref<18x16x192xbf16, #tpu.memory_space<vmem>>, vector<16x16x192xbf16>
    %112 = vector.shape_cast %111 : vector<16x16x192xbf16> to vector<256x192xbf16>
    %c1_123 = arith.constant 1 : index
    %c0_124 = arith.constant 0 : index
    %c0_125 = arith.constant 0 : index
    %113 = vector.load %arg6[%c1_123, %c0_124, %c0_125] : memref<3x192x64xbf16, #tpu.memory_space<vmem>>, vector<1x192x64xbf16>
    %114 = vector.shape_cast %113 : vector<1x192x64xbf16> to vector<192x64xbf16>
    %cst_126 = arith.constant dense<0.000000e+00> : vector<256x64xf32>
    %115 = tpu.matmul %112, %114, %cst_126 {dimension_numbers = #tpu.dot_dimension_numbers<[1], [0], [0], [1], [0, 0, 1, 1], [], []>} : vector<256x192xbf16>, vector<192x64xbf16>, vector<256x64xf32> -> vector<256x64xf32>
    %116 = arith.addf %110, %115 : vector<256x64xf32>
    %c2_127 = arith.constant 2 : index
    %c0_128 = arith.constant 0 : index
    %c0_129 = arith.constant 0 : index
    %117 = vector.load %arg13[%c2_127, %c0_128, %c0_129] : memref<18x16x192xbf16, #tpu.memory_space<vmem>>, vector<16x16x192xbf16>
    %118 = vector.shape_cast %117 : vector<16x16x192xbf16> to vector<256x192xbf16>
    %c2_130 = arith.constant 2 : index
    %c0_131 = arith.constant 0 : index
    %c0_132 = arith.constant 0 : index
    %119 = vector.load %arg6[%c2_130, %c0_131, %c0_132] : memref<3x192x64xbf16, #tpu.memory_space<vmem>>, vector<1x192x64xbf16>
    %120 = vector.shape_cast %119 : vector<1x192x64xbf16> to vector<192x64xbf16>
    %cst_133 = arith.constant dense<0.000000e+00> : vector<256x64xf32>
    %121 = tpu.matmul %118, %120, %cst_133 {dimension_numbers = #tpu.dot_dimension_numbers<[1], [0], [0], [1], [0, 0, 1, 1], [], []>} : vector<256x192xbf16>, vector<192x64xbf16>, vector<256x64xf32> -> vector<256x64xf32>
    %122 = arith.addf %116, %121 : vector<256x64xf32>
    %c0_134 = arith.constant 0 : index
    %c0_135 = arith.constant 0 : index
    %123 = vector.load %arg7[%c0_134, %c0_135] : memref<1x64xf32, #tpu.memory_space<vmem>>, vector<1x64xf32>
    %124 = vector.broadcast %123 : vector<1x64xf32> to vector<256x64xf32>
    %125 = arith.addf %122, %124 : vector<256x64xf32>
    %cst_136 = arith.constant 0.000000e+00 : f32
    %126 = vector.broadcast %cst_136 : f32 to vector<256x64xf32>
    %127 = arith.maximumf %125, %126 : vector<256x64xf32>
    %128 = vector.shape_cast %127 : vector<256x64xf32> to vector<16x16x64xf32>
    %129 = arith.truncf %128 : vector<16x16x64xf32> to vector<16x16x64xbf16>
    %130 = vector.extract_strided_slice %129 {offsets = [0, 0, 0], sizes = [16, 15, 64], strides = [1, 1, 1]} : vector<16x16x64xbf16> to vector<16x15x64xbf16>
    %c1_137 = arith.constant 1 : index
    %c1_138 = arith.constant 1 : index
    %c0_139 = arith.constant 0 : index
    %131 = vector.load %arg14[%c1_137, %c1_138, %c0_139] : memref<18x16x192xbf16, #tpu.memory_space<vmem>>, vector<16x15x64xbf16>
    tpu.vector_store %arg14[%c1_137, %c1_138, %c0_139], %130 {strides = array<i32>} : memref<18x16x192xbf16, #tpu.memory_space<vmem>>, vector<16x15x64xbf16>,
    %c1_140 = arith.constant 1 : index
    %c0_141 = arith.constant 0 : index
    %c64_142 = arith.constant 64 : index
    %132 = vector.load %arg14[%c1_140, %c0_141, %c64_142] : memref<18x16x192xbf16, #tpu.memory_space<vmem>>, vector<16x16x64xbf16>
    tpu.vector_store %arg14[%c1_140, %c0_141, %c64_142], %129 {strides = array<i32>} : memref<18x16x192xbf16, #tpu.memory_space<vmem>>, vector<16x16x64xbf16>,
    %133 = vector.extract_strided_slice %129 {offsets = [0, 1, 0], sizes = [16, 15, 64], strides = [1, 1, 1]} : vector<16x16x64xbf16> to vector<16x15x64xbf16>
    %c1_143 = arith.constant 1 : index
    %c0_144 = arith.constant 0 : index
    %c128_145 = arith.constant 128 : index
    %134 = vector.load %arg14[%c1_143, %c0_144, %c128_145] : memref<18x16x192xbf16, #tpu.memory_space<vmem>>, vector<16x15x64xbf16>
    tpu.vector_store %arg14[%c1_143, %c0_144, %c128_145], %133 {strides = array<i32>} : memref<18x16x192xbf16, #tpu.memory_space<vmem>>, vector<16x15x64xbf16>,
    %cst_146 = arith.constant 0.000000e+00 : f32
    %135 = vector.broadcast %cst_146 : f32 to vector<256x64xf32>
    %c0_147 = arith.constant 0 : index
    %c0_148 = arith.constant 0 : index
    %c0_149 = arith.constant 0 : index
    %136 = vector.load %arg14[%c0_147, %c0_148, %c0_149] : memref<18x16x192xbf16, #tpu.memory_space<vmem>>, vector<16x16x192xbf16>
    %137 = vector.shape_cast %136 : vector<16x16x192xbf16> to vector<256x192xbf16>
    %c0_150 = arith.constant 0 : index
    %c0_151 = arith.constant 0 : index
    %c0_152 = arith.constant 0 : index
    %138 = vector.load %arg8[%c0_150, %c0_151, %c0_152] : memref<3x192x64xbf16, #tpu.memory_space<vmem>>, vector<1x192x64xbf16>
    %139 = vector.shape_cast %138 : vector<1x192x64xbf16> to vector<192x64xbf16>
    %cst_153 = arith.constant dense<0.000000e+00> : vector<256x64xf32>
    %140 = tpu.matmul %137, %139, %cst_153 {dimension_numbers = #tpu.dot_dimension_numbers<[1], [0], [0], [1], [0, 0, 1, 1], [], []>} : vector<256x192xbf16>, vector<192x64xbf16>, vector<256x64xf32> -> vector<256x64xf32>
    %141 = arith.addf %135, %140 : vector<256x64xf32>
    %c1_154 = arith.constant 1 : index
    %c0_155 = arith.constant 0 : index
    %c0_156 = arith.constant 0 : index
    %142 = vector.load %arg14[%c1_154, %c0_155, %c0_156] : memref<18x16x192xbf16, #tpu.memory_space<vmem>>, vector<16x16x192xbf16>
    %143 = vector.shape_cast %142 : vector<16x16x192xbf16> to vector<256x192xbf16>
    %c1_157 = arith.constant 1 : index
    %c0_158 = arith.constant 0 : index
    %c0_159 = arith.constant 0 : index
    %144 = vector.load %arg8[%c1_157, %c0_158, %c0_159] : memref<3x192x64xbf16, #tpu.memory_space<vmem>>, vector<1x192x64xbf16>
    %145 = vector.shape_cast %144 : vector<1x192x64xbf16> to vector<192x64xbf16>
    %cst_160 = arith.constant dense<0.000000e+00> : vector<256x64xf32>
    %146 = tpu.matmul %143, %145, %cst_160 {dimension_numbers = #tpu.dot_dimension_numbers<[1], [0], [0], [1], [0, 0, 1, 1], [], []>} : vector<256x192xbf16>, vector<192x64xbf16>, vector<256x64xf32> -> vector<256x64xf32>
    %147 = arith.addf %141, %146 : vector<256x64xf32>
    %c2_161 = arith.constant 2 : index
    %c0_162 = arith.constant 0 : index
    %c0_163 = arith.constant 0 : index
    %148 = vector.load %arg14[%c2_161, %c0_162, %c0_163] : memref<18x16x192xbf16, #tpu.memory_space<vmem>>, vector<16x16x192xbf16>
    %149 = vector.shape_cast %148 : vector<16x16x192xbf16> to vector<256x192xbf16>
    %c2_164 = arith.constant 2 : index
    %c0_165 = arith.constant 0 : index
    %c0_166 = arith.constant 0 : index
    %150 = vector.load %arg8[%c2_164, %c0_165, %c0_166] : memref<3x192x64xbf16, #tpu.memory_space<vmem>>, vector<1x192x64xbf16>
    %151 = vector.shape_cast %150 : vector<1x192x64xbf16> to vector<192x64xbf16>
    %cst_167 = arith.constant dense<0.000000e+00> : vector<256x64xf32>
    %152 = tpu.matmul %149, %151, %cst_167 {dimension_numbers = #tpu.dot_dimension_numbers<[1], [0], [0], [1], [0, 0, 1, 1], [], []>} : vector<256x192xbf16>, vector<192x64xbf16>, vector<256x64xf32> -> vector<256x64xf32>
    %153 = arith.addf %147, %152 : vector<256x64xf32>
    %c0_168 = arith.constant 0 : index
    %c0_169 = arith.constant 0 : index
    %154 = vector.load %arg9[%c0_168, %c0_169] : memref<1x64xf32, #tpu.memory_space<vmem>>, vector<1x64xf32>
    %155 = vector.broadcast %154 : vector<1x64xf32> to vector<256x64xf32>
    %156 = arith.addf %153, %155 : vector<256x64xf32>
    %cst_170 = arith.constant 0.000000e+00 : f32
    %157 = vector.broadcast %cst_170 : f32 to vector<256x64xf32>
    %158 = arith.maximumf %156, %157 : vector<256x64xf32>
    %159 = vector.shape_cast %158 : vector<256x64xf32> to vector<16x16x64xf32>
    %c0_171 = arith.constant 0 : index
    %c0_172 = arith.constant 0 : index
    %c0_173 = arith.constant 0 : index
    %c0_174 = arith.constant 0 : index
    %160 = vector.load %arg10[%c0_171, %c0_172, %c0_173, %c0_174] : memref<1x16x16x64xf32, #tpu.memory_space<vmem>>, vector<1x16x16x64xf32>
    %161 = vector.shape_cast %160 : vector<1x16x16x64xf32> to vector<16x16x64xf32>
    %162 = vector.shape_cast %159 : vector<16x16x64xf32> to vector<1x16x16x64xf32>
    tpu.vector_store %arg10[%c0_171, %c0_172, %c0_173, %c0_174], %162 {strides = array<i32>} : memref<1x16x16x64xf32, #tpu.memory_space<vmem>>, vector<1x16x16x64xf32>,
    return
  }
  func.func @transform_0(%arg0: i32) -> (i32, i32, i32, i32) {
    %c0_i32 = arith.constant 0 : i32
    %c0_i32_0 = arith.constant 0 : i32
    %c0_i32_1 = arith.constant 0 : i32
    %c0_i32_2 = arith.constant 0 : i32
    return %arg0, %c0_i32, %c0_i32_0, %c0_i32_1 : i32, i32, i32, i32
  }
  func.func @transform_1(%arg0: i32) -> (i32, i32, i32) {
    %c0_i32 = arith.constant 0 : i32
    %c0_i32_0 = arith.constant 0 : i32
    %c0_i32_1 = arith.constant 0 : i32
    %c0_i32_2 = arith.constant 0 : i32
    return %c0_i32, %c0_i32_0, %c0_i32_1 : i32, i32, i32
  }
  func.func @transform_2(%arg0: i32) -> (i32, i32) {
    %c0_i32 = arith.constant 0 : i32
    %c0_i32_0 = arith.constant 0 : i32
    %c0_i32_1 = arith.constant 0 : i32
    return %c0_i32, %c0_i32_0 : i32, i32
  }
  func.func @transform_3(%arg0: i32) -> (i32, i32, i32) {
    %c0_i32 = arith.constant 0 : i32
    %c0_i32_0 = arith.constant 0 : i32
    %c0_i32_1 = arith.constant 0 : i32
    %c0_i32_2 = arith.constant 0 : i32
    return %c0_i32, %c0_i32_0, %c0_i32_1 : i32, i32, i32
  }
  func.func @transform_4(%arg0: i32) -> (i32, i32) {
    %c0_i32 = arith.constant 0 : i32
    %c0_i32_0 = arith.constant 0 : i32
    %c0_i32_1 = arith.constant 0 : i32
    return %c0_i32, %c0_i32_0 : i32, i32
  }
  func.func @transform_5(%arg0: i32) -> (i32, i32, i32) {
    %c0_i32 = arith.constant 0 : i32
    %c0_i32_0 = arith.constant 0 : i32
    %c0_i32_1 = arith.constant 0 : i32
    %c0_i32_2 = arith.constant 0 : i32
    return %c0_i32, %c0_i32_0, %c0_i32_1 : i32, i32, i32
  }
  func.func @transform_6(%arg0: i32) -> (i32, i32) {
    %c0_i32 = arith.constant 0 : i32
    %c0_i32_0 = arith.constant 0 : i32
    %c0_i32_1 = arith.constant 0 : i32
    return %c0_i32, %c0_i32_0 : i32, i32
  }
  func.func @transform_7(%arg0: i32) -> (i32, i32, i32) {
    %c0_i32 = arith.constant 0 : i32
    %c0_i32_0 = arith.constant 0 : i32
    %c0_i32_1 = arith.constant 0 : i32
    %c0_i32_2 = arith.constant 0 : i32
    return %c0_i32, %c0_i32_0, %c0_i32_1 : i32, i32, i32
  }
  func.func @transform_8(%arg0: i32) -> (i32, i32) {
    %c0_i32 = arith.constant 0 : i32
    %c0_i32_0 = arith.constant 0 : i32
    %c0_i32_1 = arith.constant 0 : i32
    return %c0_i32, %c0_i32_0 : i32, i32
  }
  func.func @transform_9(%arg0: i32) -> (i32, i32, i32, i32) {
    %c0_i32 = arith.constant 0 : i32
    %c0_i32_0 = arith.constant 0 : i32
    %c0_i32_1 = arith.constant 0 : i32
    %c0_i32_2 = arith.constant 0 : i32
    return %arg0, %c0_i32, %c0_i32_0, %c0_i32_1 : i32, i32, i32, i32
  }
}

</mosaic_0001>

<llo_original>
// kernel: group2_forward.1
$region0: #{group2_forward.1}
  #allocation0 [shape = 'u32[]', space=smem, size = 0x4, offset = 0x4, fixed_abs, tag = 'smem constant byte address 0x4 - core index']
  #allocation1 [shape = 'u32[144,128]{1,0:T(1,128)}', space=vmem, size = 0x12000, scoped, tag = 'internal scratch']
  #allocation2 [shape = 'bf16[20,16,320]{2,1,0:T(16,128)(2,1)}', space=vmem, size = 0x3c000, scoped, tag = 'scratch operand']
  #allocation3 [shape = 'bf16[20,16,320]{2,1,0:T(16,128)(2,1)}', space=vmem, size = 0x3c000, scoped, tag = 'scratch operand']
  #allocation4 [shape = 'bf16[18,16,192]{2,1,0:T(16,128)(2,1)}', space=vmem, size = 0x24000, scoped, tag = 'scratch operand']
  #allocation5 [shape = 'bf16[18,16,192]{2,1,0:T(16,128)(2,1)}', space=vmem, size = 0x24000, scoped, tag = 'scratch operand']
  %s0 = inlined_call_operand.vmem [shape: bf16[2,16,16,64], index: 0, kind: input, shape index: {}]
  %s1 = inlined_call_operand.vmem [shape: bf16[5,320,64], index: 1, kind: input, shape index: {}]
  %s2 = inlined_call_operand.vmem [shape: f32[1,64], index: 2, kind: input, shape index: {}]
  %s3 = inlined_call_operand.vmem [shape: bf16[5,320,64], index: 3, kind: input, shape index: {}]
  %s4 = inlined_call_operand.vmem [shape: f32[1,64], index: 4, kind: input, shape index: {}]
  %s5 = inlined_call_operand.vmem [shape: bf16[3,192,64], index: 5, kind: input, shape index: {}]
  %s6 = inlined_call_operand.vmem [shape: f32[1,64], index: 6, kind: input, shape index: {}]
  %s7 = inlined_call_operand.vmem [shape: bf16[3,192,64], index: 7, kind: input, shape index: {}]
  %s8 = inlined_call_operand.vmem [shape: f32[1,64], index: 8, kind: input, shape index: {}]
  %s9 = inlined_call_operand.hbm [shape: f32[2,16,16,64], index: 9, kind: output, shape index: {}]
  %s10 = sld [smem:[#allocation0]]
  $region73: #{group2_forward.1} parent=0
    _
  %s12 = ssub.s32 1, %s10
  %s13 = scalar_select 0, %s12, %s10
  $region1: #{group2_forward.1} parent=0
    #allocation6 [shape = 'u8[262144]{0}', space=vmem, size = 0x40000, scoped, tag = 'output window, operand 0']
    #allocation7 [shape = 's32[2]{0}', space=sflag, size = 0x8, scoped, tag = 'scoped memory for group2_forward.1']
    %14 = vsyncpa [#allocation7], 0
    %s15 = scalar_lea.sflag [#allocation7], 1
    %16 = vsyncpa %s15, 0
    loop: start=0, step=1, limit=4
    $region2: #{group2_forward.1} parent=1 // loop_pre_header
      _
    $region3: #{group2_forward.1} parent=1 // loop_header
      %s18 = sphi 0, %s22
      %p19 = scmp.ge.s32.totalorder %s18, 4
      %s28 = sphi 0, %s30
      %s31 = sphi 0, %s28
      %s32 = sphi 0, %s31
      %s48 = sphi 0, %s32
      %s52 = sphi 0, %s52
      %s54 = sphi 0, %s52
      %s55 = sphi 0, %s54
      %s69 = sphi 0, %s55
      %s73 = sphi 0, %s73
      %s75 = sphi 0, %s73
      %s76 = sphi 0, %s75
      %s90 = sphi 0, %s76
      %s94 = sphi 0, %s94
      %s96 = sphi 0, %s94
      %s97 = sphi 0, %s96
      %s111 = sphi 0, %s97
      %s115 = sphi 0, %s115
      %s117 = sphi 0, %s115
      %s118 = sphi 0, %s117
      %s132 = sphi 0, %s118
      %s136 = sphi 0, %s136
      %s138 = sphi 0, %s136
      %s139 = sphi 0, %s138
      %s153 = sphi 0, %s139
      %s157 = sphi 0, %s157
      %s159 = sphi 0, %s157
      %s160 = sphi 0, %s159
      %s174 = sphi 0, %s160
      %s178 = sphi 0, %s178
      %s180 = sphi 0, %s178
      %s181 = sphi 0, %s180
      %s195 = sphi 0, %s181
      %s199 = sphi 0, %s199
      %s201 = sphi 0, %s199
      %s202 = sphi 0, %s201
      %s216 = sphi 0, %s202
      %s222 = sphi 0, %s224
      %s225 = sphi 0, %s222
      %s226 = sphi 0, %s225
      %s242 = sphi 0, %s226
    $region4: #{group2_forward.1} parent=1 // loop_header_branch
      %21 = sbr.rel (%p19) target = $region8
    $region5: #{group2_forward.1} parent=1 // loop_body
      %s23 = ssub.s32 %s18, 1
      %s24 = ssub.s32 %s18, 2
      %s25 = sadd.s32 %s18, 1
      %s26 = ssub.s32 %s18, %s25
      %p27 = scmp.eq.s32.totalorder %s26, 0
      %s29 = sadd.s32 %s28, 1
      %s30 = scalar_select %p27, %s28, %s29
      %p33 = pneg %p27
      %p34 = scmp.eq.s32.totalorder %s18, 1
      %p35 = por %p33, %p34
      %p36 = scmp.ne.s32.totalorder %s28, %s31
      %p37 = scmp.eq.s32.totalorder %s18, 0
      %p38 = por %p36, %p37
      %p39 = scmp.ne.s32.totalorder %s28, %s31
      %p40 = scmp.eq.s32.totalorder %s23, 1
      %p41 = por %p39, %p40
      %p42 = scmp.ne.s32.totalorder %s31, %s32
      %p43 = scmp.eq.s32.totalorder %s23, 0
      %p44 = por %p42, %p43
      %p45 = scmp.ne.s32.totalorder %s31, %s32
      %p46 = scmp.eq.s32.totalorder %s24, 1
      %p47 = por %p45, %p46
      %p49 = scmp.ne.s32.totalorder %s32, %s48
      %p50 = scmp.eq.s32.totalorder %s24, 0
      %p51 = por %p49, %p50
      %s53 = sadd.s32 %s52, 1
      %p56 = scmp.eq.s32.totalorder %s18, 1
      %p57 = scmp.ne.s32.totalorder %s52, %s54
      %p58 = scmp.eq.s32.totalorder %s18, 0
      %p59 = por %p57, %p58
      %p60 = scmp.ne.s32.totalorder %s52, %s54
      %p61 = scmp.eq.s32.totalorder %s23, 1
      %p62 = por %p60, %p61
      %p63 = scmp.ne.s32.totalorder %s54, %s55
      %p64 = scmp.eq.s32.totalorder %s23, 0
      %p65 = por %p63, %p64
      %p66 = scmp.ne.s32.totalorder %s54, %s55
      %p67 = scmp.eq.s32.totalorder %s24, 1
      %p68 = por %p66, %p67
      %p70 = scmp.ne.s32.totalorder %s55, %s69
      %p71 = scmp.eq.s32.totalorder %s24, 0
      %p72 = por %p70, %p71
      %s74 = sadd.s32 %s73, 1
      %p77 = scmp.eq.s32.totalorder %s18, 1
      %p78 = scmp.ne.s32.totalorder %s73, %s75
      %p79 = scmp.eq.s32.totalorder %s18, 0
      %p80 = por %p78, %p79
      %p81 = scmp.ne.s32.totalorder %s73, %s75
      %p82 = scmp.eq.s32.totalorder %s23, 1
      %p83 = por %p81, %p82
      %p84 = scmp.ne.s32.totalorder %s75, %s76
      %p85 = scmp.eq.s32.totalorder %s23, 0
      %p86 = por %p84, %p85
      %p87 = scmp.ne.s32.totalorder %s75, %s76
      %p88 = scmp.eq.s32.totalorder %s24, 1
      %p89 = por %p87, %p88
      %p91 = scmp.ne.s32.totalorder %s76, %s90
      %p92 = scmp.eq.s32.totalorder %s24, 0
      %p93 = por %p91, %p92
      %s95 = sadd.s32 %s94, 1
      %p98 = scmp.eq.s32.totalorder %s18, 1
      %p99 = scmp.ne.s32.totalorder %s94, %s96
      %p100 = scmp.eq.s32.totalorder %s18, 0
      %p101 = por %p99, %p100
      %p102 = scmp.ne.s32.totalorder %s94, %s96
      %p103 = scmp.eq.s32.totalorder %s23, 1
      %p104 = por %p102, %p103
      %p105 = scmp.ne.s32.totalorder %s96, %s97
      %p106 = scmp.eq.s32.totalorder %s23, 0
      %p107 = por %p105, %p106
      %p108 = scmp.ne.s32.totalorder %s96, %s97
      %p109 = scmp.eq.s32.totalorder %s24, 1
      %p110 = por %p108, %p109
      %p112 = scmp.ne.s32.totalorder %s97, %s111
      %p113 = scmp.eq.s32.totalorder %s24, 0
      %p114 = por %p112, %p113
      %s116 = sadd.s32 %s115, 1
      %p119 = scmp.eq.s32.totalorder %s18, 1
      %p120 = scmp.ne.s32.totalorder %s115, %s117
      %p121 = scmp.eq.s32.totalorder %s18, 0
      %p122 = por %p120, %p121
      %p123 = scmp.ne.s32.totalorder %s115, %s117
      %p124 = scmp.eq.s32.totalorder %s23, 1
      %p125 = por %p123, %p124
      %p126 = scmp.ne.s32.totalorder %s117, %s118
      %p127 = scmp.eq.s32.totalorder %s23, 0
      %p128 = por %p126, %p127
      %p129 = scmp.ne.s32.totalorder %s117, %s118
      %p130 = scmp.eq.s32.totalorder %s24, 1
      %p131 = por %p129, %p130
      %p133 = scmp.ne.s32.totalorder %s118, %s132
      %p134 = scmp.eq.s32.totalorder %s24, 0
      %p135 = por %p133, %p134
      %s137 = sadd.s32 %s136, 1
      %p140 = scmp.eq.s32.totalorder %s18, 1
      %p141 = scmp.ne.s32.totalorder %s136, %s138
      %p142 = scmp.eq.s32.totalorder %s18, 0
      %p143 = por %p141, %p142
      %p144 = scmp.ne.s32.totalorder %s136, %s138
      %p145 = scmp.eq.s32.totalorder %s23, 1
      %p146 = por %p144, %p145
      %p147 = scmp.ne.s32.totalorder %s138, %s139
      %p148 = scmp.eq.s32.totalorder %s23, 0
      %p149 = por %p147, %p148
      %p150 = scmp.ne.s32.totalorder %s138, %s139
      %p151 = scmp.eq.s32.totalorder %s24, 1
      %p152 = por %p150, %p151
      %p154 = scmp.ne.s32.totalorder %s139, %s153
      %p155 = scmp.eq.s32.totalorder %s24, 0
      %p156 = por %p154, %p155
      %s158 = sadd.s32 %s157, 1
      %p161 = scmp.eq.s32.totalorder %s18, 1
      %p162 = scmp.ne.s32.totalorder %s157, %s159
      %p163 = scmp.eq.s32.totalorder %s18, 0
      %p164 = por %p162, %p163
      %p165 = scmp.ne.s32.totalorder %s157, %s159
      %p166 = scmp.eq.s32.totalorder %s23, 1
      %p167 = por %p165, %p166
      %p168 = scmp.ne.s32.totalorder %s159, %s160
      %p169 = scmp.eq.s32.totalorder %s23, 0
      %p170 = por %p168, %p169
      %p171 = scmp.ne.s32.totalorder %s159, %s160
      %p172 = scmp.eq.s32.totalorder %s24, 1
      %p173 = por %p171, %p172
      %p175 = scmp.ne.s32.totalorder %s160, %s174
      %p176 = scmp.eq.s32.totalorder %s24, 0
      %p177 = por %p175, %p176
      %s179 = sadd.s32 %s178, 1
      %p182 = scmp.eq.s32.totalorder %s18, 1
      %p183 = scmp.ne.s32.totalorder %s178, %s180
      %p184 = scmp.eq.s32.totalorder %s18, 0
      %p185 = por %p183, %p184
      %p186 = scmp.ne.s32.totalorder %s178, %s180
      %p187 = scmp.eq.s32.totalorder %s23, 1
      %p188 = por %p186, %p187
      %p189 = scmp.ne.s32.totalorder %s180, %s181
      %p190 = scmp.eq.s32.totalorder %s23, 0
      %p191 = por %p189, %p190
      %p192 = scmp.ne.s32.totalorder %s180, %s181
      %p193 = scmp.eq.s32.totalorder %s24, 1
      %p194 = por %p192, %p193
      %p196 = scmp.ne.s32.totalorder %s181, %s195
      %p197 = scmp.eq.s32.totalorder %s24, 0
      %p198 = por %p196, %p197
      %s200 = sadd.s32 %s199, 1
      %p203 = scmp.eq.s32.totalorder %s18, 1
      %p204 = scmp.ne.s32.totalorder %s199, %s201
      %p205 = scmp.eq.s32.totalorder %s18, 0
      %p206 = por %p204, %p205
      %p207 = scmp.ne.s32.totalorder %s199, %s201
      %p208 = scmp.eq.s32.totalorder %s23, 1
      %p209 = por %p207, %p208
      %p210 = scmp.ne.s32.totalorder %s201, %s202
      %p211 = scmp.eq.s32.totalorder %s23, 0
      %p212 = por %p210, %p211
      %p213 = scmp.ne.s32.totalorder %s201, %s202
      %p214 = scmp.eq.s32.totalorder %s24, 1
      %p215 = por %p213, %p214
      %p217 = scmp.ne.s32.totalorder %s202, %s216
      %p218 = scmp.eq.s32.totalorder %s24, 0
      %p219 = por %p217, %p218
      %s220 = ssub.s32 %s18, %s25
      %p221 = scmp.eq.s32.totalorder %s220, 0
      %s223 = sadd.s32 %s222, 1
      %s224 = scalar_select %p221, %s222, %s223
      %p227 = pneg %p221
      %p228 = scmp.eq.s32.totalorder %s18, 1
      %p229 = por %p227, %p228
      %p230 = scmp.ne.s32.totalorder %s222, %s225
      %p231 = scmp.eq.s32.totalorder %s18, 0
      %p232 = por %p230, %p231
      %p233 = scmp.ne.s32.totalorder %s222, %s225
      %p234 = scmp.eq.s32.totalorder %s23, 1
      %p235 = por %p233, %p234
      %p236 = scmp.ne.s32.totalorder %s225, %s226
      %p237 = scmp.eq.s32.totalorder %s23, 0
      %p238 = por %p236, %p237
      %p239 = scmp.ne.s32.totalorder %s225, %s226
      %p240 = scmp.eq.s32.totalorder %s24, 1
      %p241 = por %p239, %p240
      %p243 = scmp.ne.s32.totalorder %s226, %s242
      %p244 = scmp.eq.s32.totalorder %s24, 0
      %p245 = por %p243, %p244
      %p246 = scmp.le.s32.totalorder 1, %s18
      %p247 = scmp.lt.s32.totalorder %s18, 3
      %p248 = pnand %p246, %p247
      %p249 = pneg %p248
      // Predicated region
      $region9: #{group2_forward.1} parent=5 // pred_check
        _
      $region10: #{group2_forward.1} parent=5 // pred_check_branch
        %251 = sbr.rel (%p248) target = $region12
      $region11: #{group2_forward.1} parent=5 // pred_region
        %s252 = ssub.s32 %s18, 1
        // Predicated region
        $region13: #{group2_forward.1} parent=11 // pred_check
          %p253 = pneg %p65
        $region14: #{group2_forward.1} parent=11 // pred_check_branch
          %255 = sbr.rel (%p253) target = $region16
        $region15: #{group2_forward.1} parent=11 // pred_region
          _
        $region16: #{group2_forward.1} parent=11 // pred_fallthru
          _
        // Predicated region
        $region17: #{group2_forward.1} parent=11 // pred_check
          %p256 = pneg %p86
        $region18: #{group2_forward.1} parent=11 // pred_check_branch
          %258 = sbr.rel (%p256) target = $region20
        $region19: #{group2_forward.1} parent=11 // pred_region
          _
        $region20: #{group2_forward.1} parent=11 // pred_fallthru
          _
        // Predicated region
        $region21: #{group2_forward.1} parent=11 // pred_check
          %p259 = pneg %p107
        $region22: #{group2_forward.1} parent=11 // pred_check_branch
          %261 = sbr.rel (%p259) target = $region24
        $region23: #{group2_forward.1} parent=11 // pred_region
          _
        $region24: #{group2_forward.1} parent=11 // pred_fallthru
          _
        // Predicated region
        $region25: #{group2_forward.1} parent=11 // pred_check
          %p262 = pneg %p128
        $region26: #{group2_forward.1} parent=11 // pred_check_branch
          %264 = sbr.rel (%p262) target = $region28
        $region27: #{group2_forward.1} parent=11 // pred_region
          _
        $region28: #{group2_forward.1} parent=11 // pred_fallthru
          _
        // Predicated region
        $region29: #{group2_forward.1} parent=11 // pred_check
          %p265 = pneg %p149
        $region30: #{group2_forward.1} parent=11 // pred_check_branch
          %267 = sbr.rel (%p265) target = $region32
        $region31: #{group2_forward.1} parent=11 // pred_region
          _
        $region32: #{group2_forward.1} parent=11 // pred_fallthru
          _
        // Predicated region
        $region33: #{group2_forward.1} parent=11 // pred_check
          %p268 = pneg %p170
        $region34: #{group2_forward.1} parent=11 // pred_check_branch
          %270 = sbr.rel (%p268) target = $region36
        $region35: #{group2_forward.1} parent=11 // pred_region
          _
        $region36: #{group2_forward.1} parent=11 // pred_fallthru
          _
        // Predicated region
        $region37: #{group2_forward.1} parent=11 // pred_check
          %p271 = pneg %p191
        $region38: #{group2_forward.1} parent=11 // pred_check_branch
          %273 = sbr.rel (%p271) target = $region40
        $region39: #{group2_forward.1} parent=11 // pred_region
          _
        $region40: #{group2_forward.1} parent=11 // pred_fallthru
          _
        // Predicated region
        $region41: #{group2_forward.1} parent=11 // pred_check
          %p274 = pneg %p212
        $region42: #{group2_forward.1} parent=11 // pred_check_branch
          %276 = sbr.rel (%p274) target = $region44
        $region43: #{group2_forward.1} parent=11 // pred_region
          _
        $region44: #{group2_forward.1} parent=11 // pred_fallthru
          _
      $region12: #{group2_forward.1} parent=5 // pred_fallthru
        _
      %p277 = scmp.lt.s32.totalorder %s18, 2
      // Predicated region
      $region45: #{group2_forward.1} parent=5 // pred_check
        %p278 = pneg %p277
      $region46: #{group2_forward.1} parent=5 // pred_check_branch
        %280 = sbr.rel (%p278) target = $region48
      $region47: #{group2_forward.1} parent=5 // pred_region
        // Predicated region
        $region49: #{group2_forward.1} parent=47 // pred_check
          %p281 = pneg %p38
        $region50: #{group2_forward.1} parent=47 // pred_check_branch
          %283 = sbr.rel (%p281) target = $region52
        $region51: #{group2_forward.1} parent=47 // pred_region
          %p284 = scmp.lt.s32.totalorder %s18, 1
          %s285 = scalar_select %p284, %s18, 1
          %s286 = smul.addr %s285, 32
          %s287 = smul.addr %s286, 4
          %s288 = scalar_lea.vmem %s0, %s287
        $region52: #{group2_forward.1} parent=47 // pred_fallthru
          _
      $region48: #{group2_forward.1} parent=5 // pred_fallthru
        _
      %p289 = scmp.le.s32.totalorder 1, %s18
      %p290 = scmp.lt.s32.totalorder %s18, 3
      %p291 = pnand %p289, %p290
      %p292 = pneg %p291
      // Predicated region
      $region53: #{group2_forward.1} parent=5 // pred_check
        _
      $region54: #{group2_forward.1} parent=5 // pred_check_branch
        %294 = sbr.rel (%p291) target = $region56
      $region55: #{group2_forward.1} parent=5 // pred_region
        %s295 = ssub.s32 %s18, 1
        %p296 = scmp.lt.s32.totalorder %s23, 1
        %s297 = scalar_select %p296, %s23, 1
        %s298 = smul.addr %s297, 32
        %s299 = smul.addr %s298, 4
        %s300 = scalar_lea.vmem %s0, %s299
        %p301 = pneg %p44
        %p302 = pneg %p41
        %p303 = pneg %p65
        %p304 = pneg %p62
        %p305 = pneg %p86
        %p306 = pneg %p83
        %p307 = pneg %p107
        %p308 = pneg %p104
        %p309 = pneg %p128
        %p310 = pneg %p125
        %p311 = pneg %p149
        %p312 = pneg %p146
        %p313 = pneg %p170
        %p314 = pneg %p167
        %p315 = pneg %p191
        %p316 = pneg %p188
        %p317 = pneg %p212
        %p318 = pneg %p209
        %p319 = pneg %p238
        %p320 = pneg %p235
        %s321 = sand.u32 %s225, 1
        %s322 = scalar_lea.sflag [#allocation7], %s321
        %s323 = sand.u32 %s225, 1
        %s324 = smul.addr %s323, 256
        %s325 = scalar_lea.vmem [#allocation6], %s324
        %p326 = scmp.lt.s32.totalorder %s23, 1
        %s327 = scalar_select %p326, %s23, 1
        %s328 = smul.addr %s327, 32
        %s329 = smul.addr %s328, 4
        %s330 = scalar_lea.vmem %s0, %s329
        %p332 = scmp.eq.s32.totalorder %s23, 0
        // Predicated region
        $region57: #{group2_forward.1} parent=55 // pred_check
          %p333 = pneg %p332
        $region58: #{group2_forward.1} parent=55 // pred_check_branch
          %335 = sbr.rel (%p333) target = $region60
        $region59: #{group2_forward.1} parent=55 // pred_region
          %336 = vst [vmem:[#allocation2] sm:$0xff] 0
          %337 = vst [vmem:[#allocation2 + $0x8] sm:$0xff] 0
          %vm338 = vcmask 523264
          %339 = vst.msk [vmem:[#allocation2 + $0x10] sm:$0xff] %vm338, 0
          %340 = vst [vmem:[#allocation2 + $0x18] sm:$0xff] 0
          %341 = vst [vmem:[#allocation2 + $0x20] sm:$0xff] 0
          %342 = vst.msk [vmem:[#allocation2 + $0x28] sm:$0xff] %vm338, 0
          %343 = vst [vmem:[#allocation2 + $0x30] sm:$0xff] 0
          %344 = vst [vmem:[#allocation2 + $0x38] sm:$0xff] 0
          %345 = vst.msk [vmem:[#allocation2 + $0x40] sm:$0xff] %vm338, 0
          %346 = vst [vmem:[#allocation2 + $0x48] sm:$0xff] 0
          %347 = vst [vmem:[#allocation2 + $0x50] sm:$0xff] 0
          %348 = vst.msk [vmem:[#allocation2 + $0x58] sm:$0xff] %vm338, 0
          %349 = vst [vmem:[#allocation2 + $0x60] sm:$0xff] 0
          %350 = vst [vmem:[#allocation2 + $0x68] sm:$0xff] 0
          %351 = vst.msk [vmem:[#allocation2 + $0x70] sm:$0xff] %vm338, 0
          %352 = vst [vmem:[#allocation2 + $0x78] sm:$0xff] 0
          %353 = vst [vmem:[#allocation2 + $0x80] sm:$0xff] 0
          %354 = vst.msk [vmem:[#allocation2 + $0x88] sm:$0xff] %vm338, 0
          %355 = vst [vmem:[#allocation2 + $0x90] sm:$0xff] 0
          %356 = vst [vmem:[#allocation2 + $0x98] sm:$0xff] 0
          %357 = vst.msk [vmem:[#allocation2 + $0xa0] sm:$0xff] %vm338, 0
          %358 = vst [vmem:[#allocation2 + $0xa8] sm:$0xff] 0
          %359 = vst [vmem:[#allocation2 + $0xb0] sm:$0xff] 0
          %360 = vst.msk [vmem:[#allocation2 + $0xb8] sm:$0xff] %vm338, 0
          %361 = vst [vmem:[#allocation2 + $0xc0] sm:$0xff] 0
          %362 = vst [vmem:[#allocation2 + $0xc8] sm:$0xff] 0
          %363 = vst.msk [vmem:[#allocation2 + $0xd0] sm:$0xff] %vm338, 0
          %364 = vst [vmem:[#allocation2 + $0xd8] sm:$0xff] 0
          %365 = vst [vmem:[#allocation2 + $0xe0] sm:$0xff] 0
          %366 = vst.msk [vmem:[#allocation2 + $0xe8] sm:$0xff] %vm338, 0
          %367 = vst [vmem:[#allocation2 + $0xf0] sm:$0xff] 0
          %368 = vst [vmem:[#allocation2 + $0xf8] sm:$0xff] 0
          %369 = vst.msk [vmem:[#allocation2 + $0x100] sm:$0xff] %vm338, 0
          %370 = vst [vmem:[#allocation2 + $0x108] sm:$0xff] 0
          %371 = vst [vmem:[#allocation2 + $0x110] sm:$0xff] 0
          %372 = vst.msk [vmem:[#allocation2 + $0x118] sm:$0xff] %vm338, 0
          %373 = vst [vmem:[#allocation2 + $0x120] sm:$0xff] 0
          %374 = vst [vmem:[#allocation2 + $0x128] sm:$0xff] 0
          %375 = vst.msk [vmem:[#allocation2 + $0x130] sm:$0xff] %vm338, 0
          %376 = vst [vmem:[#allocation2 + $0x138] sm:$0xff] 0
          %377 = vst [vmem:[#allocation2 + $0x140] sm:$0xff] 0
          %378 = vst.msk [vmem:[#allocation2 + $0x148] sm:$0xff] %vm338, 0
          %379 = vst [vmem:[#allocation2 + $0x150] sm:$0xff] 0
          %380 = vst [vmem:[#allocation2 + $0x158] sm:$0xff] 0
          %381 = vst.msk [vmem:[#allocation2 + $0x160] sm:$0xff] %vm338, 0
          %382 = vst [vmem:[#allocation2 + $0x168] sm:$0xff] 0
          %383 = vst [vmem:[#allocation2 + $0x170] sm:$0xff] 0
          %384 = vst.msk [vmem:[#allocation2 + $0x178] sm:$0xff] %vm338, 0
          %385 = vst [vmem:[#allocation2 + $0x180] sm:$0xff] 0
          %386 = vst [vmem:[#allocation2 + $0x188] sm:$0xff] 0
          %387 = vst.msk [vmem:[#allocation2 + $0x190] sm:$0xff] %vm338, 0
          %388 = vst [vmem:[#allocation2 + $0x198] sm:$0xff] 0
          %389 = vst [vmem:[#allocation2 + $0x1a0] sm:$0xff] 0
          %390 = vst.msk [vmem:[#allocation2 + $0x1a8] sm:$0xff] %vm338, 0
          %391 = vst [vmem:[#allocation2 + $0x1b0] sm:$0xff] 0
          %392 = vst [vmem:[#allocation2 + $0x1b8] sm:$0xff] 0
          %393 = vst.msk [vmem:[#allocation2 + $0x1c0] sm:$0xff] %vm338, 0
          %394 = vst [vmem:[#allocation2 + $0x1c8] sm:$0xff] 0
          %395 = vst [vmem:[#allocation2 + $0x1d0] sm:$0xff] 0
          %396 = vst.msk [vmem:[#allocation2 + $0x1d8] sm:$0xff] %vm338, 0
          %397 = vst [vmem:[#allocation3] sm:$0xff] 0
          %398 = vst [vmem:[#allocation3 + $0x8] sm:$0xff] 0
          %399 = vst.msk [vmem:[#allocation3 + $0x10] sm:$0xff] %vm338, 0
          %400 = vst [vmem:[#allocation3 + $0x18] sm:$0xff] 0
          %401 = vst [vmem:[#allocation3 + $0x20] sm:$0xff] 0
          %402 = vst.msk [vmem:[#allocation3 + $0x28] sm:$0xff] %vm338, 0
          %403 = vst [vmem:[#allocation3 + $0x30] sm:$0xff] 0
          %404 = vst [vmem:[#allocation3 + $0x38] sm:$0xff] 0
          %405 = vst.msk [vmem:[#allocation3 + $0x40] sm:$0xff] %vm338, 0
          %406 = vst [vmem:[#allocation3 + $0x48] sm:$0xff] 0
          %407 = vst [vmem:[#allocation3 + $0x50] sm:$0xff] 0
          %408 = vst.msk [vmem:[#allocation3 + $0x58] sm:$0xff] %vm338, 0
          %409 = vst [vmem:[#allocation3 + $0x60] sm:$0xff] 0
          %410 = vst [vmem:[#allocation3 + $0x68] sm:$0xff] 0
          %411 = vst.msk [vmem:[#allocation3 + $0x70] sm:$0xff] %vm338, 0
          %412 = vst [vmem:[#allocation3 + $0x78] sm:$0xff] 0
          %413 = vst [vmem:[#allocation3 + $0x80] sm:$0xff] 0
          %414 = vst.msk [vmem:[#allocation3 + $0x88] sm:$0xff] %vm338, 0
          %415 = vst [vmem:[#allocation3 + $0x90] sm:$0xff] 0
          %416 = vst [vmem:[#allocation3 + $0x98] sm:$0xff] 0
          %417 = vst.msk [vmem:[#allocation3 + $0xa0] sm:$0xff] %vm338, 0
          %418 = vst [vmem:[#allocation3 + $0xa8] sm:$0xff] 0
          %419 = vst [vmem:[#allocation3 + $0xb0] sm:$0xff] 0
          %420 = vst.msk [vmem:[#allocation3 + $0xb8] sm:$0xff] %vm338, 0
          %421 = vst [vmem:[#allocation3 + $0xc0] sm:$0xff] 0
          %422 = vst [vmem:[#allocation3 + $0xc8] sm:$0xff] 0
          %423 = vst.msk [vmem:[#allocation3 + $0xd0] sm:$0xff] %vm338, 0
          %424 = vst [vmem:[#allocation3 + $0xd8] sm:$0xff] 0
          %425 = vst [vmem:[#allocation3 + $0xe0] sm:$0xff] 0
          %426 = vst.msk [vmem:[#allocation3 + $0xe8] sm:$0xff] %vm338, 0
          %427 = vst [vmem:[#allocation3 + $0xf0] sm:$0xff] 0
          %428 = vst [vmem:[#allocation3 + $0xf8] sm:$0xff] 0
          %429 = vst.msk [vmem:[#allocation3 + $0x100] sm:$0xff] %vm338, 0
          %430 = vst [vmem:[#allocation3 + $0x108] sm:$0xff] 0
          %431 = vst [vmem:[#allocation3 + $0x110] sm:$0xff] 0
          %432 = vst.msk [vmem:[#allocation3 + $0x118] sm:$0xff] %vm338, 0
          %433 = vst [vmem:[#allocation3 + $0x120] sm:$0xff] 0
          %434 = vst [vmem:[#allocation3 + $0x128] sm:$0xff] 0
          %435 = vst.msk [vmem:[#allocation3 + $0x130] sm:$0xff] %vm338, 0
          %436 = vst [vmem:[#allocation3 + $0x138] sm:$0xff] 0
          %437 = vst [vmem:[#allocation3 + $0x140] sm:$0xff] 0
          %438 = vst.msk [vmem:[#allocation3 + $0x148] sm:$0xff] %vm338, 0
          %439 = vst [vmem:[#allocation3 + $0x150] sm:$0xff] 0
          %440 = vst [vmem:[#allocation3 + $0x158] sm:$0xff] 0
          %441 = vst.msk [vmem:[#allocation3 + $0x160] sm:$0xff] %vm338, 0
          %442 = vst [vmem:[#allocation3 + $0x168] sm:$0xff] 0
          %443 = vst [vmem:[#allocation3 + $0x170] sm:$0xff] 0
          %444 = vst.msk [vmem:[#allocation3 + $0x178] sm:$0xff] %vm338, 0
          %445 = vst [vmem:[#allocation3 + $0x180] sm:$0xff] 0
          %446 = vst [vmem:[#allocation3 + $0x188] sm:$0xff] 0
          %447 = vst.msk [vmem:[#allocation3 + $0x190] sm:$0xff] %vm338, 0
          %448 = vst [vmem:[#allocation3 + $0x198] sm:$0xff] 0
          %449 = vst [vmem:[#allocation3 + $0x1a0] sm:$0xff] 0
          %450 = vst.msk [vmem:[#allocation3 + $0x1a8] sm:$0xff] %vm338, 0
          %451 = vst [vmem:[#allocation3 + $0x1b0] sm:$0xff] 0
          %452 = vst [vmem:[#allocation3 + $0x1b8] sm:$0xff] 0
          %453 = vst.msk [vmem:[#allocation3 + $0x1c0] sm:$0xff] %vm338, 0
          %454 = vst [vmem:[#allocation3 + $0x1c8] sm:$0xff] 0
          %455 = vst [vmem:[#allocation3 + $0x1d0] sm:$0xff] 0
          %456 = vst.msk [vmem:[#allocation3 + $0x1d8] sm:$0xff] %vm338, 0
          %457 = vst [vmem:[#allocation4] sm:$0xff] 0
          %458 = vst.msk [vmem:[#allocation4 + $0x8] sm:$0xff] %vm338, 0
          %459 = vst [vmem:[#allocation4 + $0x10] sm:$0xff] 0
          %460 = vst.msk [vmem:[#allocation4 + $0x18] sm:$0xff] %vm338, 0
          %461 = vst [vmem:[#allocation4 + $0x20] sm:$0xff] 0
          %462 = vst.msk [vmem:[#allocation4 + $0x28] sm:$0xff] %vm338, 0
          %463 = vst [vmem:[#allocation4 + $0x30] sm:$0xff] 0
          %464 = vst.msk [vmem:[#allocation4 + $0x38] sm:$0xff] %vm338, 0
          %465 = vst [vmem:[#allocation4 + $0x40] sm:$0xff] 0
          %466 = vst.msk [vmem:[#allocation4 + $0x48] sm:$0xff] %vm338, 0
          %467 = vst [vmem:[#allocation4 + $0x50] sm:$0xff] 0
          %468 = vst.msk [vmem:[#allocation4 + $0x58] sm:$0xff] %vm338, 0
          %469 = vst [vmem:[#allocation4 + $0x60] sm:$0xff] 0
          %470 = vst.msk [vmem:[#allocation4 + $0x68] sm:$0xff] %vm338, 0
          %471 = vst [vmem:[#allocation4 + $0x70] sm:$0xff] 0
          %472 = vst.msk [vmem:[#allocation4 + $0x78] sm:$0xff] %vm338, 0
          %473 = vst [vmem:[#allocation4 + $0x80] sm:$0xff] 0
          %474 = vst.msk [vmem:[#allocation4 + $0x88] sm:$0xff] %vm338, 0
          %475 = vst [vmem:[#allocation4 + $0x90] sm:$0xff] 0
          %476 = vst.msk [vmem:[#allocation4 + $0x98] sm:$0xff] %vm338, 0
          %477 = vst [vmem:[#allocation4 + $0xa0] sm:$0xff] 0
          %478 = vst.msk [vmem:[#allocation4 + $0xa8] sm:$0xff] %vm338, 0
          %479 = vst [vmem:[#allocation4 + $0xb0] sm:$0xff] 0
          %480 = vst.msk [vmem:[#allocation4 + $0xb8] sm:$0xff] %vm338, 0
          %481 = vst [vmem:[#allocation4 + $0xc0] sm:$0xff] 0
          %482 = vst.msk [vmem:[#allocation4 + $0xc8] sm:$0xff] %vm338, 0
          %483 = vst [vmem:[#allocation4 + $0xd0] sm:$0xff] 0
          %484 = vst.msk [vmem:[#allocation4 + $0xd8] sm:$0xff] %vm338, 0
          %485 = vst [vmem:[#allocation4 + $0xe0] sm:$0xff] 0
          %486 = vst.msk [vmem:[#allocation4 + $0xe8] sm:$0xff] %vm338, 0
          %487 = vst [vmem:[#allocation4 + $0xf0] sm:$0xff] 0
          %488 = vst.msk [vmem:[#allocation4 + $0xf8] sm:$0xff] %vm338, 0
          %489 = vst [vmem:[#allocation4 + $0x100] sm:$0xff] 0
          %490 = vst.msk [vmem:[#allocation4 + $0x108] sm:$0xff] %vm338, 0
          %491 = vst [vmem:[#allocation4 + $0x110] sm:$0xff] 0
          %492 = vst.msk [vmem:[#allocation4 + $0x118] sm:$0xff] %vm338, 0
          %493 = vst [vmem:[#allocation5] sm:$0xff] 0
          %494 = vst.msk [vmem:[#allocation5 + $0x8] sm:$0xff] %vm338, 0
          %495 = vst [vmem:[#allocation5 + $0x10] sm:$0xff] 0
          %496 = vst.msk [vmem:[#allocation5 + $0x18] sm:$0xff] %vm338, 0
          %497 = vst [vmem:[#allocation5 + $0x20] sm:$0xff] 0
          %498 = vst.msk [vmem:[#allocation5 + $0x28] sm:$0xff] %vm338, 0
          %499 = vst [vmem:[#allocation5 + $0x30] sm:$0xff] 0
          %500 = vst.msk [vmem:[#allocation5 + $0x38] sm:$0xff] %vm338, 0
          %501 = vst [vmem:[#allocation5 + $0x40] sm:$0xff] 0
          %502 = vst.msk [vmem:[#allocation5 + $0x48] sm:$0xff] %vm338, 0
          %503 = vst [vmem:[#allocation5 + $0x50] sm:$0xff] 0
          %504 = vst.msk [vmem:[#allocation5 + $0x58] sm:$0xff] %vm338, 0
          %505 = vst [vmem:[#allocation5 + $0x60] sm:$0xff] 0
          %506 = vst.msk [vmem:[#allocation5 + $0x68] sm:$0xff] %vm338, 0
          %507 = vst [vmem:[#allocation5 + $0x70] sm:$0xff] 0
          %508 = vst.msk [vmem:[#allocation5 + $0x78] sm:$0xff] %vm338, 0
          %509 = vst [vmem:[#allocation5 + $0x80] sm:$0xff] 0
          %510 = vst.msk [vmem:[#allocation5 + $0x88] sm:$0xff] %vm338, 0
          %511 = vst [vmem:[#allocation5 + $0x90] sm:$0xff] 0
          %512 = vst.msk [vmem:[#allocation5 + $0x98] sm:$0xff] %vm338, 0
          %513 = vst [vmem:[#allocation5 + $0xa0] sm:$0xff] 0
          %514 = vst.msk [vmem:[#allocation5 + $0xa8] sm:$0xff] %vm338, 0
          %515 = vst [vmem:[#allocation5 + $0xb0] sm:$0xff] 0
          %516 = vst.msk [vmem:[#allocation5 + $0xb8] sm:$0xff] %vm338, 0
          %517 = vst [vmem:[#allocation5 + $0xc0] sm:$0xff] 0
          %518 = vst.msk [vmem:[#allocation5 + $0xc8] sm:$0xff] %vm338, 0
          %519 = vst [vmem:[#allocation5 + $0xd0] sm:$0xff] 0
          %520 = vst.msk [vmem:[#allocation5 + $0xd8] sm:$0xff] %vm338, 0
          %521 = vst [vmem:[#allocation5 + $0xe0] sm:$0xff] 0
          %522 = vst.msk [vmem:[#allocation5 + $0xe8] sm:$0xff] %vm338, 0
          %523 = vst [vmem:[#allocation5 + $0xf0] sm:$0xff] 0
          %524 = vst.msk [vmem:[#allocation5 + $0xf8] sm:$0xff] %vm338, 0
          %525 = vst [vmem:[#allocation5 + $0x100] sm:$0xff] 0
          %526 = vst.msk [vmem:[#allocation5 + $0x108] sm:$0xff] %vm338, 0
          %527 = vst [vmem:[#allocation5 + $0x110] sm:$0xff] 0
          %528 = vst.msk [vmem:[#allocation5 + $0x118] sm:$0xff] %vm338, 0
        $region60: #{group2_forward.1} parent=55 // pred_fallthru
          _
        %v529 = vld [vmem:[%s330] sm:$0xf]
        %v530 = vld [vmem:[%s330 + $0x4] sm:$0xf]
        %v531 = vld [vmem:[%s330 + $0x8] sm:$0xf]
        %v532 = vld [vmem:[%s330 + $0xc] sm:$0xf]
        %v533 = vld [vmem:[%s330 + $0x10] sm:$0xf]
        %v534 = vld [vmem:[%s330 + $0x14] sm:$0xf]
        %v535 = vld [vmem:[%s330 + $0x18] sm:$0xf]
        %v536 = vld [vmem:[%s330 + $0x1c] sm:$0xf]
        %v537 = vld [vmem:[%s330 + $0x20] sm:$0xf]
        %v538 = vld [vmem:[%s330 + $0x24] sm:$0xf]
        %v539 = vld [vmem:[%s330 + $0x28] sm:$0xf]
        %v540 = vld [vmem:[%s330 + $0x2c] sm:$0xf]
        %v541 = vld [vmem:[%s330 + $0x30] sm:$0xf]
        %v542 = vld [vmem:[%s330 + $0x34] sm:$0xf]
        %v543 = vld [vmem:[%s330 + $0x38] sm:$0xf]
        %v544 = vld [vmem:[%s330 + $0x3c] sm:$0xf]
        %v545 = vld [vmem:[%s330 + $0x40] sm:$0xf]
        %v546 = vld [vmem:[%s330 + $0x44] sm:$0xf]
        %v547 = vld [vmem:[%s330 + $0x48] sm:$0xf]
        %v548 = vld [vmem:[%s330 + $0x4c] sm:$0xf]
        %v549 = vld [vmem:[%s330 + $0x50] sm:$0xf]
        %v550 = vld [vmem:[%s330 + $0x54] sm:$0xf]
        %v551 = vld [vmem:[%s330 + $0x58] sm:$0xf]
        %v552 = vld [vmem:[%s330 + $0x5c] sm:$0xf]
        %v553 = vld [vmem:[%s330 + $0x60] sm:$0xf]
        %v554 = vld [vmem:[%s330 + $0x64] sm:$0xf]
        %v555 = vld [vmem:[%s330 + $0x68] sm:$0xf]
        %v556 = vld [vmem:[%s330 + $0x6c] sm:$0xf]
        %v557 = vld [vmem:[%s330 + $0x70] sm:$0xf]
        %v558 = vld [vmem:[%s330 + $0x74] sm:$0xf]
        %v559 = vld [vmem:[%s330 + $0x78] sm:$0xf]
        %v560 = vld [vmem:[%s330 + $0x7c] sm:$0xf]
        %v593 = vunpack.c.l.b16 %v529
        %v594 = vunpack.c.l.b16 %v530
        %v595 = vunpack.c.l.b16 %v531
        %v596 = vunpack.c.l.b16 %v532
        %v597 = vunpack.c.l.b16 %v533
        %v598 = vunpack.c.l.b16 %v534
        %v599 = vunpack.c.l.b16 %v535
        %v600 = vunpack.c.l.b16 %v536
        %v601 = vunpack.c.l.b16 %v537
        %v602 = vunpack.c.l.b16 %v538
        %v603 = vunpack.c.l.b16 %v539
        %v604 = vunpack.c.l.b16 %v540
        %v605 = vunpack.c.l.b16 %v541
        %v606 = vunpack.c.l.b16 %v542
        %v607 = vunpack.c.l.b16 %v543
        %v608 = vunpack.c.l.b16 %v544
        %v609 = vunpack.c.l.b16 %v545
        %v610 = vunpack.c.l.b16 %v546
        %v611 = vunpack.c.l.b16 %v547
        %v612 = vunpack.c.l.b16 %v548
        %v613 = vunpack.c.l.b16 %v549
        %v614 = vunpack.c.l.b16 %v550
        %v615 = vunpack.c.l.b16 %v551
        %v616 = vunpack.c.l.b16 %v552
        %v617 = vunpack.c.l.b16 %v553
        %v618 = vunpack.c.l.b16 %v554
        %v619 = vunpack.c.l.b16 %v555
        %v620 = vunpack.c.l.b16 %v556
        %v621 = vunpack.c.l.b16 %v557
        %v622 = vunpack.c.l.b16 %v558
        %v623 = vunpack.c.l.b16 %v559
        %v624 = vunpack.c.l.b16 %v560
        %v625 = vpack.c.b16 %v594, %v593
        %v626 = vpack.c.b16 %v596, %v595
        %v627 = vpack.c.b16 %v598, %v597
        %v628 = vpack.c.b16 %v600, %v599
        %v629 = vpack.c.b16 %v602, %v601
        %v630 = vpack.c.b16 %v604, %v603
        %v631 = vpack.c.b16 %v606, %v605
        %v632 = vpack.c.b16 %v608, %v607
        %v633 = vpack.c.b16 %v610, %v609
        %v634 = vpack.c.b16 %v612, %v611
        %v635 = vpack.c.b16 %v614, %v613
        %v636 = vpack.c.b16 %v616, %v615
        %v637 = vpack.c.b16 %v618, %v617
        %v638 = vpack.c.b16 %v620, %v619
        %v639 = vpack.c.b16 %v622, %v621
        %v640 = vpack.c.b16 %v624, %v623
        %v641 = vrot.slane %v625, 7
        %v642 = vrot.slane %v626, 7
        %v643 = vrot.slane %v627, 7
        %v644 = vrot.slane %v628, 7
        %v645 = vrot.slane %v629, 7
        %v646 = vrot.slane %v630, 7
        %v647 = vrot.slane %v631, 7
        %v648 = vrot.slane %v632, 7
        %v649 = vrot.slane %v633, 7
        %v650 = vrot.slane %v634, 7
        %v651 = vrot.slane %v635, 7
        %v652 = vrot.slane %v636, 7
        %v653 = vrot.slane %v637, 7
        %v654 = vrot.slane %v638, 7
        %v655 = vrot.slane %v639, 7
        %v656 = vrot.slane %v640, 7
        %s673 = scalar_lea.vmem [#allocation2], 48
        %vm674 = vcmask 523265
        %675 = vst.msk [vmem:[%s673] sm:$0xfe] %vm674, %v641
        %676 = vst.msk [vmem:[%s673 + $0x18] sm:$0xfe] %vm674, %v642
        %677 = vst.msk [vmem:[%s673 + $0x30] sm:$0xfe] %vm674, %v643
        %678 = vst.msk [vmem:[%s673 + $0x48] sm:$0xfe] %vm674, %v644
        %679 = vst.msk [vmem:[%s673 + $0x60] sm:$0xfe] %vm674, %v645
        %680 = vst.msk [vmem:[%s673 + $0x78] sm:$0xfe] %vm674, %v646
        %681 = vst.msk [vmem:[%s673 + $0x90] sm:$0xfe] %vm674, %v647
        %682 = vst.msk [vmem:[%s673 + $0xa8] sm:$0xfe] %vm674, %v648
        %683 = vst.msk [vmem:[%s673 + $0xc0] sm:$0xfe] %vm674, %v649
        %684 = vst.msk [vmem:[%s673 + $0xd8] sm:$0xfe] %vm674, %v650
        %685 = vst.msk [vmem:[%s673 + $0xf0] sm:$0xfe] %vm674, %v651
        %686 = vst.msk [vmem:[%s673 + $0x108] sm:$0xfe] %vm674, %v652
        %687 = vst.msk [vmem:[%s673 + $0x120] sm:$0xfe] %vm674, %v653
        %688 = vst.msk [vmem:[%s673 + $0x138] sm:$0xfe] %vm674, %v654
        %689 = vst.msk [vmem:[%s673 + $0x150] sm:$0xfe] %vm674, %v655
        %690 = vst.msk [vmem:[%s673 + $0x168] sm:$0xfe] %vm674, %v656
        %v692 = vshrl.u32 %v625, 16
        %v694 = vrot.slane %v692, 7
        %v695 = vshll.u32 %v625, 16
        %v697 = vor.u32 %v694, %v695
        %v699 = vshrl.u32 %v626, 16
        %v701 = vrot.slane %v699, 7
        %v702 = vshll.u32 %v626, 16
        %v704 = vor.u32 %v701, %v702
        %v706 = vshrl.u32 %v627, 16
        %v708 = vrot.slane %v706, 7
        %v709 = vshll.u32 %v627, 16
        %v711 = vor.u32 %v708, %v709
        %v713 = vshrl.u32 %v628, 16
        %v715 = vrot.slane %v713, 7
        %v716 = vshll.u32 %v628, 16
        %v718 = vor.u32 %v715, %v716
        %v720 = vshrl.u32 %v629, 16
        %v722 = vrot.slane %v720, 7
        %v723 = vshll.u32 %v629, 16
        %v725 = vor.u32 %v722, %v723
        %v727 = vshrl.u32 %v630, 16
        %v729 = vrot.slane %v727, 7
        %v730 = vshll.u32 %v630, 16
        %v732 = vor.u32 %v729, %v730
        %v734 = vshrl.u32 %v631, 16
        %v736 = vrot.slane %v734, 7
        %v737 = vshll.u32 %v631, 16
        %v739 = vor.u32 %v736, %v737
        %v741 = vshrl.u32 %v632, 16
        %v743 = vrot.slane %v741, 7
        %v744 = vshll.u32 %v632, 16
        %v746 = vor.u32 %v743, %v744
        %v748 = vshrl.u32 %v633, 16
        %v750 = vrot.slane %v748, 7
        %v751 = vshll.u32 %v633, 16
        %v753 = vor.u32 %v750, %v751
        %v755 = vshrl.u32 %v634, 16
        %v757 = vrot.slane %v755, 7
        %v758 = vshll.u32 %v634, 16
        %v760 = vor.u32 %v757, %v758
        %v762 = vshrl.u32 %v635, 16
        %v764 = vrot.slane %v762, 7
        %v765 = vshll.u32 %v635, 16
        %v767 = vor.u32 %v764, %v765
        %v769 = vshrl.u32 %v636, 16
        %v771 = vrot.slane %v769, 7
        %v772 = vshll.u32 %v636, 16
        %v774 = vor.u32 %v771, %v772
        %v776 = vshrl.u32 %v637, 16
        %v778 = vrot.slane %v776, 7
        %v779 = vshll.u32 %v637, 16
        %v781 = vor.u32 %v778, %v779
        %v783 = vshrl.u32 %v638, 16
        %v785 = vrot.slane %v783, 7
        %v786 = vshll.u32 %v638, 16
        %v788 = vor.u32 %v785, %v786
        %v790 = vshrl.u32 %v639, 16
        %v792 = vrot.slane %v790, 7
        %v793 = vshll.u32 %v639, 16
        %v795 = vor.u32 %v792, %v793
        %v797 = vshrl.u32 %v640, 16
        %v799 = vrot.slane %v797, 7
        %v800 = vshll.u32 %v640, 16
        %v802 = vor.u32 %v799, %v800
        %803 = vrot.lane.b32.xlu0 %v697, 64
        %v804 = vpop.permute.xlu0 %803
        %805 = vrot.lane.b32.xlu0 %v704, 64
        %v806 = vpop.permute.xlu0 %805
        %807 = vrot.lane.b32.xlu0 %v711, 64
        %v808 = vpop.permute.xlu0 %807
        %809 = vrot.lane.b32.xlu0 %v718, 64
        %v810 = vpop.permute.xlu0 %809
        %811 = vrot.lane.b32.xlu0 %v725, 64
        %v812 = vpop.permute.xlu0 %811
        %813 = vrot.lane.b32.xlu0 %v732, 64
        %v814 = vpop.permute.xlu0 %813
        %815 = vrot.lane.b32.xlu0 %v739, 64
        %v816 = vpop.permute.xlu0 %815
        %817 = vrot.lane.b32.xlu0 %v746, 64
        %v818 = vpop.permute.xlu0 %817
        %819 = vrot.lane.b32.xlu0 %v753, 64
        %v820 = vpop.permute.xlu0 %819
        %821 = vrot.lane.b32.xlu0 %v760, 64
        %v822 = vpop.permute.xlu0 %821
        %823 = vrot.lane.b32.xlu0 %v767, 64
        %v824 = vpop.permute.xlu0 %823
        %825 = vrot.lane.b32.xlu0 %v774, 64
        %v826 = vpop.permute.xlu0 %825
        %827 = vrot.lane.b32.xlu0 %v781, 64
        %v828 = vpop.permute.xlu0 %827
        %829 = vrot.lane.b32.xlu0 %v788, 64
        %v830 = vpop.permute.xlu0 %829
        %831 = vrot.lane.b32.xlu0 %v795, 64
        %v832 = vpop.permute.xlu0 %831
        %833 = vrot.lane.b32.xlu0 %v802, 64
        %v834 = vpop.permute.xlu0 %833
        %vm851 = vcmask 1048064
        %vm852 = vsmask.f32 7938
        %vm853 = vmand %vm851, %vm852
        %v854 = vld [vmem:[%s673] sm:$0xff]
        %v855 = vsel %vm853, %v804, %v854
        %856 = vst [vmem:[%s673] sm:$0xff] %v855
        %v857 = vld [vmem:[%s673 + $0x18] sm:$0xff]
        %v858 = vsel %vm853, %v806, %v857
        %859 = vst [vmem:[%s673 + $0x18] sm:$0xff] %v858
        %v860 = vld [vmem:[%s673 + $0x30] sm:$0xff]
        %v861 = vsel %vm853, %v808, %v860
        %862 = vst [vmem:[%s673 + $0x30] sm:$0xff] %v861
        %v863 = vld [vmem:[%s673 + $0x48] sm:$0xff]
        %v864 = vsel %vm853, %v810, %v863
        %865 = vst [vmem:[%s673 + $0x48] sm:$0xff] %v864
        %v866 = vld [vmem:[%s673 + $0x60] sm:$0xff]
        %v867 = vsel %vm853, %v812, %v866
        %868 = vst [vmem:[%s673 + $0x60] sm:$0xff] %v867
        %v869 = vld [vmem:[%s673 + $0x78] sm:$0xff]
        %v870 = vsel %vm853, %v814, %v869
        %871 = vst [vmem:[%s673 + $0x78] sm:$0xff] %v870
        %v872 = vld [vmem:[%s673 + $0x90] sm:$0xff]
        %v873 = vsel %vm853, %v816, %v872
        %874 = vst [vmem:[%s673 + $0x90] sm:$0xff] %v873
        %v875 = vld [vmem:[%s673 + $0xa8] sm:$0xff]
        %v876 = vsel %vm853, %v818, %v875
        %877 = vst [vmem:[%s673 + $0xa8] sm:$0xff] %v876
        %v878 = vld [vmem:[%s673 + $0xc0] sm:$0xff]
        %v879 = vsel %vm853, %v820, %v878
        %880 = vst [vmem:[%s673 + $0xc0] sm:$0xff] %v879
        %v881 = vld [vmem:[%s673 + $0xd8] sm:$0xff]
        %v882 = vsel %vm853, %v822, %v881
        %883 = vst [vmem:[%s673 + $0xd8] sm:$0xff] %v882
        %v884 = vld [vmem:[%s673 + $0xf0] sm:$0xff]
        %v885 = vsel %vm853, %v824, %v884
        %886 = vst [vmem:[%s673 + $0xf0] sm:$0xff] %v885
        %v887 = vld [vmem:[%s673 + $0x108] sm:$0xff]
        %v888 = vsel %vm853, %v826, %v887
        %889 = vst [vmem:[%s673 + $0x108] sm:$0xff] %v888
        %v890 = vld [vmem:[%s673 + $0x120] sm:$0xff]
        %v891 = vsel %vm853, %v828, %v890
        %892 = vst [vmem:[%s673 + $0x120] sm:$0xff] %v891
        %v893 = vld [vmem:[%s673 + $0x138] sm:$0xff]
        %v894 = vsel %vm853, %v830, %v893
        %895 = vst [vmem:[%s673 + $0x138] sm:$0xff] %v894
        %v896 = vld [vmem:[%s673 + $0x150] sm:$0xff]
        %v897 = vsel %vm853, %v832, %v896
        %898 = vst [vmem:[%s673 + $0x150] sm:$0xff] %v897
        %v899 = vld [vmem:[%s673 + $0x168] sm:$0xff]
        %v900 = vsel %vm853, %v834, %v899
        %901 = vst [vmem:[%s673 + $0x168] sm:$0xff] %v900
        %vm918 = vcmask 523264
        %919 = vst.msk [vmem:[%s673 + $0x8] sm:$0xff] %vm918, %v625
        %920 = vst.msk [vmem:[%s673 + $0x20] sm:$0xff] %vm918, %v626
        %921 = vst.msk [vmem:[%s673 + $0x38] sm:$0xff] %vm918, %v627
        %922 = vst.msk [vmem:[%s673 + $0x50] sm:$0xff] %vm918, %v628
        %923 = vst.msk [vmem:[%s673 + $0x68] sm:$0xff] %vm918, %v629
        %924 = vst.msk [vmem:[%s673 + $0x80] sm:$0xff] %vm918, %v630
        %925 = vst.msk [vmem:[%s673 + $0x98] sm:$0xff] %vm918, %v631
        %926 = vst.msk [vmem:[%s673 + $0xb0] sm:$0xff] %vm918, %v632
        %927 = vst.msk [vmem:[%s673 + $0xc8] sm:$0xff] %vm918, %v633
        %928 = vst.msk [vmem:[%s673 + $0xe0] sm:$0xff] %vm918, %v634
        %929 = vst.msk [vmem:[%s673 + $0xf8] sm:$0xff] %vm918, %v635
        %930 = vst.msk [vmem:[%s673 + $0x110] sm:$0xff] %vm918, %v636
        %931 = vst.msk [vmem:[%s673 + $0x128] sm:$0xff] %vm918, %v637
        %932 = vst.msk [vmem:[%s673 + $0x140] sm:$0xff] %vm918, %v638
        %933 = vst.msk [vmem:[%s673 + $0x158] sm:$0xff] %vm918, %v639
        %934 = vst.msk [vmem:[%s673 + $0x170] sm:$0xff] %vm918, %v640
        %v935 = vrot.slane %v695, 1
        %v936 = vor.u32 %v692, %v935
        %v937 = vrot.slane %v702, 1
        %v938 = vor.u32 %v699, %v937
        %v939 = vrot.slane %v709, 1
        %v940 = vor.u32 %v706, %v939
        %v941 = vrot.slane %v716, 1
        %v942 = vor.u32 %v713, %v941
        %v943 = vrot.slane %v723, 1
        %v944 = vor.u32 %v720, %v943
        %v945 = vrot.slane %v730, 1
        %v946 = vor.u32 %v727, %v945
        %v947 = vrot.slane %v737, 1
        %v948 = vor.u32 %v734, %v947
        %v949 = vrot.slane %v744, 1
        %v950 = vor.u32 %v741, %v949
        %v951 = vrot.slane %v751, 1
        %v952 = vor.u32 %v748, %v951
        %v953 = vrot.slane %v758, 1
        %v954 = vor.u32 %v755, %v953
        %v955 = vrot.slane %v765, 1
        %v956 = vor.u32 %v762, %v955
        %v957 = vrot.slane %v772, 1
        %v958 = vor.u32 %v769, %v957
        %v959 = vrot.slane %v779, 1
        %v960 = vor.u32 %v776, %v959
        %v961 = vrot.slane %v786, 1
        %v962 = vor.u32 %v783, %v961
        %v963 = vrot.slane %v793, 1
        %v964 = vor.u32 %v790, %v963
        %v965 = vrot.slane %v800, 1
        %v966 = vor.u32 %v797, %v965
        %967 = vrot.lane.b32.xlu0 %v936, 64
        %v968 = vpop.permute.xlu0 %967
        %969 = vrot.lane.b32.xlu0 %v938, 64
        %v970 = vpop.permute.xlu0 %969
        %971 = vrot.lane.b32.xlu0 %v940, 64
        %v972 = vpop.permute.xlu0 %971
        %973 = vrot.lane.b32.xlu0 %v942, 64
        %v974 = vpop.permute.xlu0 %973
        %975 = vrot.lane.b32.xlu0 %v944, 64
        %v976 = vpop.permute.xlu0 %975
        %977 = vrot.lane.b32.xlu0 %v946, 64
        %v978 = vpop.permute.xlu0 %977
        %979 = vrot.lane.b32.xlu0 %v948, 64
        %v980 = vpop.permute.xlu0 %979
        %981 = vrot.lane.b32.xlu0 %v950, 64
        %v982 = vpop.permute.xlu0 %981
        %983 = vrot.lane.b32.xlu0 %v952, 64
        %v984 = vpop.permute.xlu0 %983
        %985 = vrot.lane.b32.xlu0 %v954, 64
        %v986 = vpop.permute.xlu0 %985
        %987 = vrot.lane.b32.xlu0 %v956, 64
        %v988 = vpop.permute.xlu0 %987
        %989 = vrot.lane.b32.xlu0 %v958, 64
        %v990 = vpop.permute.xlu0 %989
        %991 = vrot.lane.b32.xlu0 %v960, 64
        %v992 = vpop.permute.xlu0 %991
        %993 = vrot.lane.b32.xlu0 %v962, 64
        %v994 = vpop.permute.xlu0 %993
        %995 = vrot.lane.b32.xlu0 %v964, 64
        %v996 = vpop.permute.xlu0 %995
        %997 = vrot.lane.b32.xlu0 %v966, 64
        %v998 = vpop.permute.xlu0 %997
        %vm1015 = vsmask.f32 7424
        %vm1016 = vmand %vm851, %vm1015
        %v1017 = vld [vmem:[%s673 + $0x8] sm:$0xff]
        %v1018 = vsel %vm1016, %v968, %v1017
        %1019 = vst [vmem:[%s673 + $0x8] sm:$0xff] %v1018
        %v1020 = vld [vmem:[%s673 + $0x20] sm:$0xff]
        %v1021 = vsel %vm1016, %v970, %v1020
        %1022 = vst [vmem:[%s673 + $0x20] sm:$0xff] %v1021
        %v1023 = vld [vmem:[%s673 + $0x38] sm:$0xff]
        %v1024 = vsel %vm1016, %v972, %v1023
        %1025 = vst [vmem:[%s673 + $0x38] sm:$0xff] %v1024
        %v1026 = vld [vmem:[%s673 + $0x50] sm:$0xff]
        %v1027 = vsel %vm1016, %v974, %v1026
        %1028 = vst [vmem:[%s673 + $0x50] sm:$0xff] %v1027
        %v1029 = vld [vmem:[%s673 + $0x68] sm:$0xff]
        %v1030 = vsel %vm1016, %v976, %v1029
        %1031 = vst [vmem:[%s673 + $0x68] sm:$0xff] %v1030
        %v1032 = vld [vmem:[%s673 + $0x80] sm:$0xff]
        %v1033 = vsel %vm1016, %v978, %v1032
        %1034 = vst [vmem:[%s673 + $0x80] sm:$0xff] %v1033
        %v1035 = vld [vmem:[%s673 + $0x98] sm:$0xff]
        %v1036 = vsel %vm1016, %v980, %v1035
        %1037 = vst [vmem:[%s673 + $0x98] sm:$0xff] %v1036
        %v1038 = vld [vmem:[%s673 + $0xb0] sm:$0xff]
        %v1039 = vsel %vm1016, %v982, %v1038
        %1040 = vst [vmem:[%s673 + $0xb0] sm:$0xff] %v1039
        %v1041 = vld [vmem:[%s673 + $0xc8] sm:$0xff]
        %v1042 = vsel %vm1016, %v984, %v1041
        %1043 = vst [vmem:[%s673 + $0xc8] sm:$0xff] %v1042
        %v1044 = vld [vmem:[%s673 + $0xe0] sm:$0xff]
        %v1045 = vsel %vm1016, %v986, %v1044
        %1046 = vst [vmem:[%s673 + $0xe0] sm:$0xff] %v1045
        %v1047 = vld [vmem:[%s673 + $0xf8] sm:$0xff]
        %v1048 = vsel %vm1016, %v988, %v1047
        %1049 = vst [vmem:[%s673 + $0xf8] sm:$0xff] %v1048
        %v1050 = vld [vmem:[%s673 + $0x110] sm:$0xff]
        %v1051 = vsel %vm1016, %v990, %v1050
        %1052 = vst [vmem:[%s673 + $0x110] sm:$0xff] %v1051
        %v1053 = vld [vmem:[%s673 + $0x128] sm:$0xff]
        %v1054 = vsel %vm1016, %v992, %v1053
        %1055 = vst [vmem:[%s673 + $0x128] sm:$0xff] %v1054
        %v1056 = vld [vmem:[%s673 + $0x140] sm:$0xff]
        %v1057 = vsel %vm1016, %v994, %v1056
        %1058 = vst [vmem:[%s673 + $0x140] sm:$0xff] %v1057
        %v1059 = vld [vmem:[%s673 + $0x158] sm:$0xff]
        %v1060 = vsel %vm1016, %v996, %v1059
        %1061 = vst [vmem:[%s673 + $0x158] sm:$0xff] %v1060
        %v1062 = vld [vmem:[%s673 + $0x170] sm:$0xff]
        %v1063 = vsel %vm1016, %v998, %v1062
        %1064 = vst [vmem:[%s673 + $0x170] sm:$0xff] %v1063
        %v1065 = vrot.slane %v625, 1
        %v1066 = vrot.slane %v626, 1
        %v1067 = vrot.slane %v627, 1
        %v1068 = vrot.slane %v628, 1
        %v1069 = vrot.slane %v629, 1
        %v1070 = vrot.slane %v630, 1
        %v1071 = vrot.slane %v631, 1
        %v1072 = vrot.slane %v632, 1
        %v1073 = vrot.slane %v633, 1
        %v1074 = vrot.slane %v634, 1
        %v1075 = vrot.slane %v635, 1
        %v1076 = vrot.slane %v636, 1
        %v1077 = vrot.slane %v637, 1
        %v1078 = vrot.slane %v638, 1
        %v1079 = vrot.slane %v639, 1
        %v1080 = vrot.slane %v640, 1
        %vm1097 = vcmask 522240
        %1098 = vst.msk [vmem:[%s673 + $0x10] sm:$0x7f] %vm1097, %v1065
        %1099 = vst.msk [vmem:[%s673 + $0x28] sm:$0x7f] %vm1097, %v1066
        %1100 = vst.msk [vmem:[%s673 + $0x40] sm:$0x7f] %vm1097, %v1067
        %1101 = vst.msk [vmem:[%s673 + $0x58] sm:$0x7f] %vm1097, %v1068
        %1102 = vst.msk [vmem:[%s673 + $0x70] sm:$0x7f] %vm1097, %v1069
        %1103 = vst.msk [vmem:[%s673 + $0x88] sm:$0x7f] %vm1097, %v1070
        %1104 = vst.msk [vmem:[%s673 + $0xa0] sm:$0x7f] %vm1097, %v1071
        %1105 = vst.msk [vmem:[%s673 + $0xb8] sm:$0x7f] %vm1097, %v1072
        %1106 = vst.msk [vmem:[%s673 + $0xd0] sm:$0x7f] %vm1097, %v1073
        %1107 = vst.msk [vmem:[%s673 + $0xe8] sm:$0x7f] %vm1097, %v1074
        %1108 = vst.msk [vmem:[%s673 + $0x100] sm:$0x7f] %vm1097, %v1075
        %1109 = vst.msk [vmem:[%s673 + $0x118] sm:$0x7f] %vm1097, %v1076
        %1110 = vst.msk [vmem:[%s673 + $0x130] sm:$0x7f] %vm1097, %v1077
        %1111 = vst.msk [vmem:[%s673 + $0x148] sm:$0x7f] %vm1097, %v1078
        %1112 = vst.msk [vmem:[%s673 + $0x160] sm:$0x7f] %vm1097, %v1079
        %1113 = vst.msk [vmem:[%s673 + $0x178] sm:$0x7f] %vm1097, %v1080
        %v1114 = vld [vmem:[#allocation2] sm:$0xff]
        %v1115 = vld [vmem:[#allocation2 + $0x8] sm:$0xff]
        %v1116 = vld [vmem:[#allocation2 + $0x10] sm:$0xff]
        %v1117 = vld [vmem:[#allocation2 + $0x18] sm:$0xff]
        %v1118 = vld [vmem:[#allocation2 + $0x20] sm:$0xff]
        %v1119 = vld [vmem:[#allocation2 + $0x28] sm:$0xff]
        %v1120 = vld [vmem:[#allocation2 + $0x30] sm:$0xff]
        %v1121 = vld [vmem:[#allocation2 + $0x38] sm:$0xff]
        %v1122 = vld [vmem:[#allocation2 + $0x40] sm:$0xff]
        %v1123 = vld [vmem:[#allocation2 + $0x48] sm:$0xff]
        %v1124 = vld [vmem:[#allocation2 + $0x50] sm:$0xff]
        %v1125 = vld [vmem:[#allocation2 + $0x58] sm:$0xff]
        %v1126 = vld [vmem:[#allocation2 + $0x60] sm:$0xff]
        %v1127 = vld [vmem:[#allocation2 + $0x68] sm:$0xff]
        %v1128 = vld [vmem:[#allocation2 + $0x70] sm:$0xff]
        %v1129 = vld [vmem:[#allocation2 + $0x78] sm:$0xff]
        %v1130 = vld [vmem:[#allocation2 + $0x80] sm:$0xff]
        %v1131 = vld [vmem:[#allocation2 + $0x88] sm:$0xff]
        %v1132 = vld [vmem:[#allocation2 + $0x90] sm:$0xff]
        %v1133 = vld [vmem:[#allocation2 + $0x98] sm:$0xff]
        %v1134 = vld [vmem:[#allocation2 + $0xa0] sm:$0xff]
        %v1135 = vld [vmem:[#allocation2 + $0xa8] sm:$0xff]
        %v1136 = vld [vmem:[#allocation2 + $0xb0] sm:$0xff]
        %v1137 = vld [vmem:[#allocation2 + $0xb8] sm:$0xff]
        %v1138 = vld [vmem:[#allocation2 + $0xc0] sm:$0xff]
        %v1139 = vld [vmem:[#allocation2 + $0xc8] sm:$0xff]
        %v1140 = vld [vmem:[#allocation2 + $0xd0] sm:$0xff]
        %v1141 = vld [vmem:[#allocation2 + $0xd8] sm:$0xff]
        %v1142 = vld [vmem:[#allocation2 + $0xe0] sm:$0xff]
        %v1143 = vld [vmem:[#allocation2 + $0xe8] sm:$0xff]
        %v1144 = vld [vmem:[#allocation2 + $0xf0] sm:$0xff]
        %v1145 = vld [vmem:[#allocation2 + $0xf8] sm:$0xff]
        %v1146 = vld [vmem:[#allocation2 + $0x100] sm:$0xff]
        %v1147 = vld [vmem:[#allocation2 + $0x108] sm:$0xff]
        %v1148 = vld [vmem:[#allocation2 + $0x110] sm:$0xff]
        %v1149 = vld [vmem:[#allocation2 + $0x118] sm:$0xff]
        %v1150 = vld [vmem:[#allocation2 + $0x120] sm:$0xff]
        %v1151 = vld [vmem:[#allocation2 + $0x128] sm:$0xff]
        %v1152 = vld [vmem:[#allocation2 + $0x130] sm:$0xff]
        %v1153 = vld [vmem:[#allocation2 + $0x138] sm:$0xff]
        %v1154 = vld [vmem:[#allocation2 + $0x140] sm:$0xff]
        %v1155 = vld [vmem:[#allocation2 + $0x148] sm:$0xff]
        %v1156 = vld [vmem:[#allocation2 + $0x150] sm:$0xff]
        %v1157 = vld [vmem:[#allocation2 + $0x158] sm:$0xff]
        %v1158 = vld [vmem:[#allocation2 + $0x160] sm:$0xff]
        %v1159 = vld [vmem:[#allocation2 + $0x168] sm:$0xff]
        %v1160 = vld [vmem:[#allocation2 + $0x170] sm:$0xff]
        %v1161 = vld [vmem:[#allocation2 + $0x178] sm:$0xff]
        %v1162 = vld [vmem:[%s1] sm:$0xf]
        %v1163 = vld [vmem:[%s1 + $0x4] sm:$0xf]
        %v1164 = vld [vmem:[%s1 + $0x8] sm:$0xf]
        %v1165 = vld [vmem:[%s1 + $0xc] sm:$0xf]
        %v1166 = vld [vmem:[%s1 + $0x10] sm:$0xf]
        %v1167 = vld [vmem:[%s1 + $0x14] sm:$0xf]
        %v1168 = vld [vmem:[%s1 + $0x18] sm:$0xf]
        %v1169 = vld [vmem:[%s1 + $0x1c] sm:$0xf]
        %v1170 = vld [vmem:[%s1 + $0x20] sm:$0xf]
        %v1171 = vld [vmem:[%s1 + $0x24] sm:$0xf]
        %v1172 = vld [vmem:[%s1 + $0x28] sm:$0xf]
        %v1173 = vld [vmem:[%s1 + $0x2c] sm:$0xf]
        %v1174 = vld [vmem:[%s1 + $0x30] sm:$0xf]
        %v1175 = vld [vmem:[%s1 + $0x34] sm:$0xf]
        %v1176 = vld [vmem:[%s1 + $0x38] sm:$0xf]
        %v1177 = vld [vmem:[%s1 + $0x3c] sm:$0xf]
        %v1178 = vld [vmem:[%s1 + $0x40] sm:$0xf]
        %v1179 = vld [vmem:[%s1 + $0x44] sm:$0xf]
        %v1180 = vld [vmem:[%s1 + $0x48] sm:$0xf]
        %v1181 = vld [vmem:[%s1 + $0x4c] sm:$0xf]
        %v1182 = vld [vmem:[%s1 + $0x50] sm:$0xf]
        %v1183 = vld [vmem:[%s1 + $0x54] sm:$0xf]
        %v1184 = vld [vmem:[%s1 + $0x58] sm:$0xf]
        %v1185 = vld [vmem:[%s1 + $0x5c] sm:$0xf]
        %v1186 = vld [vmem:[%s1 + $0x60] sm:$0xf]
        %v1187 = vld [vmem:[%s1 + $0x64] sm:$0xf]
        %v1188 = vld [vmem:[%s1 + $0x68] sm:$0xf]
        %v1189 = vld [vmem:[%s1 + $0x6c] sm:$0xf]
        %v1190 = vld [vmem:[%s1 + $0x70] sm:$0xf]
        %v1191 = vld [vmem:[%s1 + $0x74] sm:$0xf]
        %v1192 = vld [vmem:[%s1 + $0x78] sm:$0xf]
        %v1193 = vld [vmem:[%s1 + $0x7c] sm:$0xf]
        %v1194 = vld [vmem:[%s1 + $0x80] sm:$0xf]
        %v1195 = vld [vmem:[%s1 + $0x84] sm:$0xf]
        %v1196 = vld [vmem:[%s1 + $0x88] sm:$0xf]
        %v1197 = vld [vmem:[%s1 + $0x8c] sm:$0xf]
        %v1198 = vld [vmem:[%s1 + $0x90] sm:$0xf]
        %v1199 = vld [vmem:[%s1 + $0x94] sm:$0xf]
        %v1200 = vld [vmem:[%s1 + $0x98] sm:$0xf]
        %v1201 = vld [vmem:[%s1 + $0x9c] sm:$0xf]
        %s1202 = scalar_lea.vmem [#allocation2], 24
        %v1203 = vld [vmem:[%s1202] sm:$0xff]
        %v1204 = vld [vmem:[%s1202 + $0x8] sm:$0xff]
        %v1205 = vld [vmem:[%s1202 + $0x10] sm:$0xff]
        %v1206 = vld [vmem:[%s1202 + $0x18] sm:$0xff]
        %v1207 = vld [vmem:[%s1202 + $0x20] sm:$0xff]
        %v1208 = vld [vmem:[%s1202 + $0x28] sm:$0xff]
        %v1209 = vld [vmem:[%s1202 + $0x30] sm:$0xff]
        %v1210 = vld [vmem:[%s1202 + $0x38] sm:$0xff]
        %v1211 = vld [vmem:[%s1202 + $0x40] sm:$0xff]
        %v1212 = vld [vmem:[%s1202 + $0x48] sm:$0xff]
        %v1213 = vld [vmem:[%s1202 + $0x50] sm:$0xff]
        %v1214 = vld [vmem:[%s1202 + $0x58] sm:$0xff]
        %v1215 = vld [vmem:[%s1202 + $0x60] sm:$0xff]
        %v1216 = vld [vmem:[%s1202 + $0x68] sm:$0xff]
        %v1217 = vld [vmem:[%s1202 + $0x70] sm:$0xff]
        %v1218 = vld [vmem:[%s1202 + $0x78] sm:$0xff]
        %v1219 = vld [vmem:[%s1202 + $0x80] sm:$0xff]
        %v1220 = vld [vmem:[%s1202 + $0x88] sm:$0xff]
        %v1221 = vld [vmem:[%s1202 + $0x90] sm:$0xff]
        %v1222 = vld [vmem:[%s1202 + $0x98] sm:$0xff]
        %v1223 = vld [vmem:[%s1202 + $0xa0] sm:$0xff]
        %v1224 = vld [vmem:[%s1202 + $0xa8] sm:$0xff]
        %v1225 = vld [vmem:[%s1202 + $0xb0] sm:$0xff]
        %v1226 = vld [vmem:[%s1202 + $0xb8] sm:$0xff]
        %v1227 = vld [vmem:[%s1202 + $0xc0] sm:$0xff]
        %v1228 = vld [vmem:[%s1202 + $0xc8] sm:$0xff]
        %v1229 = vld [vmem:[%s1202 + $0xd0] sm:$0xff]
        %v1230 = vld [vmem:[%s1202 + $0xd8] sm:$0xff]
        %v1231 = vld [vmem:[%s1202 + $0xe0] sm:$0xff]
        %v1232 = vld [vmem:[%s1202 + $0xe8] sm:$0xff]
        %v1233 = vld [vmem:[%s1202 + $0xf0] sm:$0xff]
        %v1234 = vld [vmem:[%s1202 + $0xf8] sm:$0xff]
        %v1235 = vld [vmem:[%s1202 + $0x100] sm:$0xff]
        %v1236 = vld [vmem:[%s1202 + $0x108] sm:$0xff]
        %v1237 = vld [vmem:[%s1202 + $0x110] sm:$0xff]
        %v1238 = vld [vmem:[%s1202 + $0x118] sm:$0xff]
        %v1239 = vld [vmem:[%s1202 + $0x120] sm:$0xff]
        %v1240 = vld [vmem:[%s1202 + $0x128] sm:$0xff]
        %v1241 = vld [vmem:[%s1202 + $0x130] sm:$0xff]
        %v1242 = vld [vmem:[%s1202 + $0x138] sm:$0xff]
        %v1243 = vld [vmem:[%s1202 + $0x140] sm:$0xff]
        %v1244 = vld [vmem:[%s1202 + $0x148] sm:$0xff]
        %v1245 = vld [vmem:[%s1202 + $0x150] sm:$0xff]
        %v1246 = vld [vmem:[%s1202 + $0x158] sm:$0xff]
        %v1247 = vld [vmem:[%s1202 + $0x160] sm:$0xff]
        %v1248 = vld [vmem:[%s1202 + $0x168] sm:$0xff]
        %v1249 = vld [vmem:[%s1202 + $0x170] sm:$0xff]
        %v1250 = vld [vmem:[%s1202 + $0x178] sm:$0xff]
        %s1251 = scalar_lea.vmem %s1, 160
        %v1252 = vld [vmem:[%s1251] sm:$0xf]
        %v1253 = vld [vmem:[%s1251 + $0x4] sm:$0xf]
        %v1254 = vld [vmem:[%s1251 + $0x8] sm:$0xf]
        %v1255 = vld [vmem:[%s1251 + $0xc] sm:$0xf]
        %v1256 = vld [vmem:[%s1251 + $0x10] sm:$0xf]
        %v1257 = vld [vmem:[%s1251 + $0x14] sm:$0xf]
        %v1258 = vld [vmem:[%s1251 + $0x18] sm:$0xf]
        %v1259 = vld [vmem:[%s1251 + $0x1c] sm:$0xf]
        %v1260 = vld [vmem:[%s1251 + $0x20] sm:$0xf]
        %v1261 = vld [vmem:[%s1251 + $0x24] sm:$0xf]
        %v1262 = vld [vmem:[%s1251 + $0x28] sm:$0xf]
        %v1263 = vld [vmem:[%s1251 + $0x2c] sm:$0xf]
        %v1264 = vld [vmem:[%s1251 + $0x30] sm:$0xf]
        %v1265 = vld [vmem:[%s1251 + $0x34] sm:$0xf]
        %v1266 = vld [vmem:[%s1251 + $0x38] sm:$0xf]
        %v1267 = vld [vmem:[%s1251 + $0x3c] sm:$0xf]
        %v1268 = vld [vmem:[%s1251 + $0x40] sm:$0xf]
        %v1269 = vld [vmem:[%s1251 + $0x44] sm:$0xf]
        %v1270 = vld [vmem:[%s1251 + $0x48] sm:$0xf]
        %v1271 = vld [vmem:[%s1251 + $0x4c] sm:$0xf]
        %v1272 = vld [vmem:[%s1251 + $0x50] sm:$0xf]
        %v1273 = vld [vmem:[%s1251 + $0x54] sm:$0xf]
        %v1274 = vld [vmem:[%s1251 + $0x58] sm:$0xf]
        %v1275 = vld [vmem:[%s1251 + $0x5c] sm:$0xf]
        %v1276 = vld [vmem:[%s1251 + $0x60] sm:$0xf]
        %v1277 = vld [vmem:[%s1251 + $0x64] sm:$0xf]
        %v1278 = vld [vmem:[%s1251 + $0x68] sm:$0xf]
        %v1279 = vld [vmem:[%s1251 + $0x6c] sm:$0xf]
        %v1280 = vld [vmem:[%s1251 + $0x70] sm:$0xf]
        %v1281 = vld [vmem:[%s1251 + $0x74] sm:$0xf]
        %v1282 = vld [vmem:[%s1251 + $0x78] sm:$0xf]
        %v1283 = vld [vmem:[%s1251 + $0x7c] sm:$0xf]
        %v1284 = vld [vmem:[%s1251 + $0x80] sm:$0xf]
        %v1285 = vld [vmem:[%s1251 + $0x84] sm:$0xf]
        %v1286 = vld [vmem:[%s1251 + $0x88] sm:$0xf]
        %v1287 = vld [vmem:[%s1251 + $0x8c] sm:$0xf]
        %v1288 = vld [vmem:[%s1251 + $0x90] sm:$0xf]
        %v1289 = vld [vmem:[%s1251 + $0x94] sm:$0xf]
        %v1290 = vld [vmem:[%s1251 + $0x98] sm:$0xf]
        %v1291 = vld [vmem:[%s1251 + $0x9c] sm:$0xf]
        %v1332 = vunpack.c.l.b16 %v1252
        %v1333 = vunpack.c.l.b16 %v1253
        %v1334 = vunpack.c.l.b16 %v1254
        %v1335 = vunpack.c.l.b16 %v1255
        %v1336 = vunpack.c.l.b16 %v1256
        %v1337 = vunpack.c.l.b16 %v1257
        %v1338 = vunpack.c.l.b16 %v1258
        %v1339 = vunpack.c.l.b16 %v1259
        %v1340 = vunpack.c.l.b16 %v1260
        %v1341 = vunpack.c.l.b16 %v1261
        %v1342 = vunpack.c.l.b16 %v1262
        %v1343 = vunpack.c.l.b16 %v1263
        %v1344 = vunpack.c.l.b16 %v1264
        %v1345 = vunpack.c.l.b16 %v1265
        %v1346 = vunpack.c.l.b16 %v1266
        %v1347 = vunpack.c.l.b16 %v1267
        %v1348 = vunpack.c.l.b16 %v1268
        %v1349 = vunpack.c.l.b16 %v1269
        %v1350 = vunpack.c.l.b16 %v1270
        %v1351 = vunpack.c.l.b16 %v1271
        %v1352 = vunpack.c.l.b16 %v1272
        %v1353 = vunpack.c.l.b16 %v1273
        %v1354 = vunpack.c.l.b16 %v1274
        %v1355 = vunpack.c.l.b16 %v1275
        %v1356 = vunpack.c.l.b16 %v1276
        %v1357 = vunpack.c.l.b16 %v1277
        %v1358 = vunpack.c.l.b16 %v1278
        %v1359 = vunpack.c.l.b16 %v1279
        %v1360 = vunpack.c.l.b16 %v1280
        %v1361 = vunpack.c.l.b16 %v1281
        %v1362 = vunpack.c.l.b16 %v1282
        %v1363 = vunpack.c.l.b16 %v1283
        %v1364 = vunpack.c.l.b16 %v1284
        %v1365 = vunpack.c.l.b16 %v1285
        %v1366 = vunpack.c.l.b16 %v1286
        %v1367 = vunpack.c.l.b16 %v1287
        %v1368 = vunpack.c.l.b16 %v1288
        %v1369 = vunpack.c.l.b16 %v1289
        %v1370 = vunpack.c.l.b16 %v1290
        %v1371 = vunpack.c.l.b16 %v1291
        %v1372 = vpack.c.b16 %v1333, %v1332
        %v1373 = vpack.c.b16 %v1335, %v1334
        %v1374 = vpack.c.b16 %v1337, %v1336
        %v1375 = vpack.c.b16 %v1339, %v1338
        %v1376 = vpack.c.b16 %v1341, %v1340
        %v1377 = vpack.c.b16 %v1343, %v1342
        %v1378 = vpack.c.b16 %v1345, %v1344
        %v1379 = vpack.c.b16 %v1347, %v1346
        %v1380 = vpack.c.b16 %v1349, %v1348
        %v1381 = vpack.c.b16 %v1351, %v1350
        %v1382 = vpack.c.b16 %v1353, %v1352
        %v1383 = vpack.c.b16 %v1355, %v1354
        %v1384 = vpack.c.b16 %v1357, %v1356
        %v1385 = vpack.c.b16 %v1359, %v1358
        %v1386 = vpack.c.b16 %v1361, %v1360
        %v1387 = vpack.c.b16 %v1363, %v1362
        %v1388 = vpack.c.b16 %v1365, %v1364
        %v1389 = vpack.c.b16 %v1367, %v1366
        %v1390 = vpack.c.b16 %v1369, %v1368
        %v1391 = vpack.c.b16 %v1371, %v1370
        %v1413 = vsel %vm918, %v1205, 0
        %v1416 = vsel %vm918, %v1208, 0
        %v1419 = vsel %vm918, %v1211, 0
        %v1422 = vsel %vm918, %v1214, 0
        %v1425 = vsel %vm918, %v1217, 0
        %v1428 = vsel %vm918, %v1220, 0
        %v1431 = vsel %vm918, %v1223, 0
        %v1434 = vsel %vm918, %v1226, 0
        %v1437 = vsel %vm918, %v1229, 0
        %v1440 = vsel %vm918, %v1232, 0
        %v1443 = vsel %vm918, %v1235, 0
        %v1446 = vsel %vm918, %v1238, 0
        %v1449 = vsel %vm918, %v1241, 0
        %v1452 = vsel %vm918, %v1244, 0
        %v1455 = vsel %vm918, %v1247, 0
        %v1458 = vsel %vm918, %v1250, 0
        %1460 = vmatprep.subr.bf16.mxu0 0
        %1461 = vmatpush1.bf16.msra.mxu0 %v1372
        %1462 = vmatprep.subr.bf16.mxu0 0
        %1463 = vmatpush1.bf16.msra.mxu0 %v1373
        %1464 = vmatprep.subr.bf16.mxu0 0
        %1465 = vmatpush1.bf16.msra.mxu0 %v1374
        %1466 = vmatprep.subr.bf16.mxu0 0
        %1467 = vmatpush1.bf16.msra.mxu0 %v1375
        %1468 = vmatprep.subr.bf16.mxu0 0
        %1469 = vmatpush1.bf16.msra.mxu0 %v1376
        %1470 = vmatprep.subr.bf16.mxu0 0
        %1471 = vmatpush1.bf16.msra.mxu0 %v1377
        %1472 = vmatprep.subr.bf16.mxu0 0
        %1473 = vmatpush1.bf16.msra.mxu0 %v1378
        %1474 = vmatprep.subr.bf16.mxu0 0
        %1475 = vmatpush1.bf16.msra.mxu0 %v1379
        %1476 = vmatprep.subr.bf16.mxu0 0
        %1477 = vmatpush1.bf16.msra.mxu0 %v1380
        %1478 = vmatprep.subr.bf16.mxu0 0
        %1479 = vmatpush1.bf16.msra.mxu0 %v1381
        %1480 = vmatprep.subr.bf16.mxu0 0
        %1481 = vmatpush1.bf16.msra.mxu0 %v1382
        %1482 = vmatprep.subr.bf16.mxu0 0
        %1483 = vmatpush1.bf16.msra.mxu0 %v1383
        %1484 = vmatprep.subr.bf16.mxu0 0
        %1485 = vmatpush1.bf16.msra.mxu0 %v1384
        %1486 = vmatprep.subr.bf16.mxu0 0
        %1487 = vmatpush1.bf16.msra.mxu0 %v1385
        %1488 = vmatprep.subr.bf16.mxu0 0
        %1489 = vmatpush1.bf16.msra.mxu0 %v1386
        %1490 = vmatprep.subr.bf16.mxu0 0
        %1491 = vmatpush1.bf16.msra.mxu0 %v1387
        %1492 = vmatprep.mubr.bf16.mxu0 %v1204
        %1493 = vmatmul.mubr.bf16.gmra.mrb[0].mxu0 %v1203
        %v1494 = vpop.f32.mrb[0].mxu0
        %v1495 = vadd.f32 0.0, %v1494
        %v1496 = vpop.f32.mrb[0].mxu0
        %v1497 = vpop.f32.mrb[0].mxu0
        %v1498 = vadd.f32 0.0, %v1497
        %v1499 = vpop.f32.mrb[0].mxu0
        %1500 = vmatprep.mubr.bf16.mxu0 %v1207
        %1501 = vmatmul.mubr.bf16.gmra.mrb[0].mxu0 %v1206
        %v1502 = vpop.f32.mrb[0].mxu0
        %v1503 = vadd.f32 0.0, %v1502
        %v1504 = vpop.f32.mrb[0].mxu0
        %v1505 = vpop.f32.mrb[0].mxu0
        %v1506 = vadd.f32 0.0, %v1505
        %v1507 = vpop.f32.mrb[0].mxu0
        %1508 = vmatprep.mubr.bf16.mxu0 %v1210
        %1509 = vmatmul.mubr.bf16.gmra.mrb[0].mxu0 %v1209
        %v1510 = vpop.f32.mrb[0].mxu0
        %v1511 = vadd.f32 0.0, %v1510
        %v1512 = vpop.f32.mrb[0].mxu0
        %v1513 = vpop.f32.mrb[0].mxu0
        %v1514 = vadd.f32 0.0, %v1513
        %v1515 = vpop.f32.mrb[0].mxu0
        %1516 = vmatprep.mubr.bf16.mxu0 %v1213
        %1517 = vmatmul.mubr.bf16.gmra.mrb[0].mxu0 %v1212
        %v1518 = vpop.f32.mrb[0].mxu0
        %v1519 = vadd.f32 0.0, %v1518
        %v1520 = vpop.f32.mrb[0].mxu0
        %v1521 = vpop.f32.mrb[0].mxu0
        %v1522 = vadd.f32 0.0, %v1521
        %v1523 = vpop.f32.mrb[0].mxu0
        %1524 = vmatprep.mubr.bf16.mxu0 %v1216
        %1525 = vmatmul.mubr.bf16.gmra.mrb[0].mxu0 %v1215
        %v1526 = vpop.f32.mrb[0].mxu0
        %v1527 = vadd.f32 0.0, %v1526
        %v1528 = vpop.f32.mrb[0].mxu0
        %v1529 = vpop.f32.mrb[0].mxu0
        %v1530 = vadd.f32 0.0, %v1529
        %v1531 = vpop.f32.mrb[0].mxu0
        %1532 = vmatprep.mubr.bf16.mxu0 %v1219
        %1533 = vmatmul.mubr.bf16.gmra.mrb[0].mxu0 %v1218
        %v1534 = vpop.f32.mrb[0].mxu0
        %v1535 = vadd.f32 0.0, %v1534
        %v1536 = vpop.f32.mrb[0].mxu0
        %v1537 = vpop.f32.mrb[0].mxu0
        %v1538 = vadd.f32 0.0, %v1537
        %v1539 = vpop.f32.mrb[0].mxu0
        %1540 = vmatprep.mubr.bf16.mxu0 %v1222
        %1541 = vmatmul.mubr.bf16.gmra.mrb[0].mxu0 %v1221
        %v1542 = vpop.f32.mrb[0].mxu0
        %v1543 = vadd.f32 0.0, %v1542
        %v1544 = vpop.f32.mrb[0].mxu0
        %v1545 = vpop.f32.mrb[0].mxu0
        %v1546 = vadd.f32 0.0, %v1545
        %v1547 = vpop.f32.mrb[0].mxu0
        %1548 = vmatprep.mubr.bf16.mxu0 %v1225
        %1549 = vmatmul.mubr.bf16.gmra.mrb[0].mxu0 %v1224
        %v1550 = vpop.f32.mrb[0].mxu0
        %v1551 = vadd.f32 0.0, %v1550
        %v1552 = vpop.f32.mrb[0].mxu0
        %v1553 = vpop.f32.mrb[0].mxu0
        %v1554 = vadd.f32 0.0, %v1553
        %v1555 = vpop.f32.mrb[0].mxu0
        %1556 = vmatprep.mubr.bf16.mxu0 %v1228
        %1557 = vmatmul.mubr.bf16.gmra.mrb[0].mxu0 %v1227
        %v1558 = vpop.f32.mrb[0].mxu0
        %v1559 = vadd.f32 0.0, %v1558
        %v1560 = vpop.f32.mrb[0].mxu0
        %v1561 = vpop.f32.mrb[0].mxu0
        %v1562 = vadd.f32 0.0, %v1561
        %v1563 = vpop.f32.mrb[0].mxu0
        %1564 = vmatprep.mubr.bf16.mxu0 %v1231
        %1565 = vmatmul.mubr.bf16.gmra.mrb[0].mxu0 %v1230
        %v1566 = vpop.f32.mrb[0].mxu0
        %v1567 = vadd.f32 0.0, %v1566
        %v1568 = vpop.f32.mrb[0].mxu0
        %v1569 = vpop.f32.mrb[0].mxu0
        %v1570 = vadd.f32 0.0, %v1569
        %v1571 = vpop.f32.mrb[0].mxu0
        %1572 = vmatprep.mubr.bf16.mxu0 %v1234
        %1573 = vmatmul.mubr.bf16.gmra.mrb[0].mxu0 %v1233
        %v1574 = vpop.f32.mrb[0].mxu0
        %v1575 = vadd.f32 0.0, %v1574
        %v1576 = vpop.f32.mrb[0].mxu0
        %v1577 = vpop.f32.mrb[0].mxu0
        %v1578 = vadd.f32 0.0, %v1577
        %v1579 = vpop.f32.mrb[0].mxu0
        %1580 = vmatprep.mubr.bf16.mxu0 %v1237
        %1581 = vmatmul.mubr.bf16.gmra.mrb[0].mxu0 %v1236
        %v1582 = vpop.f32.mrb[0].mxu0
        %v1583 = vadd.f32 0.0, %v1582
        %v1584 = vpop.f32.mrb[0].mxu0
        %v1585 = vpop.f32.mrb[0].mxu0
        %v1586 = vadd.f32 0.0, %v1585
        %v1587 = vpop.f32.mrb[0].mxu0
        %1588 = vmatprep.mubr.bf16.mxu0 %v1240
        %1589 = vmatmul.mubr.bf16.gmra.mrb[0].mxu0 %v1239
        %v1590 = vpop.f32.mrb[0].mxu0
        %v1591 = vadd.f32 0.0, %v1590
        %v1592 = vpop.f32.mrb[0].mxu0
        %v1593 = vpop.f32.mrb[0].mxu0
        %v1594 = vadd.f32 0.0, %v1593
        %v1595 = vpop.f32.mrb[0].mxu0
        %1596 = vmatprep.mubr.bf16.mxu0 %v1243
        %1597 = vmatmul.mubr.bf16.gmra.mrb[0].mxu0 %v1242
        %v1598 = vpop.f32.mrb[0].mxu0
        %v1599 = vadd.f32 0.0, %v1598
        %v1600 = vpop.f32.mrb[0].mxu0
        %v1601 = vpop.f32.mrb[0].mxu0
        %v1602 = vadd.f32 0.0, %v1601
        %v1603 = vpop.f32.mrb[0].mxu0
        %1604 = vmatprep.mubr.bf16.mxu0 %v1246
        %1605 = vmatmul.mubr.bf16.gmra.mrb[0].mxu0 %v1245
        %v1606 = vpop.f32.mrb[0].mxu0
        %v1607 = vadd.f32 0.0, %v1606
        %v1608 = vpop.f32.mrb[0].mxu0
        %v1609 = vpop.f32.mrb[0].mxu0
        %v1610 = vadd.f32 0.0, %v1609
        %v1611 = vpop.f32.mrb[0].mxu0
        %1612 = vmatprep.mubr.bf16.mxu0 %v1249
        %1613 = vmatmul.mubr.bf16.gmra.mrb[0].mxu0 %v1248
        %v1614 = vpop.f32.mrb[0].mxu0
        %v1615 = vadd.f32 0.0, %v1614
        %v1616 = vpop.f32.mrb[0].mxu0
        %v1617 = vpop.f32.mrb[0].mxu0
        %v1618 = vadd.f32 0.0, %v1617
        %v1619 = vpop.f32.mrb[0].mxu0
        %1620 = vdwg.mxu0
        %1621 = vmatprep.subr.bf16.mxu0 0
        %1622 = vmatpush1.bf16.msra.mxu0 %v1388
        %1623 = vmatprep.subr.bf16.mxu0 0
        %1624 = vmatpush1.bf16.msra.mxu0 %v1389
        %1625 = vmatprep.subr.bf16.mxu0 0
        %1626 = vmatpush1.bf16.msra.mxu0 %v1390
        %1627 = vmatprep.subr.bf16.mxu0 0
        %1628 = vmatpush1.bf16.msra.mxu0 %v1391
        %1629 = vmatprep.subr.bf16.mxu0 0
        %1630 = vmatpush1.bf16.msra.mxu0 0
        %1631 = vmatprep.subr.bf16.mxu0 0
        %1632 = vmatpush1.bf16.msra.mxu0 0
        %1633 = vmatprep.subr.bf16.mxu0 0
        %1634 = vmatpush1.bf16.msra.mxu0 0
        %1635 = vmatprep.subr.bf16.mxu0 0
        %1636 = vmatpush1.bf16.msra.mxu0 0
        %1637 = vmatprep.subr.bf16.mxu0 0
        %1638 = vmatpush1.bf16.msra.mxu0 0
        %1639 = vmatprep.subr.bf16.mxu0 0
        %1640 = vmatpush1.bf16.msra.mxu0 0
        %1641 = vmatprep.subr.bf16.mxu0 0
        %1642 = vmatpush1.bf16.msra.mxu0 0
        %1643 = vmatprep.subr.bf16.mxu0 0
        %1644 = vmatpush1.bf16.msra.mxu0 0
        %1645 = vmatprep.subr.bf16.mxu0 0
        %1646 = vmatpush1.bf16.msra.mxu0 0
        %1647 = vmatprep.subr.bf16.mxu0 0
        %1648 = vmatpush1.bf16.msra.mxu0 0
        %1649 = vmatprep.subr.bf16.mxu0 0
        %1650 = vmatpush1.bf16.msra.mxu0 0
        %1651 = vmatprep.subr.bf16.mxu0 0
        %1652 = vmatpush1.bf16.msra.mxu0 0
        %1653 = vmatprep.mubr.bf16.mxu0 0
        %1654 = vmatmul.mubr.bf16.gmra.mrb[0].mxu0 %v1413
        %v1655 = vpop.f32.mrb[0].mxu0
        %v1656 = vadd.f32 %v1495, %v1655
        %v1657 = vpop.f32.mrb[0].mxu0
        %v1658 = vpop.f32.mrb[0].mxu0
        %v1659 = vadd.f32 %v1498, %v1658
        %v1660 = vpop.f32.mrb[0].mxu0
        %1661 = vmatprep.mubr.bf16.mxu0 0
        %1662 = vmatmul.mubr.bf16.gmra.mrb[0].mxu0 %v1416
        %v1663 = vpop.f32.mrb[0].mxu0
        %v1664 = vadd.f32 %v1503, %v1663
        %v1665 = vpop.f32.mrb[0].mxu0
        %v1666 = vpop.f32.mrb[0].mxu0
        %v1667 = vadd.f32 %v1506, %v1666
        %v1668 = vpop.f32.mrb[0].mxu0
        %1669 = vmatprep.mubr.bf16.mxu0 0
        %1670 = vmatmul.mubr.bf16.gmra.mrb[0].mxu0 %v1419
        %v1671 = vpop.f32.mrb[0].mxu0
        %v1672 = vadd.f32 %v1511, %v1671
        %v1673 = vpop.f32.mrb[0].mxu0
        %v1674 = vpop.f32.mrb[0].mxu0
        %v1675 = vadd.f32 %v1514, %v1674
        %v1676 = vpop.f32.mrb[0].mxu0
        %1677 = vmatprep.mubr.bf16.mxu0 0
        %1678 = vmatmul.mubr.bf16.gmra.mrb[0].mxu0 %v1422
        %v1679 = vpop.f32.mrb[0].mxu0
        %v1680 = vadd.f32 %v1519, %v1679
        %v1681 = vpop.f32.mrb[0].mxu0
        %v1682 = vpop.f32.mrb[0].mxu0
        %v1683 = vadd.f32 %v1522, %v1682
        %v1684 = vpop.f32.mrb[0].mxu0
        %1685 = vmatprep.mubr.bf16.mxu0 0
        %1686 = vmatmul.mubr.bf16.gmra.mrb[0].mxu0 %v1425
        %v1687 = vpop.f32.mrb[0].mxu0
        %v1688 = vadd.f32 %v1527, %v1687
        %v1689 = vpop.f32.mrb[0].mxu0
        %v1690 = vpop.f32.mrb[0].mxu0
        %v1691 = vadd.f32 %v1530, %v1690
        %v1692 = vpop.f32.mrb[0].mxu0
        %1693 = vmatprep.mubr.bf16.mxu0 0
        %1694 = vmatmul.mubr.bf16.gmra.mrb[0].mxu0 %v1428
        %v1695 = vpop.f32.mrb[0].mxu0
        %v1696 = vadd.f32 %v1535, %v1695
        %v1697 = vpop.f32.mrb[0].mxu0
        %v1698 = vpop.f32.mrb[0].mxu0
        %v1699 = vadd.f32 %v1538, %v1698
        %v1700 = vpop.f32.mrb[0].mxu0
        %1701 = vmatprep.mubr.bf16.mxu0 0
        %1702 = vmatmul.mubr.bf16.gmra.mrb[0].mxu0 %v1431
        %v1703 = vpop.f32.mrb[0].mxu0
        %v1704 = vadd.f32 %v1543, %v1703
        %v1705 = vpop.f32.mrb[0].mxu0
        %v1706 = vpop.f32.mrb[0].mxu0
        %v1707 = vadd.f32 %v1546, %v1706
        %v1708 = vpop.f32.mrb[0].mxu0
        %1709 = vmatprep.mubr.bf16.mxu0 0
        %1710 = vmatmul.mubr.bf16.gmra.mrb[0].mxu0 %v1434
        %v1711 = vpop.f32.mrb[0].mxu0
        %v1712 = vadd.f32 %v1551, %v1711
        %v1713 = vpop.f32.mrb[0].mxu0
        %v1714 = vpop.f32.mrb[0].mxu0
        %v1715 = vadd.f32 %v1554, %v1714
        %v1716 = vpop.f32.mrb[0].mxu0
        %1717 = vmatprep.mubr.bf16.mxu0 0
        %1718 = vmatmul.mubr.bf16.gmra.mrb[0].mxu0 %v1437
        %v1719 = vpop.f32.mrb[0].mxu0
        %v1720 = vadd.f32 %v1559, %v1719
        %v1721 = vpop.f32.mrb[0].mxu0
        %v1722 = vpop.f32.mrb[0].mxu0
        %v1723 = vadd.f32 %v1562, %v1722
        %v1724 = vpop.f32.mrb[0].mxu0
        %1725 = vmatprep.mubr.bf16.mxu0 0
        %1726 = vmatmul.mubr.bf16.gmra.mrb[0].mxu0 %v1440
        %v1727 = vpop.f32.mrb[0].mxu0
        %v1728 = vadd.f32 %v1567, %v1727
        %v1729 = vpop.f32.mrb[0].mxu0
        %v1730 = vpop.f32.mrb[0].mxu0
        %v1731 = vadd.f32 %v1570, %v1730
        %v1732 = vpop.f32.mrb[0].mxu0
        %1733 = vmatprep.mubr.bf16.mxu0 0
        %1734 = vmatmul.mubr.bf16.gmra.mrb[0].mxu0 %v1443
        %v1735 = vpop.f32.mrb[0].mxu0
        %v1736 = vadd.f32 %v1575, %v1735
        %v1737 = vpop.f32.mrb[0].mxu0
        %v1738 = vpop.f32.mrb[0].mxu0
        %v1739 = vadd.f32 %v1578, %v1738
        %v1740 = vpop.f32.mrb[0].mxu0
        %1741 = vmatprep.mubr.bf16.mxu0 0
        %1742 = vmatmul.mubr.bf16.gmra.mrb[0].mxu0 %v1446
        %v1743 = vpop.f32.mrb[0].mxu0
        %v1744 = vadd.f32 %v1583, %v1743
        %v1745 = vpop.f32.mrb[0].mxu0
        %v1746 = vpop.f32.mrb[0].mxu0
        %v1747 = vadd.f32 %v1586, %v1746
        %v1748 = vpop.f32.mrb[0].mxu0
        %1749 = vmatprep.mubr.bf16.mxu0 0
        %1750 = vmatmul.mubr.bf16.gmra.mrb[0].mxu0 %v1449
        %v1751 = vpop.f32.mrb[0].mxu0
        %v1752 = vadd.f32 %v1591, %v1751
        %v1753 = vpop.f32.mrb[0].mxu0
        %v1754 = vpop.f32.mrb[0].mxu0
        %v1755 = vadd.f32 %v1594, %v1754
        %v1756 = vpop.f32.mrb[0].mxu0
        %1757 = vmatprep.mubr.bf16.mxu0 0
        %1758 = vmatmul.mubr.bf16.gmra.mrb[0].mxu0 %v1452
        %v1759 = vpop.f32.mrb[0].mxu0
        %v1760 = vadd.f32 %v1599, %v1759
        %v1761 = vpop.f32.mrb[0].mxu0
        %v1762 = vpop.f32.mrb[0].mxu0
        %v1763 = vadd.f32 %v1602, %v1762
        %v1764 = vpop.f32.mrb[0].mxu0
        %1765 = vmatprep.mubr.bf16.mxu0 0
        %1766 = vmatmul.mubr.bf16.gmra.mrb[0].mxu0 %v1455
        %v1767 = vpop.f32.mrb[0].mxu0
        %v1768 = vadd.f32 %v1607, %v1767
        %v1769 = vpop.f32.mrb[0].mxu0
        %v1770 = vpop.f32.mrb[0].mxu0
        %v1771 = vadd.f32 %v1610, %v1770
        %v1772 = vpop.f32.mrb[0].mxu0
        %1773 = vmatprep.mubr.bf16.mxu0 0
        %1774 = vmatmul.mubr.bf16.gmra.mrb[0].mxu0 %v1458
        %v1775 = vpop.f32.mrb[0].mxu0
        %v1776 = vadd.f32 %v1615, %v1775
        %v1777 = vpop.f32.mrb[0].mxu0
        %v1778 = vpop.f32.mrb[0].mxu0
        %v1779 = vadd.f32 %v1618, %v1778
        %v1780 = vpop.f32.mrb[0].mxu0
        %1781 = vdwg.mxu0
        %v1822 = vunpack.c.l.b16 %v1162
        %v1823 = vunpack.c.l.b16 %v1163
        %v1824 = vunpack.c.l.b16 %v1164
        %v1825 = vunpack.c.l.b16 %v1165
        %v1826 = vunpack.c.l.b16 %v1166
        %v1827 = vunpack.c.l.b16 %v1167
        %v1828 = vunpack.c.l.b16 %v1168
        %v1829 = vunpack.c.l.b16 %v1169
        %v1830 = vunpack.c.l.b16 %v1170
        %v1831 = vunpack.c.l.b16 %v1171
        %v1832 = vunpack.c.l.b16 %v1172
        %v1833 = vunpack.c.l.b16 %v1173
        %v1834 = vunpack.c.l.b16 %v1174
        %v1835 = vunpack.c.l.b16 %v1175
        %v1836 = vunpack.c.l.b16 %v1176
        %v1837 = vunpack.c.l.b16 %v1177
        %v1838 = vunpack.c.l.b16 %v1178
        %v1839 = vunpack.c.l.b16 %v1179
        %v1840 = vunpack.c.l.b16 %v1180
        %v1841 = vunpack.c.l.b16 %v1181
        %v1842 = vunpack.c.l.b16 %v1182
        %v1843 = vunpack.c.l.b16 %v1183
        %v1844 = vunpack.c.l.b16 %v1184
        %v1845 = vunpack.c.l.b16 %v1185
        %v1846 = vunpack.c.l.b16 %v1186
        %v1847 = vunpack.c.l.b16 %v1187
        %v1848 = vunpack.c.l.b16 %v1188
        %v1849 = vunpack.c.l.b16 %v1189
        %v1850 = vunpack.c.l.b16 %v1190
        %v1851 = vunpack.c.l.b16 %v1191
        %v1852 = vunpack.c.l.b16 %v1192
        %v1853 = vunpack.c.l.b16 %v1193
        %v1854 = vunpack.c.l.b16 %v1194
        %v1855 = vunpack.c.l.b16 %v1195
        %v1856 = vunpack.c.l.b16 %v1196
        %v1857 = vunpack.c.l.b16 %v1197
        %v1858 = vunpack.c.l.b16 %v1198
        %v1859 = vunpack.c.l.b16 %v1199
        %v1860 = vunpack.c.l.b16 %v1200
        %v1861 = vunpack.c.l.b16 %v1201
        %v1862 = vpack.c.b16 %v1823, %v1822
        %v1863 = vpack.c.b16 %v1825, %v1824
        %v1864 = vpack.c.b16 %v1827, %v1826
        %v1865 = vpack.c.b16 %v1829, %v1828
        %v1866 = vpack.c.b16 %v1831, %v1830
        %v1867 = vpack.c.b16 %v1833, %v1832
        %v1868 = vpack.c.b16 %v1835, %v1834
        %v1869 = vpack.c.b16 %v1837, %v1836
        %v1870 = vpack.c.b16 %v1839, %v1838
        %v1871 = vpack.c.b16 %v1841, %v1840
        %v1872 = vpack.c.b16 %v1843, %v1842
        %v1873 = vpack.c.b16 %v1845, %v1844
        %v1874 = vpack.c.b16 %v1847, %v1846
        %v1875 = vpack.c.b16 %v1849, %v1848
        %v1876 = vpack.c.b16 %v1851, %v1850
        %v1877 = vpack.c.b16 %v1853, %v1852
        %v1878 = vpack.c.b16 %v1855, %v1854
        %v1879 = vpack.c.b16 %v1857, %v1856
        %v1880 = vpack.c.b16 %v1859, %v1858
        %v1881 = vpack.c.b16 %v1861, %v1860
        %v1903 = vsel %vm918, %v1116, 0
        %v1906 = vsel %vm918, %v1119, 0
        %v1909 = vsel %vm918, %v1122, 0
        %v1912 = vsel %vm918, %v1125, 0
        %v1915 = vsel %vm918, %v1128, 0
        %v1918 = vsel %vm918, %v1131, 0
        %v1921 = vsel %vm918, %v1134, 0
        %v1924 = vsel %vm918, %v1137, 0
        %v1927 = vsel %vm918, %v1140, 0
        %v1930 = vsel %vm918, %v1143, 0
        %v1933 = vsel %vm918, %v1146, 0
        %v1936 = vsel %vm918, %v1149, 0
        %v1939 = vsel %vm918, %v1152, 0
        %v1942 = vsel %vm918, %v1155, 0
        %v1945 = vsel %vm918, %v1158, 0
        %v1948 = vsel %vm918, %v1161, 0
        %1950 = vmatprep.subr.bf16.mxu0 0
        %1951 = vmatpush1.bf16.msra.mxu0 %v1862
        %1952 = vmatprep.subr.bf16.mxu0 0
        %1953 = vmatpush1.bf16.msra.mxu0 %v1863
        %1954 = vmatprep.subr.bf16.mxu0 0
        %1955 = vmatpush1.bf16.msra.mxu0 %v1864
        %1956 = vmatprep.subr.bf16.mxu0 0
        %1957 = vmatpush1.bf16.msra.mxu0 %v1865
        %1958 = vmatprep.subr.bf16.mxu0 0
        %1959 = vmatpush1.bf16.msra.mxu0 %v1866
        %1960 = vmatprep.subr.bf16.mxu0 0
        %1961 = vmatpush1.bf16.msra.mxu0 %v1867
        %1962 = vmatprep.subr.bf16.mxu0 0
        %1963 = vmatpush1.bf16.msra.mxu0 %v1868
        %1964 = vmatprep.subr.bf16.mxu0 0
        %1965 = vmatpush1.bf16.msra.mxu0 %v1869
        %1966 = vmatprep.subr.bf16.mxu0 0
        %1967 = vmatpush1.bf16.msra.mxu0 %v1870
        %1968 = vmatprep.subr.bf16.mxu0 0
        %1969 = vmatpush1.bf16.msra.mxu0 %v1871
        %1970 = vmatprep.subr.bf16.mxu0 0
        %1971 = vmatpush1.bf16.msra.mxu0 %v1872
        %1972 = vmatprep.subr.bf16.mxu0 0
        %1973 = vmatpush1.bf16.msra.mxu0 %v1873
        %1974 = vmatprep.subr.bf16.mxu0 0
        %1975 = vmatpush1.bf16.msra.mxu0 %v1874
        %1976 = vmatprep.subr.bf16.mxu0 0
        %1977 = vmatpush1.bf16.msra.mxu0 %v1875
        %1978 = vmatprep.subr.bf16.mxu0 0
        %1979 = vmatpush1.bf16.msra.mxu0 %v1876
        %1980 = vmatprep.subr.bf16.mxu0 0
        %1981 = vmatpush1.bf16.msra.mxu0 %v1877
        %1982 = vmatprep.mubr.bf16.mxu0 %v1115
        %1983 = vmatmul.mubr.bf16.gmra.mrb[0].mxu0 %v1114
        %v1984 = vpop.f32.mrb[0].mxu0
        %v1985 = vadd.f32 %v1656, %v1984
        %v1986 = vpop.f32.mrb[0].mxu0
        %v1987 = vpop.f32.mrb[0].mxu0
        %v1988 = vadd.f32 %v1659, %v1987
        %v1989 = vpop.f32.mrb[0].mxu0
        %1990 = vmatprep.mubr.bf16.mxu0 %v1118
        %1991 = vmatmul.mubr.bf16.gmra.mrb[0].mxu0 %v1117
        %v1992 = vpop.f32.mrb[0].mxu0
        %v1993 = vadd.f32 %v1664, %v1992
        %v1994 = vpop.f32.mrb[0].mxu0
        %v1995 = vpop.f32.mrb[0].mxu0
        %v1996 = vadd.f32 %v1667, %v1995
        %v1997 = vpop.f32.mrb[0].mxu0
        %1998 = vmatprep.mubr.bf16.mxu0 %v1121
        %1999 = vmatmul.mubr.bf16.gmra.mrb[0].mxu0 %v1120
        %v2000 = vpop.f32.mrb[0].mxu0
        %v2001 = vadd.f32 %v1672, %v2000
        %v2002 = vpop.f32.mrb[0].mxu0
        %v2003 = vpop.f32.mrb[0].mxu0
        %v2004 = vadd.f32 %v1675, %v2003
        %v2005 = vpop.f32.mrb[0].mxu0
        %2006 = vmatprep.mubr.bf16.mxu0 %v1124
        %2007 = vmatmul.mubr.bf16.gmra.mrb[0].mxu0 %v1123
        %v2008 = vpop.f32.mrb[0].mxu0
        %v2009 = vadd.f32 %v1680, %v2008
        %v2010 = vpop.f32.mrb[0].mxu0
        %v2011 = vpop.f32.mrb[0].mxu0
        %v2012 = vadd.f32 %v1683, %v2011
        %v2013 = vpop.f32.mrb[0].mxu0
        %2014 = vmatprep.mubr.bf16.mxu0 %v1127
        %2015 = vmatmul.mubr.bf16.gmra.mrb[0].mxu0 %v1126
        %v2016 = vpop.f32.mrb[0].mxu0
        %v2017 = vadd.f32 %v1688, %v2016
        %v2018 = vpop.f32.mrb[0].mxu0
        %v2019 = vpop.f32.mrb[0].mxu0
        %v2020 = vadd.f32 %v1691, %v2019
        %v2021 = vpop.f32.mrb[0].mxu0
        %2022 = vmatprep.mubr.bf16.mxu0 %v1130
        %2023 = vmatmul.mubr.bf16.gmra.mrb[0].mxu0 %v1129
        %v2024 = vpop.f32.mrb[0].mxu0
        %v2025 = vadd.f32 %v1696, %v2024
        %v2026 = vpop.f32.mrb[0].mxu0
        %v2027 = vpop.f32.mrb[0].mxu0
        %v2028 = vadd.f32 %v1699, %v2027
        %v2029 = vpop.f32.mrb[0].mxu0
        %2030 = vmatprep.mubr.bf16.mxu0 %v1133
        %2031 = vmatmul.mubr.bf16.gmra.mrb[0].mxu0 %v1132
        %v2032 = vpop.f32.mrb[0].mxu0
        %v2033 = vadd.f32 %v1704, %v2032
        %v2034 = vpop.f32.mrb[0].mxu0
        %v2035 = vpop.f32.mrb[0].mxu0
        %v2036 = vadd.f32 %v1707, %v2035
        %v2037 = vpop.f32.mrb[0].mxu0
        %2038 = vmatprep.mubr.bf16.mxu0 %v1136
        %2039 = vmatmul.mubr.bf16.gmra.mrb[0].mxu0 %v1135
        %v2040 = vpop.f32.mrb[0].mxu0
        %v2041 = vadd.f32 %v1712, %v2040
        %v2042 = vpop.f32.mrb[0].mxu0
        %v2043 = vpop.f32.mrb[0].mxu0
        %v2044 = vadd.f32 %v1715, %v2043
        %v2045 = vpop.f32.mrb[0].mxu0
        %2046 = vmatprep.mubr.bf16.mxu0 %v1139
        %2047 = vmatmul.mubr.bf16.gmra.mrb[0].mxu0 %v1138
        %v2048 = vpop.f32.mrb[0].mxu0
        %v2049 = vadd.f32 %v1720, %v2048
        %v2050 = vpop.f32.mrb[0].mxu0
        %v2051 = vpop.f32.mrb[0].mxu0
        %v2052 = vadd.f32 %v1723, %v2051
        %v2053 = vpop.f32.mrb[0].mxu0
        %2054 = vmatprep.mubr.bf16.mxu0 %v1142
        %2055 = vmatmul.mubr.bf16.gmra.mrb[0].mxu0 %v1141
        %v2056 = vpop.f32.mrb[0].mxu0
        %v2057 = vadd.f32 %v1728, %v2056
        %v2058 = vpop.f32.mrb[0].mxu0
        %v2059 = vpop.f32.mrb[0].mxu0
        %v2060 = vadd.f32 %v1731, %v2059
        %v2061 = vpop.f32.mrb[0].mxu0
        %2062 = vmatprep.mubr.bf16.mxu0 %v1145
        %2063 = vmatmul.mubr.bf16.gmra.mrb[0].mxu0 %v1144
        %v2064 = vpop.f32.mrb[0].mxu0
        %v2065 = vadd.f32 %v1736, %v2064
        %v2066 = vpop.f32.mrb[0].mxu0
        %v2067 = vpop.f32.mrb[0].mxu0
        %v2068 = vadd.f32 %v1739, %v2067
        %v2069 = vpop.f32.mrb[0].mxu0
        %2070 = vmatprep.mubr.bf16.mxu0 %v1148
        %2071 = vmatmul.mubr.bf16.gmra.mrb[0].mxu0 %v1147
        %v2072 = vpop.f32.mrb[0].mxu0
        %v2073 = vadd.f32 %v1744, %v2072
        %v2074 = vpop.f32.mrb[0].mxu0
        %v2075 = vpop.f32.mrb[0].mxu0
        %v2076 = vadd.f32 %v1747, %v2075
        %v2077 = vpop.f32.mrb[0].mxu0
        %2078 = vmatprep.mubr.bf16.mxu0 %v1151
        %2079 = vmatmul.mubr.bf16.gmra.mrb[0].mxu0 %v1150
        %v2080 = vpop.f32.mrb[0].mxu0
        %v2081 = vadd.f32 %v1752, %v2080
        %v2082 = vpop.f32.mrb[0].mxu0
        %v2083 = vpop.f32.mrb[0].mxu0
        %v2084 = vadd.f32 %v1755, %v2083
        %v2085 = vpop.f32.mrb[0].mxu0
        %2086 = vmatprep.mubr.bf16.mxu0 %v1154
        %2087 = vmatmul.mubr.bf16.gmra.mrb[0].mxu0 %v1153
        %v2088 = vpop.f32.mrb[0].mxu0
        %v2089 = vadd.f32 %v1760, %v2088
        %v2090 = vpop.f32.mrb[0].mxu0
        %v2091 = vpop.f32.mrb[0].mxu0
        %v2092 = vadd.f32 %v1763, %v2091
        %v2093 = vpop.f32.mrb[0].mxu0
        %2094 = vmatprep.mubr.bf16.mxu0 %v1157
        %2095 = vmatmul.mubr.bf16.gmra.mrb[0].mxu0 %v1156
        %v2096 = vpop.f32.mrb[0].mxu0
        %v2097 = vadd.f32 %v1768, %v2096
        %v2098 = vpop.f32.mrb[0].mxu0
        %v2099 = vpop.f32.mrb[0].mxu0
        %v2100 = vadd.f32 %v1771, %v2099
        %v2101 = vpop.f32.mrb[0].mxu0
        %2102 = vmatprep.mubr.bf16.mxu0 %v1160
        %2103 = vmatmul.mubr.bf16.gmra.mrb[0].mxu0 %v1159
        %v2104 = vpop.f32.mrb[0].mxu0
        %v2105 = vadd.f32 %v1776, %v2104
        %v2106 = vpop.f32.mrb[0].mxu0
        %v2107 = vpop.f32.mrb[0].mxu0
        %v2108 = vadd.f32 %v1779, %v2107
        %v2109 = vpop.f32.mrb[0].mxu0
        %2110 = vdwg.mxu0
        %2111 = vmatprep.subr.bf16.mxu0 0
        %2112 = vmatpush1.bf16.msra.mxu0 %v1878
        %2113 = vmatprep.subr.bf16.mxu0 0
        %2114 = vmatpush1.bf16.msra.mxu0 %v1879
        %2115 = vmatprep.subr.bf16.mxu0 0
        %2116 = vmatpush1.bf16.msra.mxu0 %v1880
        %2117 = vmatprep.subr.bf16.mxu0 0
        %2118 = vmatpush1.bf16.msra.mxu0 %v1881
        %2119 = vmatprep.subr.bf16.mxu0 0
        %2120 = vmatpush1.bf16.msra.mxu0 0
        %2121 = vmatprep.subr.bf16.mxu0 0
        %2122 = vmatpush1.bf16.msra.mxu0 0
        %2123 = vmatprep.subr.bf16.mxu0 0
        %2124 = vmatpush1.bf16.msra.mxu0 0
        %2125 = vmatprep.subr.bf16.mxu0 0
        %2126 = vmatpush1.bf16.msra.mxu0 0
        %2127 = vmatprep.subr.bf16.mxu0 0
        %2128 = vmatpush1.bf16.msra.mxu0 0
        %2129 = vmatprep.subr.bf16.mxu0 0
        %2130 = vmatpush1.bf16.msra.mxu0 0
        %2131 = vmatprep.subr.bf16.mxu0 0
        %2132 = vmatpush1.bf16.msra.mxu0 0
        %2133 = vmatprep.subr.bf16.mxu0 0
        %2134 = vmatpush1.bf16.msra.mxu0 0
        %2135 = vmatprep.subr.bf16.mxu0 0
        %2136 = vmatpush1.bf16.msra.mxu0 0
        %2137 = vmatprep.subr.bf16.mxu0 0
        %2138 = vmatpush1.bf16.msra.mxu0 0
        %2139 = vmatprep.subr.bf16.mxu0 0
        %2140 = vmatpush1.bf16.msra.mxu0 0
        %2141 = vmatprep.subr.bf16.mxu0 0
        %2142 = vmatpush1.bf16.msra.mxu0 0
        %2143 = vmatprep.mubr.bf16.mxu0 0
        %2144 = vmatmul.mubr.bf16.gmra.mrb[0].mxu0 %v1903
        %v2145 = vpop.f32.mrb[0].mxu0
        %v2146 = vadd.f32 %v1985, %v2145
        %v2147 = vpop.f32.mrb[0].mxu0
        %v2148 = vpop.f32.mrb[0].mxu0
        %v2149 = vadd.f32 %v1988, %v2148
        %v2150 = vpop.f32.mrb[0].mxu0
        %2151 = vmatprep.mubr.bf16.mxu0 0
        %2152 = vmatmul.mubr.bf16.gmra.mrb[0].mxu0 %v1906
        %v2153 = vpop.f32.mrb[0].mxu0
        %v2154 = vadd.f32 %v1993, %v2153
        %v2155 = vpop.f32.mrb[0].mxu0
        %v2156 = vpop.f32.mrb[0].mxu0
        %v2157 = vadd.f32 %v1996, %v2156
        %v2158 = vpop.f32.mrb[0].mxu0
        %2159 = vmatprep.mubr.bf16.mxu0 0
        %2160 = vmatmul.mubr.bf16.gmra.mrb[0].mxu0 %v1909
        %v2161 = vpop.f32.mrb[0].mxu0
        %v2162 = vadd.f32 %v2001, %v2161
        %v2163 = vpop.f32.mrb[0].mxu0
        %v2164 = vpop.f32.mrb[0].mxu0
        %v2165 = vadd.f32 %v2004, %v2164
        %v2166 = vpop.f32.mrb[0].mxu0
        %2167 = vmatprep.mubr.bf16.mxu0 0
        %2168 = vmatmul.mubr.bf16.gmra.mrb[0].mxu0 %v1912
        %v2169 = vpop.f32.mrb[0].mxu0
        %v2170 = vadd.f32 %v2009, %v2169
        %v2171 = vpop.f32.mrb[0].mxu0
        %v2172 = vpop.f32.mrb[0].mxu0
        %v2173 = vadd.f32 %v2012, %v2172
        %v2174 = vpop.f32.mrb[0].mxu0
        %2175 = vmatprep.mubr.bf16.mxu0 0
        %2176 = vmatmul.mubr.bf16.gmra.mrb[0].mxu0 %v1915
        %v2177 = vpop.f32.mrb[0].mxu0
        %v2178 = vadd.f32 %v2017, %v2177
        %v2179 = vpop.f32.mrb[0].mxu0
        %v2180 = vpop.f32.mrb[0].mxu0
        %v2181 = vadd.f32 %v2020, %v2180
        %v2182 = vpop.f32.mrb[0].mxu0
        %2183 = vmatprep.mubr.bf16.mxu0 0
        %2184 = vmatmul.mubr.bf16.gmra.mrb[0].mxu0 %v1918
        %v2185 = vpop.f32.mrb[0].mxu0
        %v2186 = vadd.f32 %v2025, %v2185
        %v2187 = vpop.f32.mrb[0].mxu0
        %v2188 = vpop.f32.mrb[0].mxu0
        %v2189 = vadd.f32 %v2028, %v2188
        %v2190 = vpop.f32.mrb[0].mxu0
        %2191 = vmatprep.mubr.bf16.mxu0 0
        %2192 = vmatmul.mubr.bf16.gmra.mrb[0].mxu0 %v1921
        %v2193 = vpop.f32.mrb[0].mxu0
        %v2194 = vadd.f32 %v2033, %v2193
        %v2195 = vpop.f32.mrb[0].mxu0
        %v2196 = vpop.f32.mrb[0].mxu0
        %v2197 = vadd.f32 %v2036, %v2196
        %v2198 = vpop.f32.mrb[0].mxu0
        %2199 = vmatprep.mubr.bf16.mxu0 0
        %2200 = vmatmul.mubr.bf16.gmra.mrb[0].mxu0 %v1924
        %v2201 = vpop.f32.mrb[0].mxu0
        %v2202 = vadd.f32 %v2041, %v2201
        %v2203 = vpop.f32.mrb[0].mxu0
        %v2204 = vpop.f32.mrb[0].mxu0
        %v2205 = vadd.f32 %v2044, %v2204
        %v2206 = vpop.f32.mrb[0].mxu0
        %2207 = vmatprep.mubr.bf16.mxu0 0
        %2208 = vmatmul.mubr.bf16.gmra.mrb[0].mxu0 %v1927
        %v2209 = vpop.f32.mrb[0].mxu0
        %v2210 = vadd.f32 %v2049, %v2209
        %v2211 = vpop.f32.mrb[0].mxu0
        %v2212 = vpop.f32.mrb[0].mxu0
        %v2213 = vadd.f32 %v2052, %v2212
        %v2214 = vpop.f32.mrb[0].mxu0
        %2215 = vmatprep.mubr.bf16.mxu0 0
        %2216 = vmatmul.mubr.bf16.gmra.mrb[0].mxu0 %v1930
        %v2217 = vpop.f32.mrb[0].mxu0
        %v2218 = vadd.f32 %v2057, %v2217
        %v2219 = vpop.f32.mrb[0].mxu0
        %v2220 = vpop.f32.mrb[0].mxu0
        %v2221 = vadd.f32 %v2060, %v2220
        %v2222 = vpop.f32.mrb[0].mxu0
        %2223 = vmatprep.mubr.bf16.mxu0 0
        %2224 = vmatmul.mubr.bf16.gmra.mrb[0].mxu0 %v1933
        %v2225 = vpop.f32.mrb[0].mxu0
        %v2226 = vadd.f32 %v2065, %v2225
        %v2227 = vpop.f32.mrb[0].mxu0
        %v2228 = vpop.f32.mrb[0].mxu0
        %v2229 = vadd.f32 %v2068, %v2228
        %v2230 = vpop.f32.mrb[0].mxu0
        %2231 = vmatprep.mubr.bf16.mxu0 0
        %2232 = vmatmul.mubr.bf16.gmra.mrb[0].mxu0 %v1936
        %v2233 = vpop.f32.mrb[0].mxu0
        %v2234 = vadd.f32 %v2073, %v2233
        %v2235 = vpop.f32.mrb[0].mxu0
        %v2236 = vpop.f32.mrb[0].mxu0
        %v2237 = vadd.f32 %v2076, %v2236
        %v2238 = vpop.f32.mrb[0].mxu0
        %2239 = vmatprep.mubr.bf16.mxu0 0
        %2240 = vmatmul.mubr.bf16.gmra.mrb[0].mxu0 %v1939
        %v2241 = vpop.f32.mrb[0].mxu0
        %v2242 = vadd.f32 %v2081, %v2241
        %v2243 = vpop.f32.mrb[0].mxu0
        %v2244 = vpop.f32.mrb[0].mxu0
        %v2245 = vadd.f32 %v2084, %v2244
        %v2246 = vpop.f32.mrb[0].mxu0
        %2247 = vmatprep.mubr.bf16.mxu0 0
        %2248 = vmatmul.mubr.bf16.gmra.mrb[0].mxu0 %v1942
        %v2249 = vpop.f32.mrb[0].mxu0
        %v2250 = vadd.f32 %v2089, %v2249
        %v2251 = vpop.f32.mrb[0].mxu0
        %v2252 = vpop.f32.mrb[0].mxu0
        %v2253 = vadd.f32 %v2092, %v2252
        %v2254 = vpop.f32.mrb[0].mxu0
        %2255 = vmatprep.mubr.bf16.mxu0 0
        %2256 = vmatmul.mubr.bf16.gmra.mrb[0].mxu0 %v1945
        %v2257 = vpop.f32.mrb[0].mxu0
        %v2258 = vadd.f32 %v2097, %v2257
        %v2259 = vpop.f32.mrb[0].mxu0
        %v2260 = vpop.f32.mrb[0].mxu0
        %v2261 = vadd.f32 %v2100, %v2260
        %v2262 = vpop.f32.mrb[0].mxu0
        %2263 = vmatprep.mubr.bf16.mxu0 0
        %2264 = vmatmul.mubr.bf16.gmra.mrb[0].mxu0 %v1948
        %v2265 = vpop.f32.mrb[0].mxu0
        %v2266 = vadd.f32 %v2105, %v2265
        %v2267 = vpop.f32.mrb[0].mxu0
        %v2268 = vpop.f32.mrb[0].mxu0
        %v2269 = vadd.f32 %v2108, %v2268
        %v2270 = vpop.f32.mrb[0].mxu0
        %2271 = vdwg.mxu0
        %v2272 = vld [vmem:[%s673] sm:$0xff]
        %v2273 = vld [vmem:[%s673 + $0x8] sm:$0xff]
        %v2274 = vld [vmem:[%s673 + $0x10] sm:$0xff]
        %v2275 = vld [vmem:[%s673 + $0x18] sm:$0xff]
        %v2276 = vld [vmem:[%s673 + $0x20] sm:$0xff]
        %v2277 = vld [vmem:[%s673 + $0x28] sm:$0xff]
        %v2278 = vld [vmem:[%s673 + $0x30] sm:$0xff]
        %v2279 = vld [vmem:[%s673 + $0x38] sm:$0xff]
        %v2280 = vld [vmem:[%s673 + $0x40] sm:$0xff]
        %v2281 = vld [vmem:[%s673 + $0x48] sm:$0xff]
        %v2282 = vld [vmem:[%s673 + $0x50] sm:$0xff]
        %v2283 = vld [vmem:[%s673 + $0x58] sm:$0xff]
        %v2284 = vld [vmem:[%s673 + $0x60] sm:$0xff]
        %v2285 = vld [vmem:[%s673 + $0x68] sm:$0xff]
        %v2286 = vld [vmem:[%s673 + $0x70] sm:$0xff]
        %v2287 = vld [vmem:[%s673 + $0x78] sm:$0xff]
        %v2288 = vld [vmem:[%s673 + $0x80] sm:$0xff]
        %v2289 = vld [vmem:[%s673 + $0x88] sm:$0xff]
        %v2290 = vld [vmem:[%s673 + $0x90] sm:$0xff]
        %v2291 = vld [vmem:[%s673 + $0x98] sm:$0xff]
        %v2292 = vld [vmem:[%s673 + $0xa0] sm:$0xff]
        %v2293 = vld [vmem:[%s673 + $0xa8] sm:$0xff]
        %v2294 = vld [vmem:[%s673 + $0xb0] sm:$0xff]
        %v2295 = vld [vmem:[%s673 + $0xb8] sm:$0xff]
        %v2296 = vld [vmem:[%s673 + $0xc0] sm:$0xff]
        %v2297 = vld [vmem:[%s673 + $0xc8] sm:$0xff]
        %v2298 = vld [vmem:[%s673 + $0xd0] sm:$0xff]
        %v2299 = vld [vmem:[%s673 + $0xd8] sm:$0xff]
        %v2300 = vld [vmem:[%s673 + $0xe0] sm:$0xff]
        %v2301 = vld [vmem:[%s673 + $0xe8] sm:$0xff]
        %v2302 = vld [vmem:[%s673 + $0xf0] sm:$0xff]
        %v2303 = vld [vmem:[%s673 + $0xf8] sm:$0xff]
        %v2304 = vld [vmem:[%s673 + $0x100] sm:$0xff]
        %v2305 = vld [vmem:[%s673 + $0x108] sm:$0xff]
        %v2306 = vld [vmem:[%s673 + $0x110] sm:$0xff]
        %v2307 = vld [vmem:[%s673 + $0x118] sm:$0xff]
        %v2308 = vld [vmem:[%s673 + $0x120] sm:$0xff]
        %v2309 = vld [vmem:[%s673 + $0x128] sm:$0xff]
        %v2310 = vld [vmem:[%s673 + $0x130] sm:$0xff]
        %v2311 = vld [vmem:[%s673 + $0x138] sm:$0xff]
        %v2312 = vld [vmem:[%s673 + $0x140] sm:$0xff]
        %v2313 = vld [vmem:[%s673 + $0x148] sm:$0xff]
        %v2314 = vld [vmem:[%s673 + $0x150] sm:$0xff]
        %v2315 = vld [vmem:[%s673 + $0x158] sm:$0xff]
        %v2316 = vld [vmem:[%s673 + $0x160] sm:$0xff]
        %v2317 = vld [vmem:[%s673 + $0x168] sm:$0xff]
        %v2318 = vld [vmem:[%s673 + $0x170] sm:$0xff]
        %v2319 = vld [vmem:[%s673 + $0x178] sm:$0xff]
        %s2320 = scalar_lea.vmem %s1, 320
        %v2321 = vld [vmem:[%s2320] sm:$0xf]
        %v2322 = vld [vmem:[%s2320 + $0x4] sm:$0xf]
        %v2323 = vld [vmem:[%s2320 + $0x8] sm:$0xf]
        %v2324 = vld [vmem:[%s2320 + $0xc] sm:$0xf]
        %v2325 = vld [vmem:[%s2320 + $0x10] sm:$0xf]
        %v2326 = vld [vmem:[%s2320 + $0x14] sm:$0xf]
        %v2327 = vld [vmem:[%s2320 + $0x18] sm:$0xf]
        %v2328 = vld [vmem:[%s2320 + $0x1c] sm:$0xf]
        %v2329 = vld [vmem:[%s2320 + $0x20] sm:$0xf]
        %v2330 = vld [vmem:[%s2320 + $0x24] sm:$0xf]
        %v2331 = vld [vmem:[%s2320 + $0x28] sm:$0xf]
        %v2332 = vld [vmem:[%s2320 + $0x2c] sm:$0xf]
        %v2333 = vld [vmem:[%s2320 + $0x30] sm:$0xf]
        %v2334 = vld [vmem:[%s2320 + $0x34] sm:$0xf]
        %v2335 = vld [vmem:[%s2320 + $0x38] sm:$0xf]
        %v2336 = vld [vmem:[%s2320 + $0x3c] sm:$0xf]
        %v2337 = vld [vmem:[%s2320 + $0x40] sm:$0xf]
        %v2338 = vld [vmem:[%s2320 + $0x44] sm:$0xf]
        %v2339 = vld [vmem:[%s2320 + $0x48] sm:$0xf]
        %v2340 = vld [vmem:[%s2320 + $0x4c] sm:$0xf]
        %v2341 = vld [vmem:[%s2320 + $0x50] sm:$0xf]
        %v2342 = vld [vmem:[%s2320 + $0x54] sm:$0xf]
        %v2343 = vld [vmem:[%s2320 + $0x58] sm:$0xf]
        %v2344 = vld [vmem:[%s2320 + $0x5c] sm:$0xf]
        %v2345 = vld [vmem:[%s2320 + $0x60] sm:$0xf]
        %v2346 = vld [vmem:[%s2320 + $0x64] sm:$0xf]
        %v2347 = vld [vmem:[%s2320 + $0x68] sm:$0xf]
        %v2348 = vld [vmem:[%s2320 + $0x6c] sm:$0xf]
        %v2349 = vld [vmem:[%s2320 + $0x70] sm:$0xf]
        %v2350 = vld [vmem:[%s2320 + $0x74] sm:$0xf]
        %v2351 = vld [vmem:[%s2320 + $0x78] sm:$0xf]
        %v2352 = vld [vmem:[%s2320 + $0x7c] sm:$0xf]
        %v2353 = vld [vmem:[%s2320 + $0x80] sm:$0xf]
        %v2354 = vld [vmem:[%s2320 + $0x84] sm:$0xf]
        %v2355 = vld [vmem:[%s2320 + $0x88] sm:$0xf]
        %v2356 = vld [vmem:[%s2320 + $0x8c] sm:$0xf]
        %v2357 = vld [vmem:[%s2320 + $0x90] sm:$0xf]
        %v2358 = vld [vmem:[%s2320 + $0x94] sm:$0xf]
        %v2359 = vld [vmem:[%s2320 + $0x98] sm:$0xf]
        %v2360 = vld [vmem:[%s2320 + $0x9c] sm:$0xf]
        %v2401 = vunpack.c.l.b16 %v2321
        %v2402 = vunpack.c.l.b16 %v2322
        %v2403 = vunpack.c.l.b16 %v2323
        %v2404 = vunpack.c.l.b16 %v2324
        %v2405 = vunpack.c.l.b16 %v2325
        %v2406 = vunpack.c.l.b16 %v2326
        %v2407 = vunpack.c.l.b16 %v2327
        %v2408 = vunpack.c.l.b16 %v2328
        %v2409 = vunpack.c.l.b16 %v2329
        %v2410 = vunpack.c.l.b16 %v2330
        %v2411 = vunpack.c.l.b16 %v2331
        %v2412 = vunpack.c.l.b16 %v2332
        %v2413 = vunpack.c.l.b16 %v2333
        %v2414 = vunpack.c.l.b16 %v2334
        %v2415 = vunpack.c.l.b16 %v2335
        %v2416 = vunpack.c.l.b16 %v2336
        %v2417 = vunpack.c.l.b16 %v2337
        %v2418 = vunpack.c.l.b16 %v2338
        %v2419 = vunpack.c.l.b16 %v2339
        %v2420 = vunpack.c.l.b16 %v2340
        %v2421 = vunpack.c.l.b16 %v2341
        %v2422 = vunpack.c.l.b16 %v2342
        %v2423 = vunpack.c.l.b16 %v2343
        %v2424 = vunpack.c.l.b16 %v2344
        %v2425 = vunpack.c.l.b16 %v2345
        %v2426 = vunpack.c.l.b16 %v2346
        %v2427 = vunpack.c.l.b16 %v2347
        %v2428 = vunpack.c.l.b16 %v2348
        %v2429 = vunpack.c.l.b16 %v2349
        %v2430 = vunpack.c.l.b16 %v2350
        %v2431 = vunpack.c.l.b16 %v2351
        %v2432 = vunpack.c.l.b16 %v2352
        %v2433 = vunpack.c.l.b16 %v2353
        %v2434 = vunpack.c.l.b16 %v2354
        %v2435 = vunpack.c.l.b16 %v2355
        %v2436 = vunpack.c.l.b16 %v2356
        %v2437 = vunpack.c.l.b16 %v2357
        %v2438 = vunpack.c.l.b16 %v2358
        %v2439 = vunpack.c.l.b16 %v2359
        %v2440 = vunpack.c.l.b16 %v2360
        %v2441 = vpack.c.b16 %v2402, %v2401
        %v2442 = vpack.c.b16 %v2404, %v2403
        %v2443 = vpack.c.b16 %v2406, %v2405
        %v2444 = vpack.c.b16 %v2408, %v2407
        %v2445 = vpack.c.b16 %v2410, %v2409
        %v2446 = vpack.c.b16 %v2412, %v2411
        %v2447 = vpack.c.b16 %v2414, %v2413
        %v2448 = vpack.c.b16 %v2416, %v2415
        %v2449 = vpack.c.b16 %v2418, %v2417
        %v2450 = vpack.c.b16 %v2420, %v2419
        %v2451 = vpack.c.b16 %v2422, %v2421
        %v2452 = vpack.c.b16 %v2424, %v2423
        %v2453 = vpack.c.b16 %v2426, %v2425
        %v2454 = vpack.c.b16 %v2428, %v2427
        %v2455 = vpack.c.b16 %v2430, %v2429
        %v2456 = vpack.c.b16 %v2432, %v2431
        %v2457 = vpack.c.b16 %v2434, %v2433
        %v2458 = vpack.c.b16 %v2436, %v2435
        %v2459 = vpack.c.b16 %v2438, %v2437
        %v2460 = vpack.c.b16 %v2440, %v2439
        %v2482 = vsel %vm918, %v2274, 0
        %v2485 = vsel %vm918, %v2277, 0
        %v2488 = vsel %vm918, %v2280, 0
        %v2491 = vsel %vm918, %v2283, 0
        %v2494 = vsel %vm918, %v2286, 0
        %v2497 = vsel %vm918, %v2289, 0
        %v2500 = vsel %vm918, %v2292, 0
        %v2503 = vsel %vm918, %v2295, 0
        %v2506 = vsel %vm918, %v2298, 0
        %v2509 = vsel %vm918, %v2301, 0
        %v2512 = vsel %vm918, %v2304, 0
        %v2515 = vsel %vm918, %v2307, 0
        %v2518 = vsel %vm918, %v2310, 0
        %v2521 = vsel %vm918, %v2313, 0
        %v2524 = vsel %vm918, %v2316, 0
        %v2527 = vsel %vm918, %v2319, 0
        %2529 = vmatprep.subr.bf16.mxu0 0
        %2530 = vmatpush1.bf16.msra.mxu0 %v2441
        %2531 = vmatprep.subr.bf16.mxu0 0
        %2532 = vmatpush1.bf16.msra.mxu0 %v2442
        %2533 = vmatprep.subr.bf16.mxu0 0
        %2534 = vmatpush1.bf16.msra.mxu0 %v2443
        %2535 = vmatprep.subr.bf16.mxu0 0
        %2536 = vmatpush1.bf16.msra.mxu0 %v2444
        %2537 = vmatprep.subr.bf16.mxu0 0
        %2538 = vmatpush1.bf16.msra.mxu0 %v2445
        %2539 = vmatprep.subr.bf16.mxu0 0
        %2540 = vmatpush1.bf16.msra.mxu0 %v2446
        %2541 = vmatprep.subr.bf16.mxu0 0
        %2542 = vmatpush1.bf16.msra.mxu0 %v2447
        %2543 = vmatprep.subr.bf16.mxu0 0
        %2544 = vmatpush1.bf16.msra.mxu0 %v2448
        %2545 = vmatprep.subr.bf16.mxu0 0
        %2546 = vmatpush1.bf16.msra.mxu0 %v2449
        %2547 = vmatprep.subr.bf16.mxu0 0
        %2548 = vmatpush1.bf16.msra.mxu0 %v2450
        %2549 = vmatprep.subr.bf16.mxu0 0
        %2550 = vmatpush1.bf16.msra.mxu0 %v2451
        %2551 = vmatprep.subr.bf16.mxu0 0
        %2552 = vmatpush1.bf16.msra.mxu0 %v2452
        %2553 = vmatprep.subr.bf16.mxu0 0
        %2554 = vmatpush1.bf16.msra.mxu0 %v2453
        %2555 = vmatprep.subr.bf16.mxu0 0
        %2556 = vmatpush1.bf16.msra.mxu0 %v2454
        %2557 = vmatprep.subr.bf16.mxu0 0
        %2558 = vmatpush1.bf16.msra.mxu0 %v2455
        %2559 = vmatprep.subr.bf16.mxu0 0
        %2560 = vmatpush1.bf16.msra.mxu0 %v2456
        %2561 = vmatprep.mubr.bf16.mxu0 %v2273
        %2562 = vmatmul.mubr.bf16.gmra.mrb[0].mxu0 %v2272
        %v2563 = vpop.f32.mrb[0].mxu0
        %v2564 = vadd.f32 0.0, %v2563
        %v2565 = vpop.f32.mrb[0].mxu0
        %v2566 = vpop.f32.mrb[0].mxu0
        %v2567 = vadd.f32 0.0, %v2566
        %v2568 = vpop.f32.mrb[0].mxu0
        %2569 = vmatprep.mubr.bf16.mxu0 %v2276
        %2570 = vmatmul.mubr.bf16.gmra.mrb[0].mxu0 %v2275
        %v2571 = vpop.f32.mrb[0].mxu0
        %v2572 = vadd.f32 0.0, %v2571
        %v2573 = vpop.f32.mrb[0].mxu0
        %v2574 = vpop.f32.mrb[0].mxu0
        %v2575 = vadd.f32 0.0, %v2574
        %v2576 = vpop.f32.mrb[0].mxu0
        %2577 = vmatprep.mubr.bf16.mxu0 %v2279
        %2578 = vmatmul.mubr.bf16.gmra.mrb[0].mxu0 %v2278
        %v2579 = vpop.f32.mrb[0].mxu0
        %v2580 = vadd.f32 0.0, %v2579
        %v2581 = vpop.f32.mrb[0].mxu0
        %v2582 = vpop.f32.mrb[0].mxu0
        %v2583 = vadd.f32 0.0, %v2582
        %v2584 = vpop.f32.mrb[0].mxu0
        %2585 = vmatprep.mubr.bf16.mxu0 %v2282
        %2586 = vmatmul.mubr.bf16.gmra.mrb[0].mxu0 %v2281
        %v2587 = vpop.f32.mrb[0].mxu0
        %v2588 = vadd.f32 0.0, %v2587
        %v2589 = vpop.f32.mrb[0].mxu0
        %v2590 = vpop.f32.mrb[0].mxu0
        %v2591 = vadd.f32 0.0, %v2590
        %v2592 = vpop.f32.mrb[0].mxu0
        %2593 = vmatprep.mubr.bf16.mxu0 %v2285
        %2594 = vmatmul.mubr.bf16.gmra.mrb[0].mxu0 %v2284
        %v2595 = vpop.f32.mrb[0].mxu0
        %v2596 = vadd.f32 0.0, %v2595
        %v2597 = vpop.f32.mrb[0].mxu0
        %v2598 = vpop.f32.mrb[0].mxu0
        %v2599 = vadd.f32 0.0, %v2598
        %v2600 = vpop.f32.mrb[0].mxu0
        %2601 = vmatprep.mubr.bf16.mxu0 %v2288
        %2602 = vmatmul.mubr.bf16.gmra.mrb[0].mxu0 %v2287
        %v2603 = vpop.f32.mrb[0].mxu0
        %v2604 = vadd.f32 0.0, %v2603
        %v2605 = vpop.f32.mrb[0].mxu0
        %v2606 = vpop.f32.mrb[0].mxu0
        %v2607 = vadd.f32 0.0, %v2606
        %v2608 = vpop.f32.mrb[0].mxu0
        %2609 = vmatprep.mubr.bf16.mxu0 %v2291
        %2610 = vmatmul.mubr.bf16.gmra.mrb[0].mxu0 %v2290
        %v2611 = vpop.f32.mrb[0].mxu0
        %v2612 = vadd.f32 0.0, %v2611
        %v2613 = vpop.f32.mrb[0].mxu0
        %v2614 = vpop.f32.mrb[0].mxu0
        %v2615 = vadd.f32 0.0, %v2614
        %v2616 = vpop.f32.mrb[0].mxu0
        %2617 = vmatprep.mubr.bf16.mxu0 %v2294
        %2618 = vmatmul.mubr.bf16.gmra.mrb[0].mxu0 %v2293
        %v2619 = vpop.f32.mrb[0].mxu0
        %v2620 = vadd.f32 0.0, %v2619
        %v2621 = vpop.f32.mrb[0].mxu0
        %v2622 = vpop.f32.mrb[0].mxu0
        %v2623 = vadd.f32 0.0, %v2622
        %v2624 = vpop.f32.mrb[0].mxu0
        %2625 = vmatprep.mubr.bf16.mxu0 %v2297
        %2626 = vmatmul.mubr.bf16.gmra.mrb[0].mxu0 %v2296
        %v2627 = vpop.f32.mrb[0].mxu0
        %v2628 = vadd.f32 0.0, %v2627
        %v2629 = vpop.f32.mrb[0].mxu0
        %v2630 = vpop.f32.mrb[0].mxu0
        %v2631 = vadd.f32 0.0, %v2630
        %v2632 = vpop.f32.mrb[0].mxu0
        %2633 = vmatprep.mubr.bf16.mxu0 %v2300
        %2634 = vmatmul.mubr.bf16.gmra.mrb[0].mxu0 %v2299
        %v2635 = vpop.f32.mrb[0].mxu0
        %v2636 = vadd.f32 0.0, %v2635
        %v2637 = vpop.f32.mrb[0].mxu0
        %v2638 = vpop.f32.mrb[0].mxu0
        %v2639 = vadd.f32 0.0, %v2638
        %v2640 = vpop.f32.mrb[0].mxu0
        %2641 = vmatprep.mubr.bf16.mxu0 %v2303
        %2642 = vmatmul.mubr.bf16.gmra.mrb[0].mxu0 %v2302
        %v2643 = vpop.f32.mrb[0].mxu0
        %v2644 = vadd.f32 0.0, %v2643
        %v2645 = vpop.f32.mrb[0].mxu0
        %v2646 = vpop.f32.mrb[0].mxu0
        %v2647 = vadd.f32 0.0, %v2646
        %v2648 = vpop.f32.mrb[0].mxu0
        %2649 = vmatprep.mubr.bf16.mxu0 %v2306
        %2650 = vmatmul.mubr.bf16.gmra.mrb[0].mxu0 %v2305
        %v2651 = vpop.f32.mrb[0].mxu0
        %v2652 = vadd.f32 0.0, %v2651
        %v2653 = vpop.f32.mrb[0].mxu0
        %v2654 = vpop.f32.mrb[0].mxu0
        %v2655 = vadd.f32 0.0, %v2654
        %v2656 = vpop.f32.mrb[0].mxu0
        %2657 = vmatprep.mubr.bf16.mxu0 %v2309
        %2658 = vmatmul.mubr.bf16.gmra.mrb[0].mxu0 %v2308
        %v2659 = vpop.f32.mrb[0].mxu0
        %v2660 = vadd.f32 0.0, %v2659
        %v2661 = vpop.f32.mrb[0].mxu0
        %v2662 = vpop.f32.mrb[0].mxu0
        %v2663 = vadd.f32 0.0, %v2662
        %v2664 = vpop.f32.mrb[0].mxu0
        %2665 = vmatprep.mubr.bf16.mxu0 %v2312
        %2666 = vmatmul.mubr.bf16.gmra.mrb[0].mxu0 %v2311
        %v2667 = vpop.f32.mrb[0].mxu0
        %v2668 = vadd.f32 0.0, %v2667
        %v2669 = vpop.f32.mrb[0].mxu0
        %v2670 = vpop.f32.mrb[0].mxu0
        %v2671 = vadd.f32 0.0, %v2670
        %v2672 = vpop.f32.mrb[0].mxu0
        %2673 = vmatprep.mubr.bf16.mxu0 %v2315
        %2674 = vmatmul.mubr.bf16.gmra.mrb[0].mxu0 %v2314
        %v2675 = vpop.f32.mrb[0].mxu0
        %v2676 = vadd.f32 0.0, %v2675
        %v2677 = vpop.f32.mrb[0].mxu0
        %v2678 = vpop.f32.mrb[0].mxu0
        %v2679 = vadd.f32 0.0, %v2678
        %v2680 = vpop.f32.mrb[0].mxu0
        %2681 = vmatprep.mubr.bf16.mxu0 %v2318
        %2682 = vmatmul.mubr.bf16.gmra.mrb[0].mxu0 %v2317
        %v2683 = vpop.f32.mrb[0].mxu0
        %v2684 = vadd.f32 0.0, %v2683
        %v2685 = vpop.f32.mrb[0].mxu0
        %v2686 = vpop.f32.mrb[0].mxu0
        %v2687 = vadd.f32 0.0, %v2686
        %v2688 = vpop.f32.mrb[0].mxu0
        %2689 = vdwg.mxu0
        %2690 = vmatprep.subr.bf16.mxu0 0
        %2691 = vmatpush1.bf16.msra.mxu0 %v2457
        %2692 = vmatprep.subr.bf16.mxu0 0
        %2693 = vmatpush1.bf16.msra.mxu0 %v2458
        %2694 = vmatprep.subr.bf16.mxu0 0
        %2695 = vmatpush1.bf16.msra.mxu0 %v2459
        %2696 = vmatprep.subr.bf16.mxu0 0
        %2697 = vmatpush1.bf16.msra.mxu0 %v2460
        %2698 = vmatprep.subr.bf16.mxu0 0
        %2699 = vmatpush1.bf16.msra.mxu0 0
        %2700 = vmatprep.subr.bf16.mxu0 0
        %2701 = vmatpush1.bf16.msra.mxu0 0
        %2702 = vmatprep.subr.bf16.mxu0 0
        %2703 = vmatpush1.bf16.msra.mxu0 0
        %2704 = vmatprep.subr.bf16.mxu0 0
        %2705 = vmatpush1.bf16.msra.mxu0 0
        %2706 = vmatprep.subr.bf16.mxu0 0
        %2707 = vmatpush1.bf16.msra.mxu0 0
        %2708 = vmatprep.subr.bf16.mxu0 0
        %2709 = vmatpush1.bf16.msra.mxu0 0
        %2710 = vmatprep.subr.bf16.mxu0 0
        %2711 = vmatpush1.bf16.msra.mxu0 0
        %2712 = vmatprep.subr.bf16.mxu0 0
        %2713 = vmatpush1.bf16.msra.mxu0 0
        %2714 = vmatprep.subr.bf16.mxu0 0
        %2715 = vmatpush1.bf16.msra.mxu0 0
        %2716 = vmatprep.subr.bf16.mxu0 0
        %2717 = vmatpush1.bf16.msra.mxu0 0
        %2718 = vmatprep.subr.bf16.mxu0 0
        %2719 = vmatpush1.bf16.msra.mxu0 0
        %2720 = vmatprep.subr.bf16.mxu0 0
        %2721 = vmatpush1.bf16.msra.mxu0 0
        %2722 = vmatprep.mubr.bf16.mxu0 0
        %2723 = vmatmul.mubr.bf16.gmra.mrb[0].mxu0 %v2482
        %v2724 = vpop.f32.mrb[0].mxu0
        %v2725 = vadd.f32 %v2564, %v2724
        %v2726 = vpop.f32.mrb[0].mxu0
        %v2727 = vpop.f32.mrb[0].mxu0
        %v2728 = vadd.f32 %v2567, %v2727
        %v2729 = vpop.f32.mrb[0].mxu0
        %2730 = vmatprep.mubr.bf16.mxu0 0
        %2731 = vmatmul.mubr.bf16.gmra.mrb[0].mxu0 %v2485
        %v2732 = vpop.f32.mrb[0].mxu0
        %v2733 = vadd.f32 %v2572, %v2732
        %v2734 = vpop.f32.mrb[0].mxu0
        %v2735 = vpop.f32.mrb[0].mxu0
        %v2736 = vadd.f32 %v2575, %v2735
        %v2737 = vpop.f32.mrb[0].mxu0
        %2738 = vmatprep.mubr.bf16.mxu0 0
        %2739 = vmatmul.mubr.bf16.gmra.mrb[0].mxu0 %v2488
        %v2740 = vpop.f32.mrb[0].mxu0
        %v2741 = vadd.f32 %v2580, %v2740
        %v2742 = vpop.f32.mrb[0].mxu0
        %v2743 = vpop.f32.mrb[0].mxu0
        %v2744 = vadd.f32 %v2583, %v2743
        %v2745 = vpop.f32.mrb[0].mxu0
        %2746 = vmatprep.mubr.bf16.mxu0 0
        %2747 = vmatmul.mubr.bf16.gmra.mrb[0].mxu0 %v2491
        %v2748 = vpop.f32.mrb[0].mxu0
        %v2749 = vadd.f32 %v2588, %v2748
        %v2750 = vpop.f32.mrb[0].mxu0
        %v2751 = vpop.f32.mrb[0].mxu0
        %v2752 = vadd.f32 %v2591, %v2751
        %v2753 = vpop.f32.mrb[0].mxu0
        %2754 = vmatprep.mubr.bf16.mxu0 0
        %2755 = vmatmul.mubr.bf16.gmra.mrb[0].mxu0 %v2494
        %v2756 = vpop.f32.mrb[0].mxu0
        %v2757 = vadd.f32 %v2596, %v2756
        %v2758 = vpop.f32.mrb[0].mxu0
        %v2759 = vpop.f32.mrb[0].mxu0
        %v2760 = vadd.f32 %v2599, %v2759
        %v2761 = vpop.f32.mrb[0].mxu0
        %2762 = vmatprep.mubr.bf16.mxu0 0
        %2763 = vmatmul.mubr.bf16.gmra.mrb[0].mxu0 %v2497
        %v2764 = vpop.f32.mrb[0].mxu0
        %v2765 = vadd.f32 %v2604, %v2764
        %v2766 = vpop.f32.mrb[0].mxu0
        %v2767 = vpop.f32.mrb[0].mxu0
        %v2768 = vadd.f32 %v2607, %v2767
        %v2769 = vpop.f32.mrb[0].mxu0
        %2770 = vmatprep.mubr.bf16.mxu0 0
        %2771 = vmatmul.mubr.bf16.gmra.mrb[0].mxu0 %v2500
        %v2772 = vpop.f32.mrb[0].mxu0
        %v2773 = vadd.f32 %v2612, %v2772
        %v2774 = vpop.f32.mrb[0].mxu0
        %v2775 = vpop.f32.mrb[0].mxu0
        %v2776 = vadd.f32 %v2615, %v2775
        %v2777 = vpop.f32.mrb[0].mxu0
        %2778 = vmatprep.mubr.bf16.mxu0 0
        %2779 = vmatmul.mubr.bf16.gmra.mrb[0].mxu0 %v2503
        %v2780 = vpop.f32.mrb[0].mxu0
        %v2781 = vadd.f32 %v2620, %v2780
        %v2782 = vpop.f32.mrb[0].mxu0
        %v2783 = vpop.f32.mrb[0].mxu0
        %v2784 = vadd.f32 %v2623, %v2783
        %v2785 = vpop.f32.mrb[0].mxu0
        %2786 = vmatprep.mubr.bf16.mxu0 0
        %2787 = vmatmul.mubr.bf16.gmra.mrb[0].mxu0 %v2506
        %v2788 = vpop.f32.mrb[0].mxu0
        %v2789 = vadd.f32 %v2628, %v2788
        %v2790 = vpop.f32.mrb[0].mxu0
        %v2791 = vpop.f32.mrb[0].mxu0
        %v2792 = vadd.f32 %v2631, %v2791
        %v2793 = vpop.f32.mrb[0].mxu0
        %2794 = vmatprep.mubr.bf16.mxu0 0
        %2795 = vmatmul.mubr.bf16.gmra.mrb[0].mxu0 %v2509
        %v2796 = vpop.f32.mrb[0].mxu0
        %v2797 = vadd.f32 %v2636, %v2796
        %v2798 = vpop.f32.mrb[0].mxu0
        %v2799 = vpop.f32.mrb[0].mxu0
        %v2800 = vadd.f32 %v2639, %v2799
        %v2801 = vpop.f32.mrb[0].mxu0
        %2802 = vmatprep.mubr.bf16.mxu0 0
        %2803 = vmatmul.mubr.bf16.gmra.mrb[0].mxu0 %v2512
        %v2804 = vpop.f32.mrb[0].mxu0
        %v2805 = vadd.f32 %v2644, %v2804
        %v2806 = vpop.f32.mrb[0].mxu0
        %v2807 = vpop.f32.mrb[0].mxu0
        %v2808 = vadd.f32 %v2647, %v2807
        %v2809 = vpop.f32.mrb[0].mxu0
        %2810 = vmatprep.mubr.bf16.mxu0 0
        %2811 = vmatmul.mubr.bf16.gmra.mrb[0].mxu0 %v2515
        %v2812 = vpop.f32.mrb[0].mxu0
        %v2813 = vadd.f32 %v2652, %v2812
        %v2814 = vpop.f32.mrb[0].mxu0
        %v2815 = vpop.f32.mrb[0].mxu0
        %v2816 = vadd.f32 %v2655, %v2815
        %v2817 = vpop.f32.mrb[0].mxu0
        %2818 = vmatprep.mubr.bf16.mxu0 0
        %2819 = vmatmul.mubr.bf16.gmra.mrb[0].mxu0 %v2518
        %v2820 = vpop.f32.mrb[0].mxu0
        %v2821 = vadd.f32 %v2660, %v2820
        %v2822 = vpop.f32.mrb[0].mxu0
        %v2823 = vpop.f32.mrb[0].mxu0
        %v2824 = vadd.f32 %v2663, %v2823
        %v2825 = vpop.f32.mrb[0].mxu0
        %2826 = vmatprep.mubr.bf16.mxu0 0
        %2827 = vmatmul.mubr.bf16.gmra.mrb[0].mxu0 %v2521
        %v2828 = vpop.f32.mrb[0].mxu0
        %v2829 = vadd.f32 %v2668, %v2828
        %v2830 = vpop.f32.mrb[0].mxu0
        %v2831 = vpop.f32.mrb[0].mxu0
        %v2832 = vadd.f32 %v2671, %v2831
        %v2833 = vpop.f32.mrb[0].mxu0
        %2834 = vmatprep.mubr.bf16.mxu0 0
        %2835 = vmatmul.mubr.bf16.gmra.mrb[0].mxu0 %v2524
        %v2836 = vpop.f32.mrb[0].mxu0
        %v2837 = vadd.f32 %v2676, %v2836
        %v2838 = vpop.f32.mrb[0].mxu0
        %v2839 = vpop.f32.mrb[0].mxu0
        %v2840 = vadd.f32 %v2679, %v2839
        %v2841 = vpop.f32.mrb[0].mxu0
        %2842 = vmatprep.mubr.bf16.mxu0 0
        %2843 = vmatmul.mubr.bf16.gmra.mrb[0].mxu0 %v2527
        %v2844 = vpop.f32.mrb[0].mxu0
        %v2845 = vadd.f32 %v2684, %v2844
        %v2846 = vpop.f32.mrb[0].mxu0
        %v2847 = vpop.f32.mrb[0].mxu0
        %v2848 = vadd.f32 %v2687, %v2847
        %v2849 = vpop.f32.mrb[0].mxu0
        %2850 = vdwg.mxu0
        %v2851 = vadd.f32 %v2146, %v2725
        %v2852 = vadd.f32 %v2149, %v2728
        %v2853 = vadd.f32 %v2154, %v2733
        %v2854 = vadd.f32 %v2157, %v2736
        %v2855 = vadd.f32 %v2162, %v2741
        %v2856 = vadd.f32 %v2165, %v2744
        %v2857 = vadd.f32 %v2170, %v2749
        %v2858 = vadd.f32 %v2173, %v2752
        %v2859 = vadd.f32 %v2178, %v2757
        %v2860 = vadd.f32 %v2181, %v2760
        %v2861 = vadd.f32 %v2186, %v2765
        %v2862 = vadd.f32 %v2189, %v2768
        %v2863 = vadd.f32 %v2194, %v2773
        %v2864 = vadd.f32 %v2197, %v2776
        %v2865 = vadd.f32 %v2202, %v2781
        %v2866 = vadd.f32 %v2205, %v2784
        %v2867 = vadd.f32 %v2210, %v2789
        %v2868 = vadd.f32 %v2213, %v2792
        %v2869 = vadd.f32 %v2218, %v2797
        %v2870 = vadd.f32 %v2221, %v2800
        %v2871 = vadd.f32 %v2226, %v2805
        %v2872 = vadd.f32 %v2229, %v2808
        %v2873 = vadd.f32 %v2234, %v2813
        %v2874 = vadd.f32 %v2237, %v2816
        %v2875 = vadd.f32 %v2242, %v2821
        %v2876 = vadd.f32 %v2245, %v2824
        %v2877 = vadd.f32 %v2250, %v2829
        %v2878 = vadd.f32 %v2253, %v2832
        %v2879 = vadd.f32 %v2258, %v2837
        %v2880 = vadd.f32 %v2261, %v2840
        %v2881 = vadd.f32 %v2266, %v2845
        %v2882 = vadd.f32 %v2269, %v2848
        %s2883 = scalar_lea.vmem [#allocation2], 72
        %v2884 = vld [vmem:[%s2883] sm:$0xff]
        %v2885 = vld [vmem:[%s2883 + $0x8] sm:$0xff]
        %v2886 = vld [vmem:[%s2883 + $0x10] sm:$0xff]
        %v2887 = vld [vmem:[%s2883 + $0x18] sm:$0xff]
        %v2888 = vld [vmem:[%s2883 + $0x20] sm:$0xff]
        %v2889 = vld [vmem:[%s2883 + $0x28] sm:$0xff]
        %v2890 = vld [vmem:[%s2883 + $0x30] sm:$0xff]
        %v2891 = vld [vmem:[%s2883 + $0x38] sm:$0xff]
        %v2892 = vld [vmem:[%s2883 + $0x40] sm:$0xff]
        %v2893 = vld [vmem:[%s2883 + $0x48] sm:$0xff]
        %v2894 = vld [vmem:[%s2883 + $0x50] sm:$0xff]
        %v2895 = vld [vmem:[%s2883 + $0x58] sm:$0xff]
        %v2896 = vld [vmem:[%s2883 + $0x60] sm:$0xff]
        %v2897 = vld [vmem:[%s2883 + $0x68] sm:$0xff]
        %v2898 = vld [vmem:[%s2883 + $0x70] sm:$0xff]
        %v2899 = vld [vmem:[%s2883 + $0x78] sm:$0xff]
        %v2900 = vld [vmem:[%s2883 + $0x80] sm:$0xff]
        %v2901 = vld [vmem:[%s2883 + $0x88] sm:$0xff]
        %v2902 = vld [vmem:[%s2883 + $0x90] sm:$0xff]
        %v2903 = vld [vmem:[%s2883 + $0x98] sm:$0xff]
        %v2904 = vld [vmem:[%s2883 + $0xa0] sm:$0xff]
        %v2905 = vld [vmem:[%s2883 + $0xa8] sm:$0xff]
        %v2906 = vld [vmem:[%s2883 + $0xb0] sm:$0xff]
        %v2907 = vld [vmem:[%s2883 + $0xb8] sm:$0xff]
        %v2908 = vld [vmem:[%s2883 + $0xc0] sm:$0xff]
        %v2909 = vld [vmem:[%s2883 + $0xc8] sm:$0xff]
        %v2910 = vld [vmem:[%s2883 + $0xd0] sm:$0xff]
        %v2911 = vld [vmem:[%s2883 + $0xd8] sm:$0xff]
        %v2912 = vld [vmem:[%s2883 + $0xe0] sm:$0xff]
        %v2913 = vld [vmem:[%s2883 + $0xe8] sm:$0xff]
        %v2914 = vld [vmem:[%s2883 + $0xf0] sm:$0xff]
        %v2915 = vld [vmem:[%s2883 + $0xf8] sm:$0xff]
        %v2916 = vld [vmem:[%s2883 + $0x100] sm:$0xff]
        %v2917 = vld [vmem:[%s2883 + $0x108] sm:$0xff]
        %v2918 = vld [vmem:[%s2883 + $0x110] sm:$0xff]
        %v2919 = vld [vmem:[%s2883 + $0x118] sm:$0xff]
        %v2920 = vld [vmem:[%s2883 + $0x120] sm:$0xff]
        %v2921 = vld [vmem:[%s2883 + $0x128] sm:$0xff]
        %v2922 = vld [vmem:[%s2883 + $0x130] sm:$0xff]
        %v2923 = vld [vmem:[%s2883 + $0x138] sm:$0xff]
        %v2924 = vld [vmem:[%s2883 + $0x140] sm:$0xff]
        %v2925 = vld [vmem:[%s2883 + $0x148] sm:$0xff]
        %v2926 = vld [vmem:[%s2883 + $0x150] sm:$0xff]
        %v2927 = vld [vmem:[%s2883 + $0x158] sm:$0xff]
        %v2928 = vld [vmem:[%s2883 + $0x160] sm:$0xff]
        %v2929 = vld [vmem:[%s2883 + $0x168] sm:$0xff]
        %v2930 = vld [vmem:[%s2883 + $0x170] sm:$0xff]
        %v2931 = vld [vmem:[%s2883 + $0x178] sm:$0xff]
        %s2932 = scalar_lea.vmem %s1, 480
        %v2933 = vld [vmem:[%s2932] sm:$0xf]
        %v2934 = vld [vmem:[%s2932 + $0x4] sm:$0xf]
        %v2935 = vld [vmem:[%s2932 + $0x8] sm:$0xf]
        %v2936 = vld [vmem:[%s2932 + $0xc] sm:$0xf]
        %v2937 = vld [vmem:[%s2932 + $0x10] sm:$0xf]
        %v2938 = vld [vmem:[%s2932 + $0x14] sm:$0xf]
        %v2939 = vld [vmem:[%s2932 + $0x18] sm:$0xf]
        %v2940 = vld [vmem:[%s2932 + $0x1c] sm:$0xf]
        %v2941 = vld [vmem:[%s2932 + $0x20] sm:$0xf]
        %v2942 = vld [vmem:[%s2932 + $0x24] sm:$0xf]
        %v2943 = vld [vmem:[%s2932 + $0x28] sm:$0xf]
        %v2944 = vld [vmem:[%s2932 + $0x2c] sm:$0xf]
        %v2945 = vld [vmem:[%s2932 + $0x30] sm:$0xf]
        %v2946 = vld [vmem:[%s2932 + $0x34] sm:$0xf]
        %v2947 = vld [vmem:[%s2932 + $0x38] sm:$0xf]
        %v2948 = vld [vmem:[%s2932 + $0x3c] sm:$0xf]
        %v2949 = vld [vmem:[%s2932 + $0x40] sm:$0xf]
        %v2950 = vld [vmem:[%s2932 + $0x44] sm:$0xf]
        %v2951 = vld [vmem:[%s2932 + $0x48] sm:$0xf]
        %v2952 = vld [vmem:[%s2932 + $0x4c] sm:$0xf]
        %v2953 = vld [vmem:[%s2932 + $0x50] sm:$0xf]
        %v2954 = vld [vmem:[%s2932 + $0x54] sm:$0xf]
        %v2955 = vld [vmem:[%s2932 + $0x58] sm:$0xf]
        %v2956 = vld [vmem:[%s2932 + $0x5c] sm:$0xf]
        %v2957 = vld [vmem:[%s2932 + $0x60] sm:$0xf]
        %v2958 = vld [vmem:[%s2932 + $0x64] sm:$0xf]
        %v2959 = vld [vmem:[%s2932 + $0x68] sm:$0xf]
        %v2960 = vld [vmem:[%s2932 + $0x6c] sm:$0xf]
        %v2961 = vld [vmem:[%s2932 + $0x70] sm:$0xf]
        %v2962 = vld [vmem:[%s2932 + $0x74] sm:$0xf]
        %v2963 = vld [vmem:[%s2932 + $0x78] sm:$0xf]
        %v2964 = vld [vmem:[%s2932 + $0x7c] sm:$0xf]
        %v2965 = vld [vmem:[%s2932 + $0x80] sm:$0xf]
        %v2966 = vld [vmem:[%s2932 + $0x84] sm:$0xf]
        %v2967 = vld [vmem:[%s2932 + $0x88] sm:$0xf]
        %v2968 = vld [vmem:[%s2932 + $0x8c] sm:$0xf]
        %v2969 = vld [vmem:[%s2932 + $0x90] sm:$0xf]
        %v2970 = vld [vmem:[%s2932 + $0x94] sm:$0xf]
        %v2971 = vld [vmem:[%s2932 + $0x98] sm:$0xf]
        %v2972 = vld [vmem:[%s2932 + $0x9c] sm:$0xf]
        %v3013 = vunpack.c.l.b16 %v2933
        %v3014 = vunpack.c.l.b16 %v2934
        %v3015 = vunpack.c.l.b16 %v2935
        %v3016 = vunpack.c.l.b16 %v2936
        %v3017 = vunpack.c.l.b16 %v2937
        %v3018 = vunpack.c.l.b16 %v2938
        %v3019 = vunpack.c.l.b16 %v2939
        %v3020 = vunpack.c.l.b16 %v2940
        %v3021 = vunpack.c.l.b16 %v2941
        %v3022 = vunpack.c.l.b16 %v2942
        %v3023 = vunpack.c.l.b16 %v2943
        %v3024 = vunpack.c.l.b16 %v2944
        %v3025 = vunpack.c.l.b16 %v2945
        %v3026 = vunpack.c.l.b16 %v2946
        %v3027 = vunpack.c.l.b16 %v2947
        %v3028 = vunpack.c.l.b16 %v2948
        %v3029 = vunpack.c.l.b16 %v2949
        %v3030 = vunpack.c.l.b16 %v2950
        %v3031 = vunpack.c.l.b16 %v2951
        %v3032 = vunpack.c.l.b16 %v2952
        %v3033 = vunpack.c.l.b16 %v2953
        %v3034 = vunpack.c.l.b16 %v2954
        %v3035 = vunpack.c.l.b16 %v2955
        %v3036 = vunpack.c.l.b16 %v2956
        %v3037 = vunpack.c.l.b16 %v2957
        %v3038 = vunpack.c.l.b16 %v2958
        %v3039 = vunpack.c.l.b16 %v2959
        %v3040 = vunpack.c.l.b16 %v2960
        %v3041 = vunpack.c.l.b16 %v2961
        %v3042 = vunpack.c.l.b16 %v2962
        %v3043 = vunpack.c.l.b16 %v2963
        %v3044 = vunpack.c.l.b16 %v2964
        %v3045 = vunpack.c.l.b16 %v2965
        %v3046 = vunpack.c.l.b16 %v2966
        %v3047 = vunpack.c.l.b16 %v2967
        %v3048 = vunpack.c.l.b16 %v2968
        %v3049 = vunpack.c.l.b16 %v2969
        %v3050 = vunpack.c.l.b16 %v2970
        %v3051 = vunpack.c.l.b16 %v2971
        %v3052 = vunpack.c.l.b16 %v2972
        %v3053 = vpack.c.b16 %v3014, %v3013
        %v3054 = vpack.c.b16 %v3016, %v3015
        %v3055 = vpack.c.b16 %v3018, %v3017
        %v3056 = vpack.c.b16 %v3020, %v3019
        %v3057 = vpack.c.b16 %v3022, %v3021
        %v3058 = vpack.c.b16 %v3024, %v3023
        %v3059 = vpack.c.b16 %v3026, %v3025
        %v3060 = vpack.c.b16 %v3028, %v3027
        %v3061 = vpack.c.b16 %v3030, %v3029
        %v3062 = vpack.c.b16 %v3032, %v3031
        %v3063 = vpack.c.b16 %v3034, %v3033
        %v3064 = vpack.c.b16 %v3036, %v3035
        %v3065 = vpack.c.b16 %v3038, %v3037
        %v3066 = vpack.c.b16 %v3040, %v3039
        %v3067 = vpack.c.b16 %v3042, %v3041
        %v3068 = vpack.c.b16 %v3044, %v3043
        %v3069 = vpack.c.b16 %v3046, %v3045
        %v3070 = vpack.c.b16 %v3048, %v3047
        %v3071 = vpack.c.b16 %v3050, %v3049
        %v3072 = vpack.c.b16 %v3052, %v3051
        %v3094 = vsel %vm918, %v2886, 0
        %v3097 = vsel %vm918, %v2889, 0
        %v3100 = vsel %vm918, %v2892, 0
        %v3103 = vsel %vm918, %v2895, 0
        %v3106 = vsel %vm918, %v2898, 0
        %v3109 = vsel %vm918, %v2901, 0
        %v3112 = vsel %vm918, %v2904, 0
        %v3115 = vsel %vm918, %v2907, 0
        %v3118 = vsel %vm918, %v2910, 0
        %v3121 = vsel %vm918, %v2913, 0
        %v3124 = vsel %vm918, %v2916, 0
        %v3127 = vsel %vm918, %v2919, 0
        %v3130 = vsel %vm918, %v2922, 0
        %v3133 = vsel %vm918, %v2925, 0
        %v3136 = vsel %vm918, %v2928, 0
        %v3139 = vsel %vm918, %v2931, 0
        %3141 = vmatprep.subr.bf16.mxu0 0
        %3142 = vmatpush1.bf16.msra.mxu0 %v3053
        %3143 = vmatprep.subr.bf16.mxu0 0
        %3144 = vmatpush1.bf16.msra.mxu0 %v3054
        %3145 = vmatprep.subr.bf16.mxu0 0
        %3146 = vmatpush1.bf16.msra.mxu0 %v3055
        %3147 = vmatprep.subr.bf16.mxu0 0
        %3148 = vmatpush1.bf16.msra.mxu0 %v3056
        %3149 = vmatprep.subr.bf16.mxu0 0
        %3150 = vmatpush1.bf16.msra.mxu0 %v3057
        %3151 = vmatprep.subr.bf16.mxu0 0
        %3152 = vmatpush1.bf16.msra.mxu0 %v3058
        %3153 = vmatprep.subr.bf16.mxu0 0
        %3154 = vmatpush1.bf16.msra.mxu0 %v3059
        %3155 = vmatprep.subr.bf16.mxu0 0
        %3156 = vmatpush1.bf16.msra.mxu0 %v3060
        %3157 = vmatprep.subr.bf16.mxu0 0
        %3158 = vmatpush1.bf16.msra.mxu0 %v3061
        %3159 = vmatprep.subr.bf16.mxu0 0
        %3160 = vmatpush1.bf16.msra.mxu0 %v3062
        %3161 = vmatprep.subr.bf16.mxu0 0
        %3162 = vmatpush1.bf16.msra.mxu0 %v3063
        %3163 = vmatprep.subr.bf16.mxu0 0
        %3164 = vmatpush1.bf16.msra.mxu0 %v3064
        %3165 = vmatprep.subr.bf16.mxu0 0
        %3166 = vmatpush1.bf16.msra.mxu0 %v3065
        %3167 = vmatprep.subr.bf16.mxu0 0
        %3168 = vmatpush1.bf16.msra.mxu0 %v3066
        %3169 = vmatprep.subr.bf16.mxu0 0
        %3170 = vmatpush1.bf16.msra.mxu0 %v3067
        %3171 = vmatprep.subr.bf16.mxu0 0
        %3172 = vmatpush1.bf16.msra.mxu0 %v3068
        %3173 = vmatprep.mubr.bf16.mxu0 %v2885
        %3174 = vmatmul.mubr.bf16.gmra.mrb[0].mxu0 %v2884
        %v3175 = vpop.f32.mrb[0].mxu0
        %v3176 = vadd.f32 0.0, %v3175
        %v3177 = vpop.f32.mrb[0].mxu0
        %v3178 = vpop.f32.mrb[0].mxu0
        %v3179 = vadd.f32 0.0, %v3178
        %v3180 = vpop.f32.mrb[0].mxu0
        %3181 = vmatprep.mubr.bf16.mxu0 %v2888
        %3182 = vmatmul.mubr.bf16.gmra.mrb[0].mxu0 %v2887
        %v3183 = vpop.f32.mrb[0].mxu0
        %v3184 = vadd.f32 0.0, %v3183
        %v3185 = vpop.f32.mrb[0].mxu0
        %v3186 = vpop.f32.mrb[0].mxu0
        %v3187 = vadd.f32 0.0, %v3186
        %v3188 = vpop.f32.mrb[0].mxu0
        %3189 = vmatprep.mubr.bf16.mxu0 %v2891
        %3190 = vmatmul.mubr.bf16.gmra.mrb[0].mxu0 %v2890
        %v3191 = vpop.f32.mrb[0].mxu0
        %v3192 = vadd.f32 0.0, %v3191
        %v3193 = vpop.f32.mrb[0].mxu0
        %v3194 = vpop.f32.mrb[0].mxu0
        %v3195 = vadd.f32 0.0, %v3194
        %v3196 = vpop.f32.mrb[0].mxu0
        %3197 = vmatprep.mubr.bf16.mxu0 %v2894
        %3198 = vmatmul.mubr.bf16.gmra.mrb[0].mxu0 %v2893
        %v3199 = vpop.f32.mrb[0].mxu0
        %v3200 = vadd.f32 0.0, %v3199
        %v3201 = vpop.f32.mrb[0].mxu0
        %v3202 = vpop.f32.mrb[0].mxu0
        %v3203 = vadd.f32 0.0, %v3202
        %v3204 = vpop.f32.mrb[0].mxu0
        %3205 = vmatprep.mubr.bf16.mxu0 %v2897
        %3206 = vmatmul.mubr.bf16.gmra.mrb[0].mxu0 %v2896
        %v3207 = vpop.f32.mrb[0].mxu0
        %v3208 = vadd.f32 0.0, %v3207
        %v3209 = vpop.f32.mrb[0].mxu0
        %v3210 = vpop.f32.mrb[0].mxu0
        %v3211 = vadd.f32 0.0, %v3210
        %v3212 = vpop.f32.mrb[0].mxu0
        %3213 = vmatprep.mubr.bf16.mxu0 %v2900
        %3214 = vmatmul.mubr.bf16.gmra.mrb[0].mxu0 %v2899
        %v3215 = vpop.f32.mrb[0].mxu0
        %v3216 = vadd.f32 0.0, %v3215
        %v3217 = vpop.f32.mrb[0].mxu0
        %v3218 = vpop.f32.mrb[0].mxu0
        %v3219 = vadd.f32 0.0, %v3218
        %v3220 = vpop.f32.mrb[0].mxu0
        %3221 = vmatprep.mubr.bf16.mxu0 %v2903
        %3222 = vmatmul.mubr.bf16.gmra.mrb[0].mxu0 %v2902
        %v3223 = vpop.f32.mrb[0].mxu0
        %v3224 = vadd.f32 0.0, %v3223
        %v3225 = vpop.f32.mrb[0].mxu0
        %v3226 = vpop.f32.mrb[0].mxu0
        %v3227 = vadd.f32 0.0, %v3226
        %v3228 = vpop.f32.mrb[0].mxu0
        %3229 = vmatprep.mubr.bf16.mxu0 %v2906
        %3230 = vmatmul.mubr.bf16.gmra.mrb[0].mxu0 %v2905
        %v3231 = vpop.f32.mrb[0].mxu0
        %v3232 = vadd.f32 0.0, %v3231
        %v3233 = vpop.f32.mrb[0].mxu0
        %v3234 = vpop.f32.mrb[0].mxu0
        %v3235 = vadd.f32 0.0, %v3234
        %v3236 = vpop.f32.mrb[0].mxu0
        %3237 = vmatprep.mubr.bf16.mxu0 %v2909
        %3238 = vmatmul.mubr.bf16.gmra.mrb[0].mxu0 %v2908
        %v3239 = vpop.f32.mrb[0].mxu0
        %v3240 = vadd.f32 0.0, %v3239
        %v3241 = vpop.f32.mrb[0].mxu0
        %v3242 = vpop.f32.mrb[0].mxu0
        %v3243 = vadd.f32 0.0, %v3242
        %v3244 = vpop.f32.mrb[0].mxu0
        %3245 = vmatprep.mubr.bf16.mxu0 %v2912
        %3246 = vmatmul.mubr.bf16.gmra.mrb[0].mxu0 %v2911
        %v3247 = vpop.f32.mrb[0].mxu0
        %v3248 = vadd.f32 0.0, %v3247
        %v3249 = vpop.f32.mrb[0].mxu0
        %v3250 = vpop.f32.mrb[0].mxu0
        %v3251 = vadd.f32 0.0, %v3250
        %v3252 = vpop.f32.mrb[0].mxu0
        %3253 = vmatprep.mubr.bf16.mxu0 %v2915
        %3254 = vmatmul.mubr.bf16.gmra.mrb[0].mxu0 %v2914
        %v3255 = vpop.f32.mrb[0].mxu0
        %v3256 = vadd.f32 0.0, %v3255
        %v3257 = vpop.f32.mrb[0].mxu0
        %v3258 = vpop.f32.mrb[0].mxu0
        %v3259 = vadd.f32 0.0, %v3258
        %v3260 = vpop.f32.mrb[0].mxu0
        %3261 = vmatprep.mubr.bf16.mxu0 %v2918
        %3262 = vmatmul.mubr.bf16.gmra.mrb[0].mxu0 %v2917
        %v3263 = vpop.f32.mrb[0].mxu0
        %v3264 = vadd.f32 0.0, %v3263
        %v3265 = vpop.f32.mrb[0].mxu0
        %v3266 = vpop.f32.mrb[0].mxu0
        %v3267 = vadd.f32 0.0, %v3266
        %v3268 = vpop.f32.mrb[0].mxu0
        %3269 = vmatprep.mubr.bf16.mxu0 %v2921
        %3270 = vmatmul.mubr.bf16.gmra.mrb[0].mxu0 %v2920
        %v3271 = vpop.f32.mrb[0].mxu0
        %v3272 = vadd.f32 0.0, %v3271
        %v3273 = vpop.f32.mrb[0].mxu0
        %v3274 = vpop.f32.mrb[0].mxu0
        %v3275 = vadd.f32 0.0, %v3274
        %v3276 = vpop.f32.mrb[0].mxu0
        %3277 = vmatprep.mubr.bf16.mxu0 %v2924
        %3278 = vmatmul.mubr.bf16.gmra.mrb[0].mxu0 %v2923
        %v3279 = vpop.f32.mrb[0].mxu0
        %v3280 = vadd.f32 0.0, %v3279
        %v3281 = vpop.f32.mrb[0].mxu0
        %v3282 = vpop.f32.mrb[0].mxu0
        %v3283 = vadd.f32 0.0, %v3282
        %v3284 = vpop.f32.mrb[0].mxu0
        %3285 = vmatprep.mubr.bf16.mxu0 %v2927
        %3286 = vmatmul.mubr.bf16.gmra.mrb[0].mxu0 %v2926
        %v3287 = vpop.f32.mrb[0].mxu0
        %v3288 = vadd.f32 0.0, %v3287
        %v3289 = vpop.f32.mrb[0].mxu0
        %v3290 = vpop.f32.mrb[0].mxu0
        %v3291 = vadd.f32 0.0, %v3290
        %v3292 = vpop.f32.mrb[0].mxu0
        %3293 = vmatprep.mubr.bf16.mxu0 %v2930
        %3294 = vmatmul.mubr.bf16.gmra.mrb[0].mxu0 %v2929
        %v3295 = vpop.f32.mrb[0].mxu0
        %v3296 = vadd.f32 0.0, %v3295
        %v3297 = vpop.f32.mrb[0].mxu0
        %v3298 = vpop.f32.mrb[0].mxu0
        %v3299 = vadd.f32 0.0, %v3298
        %v3300 = vpop.f32.mrb[0].mxu0
        %3301 = vdwg.mxu0
        %3302 = vmatprep.subr.bf16.mxu0 0
        %3303 = vmatpush1.bf16.msra.mxu0 %v3069
        %3304 = vmatprep.subr.bf16.mxu0 0
        %3305 = vmatpush1.bf16.msra.mxu0 %v3070
        %3306 = vmatprep.subr.bf16.mxu0 0
        %3307 = vmatpush1.bf16.msra.mxu0 %v3071
        %3308 = vmatprep.subr.bf16.mxu0 0
        %3309 = vmatpush1.bf16.msra.mxu0 %v3072
        %3310 = vmatprep.subr.bf16.mxu0 0
        %3311 = vmatpush1.bf16.msra.mxu0 0
        %3312 = vmatprep.subr.bf16.mxu0 0
        %3313 = vmatpush1.bf16.msra.mxu0 0
        %3314 = vmatprep.subr.bf16.mxu0 0
        %3315 = vmatpush1.bf16.msra.mxu0 0
        %3316 = vmatprep.subr.bf16.mxu0 0
        %3317 = vmatpush1.bf16.msra.mxu0 0
        %3318 = vmatprep.subr.bf16.mxu0 0
        %3319 = vmatpush1.bf16.msra.mxu0 0
        %3320 = vmatprep.subr.bf16.mxu0 0
        %3321 = vmatpush1.bf16.msra.mxu0 0
        %3322 = vmatprep.subr.bf16.mxu0 0
        %3323 = vmatpush1.bf16.msra.mxu0 0
        %3324 = vmatprep.subr.bf16.mxu0 0
        %3325 = vmatpush1.bf16.msra.mxu0 0
        %3326 = vmatprep.subr.bf16.mxu0 0
        %3327 = vmatpush1.bf16.msra.mxu0 0
        %3328 = vmatprep.subr.bf16.mxu0 0
        %3329 = vmatpush1.bf16.msra.mxu0 0
        %3330 = vmatprep.subr.bf16.mxu0 0
        %3331 = vmatpush1.bf16.msra.mxu0 0
        %3332 = vmatprep.subr.bf16.mxu0 0
        %3333 = vmatpush1.bf16.msra.mxu0 0
        %3334 = vmatprep.mubr.bf16.mxu0 0
        %3335 = vmatmul.mubr.bf16.gmra.mrb[0].mxu0 %v3094
        %v3336 = vpop.f32.mrb[0].mxu0
        %v3337 = vadd.f32 %v3176, %v3336
        %v3338 = vpop.f32.mrb[0].mxu0
        %v3339 = vpop.f32.mrb[0].mxu0
        %v3340 = vadd.f32 %v3179, %v3339
        %v3341 = vpop.f32.mrb[0].mxu0
        %3342 = vmatprep.mubr.bf16.mxu0 0
        %3343 = vmatmul.mubr.bf16.gmra.mrb[0].mxu0 %v3097
        %v3344 = vpop.f32.mrb[0].mxu0
        %v3345 = vadd.f32 %v3184, %v3344
        %v3346 = vpop.f32.mrb[0].mxu0
        %v3347 = vpop.f32.mrb[0].mxu0
        %v3348 = vadd.f32 %v3187, %v3347
        %v3349 = vpop.f32.mrb[0].mxu0
        %3350 = vmatprep.mubr.bf16.mxu0 0
        %3351 = vmatmul.mubr.bf16.gmra.mrb[0].mxu0 %v3100
        %v3352 = vpop.f32.mrb[0].mxu0
        %v3353 = vadd.f32 %v3192, %v3352
        %v3354 = vpop.f32.mrb[0].mxu0
        %v3355 = vpop.f32.mrb[0].mxu0
        %v3356 = vadd.f32 %v3195, %v3355
        %v3357 = vpop.f32.mrb[0].mxu0
        %3358 = vmatprep.mubr.bf16.mxu0 0
        %3359 = vmatmul.mubr.bf16.gmra.mrb[0].mxu0 %v3103
        %v3360 = vpop.f32.mrb[0].mxu0
        %v3361 = vadd.f32 %v3200, %v3360
        %v3362 = vpop.f32.mrb[0].mxu0
        %v3363 = vpop.f32.mrb[0].mxu0
        %v3364 = vadd.f32 %v3203, %v3363
        %v3365 = vpop.f32.mrb[0].mxu0
        %3366 = vmatprep.mubr.bf16.mxu0 0
        %3367 = vmatmul.mubr.bf16.gmra.mrb[0].mxu0 %v3106
        %v3368 = vpop.f32.mrb[0].mxu0
        %v3369 = vadd.f32 %v3208, %v3368
        %v3370 = vpop.f32.mrb[0].mxu0
        %v3371 = vpop.f32.mrb[0].mxu0
        %v3372 = vadd.f32 %v3211, %v3371
        %v3373 = vpop.f32.mrb[0].mxu0
        %3374 = vmatprep.mubr.bf16.mxu0 0
        %3375 = vmatmul.mubr.bf16.gmra.mrb[0].mxu0 %v3109
        %v3376 = vpop.f32.mrb[0].mxu0
        %v3377 = vadd.f32 %v3216, %v3376
        %v3378 = vpop.f32.mrb[0].mxu0
        %v3379 = vpop.f32.mrb[0].mxu0
        %v3380 = vadd.f32 %v3219, %v3379
        %v3381 = vpop.f32.mrb[0].mxu0
        %3382 = vmatprep.mubr.bf16.mxu0 0
        %3383 = vmatmul.mubr.bf16.gmra.mrb[0].mxu0 %v3112
        %v3384 = vpop.f32.mrb[0].mxu0
        %v3385 = vadd.f32 %v3224, %v3384
        %v3386 = vpop.f32.mrb[0].mxu0
        %v3387 = vpop.f32.mrb[0].mxu0
        %v3388 = vadd.f32 %v3227, %v3387
        %v3389 = vpop.f32.mrb[0].mxu0
        %3390 = vmatprep.mubr.bf16.mxu0 0
        %3391 = vmatmul.mubr.bf16.gmra.mrb[0].mxu0 %v3115
        %v3392 = vpop.f32.mrb[0].mxu0
        %v3393 = vadd.f32 %v3232, %v3392
        %v3394 = vpop.f32.mrb[0].mxu0
        %v3395 = vpop.f32.mrb[0].mxu0
        %v3396 = vadd.f32 %v3235, %v3395
        %v3397 = vpop.f32.mrb[0].mxu0
        %3398 = vmatprep.mubr.bf16.mxu0 0
        %3399 = vmatmul.mubr.bf16.gmra.mrb[0].mxu0 %v3118
        %v3400 = vpop.f32.mrb[0].mxu0
        %v3401 = vadd.f32 %v3240, %v3400
        %v3402 = vpop.f32.mrb[0].mxu0
        %v3403 = vpop.f32.mrb[0].mxu0
        %v3404 = vadd.f32 %v3243, %v3403
        %v3405 = vpop.f32.mrb[0].mxu0
        %3406 = vmatprep.mubr.bf16.mxu0 0
        %3407 = vmatmul.mubr.bf16.gmra.mrb[0].mxu0 %v3121
        %v3408 = vpop.f32.mrb[0].mxu0
        %v3409 = vadd.f32 %v3248, %v3408
        %v3410 = vpop.f32.mrb[0].mxu0
        %v3411 = vpop.f32.mrb[0].mxu0
        %v3412 = vadd.f32 %v3251, %v3411
        %v3413 = vpop.f32.mrb[0].mxu0
        %3414 = vmatprep.mubr.bf16.mxu0 0
        %3415 = vmatmul.mubr.bf16.gmra.mrb[0].mxu0 %v3124
        %v3416 = vpop.f32.mrb[0].mxu0
        %v3417 = vadd.f32 %v3256, %v3416
        %v3418 = vpop.f32.mrb[0].mxu0
        %v3419 = vpop.f32.mrb[0].mxu0
        %v3420 = vadd.f32 %v3259, %v3419
        %v3421 = vpop.f32.mrb[0].mxu0
        %3422 = vmatprep.mubr.bf16.mxu0 0
        %3423 = vmatmul.mubr.bf16.gmra.mrb[0].mxu0 %v3127
        %v3424 = vpop.f32.mrb[0].mxu0
        %v3425 = vadd.f32 %v3264, %v3424
        %v3426 = vpop.f32.mrb[0].mxu0
        %v3427 = vpop.f32.mrb[0].mxu0
        %v3428 = vadd.f32 %v3267, %v3427
        %v3429 = vpop.f32.mrb[0].mxu0
        %3430 = vmatprep.mubr.bf16.mxu0 0
        %3431 = vmatmul.mubr.bf16.gmra.mrb[0].mxu0 %v3130
        %v3432 = vpop.f32.mrb[0].mxu0
        %v3433 = vadd.f32 %v3272, %v3432
        %v3434 = vpop.f32.mrb[0].mxu0
        %v3435 = vpop.f32.mrb[0].mxu0
        %v3436 = vadd.f32 %v3275, %v3435
        %v3437 = vpop.f32.mrb[0].mxu0
        %3438 = vmatprep.mubr.bf16.mxu0 0
        %3439 = vmatmul.mubr.bf16.gmra.mrb[0].mxu0 %v3133
        %v3440 = vpop.f32.mrb[0].mxu0
        %v3441 = vadd.f32 %v3280, %v3440
        %v3442 = vpop.f32.mrb[0].mxu0
        %v3443 = vpop.f32.mrb[0].mxu0
        %v3444 = vadd.f32 %v3283, %v3443
        %v3445 = vpop.f32.mrb[0].mxu0
        %3446 = vmatprep.mubr.bf16.mxu0 0
        %3447 = vmatmul.mubr.bf16.gmra.mrb[0].mxu0 %v3136
        %v3448 = vpop.f32.mrb[0].mxu0
        %v3449 = vadd.f32 %v3288, %v3448
        %v3450 = vpop.f32.mrb[0].mxu0
        %v3451 = vpop.f32.mrb[0].mxu0
        %v3452 = vadd.f32 %v3291, %v3451
        %v3453 = vpop.f32.mrb[0].mxu0
        %3454 = vmatprep.mubr.bf16.mxu0 0
        %3455 = vmatmul.mubr.bf16.gmra.mrb[0].mxu0 %v3139
        %v3456 = vpop.f32.mrb[0].mxu0
        %v3457 = vadd.f32 %v3296, %v3456
        %v3458 = vpop.f32.mrb[0].mxu0
        %v3459 = vpop.f32.mrb[0].mxu0
        %v3460 = vadd.f32 %v3299, %v3459
        %v3461 = vpop.f32.mrb[0].mxu0
        %3462 = vdwg.mxu0
        %v3463 = vadd.f32 %v2851, %v3337
        %v3464 = vadd.f32 %v2852, %v3340
        %v3465 = vadd.f32 %v2853, %v3345
        %v3466 = vadd.f32 %v2854, %v3348
        %v3467 = vadd.f32 %v2855, %v3353
        %v3468 = vadd.f32 %v2856, %v3356
        %v3469 = vadd.f32 %v2857, %v3361
        %v3470 = vadd.f32 %v2858, %v3364
        %v3471 = vadd.f32 %v2859, %v3369
        %v3472 = vadd.f32 %v2860, %v3372
        %v3473 = vadd.f32 %v2861, %v3377
        %v3474 = vadd.f32 %v2862, %v3380
        %v3475 = vadd.f32 %v2863, %v3385
        %v3476 = vadd.f32 %v2864, %v3388
        %v3477 = vadd.f32 %v2865, %v3393
        %v3478 = vadd.f32 %v2866, %v3396
        %v3479 = vadd.f32 %v2867, %v3401
        %v3480 = vadd.f32 %v2868, %v3404
        %v3481 = vadd.f32 %v2869, %v3409
        %v3482 = vadd.f32 %v2870, %v3412
        %v3483 = vadd.f32 %v2871, %v3417
        %v3484 = vadd.f32 %v2872, %v3420
        %v3485 = vadd.f32 %v2873, %v3425
        %v3486 = vadd.f32 %v2874, %v3428
        %v3487 = vadd.f32 %v2875, %v3433
        %v3488 = vadd.f32 %v2876, %v3436
        %v3489 = vadd.f32 %v2877, %v3441
        %v3490 = vadd.f32 %v2878, %v3444
        %v3491 = vadd.f32 %v2879, %v3449
        %v3492 = vadd.f32 %v2880, %v3452
        %v3493 = vadd.f32 %v2881, %v3457
        %v3494 = vadd.f32 %v2882, %v3460
        %s3495 = scalar_lea.vmem [#allocation2], 96
        %v3496 = vld [vmem:[%s3495] sm:$0xff]
        %v3497 = vld [vmem:[%s3495 + $0x8] sm:$0xff]
        %v3498 = vld [vmem:[%s3495 + $0x10] sm:$0xff]
        %v3499 = vld [vmem:[%s3495 + $0x18] sm:$0xff]
        %v3500 = vld [vmem:[%s3495 + $0x20] sm:$0xff]
        %v3501 = vld [vmem:[%s3495 + $0x28] sm:$0xff]
        %v3502 = vld [vmem:[%s3495 + $0x30] sm:$0xff]
        %v3503 = vld [vmem:[%s3495 + $0x38] sm:$0xff]
        %v3504 = vld [vmem:[%s3495 + $0x40] sm:$0xff]
        %v3505 = vld [vmem:[%s3495 + $0x48] sm:$0xff]
        %v3506 = vld [vmem:[%s3495 + $0x50] sm:$0xff]
        %v3507 = vld [vmem:[%s3495 + $0x58] sm:$0xff]
        %v3508 = vld [vmem:[%s3495 + $0x60] sm:$0xff]
        %v3509 = vld [vmem:[%s3495 + $0x68] sm:$0xff]
        %v3510 = vld [vmem:[%s3495 + $0x70] sm:$0xff]
        %v3511 = vld [vmem:[%s3495 + $0x78] sm:$0xff]
        %v3512 = vld [vmem:[%s3495 + $0x80] sm:$0xff]
        %v3513 = vld [vmem:[%s3495 + $0x88] sm:$0xff]
        %v3514 = vld [vmem:[%s3495 + $0x90] sm:$0xff]
        %v3515 = vld [vmem:[%s3495 + $0x98] sm:$0xff]
        %v3516 = vld [vmem:[%s3495 + $0xa0] sm:$0xff]
        %v3517 = vld [vmem:[%s3495 + $0xa8] sm:$0xff]
        %v3518 = vld [vmem:[%s3495 + $0xb0] sm:$0xff]
        %v3519 = vld [vmem:[%s3495 + $0xb8] sm:$0xff]
        %v3520 = vld [vmem:[%s3495 + $0xc0] sm:$0xff]
        %v3521 = vld [vmem:[%s3495 + $0xc8] sm:$0xff]
        %v3522 = vld [vmem:[%s3495 + $0xd0] sm:$0xff]
        %v3523 = vld [vmem:[%s3495 + $0xd8] sm:$0xff]
        %v3524 = vld [vmem:[%s3495 + $0xe0] sm:$0xff]
        %v3525 = vld [vmem:[%s3495 + $0xe8] sm:$0xff]
        %v3526 = vld [vmem:[%s3495 + $0xf0] sm:$0xff]
        %v3527 = vld [vmem:[%s3495 + $0xf8] sm:$0xff]
        %v3528 = vld [vmem:[%s3495 + $0x100] sm:$0xff]
        %v3529 = vld [vmem:[%s3495 + $0x108] sm:$0xff]
        %v3530 = vld [vmem:[%s3495 + $0x110] sm:$0xff]
        %v3531 = vld [vmem:[%s3495 + $0x118] sm:$0xff]
        %v3532 = vld [vmem:[%s3495 + $0x120] sm:$0xff]
        %v3533 = vld [vmem:[%s3495 + $0x128] sm:$0xff]
        %v3534 = vld [vmem:[%s3495 + $0x130] sm:$0xff]
        %v3535 = vld [vmem:[%s3495 + $0x138] sm:$0xff]
        %v3536 = vld [vmem:[%s3495 + $0x140] sm:$0xff]
        %v3537 = vld [vmem:[%s3495 + $0x148] sm:$0xff]
        %v3538 = vld [vmem:[%s3495 + $0x150] sm:$0xff]
        %v3539 = vld [vmem:[%s3495 + $0x158] sm:$0xff]
        %v3540 = vld [vmem:[%s3495 + $0x160] sm:$0xff]
        %v3541 = vld [vmem:[%s3495 + $0x168] sm:$0xff]
        %v3542 = vld [vmem:[%s3495 + $0x170] sm:$0xff]
        %v3543 = vld [vmem:[%s3495 + $0x178] sm:$0xff]
        %s3544 = scalar_lea.vmem %s1, 640
        %v3545 = vld [vmem:[%s3544] sm:$0xf]
        %v3546 = vld [vmem:[%s3544 + $0x4] sm:$0xf]
        %v3547 = vld [vmem:[%s3544 + $0x8] sm:$0xf]
        %v3548 = vld [vmem:[%s3544 + $0xc] sm:$0xf]
        %v3549 = vld [vmem:[%s3544 + $0x10] sm:$0xf]
        %v3550 = vld [vmem:[%s3544 + $0x14] sm:$0xf]
        %v3551 = vld [vmem:[%s3544 + $0x18] sm:$0xf]
        %v3552 = vld [vmem:[%s3544 + $0x1c] sm:$0xf]
        %v3553 = vld [vmem:[%s3544 + $0x20] sm:$0xf]
        %v3554 = vld [vmem:[%s3544 + $0x24] sm:$0xf]
        %v3555 = vld [vmem:[%s3544 + $0x28] sm:$0xf]
        %v3556 = vld [vmem:[%s3544 + $0x2c] sm:$0xf]
        %v3557 = vld [vmem:[%s3544 + $0x30] sm:$0xf]
        %v3558 = vld [vmem:[%s3544 + $0x34] sm:$0xf]
        %v3559 = vld [vmem:[%s3544 + $0x38] sm:$0xf]
        %v3560 = vld [vmem:[%s3544 + $0x3c] sm:$0xf]
        %v3561 = vld [vmem:[%s3544 + $0x40] sm:$0xf]
        %v3562 = vld [vmem:[%s3544 + $0x44] sm:$0xf]
        %v3563 = vld [vmem:[%s3544 + $0x48] sm:$0xf]
        %v3564 = vld [vmem:[%s3544 + $0x4c] sm:$0xf]
        %v3565 = vld [vmem:[%s3544 + $0x50] sm:$0xf]
        %v3566 = vld [vmem:[%s3544 + $0x54] sm:$0xf]
        %v3567 = vld [vmem:[%s3544 + $0x58] sm:$0xf]
        %v3568 = vld [vmem:[%s3544 + $0x5c] sm:$0xf]
        %v3569 = vld [vmem:[%s3544 + $0x60] sm:$0xf]
        %v3570 = vld [vmem:[%s3544 + $0x64] sm:$0xf]
        %v3571 = vld [vmem:[%s3544 + $0x68] sm:$0xf]
        %v3572 = vld [vmem:[%s3544 + $0x6c] sm:$0xf]
        %v3573 = vld [vmem:[%s3544 + $0x70] sm:$0xf]
        %v3574 = vld [vmem:[%s3544 + $0x74] sm:$0xf]
        %v3575 = vld [vmem:[%s3544 + $0x78] sm:$0xf]
        %v3576 = vld [vmem:[%s3544 + $0x7c] sm:$0xf]
        %v3577 = vld [vmem:[%s3544 + $0x80] sm:$0xf]
        %v3578 = vld [vmem:[%s3544 + $0x84] sm:$0xf]
        %v3579 = vld [vmem:[%s3544 + $0x88] sm:$0xf]
        %v3580 = vld [vmem:[%s3544 + $0x8c] sm:$0xf]
        %v3581 = vld [vmem:[%s3544 + $0x90] sm:$0xf]
        %v3582 = vld [vmem:[%s3544 + $0x94] sm:$0xf]
        %v3583 = vld [vmem:[%s3544 + $0x98] sm:$0xf]
        %v3584 = vld [vmem:[%s3544 + $0x9c] sm:$0xf]
        %v3625 = vunpack.c.l.b16 %v3545
        %v3626 = vunpack.c.l.b16 %v3546
        %v3627 = vunpack.c.l.b16 %v3547
        %v3628 = vunpack.c.l.b16 %v3548
        %v3629 = vunpack.c.l.b16 %v3549
        %v3630 = vunpack.c.l.b16 %v3550
        %v3631 = vunpack.c.l.b16 %v3551
        %v3632 = vunpack.c.l.b16 %v3552
        %v3633 = vunpack.c.l.b16 %v3553
        %v3634 = vunpack.c.l.b16 %v3554
        %v3635 = vunpack.c.l.b16 %v3555
        %v3636 = vunpack.c.l.b16 %v3556
        %v3637 = vunpack.c.l.b16 %v3557
        %v3638 = vunpack.c.l.b16 %v3558
        %v3639 = vunpack.c.l.b16 %v3559
        %v3640 = vunpack.c.l.b16 %v3560
        %v3641 = vunpack.c.l.b16 %v3561
        %v3642 = vunpack.c.l.b16 %v3562
        %v3643 = vunpack.c.l.b16 %v3563
        %v3644 = vunpack.c.l.b16 %v3564
        %v3645 = vunpack.c.l.b16 %v3565
        %v3646 = vunpack.c.l.b16 %v3566
        %v3647 = vunpack.c.l.b16 %v3567
        %v3648 = vunpack.c.l.b16 %v3568
        %v3649 = vunpack.c.l.b16 %v3569
        %v3650 = vunpack.c.l.b16 %v3570
        %v3651 = vunpack.c.l.b16 %v3571
        %v3652 = vunpack.c.l.b16 %v3572
        %v3653 = vunpack.c.l.b16 %v3573
        %v3654 = vunpack.c.l.b16 %v3574
        %v3655 = vunpack.c.l.b16 %v3575
        %v3656 = vunpack.c.l.b16 %v3576
        %v3657 = vunpack.c.l.b16 %v3577
        %v3658 = vunpack.c.l.b16 %v3578
        %v3659 = vunpack.c.l.b16 %v3579
        %v3660 = vunpack.c.l.b16 %v3580
        %v3661 = vunpack.c.l.b16 %v3581
        %v3662 = vunpack.c.l.b16 %v3582
        %v3663 = vunpack.c.l.b16 %v3583
        %v3664 = vunpack.c.l.b16 %v3584
        %v3665 = vpack.c.b16 %v3626, %v3625
        %v3666 = vpack.c.b16 %v3628, %v3627
        %v3667 = vpack.c.b16 %v3630, %v3629
        %v3668 = vpack.c.b16 %v3632, %v3631
        %v3669 = vpack.c.b16 %v3634, %v3633
        %v3670 = vpack.c.b16 %v3636, %v3635
        %v3671 = vpack.c.b16 %v3638, %v3637
        %v3672 = vpack.c.b16 %v3640, %v3639
        %v3673 = vpack.c.b16 %v3642, %v3641
        %v3674 = vpack.c.b16 %v3644, %v3643
        %v3675 = vpack.c.b16 %v3646, %v3645
        %v3676 = vpack.c.b16 %v3648, %v3647
        %v3677 = vpack.c.b16 %v3650, %v3649
        %v3678 = vpack.c.b16 %v3652, %v3651
        %v3679 = vpack.c.b16 %v3654, %v3653
        %v3680 = vpack.c.b16 %v3656, %v3655
        %v3681 = vpack.c.b16 %v3658, %v3657
        %v3682 = vpack.c.b16 %v3660, %v3659
        %v3683 = vpack.c.b16 %v3662, %v3661
        %v3684 = vpack.c.b16 %v3664, %v3663
        %v3706 = vsel %vm918, %v3498, 0
        %v3709 = vsel %vm918, %v3501, 0
        %v3712 = vsel %vm918, %v3504, 0
        %v3715 = vsel %vm918, %v3507, 0
        %v3718 = vsel %vm918, %v3510, 0
        %v3721 = vsel %vm918, %v3513, 0
        %v3724 = vsel %vm918, %v3516, 0
        %v3727 = vsel %vm918, %v3519, 0
        %v3730 = vsel %vm918, %v3522, 0
        %v3733 = vsel %vm918, %v3525, 0
        %v3736 = vsel %vm918, %v3528, 0
        %v3739 = vsel %vm918, %v3531, 0
        %v3742 = vsel %vm918, %v3534, 0
        %v3745 = vsel %vm918, %v3537, 0
        %v3748 = vsel %vm918, %v3540, 0
        %v3751 = vsel %vm918, %v3543, 0
        %3753 = vmatprep.subr.bf16.mxu0 0
        %3754 = vmatpush1.bf16.msra.mxu0 %v3665
        %3755 = vmatprep.subr.bf16.mxu0 0
        %3756 = vmatpush1.bf16.msra.mxu0 %v3666
        %3757 = vmatprep.subr.bf16.mxu0 0
        %3758 = vmatpush1.bf16.msra.mxu0 %v3667
        %3759 = vmatprep.subr.bf16.mxu0 0
        %3760 = vmatpush1.bf16.msra.mxu0 %v3668
        %3761 = vmatprep.subr.bf16.mxu0 0
        %3762 = vmatpush1.bf16.msra.mxu0 %v3669
        %3763 = vmatprep.subr.bf16.mxu0 0
        %3764 = vmatpush1.bf16.msra.mxu0 %v3670
        %3765 = vmatprep.subr.bf16.mxu0 0
        %3766 = vmatpush1.bf16.msra.mxu0 %v3671
        %3767 = vmatprep.subr.bf16.mxu0 0
        %3768 = vmatpush1.bf16.msra.mxu0 %v3672
        %3769 = vmatprep.subr.bf16.mxu0 0
        %3770 = vmatpush1.bf16.msra.mxu0 %v3673
        %3771 = vmatprep.subr.bf16.mxu0 0
        %3772 = vmatpush1.bf16.msra.mxu0 %v3674
        %3773 = vmatprep.subr.bf16.mxu0 0
        %3774 = vmatpush1.bf16.msra.mxu0 %v3675
        %3775 = vmatprep.subr.bf16.mxu0 0
        %3776 = vmatpush1.bf16.msra.mxu0 %v3676
        %3777 = vmatprep.subr.bf16.mxu0 0
        %3778 = vmatpush1.bf16.msra.mxu0 %v3677
        %3779 = vmatprep.subr.bf16.mxu0 0
        %3780 = vmatpush1.bf16.msra.mxu0 %v3678
        %3781 = vmatprep.subr.bf16.mxu0 0
        %3782 = vmatpush1.bf16.msra.mxu0 %v3679
        %3783 = vmatprep.subr.bf16.mxu0 0
        %3784 = vmatpush1.bf16.msra.mxu0 %v3680
        %3785 = vmatprep.mubr.bf16.mxu0 %v3497
        %3786 = vmatmul.mubr.bf16.gmra.mrb[0].mxu0 %v3496
        %v3787 = vpop.f32.mrb[0].mxu0
        %v3788 = vadd.f32 0.0, %v3787
        %v3789 = vpop.f32.mrb[0].mxu0
        %v3790 = vpop.f32.mrb[0].mxu0
        %v3791 = vadd.f32 0.0, %v3790
        %v3792 = vpop.f32.mrb[0].mxu0
        %3793 = vmatprep.mubr.bf16.mxu0 %v3500
        %3794 = vmatmul.mubr.bf16.gmra.mrb[0].mxu0 %v3499
        %v3795 = vpop.f32.mrb[0].mxu0
        %v3796 = vadd.f32 0.0, %v3795
        %v3797 = vpop.f32.mrb[0].mxu0
        %v3798 = vpop.f32.mrb[0].mxu0
        %v3799 = vadd.f32 0.0, %v3798
        %v3800 = vpop.f32.mrb[0].mxu0
        %3801 = vmatprep.mubr.bf16.mxu0 %v3503
        %3802 = vmatmul.mubr.bf16.gmra.mrb[0].mxu0 %v3502
        %v3803 = vpop.f32.mrb[0].mxu0
        %v3804 = vadd.f32 0.0, %v3803
        %v3805 = vpop.f32.mrb[0].mxu0
        %v3806 = vpop.f32.mrb[0].mxu0
        %v3807 = vadd.f32 0.0, %v3806
        %v3808 = vpop.f32.mrb[0].mxu0
        %3809 = vmatprep.mubr.bf16.mxu0 %v3506
        %3810 = vmatmul.mubr.bf16.gmra.mrb[0].mxu0 %v3505
        %v3811 = vpop.f32.mrb[0].mxu0
        %v3812 = vadd.f32 0.0, %v3811
        %v3813 = vpop.f32.mrb[0].mxu0
        %v3814 = vpop.f32.mrb[0].mxu0
        %v3815 = vadd.f32 0.0, %v3814
        %v3816 = vpop.f32.mrb[0].mxu0
        %3817 = vmatprep.mubr.bf16.mxu0 %v3509
        %3818 = vmatmul.mubr.bf16.gmra.mrb[0].mxu0 %v3508
        %v3819 = vpop.f32.mrb[0].mxu0
        %v3820 = vadd.f32 0.0, %v3819
        %v3821 = vpop.f32.mrb[0].mxu0
        %v3822 = vpop.f32.mrb[0].mxu0
        %v3823 = vadd.f32 0.0, %v3822
        %v3824 = vpop.f32.mrb[0].mxu0
        %3825 = vmatprep.mubr.bf16.mxu0 %v3512
        %3826 = vmatmul.mubr.bf16.gmra.mrb[0].mxu0 %v3511
        %v3827 = vpop.f32.mrb[0].mxu0
        %v3828 = vadd.f32 0.0, %v3827
        %v3829 = vpop.f32.mrb[0].mxu0
        %v3830 = vpop.f32.mrb[0].mxu0
        %v3831 = vadd.f32 0.0, %v3830
        %v3832 = vpop.f32.mrb[0].mxu0
        %3833 = vmatprep.mubr.bf16.mxu0 %v3515
        %3834 = vmatmul.mubr.bf16.gmra.mrb[0].mxu0 %v3514
        %v3835 = vpop.f32.mrb[0].mxu0
        %v3836 = vadd.f32 0.0, %v3835
        %v3837 = vpop.f32.mrb[0].mxu0
        %v3838 = vpop.f32.mrb[0].mxu0
        %v3839 = vadd.f32 0.0, %v3838
        %v3840 = vpop.f32.mrb[0].mxu0
        %3841 = vmatprep.mubr.bf16.mxu0 %v3518
        %3842 = vmatmul.mubr.bf16.gmra.mrb[0].mxu0 %v3517
        %v3843 = vpop.f32.mrb[0].mxu0
        %v3844 = vadd.f32 0.0, %v3843
        %v3845 = vpop.f32.mrb[0].mxu0
        %v3846 = vpop.f32.mrb[0].mxu0
        %v3847 = vadd.f32 0.0, %v3846
        %v3848 = vpop.f32.mrb[0].mxu0
        %3849 = vmatprep.mubr.bf16.mxu0 %v3521
        %3850 = vmatmul.mubr.bf16.gmra.mrb[0].mxu0 %v3520
        %v3851 = vpop.f32.mrb[0].mxu0
        %v3852 = vadd.f32 0.0, %v3851
        %v3853 = vpop.f32.mrb[0].mxu0
        %v3854 = vpop.f32.mrb[0].mxu0
        %v3855 = vadd.f32 0.0, %v3854
        %v3856 = vpop.f32.mrb[0].mxu0
        %3857 = vmatprep.mubr.bf16.mxu0 %v3524
        %3858 = vmatmul.mubr.bf16.gmra.mrb[0].mxu0 %v3523
        %v3859 = vpop.f32.mrb[0].mxu0
        %v3860 = vadd.f32 0.0, %v3859
        %v3861 = vpop.f32.mrb[0].mxu0
        %v3862 = vpop.f32.mrb[0].mxu0
        %v3863 = vadd.f32 0.0, %v3862
        %v3864 = vpop.f32.mrb[0].mxu0
        %3865 = vmatprep.mubr.bf16.mxu0 %v3527
        %3866 = vmatmul.mubr.bf16.gmra.mrb[0].mxu0 %v3526
        %v3867 = vpop.f32.mrb[0].mxu0
        %v3868 = vadd.f32 0.0, %v3867
        %v3869 = vpop.f32.mrb[0].mxu0
        %v3870 = vpop.f32.mrb[0].mxu0
        %v3871 = vadd.f32 0.0, %v3870
        %v3872 = vpop.f32.mrb[0].mxu0
        %3873 = vmatprep.mubr.bf16.mxu0 %v3530
        %3874 = vmatmul.mubr.bf16.gmra.mrb[0].mxu0 %v3529
        %v3875 = vpop.f32.mrb[0].mxu0
        %v3876 = vadd.f32 0.0, %v3875
        %v3877 = vpop.f32.mrb[0].mxu0
        %v3878 = vpop.f32.mrb[0].mxu0
        %v3879 = vadd.f32 0.0, %v3878
        %v3880 = vpop.f32.mrb[0].mxu0
        %3881 = vmatprep.mubr.bf16.mxu0 %v3533
        %3882 = vmatmul.mubr.bf16.gmra.mrb[0].mxu0 %v3532
        %v3883 = vpop.f32.mrb[0].mxu0
        %v3884 = vadd.f32 0.0, %v3883
        %v3885 = vpop.f32.mrb[0].mxu0
        %v3886 = vpop.f32.mrb[0].mxu0
        %v3887 = vadd.f32 0.0, %v3886
        %v3888 = vpop.f32.mrb[0].mxu0
        %3889 = vmatprep.mubr.bf16.mxu0 %v3536
        %3890 = vmatmul.mubr.bf16.gmra.mrb[0].mxu0 %v3535
        %v3891 = vpop.f32.mrb[0].mxu0
        %v3892 = vadd.f32 0.0, %v3891
        %v3893 = vpop.f32.mrb[0].mxu0
        %v3894 = vpop.f32.mrb[0].mxu0
        %v3895 = vadd.f32 0.0, %v3894
        %v3896 = vpop.f32.mrb[0].mxu0
        %3897 = vmatprep.mubr.bf16.mxu0 %v3539
        %3898 = vmatmul.mubr.bf16.gmra.mrb[0].mxu0 %v3538
        %v3899 = vpop.f32.mrb[0].mxu0
        %v3900 = vadd.f32 0.0, %v3899
        %v3901 = vpop.f32.mrb[0].mxu0
        %v3902 = vpop.f32.mrb[0].mxu0
        %v3903 = vadd.f32 0.0, %v3902
        %v3904 = vpop.f32.mrb[0].mxu0
        %3905 = vmatprep.mubr.bf16.mxu0 %v3542
        %3906 = vmatmul.mubr.bf16.gmra.mrb[0].mxu0 %v3541
        %v3907 = vpop.f32.mrb[0].mxu0
        %v3908 = vadd.f32 0.0, %v3907
        %v3909 = vpop.f32.mrb[0].mxu0
        %v3910 = vpop.f32.mrb[0].mxu0
        %v3911 = vadd.f32 0.0, %v3910
        %v3912 = vpop.f32.mrb[0].mxu0
        %3913 = vdwg.mxu0
        %3914 = vmatprep.subr.bf16.mxu0 0
        %3915 = vmatpush1.bf16.msra.mxu0 %v3681
        %3916 = vmatprep.subr.bf16.mxu0 0
        %3917 = vmatpush1.bf16.msra.mxu0 %v3682
        %3918 = vmatprep.subr.bf16.mxu0 0
        %3919 = vmatpush1.bf16.msra.mxu0 %v3683
        %3920 = vmatprep.subr.bf16.mxu0 0
        %3921 = vmatpush1.bf16.msra.mxu0 %v3684
        %3922 = vmatprep.subr.bf16.mxu0 0
        %3923 = vmatpush1.bf16.msra.mxu0 0
        %3924 = vmatprep.subr.bf16.mxu0 0
        %3925 = vmatpush1.bf16.msra.mxu0 0
        %3926 = vmatprep.subr.bf16.mxu0 0
        %3927 = vmatpush1.bf16.msra.mxu0 0
        %3928 = vmatprep.subr.bf16.mxu0 0
        %3929 = vmatpush1.bf16.msra.mxu0 0
        %3930 = vmatprep.subr.bf16.mxu0 0
        %3931 = vmatpush1.bf16.msra.mxu0 0
        %3932 = vmatprep.subr.bf16.mxu0 0
        %3933 = vmatpush1.bf16.msra.mxu0 0
        %3934 = vmatprep.subr.bf16.mxu0 0
        %3935 = vmatpush1.bf16.msra.mxu0 0
        %3936 = vmatprep.subr.bf16.mxu0 0
        %3937 = vmatpush1.bf16.msra.mxu0 0
        %3938 = vmatprep.subr.bf16.mxu0 0
        %3939 = vmatpush1.bf16.msra.mxu0 0
        %3940 = vmatprep.subr.bf16.mxu0 0
        %3941 = vmatpush1.bf16.msra.mxu0 0
        %3942 = vmatprep.subr.bf16.mxu0 0
        %3943 = vmatpush1.bf16.msra.mxu0 0
        %3944 = vmatprep.subr.bf16.mxu0 0
        %3945 = vmatpush1.bf16.msra.mxu0 0
        %3946 = vmatprep.mubr.bf16.mxu0 0
        %3947 = vmatmul.mubr.bf16.gmra.mrb[0].mxu0 %v3706
        %v3948 = vpop.f32.mrb[0].mxu0
        %v3949 = vadd.f32 %v3788, %v3948
        %v3950 = vpop.f32.mrb[0].mxu0
        %v3951 = vpop.f32.mrb[0].mxu0
        %v3952 = vadd.f32 %v3791, %v3951
        %v3953 = vpop.f32.mrb[0].mxu0
        %3954 = vmatprep.mubr.bf16.mxu0 0
        %3955 = vmatmul.mubr.bf16.gmra.mrb[0].mxu0 %v3709
        %v3956 = vpop.f32.mrb[0].mxu0
        %v3957 = vadd.f32 %v3796, %v3956
        %v3958 = vpop.f32.mrb[0].mxu0
        %v3959 = vpop.f32.mrb[0].mxu0
        %v3960 = vadd.f32 %v3799, %v3959
        %v3961 = vpop.f32.mrb[0].mxu0
        %3962 = vmatprep.mubr.bf16.mxu0 0
        %3963 = vmatmul.mubr.bf16.gmra.mrb[0].mxu0 %v3712
        %v3964 = vpop.f32.mrb[0].mxu0
        %v3965 = vadd.f32 %v3804, %v3964
        %v3966 = vpop.f32.mrb[0].mxu0
        %v3967 = vpop.f32.mrb[0].mxu0
        %v3968 = vadd.f32 %v3807, %v3967
        %v3969 = vpop.f32.mrb[0].mxu0
        %3970 = vmatprep.mubr.bf16.mxu0 0
        %3971 = vmatmul.mubr.bf16.gmra.mrb[0].mxu0 %v3715
        %v3972 = vpop.f32.mrb[0].mxu0
        %v3973 = vadd.f32 %v3812, %v3972
        %v3974 = vpop.f32.mrb[0].mxu0
        %v3975 = vpop.f32.mrb[0].mxu0
        %v3976 = vadd.f32 %v3815, %v3975
        %v3977 = vpop.f32.mrb[0].mxu0
        %3978 = vmatprep.mubr.bf16.mxu0 0
        %3979 = vmatmul.mubr.bf16.gmra.mrb[0].mxu0 %v3718
        %v3980 = vpop.f32.mrb[0].mxu0
        %v3981 = vadd.f32 %v3820, %v3980
        %v3982 = vpop.f32.mrb[0].mxu0
        %v3983 = vpop.f32.mrb[0].mxu0
        %v3984 = vadd.f32 %v3823, %v3983
        %v3985 = vpop.f32.mrb[0].mxu0
        %3986 = vmatprep.mubr.bf16.mxu0 0
        %3987 = vmatmul.mubr.bf16.gmra.mrb[0].mxu0 %v3721
        %v3988 = vpop.f32.mrb[0].mxu0
        %v3989 = vadd.f32 %v3828, %v3988
        %v3990 = vpop.f32.mrb[0].mxu0
        %v3991 = vpop.f32.mrb[0].mxu0
        %v3992 = vadd.f32 %v3831, %v3991
        %v3993 = vpop.f32.mrb[0].mxu0
        %3994 = vmatprep.mubr.bf16.mxu0 0
        %3995 = vmatmul.mubr.bf16.gmra.mrb[0].mxu0 %v3724
        %v3996 = vpop.f32.mrb[0].mxu0
        %v3997 = vadd.f32 %v3836, %v3996
        %v3998 = vpop.f32.mrb[0].mxu0
        %v3999 = vpop.f32.mrb[0].mxu0
        %v4000 = vadd.f32 %v3839, %v3999
        %v4001 = vpop.f32.mrb[0].mxu0
        %4002 = vmatprep.mubr.bf16.mxu0 0
        %4003 = vmatmul.mubr.bf16.gmra.mrb[0].mxu0 %v3727
        %v4004 = vpop.f32.mrb[0].mxu0
        %v4005 = vadd.f32 %v3844, %v4004
        %v4006 = vpop.f32.mrb[0].mxu0
        %v4007 = vpop.f32.mrb[0].mxu0
        %v4008 = vadd.f32 %v3847, %v4007
        %v4009 = vpop.f32.mrb[0].mxu0
        %4010 = vmatprep.mubr.bf16.mxu0 0
        %4011 = vmatmul.mubr.bf16.gmra.mrb[0].mxu0 %v3730
        %v4012 = vpop.f32.mrb[0].mxu0
        %v4013 = vadd.f32 %v3852, %v4012
        %v4014 = vpop.f32.mrb[0].mxu0
        %v4015 = vpop.f32.mrb[0].mxu0
        %v4016 = vadd.f32 %v3855, %v4015
        %v4017 = vpop.f32.mrb[0].mxu0
        %4018 = vmatprep.mubr.bf16.mxu0 0
        %4019 = vmatmul.mubr.bf16.gmra.mrb[0].mxu0 %v3733
        %v4020 = vpop.f32.mrb[0].mxu0
        %v4021 = vadd.f32 %v3860, %v4020
        %v4022 = vpop.f32.mrb[0].mxu0
        %v4023 = vpop.f32.mrb[0].mxu0
        %v4024 = vadd.f32 %v3863, %v4023
        %v4025 = vpop.f32.mrb[0].mxu0
        %4026 = vmatprep.mubr.bf16.mxu0 0
        %4027 = vmatmul.mubr.bf16.gmra.mrb[0].mxu0 %v3736
        %v4028 = vpop.f32.mrb[0].mxu0
        %v4029 = vadd.f32 %v3868, %v4028
        %v4030 = vpop.f32.mrb[0].mxu0
        %v4031 = vpop.f32.mrb[0].mxu0
        %v4032 = vadd.f32 %v3871, %v4031
        %v4033 = vpop.f32.mrb[0].mxu0
        %4034 = vmatprep.mubr.bf16.mxu0 0
        %4035 = vmatmul.mubr.bf16.gmra.mrb[0].mxu0 %v3739
        %v4036 = vpop.f32.mrb[0].mxu0
        %v4037 = vadd.f32 %v3876, %v4036
        %v4038 = vpop.f32.mrb[0].mxu0
        %v4039 = vpop.f32.mrb[0].mxu0
        %v4040 = vadd.f32 %v3879, %v4039
        %v4041 = vpop.f32.mrb[0].mxu0
        %4042 = vmatprep.mubr.bf16.mxu0 0
        %4043 = vmatmul.mubr.bf16.gmra.mrb[0].mxu0 %v3742
        %v4044 = vpop.f32.mrb[0].mxu0
        %v4045 = vadd.f32 %v3884, %v4044
        %v4046 = vpop.f32.mrb[0].mxu0
        %v4047 = vpop.f32.mrb[0].mxu0
        %v4048 = vadd.f32 %v3887, %v4047
        %v4049 = vpop.f32.mrb[0].mxu0
        %4050 = vmatprep.mubr.bf16.mxu0 0
        %4051 = vmatmul.mubr.bf16.gmra.mrb[0].mxu0 %v3745
        %v4052 = vpop.f32.mrb[0].mxu0
        %v4053 = vadd.f32 %v3892, %v4052
        %v4054 = vpop.f32.mrb[0].mxu0
        %v4055 = vpop.f32.mrb[0].mxu0
        %v4056 = vadd.f32 %v3895, %v4055
        %v4057 = vpop.f32.mrb[0].mxu0
        %4058 = vmatprep.mubr.bf16.mxu0 0
        %4059 = vmatmul.mubr.bf16.gmra.mrb[0].mxu0 %v3748
        %v4060 = vpop.f32.mrb[0].mxu0
        %v4061 = vadd.f32 %v3900, %v4060
        %v4062 = vpop.f32.mrb[0].mxu0
        %v4063 = vpop.f32.mrb[0].mxu0
        %v4064 = vadd.f32 %v3903, %v4063
        %v4065 = vpop.f32.mrb[0].mxu0
        %4066 = vmatprep.mubr.bf16.mxu0 0
        %4067 = vmatmul.mubr.bf16.gmra.mrb[0].mxu0 %v3751
        %v4068 = vpop.f32.mrb[0].mxu0
        %v4069 = vadd.f32 %v3908, %v4068
        %v4070 = vpop.f32.mrb[0].mxu0
        %v4071 = vpop.f32.mrb[0].mxu0
        %v4072 = vadd.f32 %v3911, %v4071
        %v4073 = vpop.f32.mrb[0].mxu0
        %4074 = vdwg.mxu0
        %v4075 = vadd.f32 %v3463, %v3949
        %v4076 = vadd.f32 %v3464, %v3952
        %v4077 = vadd.f32 %v3465, %v3957
        %v4078 = vadd.f32 %v3466, %v3960
        %v4079 = vadd.f32 %v3467, %v3965
        %v4080 = vadd.f32 %v3468, %v3968
        %v4081 = vadd.f32 %v3469, %v3973
        %v4082 = vadd.f32 %v3470, %v3976
        %v4083 = vadd.f32 %v3471, %v3981
        %v4084 = vadd.f32 %v3472, %v3984
        %v4085 = vadd.f32 %v3473, %v3989
        %v4086 = vadd.f32 %v3474, %v3992
        %v4087 = vadd.f32 %v3475, %v3997
        %v4088 = vadd.f32 %v3476, %v4000
        %v4089 = vadd.f32 %v3477, %v4005
        %v4090 = vadd.f32 %v3478, %v4008
        %v4091 = vadd.f32 %v3479, %v4013
        %v4092 = vadd.f32 %v3480, %v4016
        %v4093 = vadd.f32 %v3481, %v4021
        %v4094 = vadd.f32 %v3482, %v4024
        %v4095 = vadd.f32 %v3483, %v4029
        %v4096 = vadd.f32 %v3484, %v4032
        %v4097 = vadd.f32 %v3485, %v4037
        %v4098 = vadd.f32 %v3486, %v4040
        %v4099 = vadd.f32 %v3487, %v4045
        %v4100 = vadd.f32 %v3488, %v4048
        %v4101 = vadd.f32 %v3489, %v4053
        %v4102 = vadd.f32 %v3490, %v4056
        %v4103 = vadd.f32 %v3491, %v4061
        %v4104 = vadd.f32 %v3492, %v4064
        %v4105 = vadd.f32 %v3493, %v4069
        %v4106 = vadd.f32 %v3494, %v4072
        %v4107 = vld [vmem:[%s2] sm:$0x1]
        %v4109 = vlaneseq
        %v4110 = vshrl.u32 %v4109, 7
        %v4111 = vsub.s32 0, %v4110
        %v4112 = vrot.slane %v4107, %v4111
        %v4114 = vadd.f32 %v4075, %v4112
        %v4115 = vadd.f32 %v4076, %v4112
        %v4116 = vadd.f32 %v4077, %v4112
        %v4117 = vadd.f32 %v4078, %v4112
        %v4118 = vadd.f32 %v4079, %v4112
        %v4119 = vadd.f32 %v4080, %v4112
        %v4120 = vadd.f32 %v4081, %v4112
        %v4121 = vadd.f32 %v4082, %v4112
        %v4122 = vadd.f32 %v4083, %v4112
        %v4123 = vadd.f32 %v4084, %v4112
        %v4124 = vadd.f32 %v4085, %v4112
        %v4125 = vadd.f32 %v4086, %v4112
        %v4126 = vadd.f32 %v4087, %v4112
        %v4127 = vadd.f32 %v4088, %v4112
        %v4128 = vadd.f32 %v4089, %v4112
        %v4129 = vadd.f32 %v4090, %v4112
        %v4130 = vadd.f32 %v4091, %v4112
        %v4131 = vadd.f32 %v4092, %v4112
        %v4132 = vadd.f32 %v4093, %v4112
        %v4133 = vadd.f32 %v4094, %v4112
        %v4134 = vadd.f32 %v4095, %v4112
        %v4135 = vadd.f32 %v4096, %v4112
        %v4136 = vadd.f32 %v4097, %v4112
        %v4137 = vadd.f32 %v4098, %v4112
        %v4138 = vadd.f32 %v4099, %v4112
        %v4139 = vadd.f32 %v4100, %v4112
        %v4140 = vadd.f32 %v4101, %v4112
        %v4141 = vadd.f32 %v4102, %v4112
        %v4142 = vadd.f32 %v4103, %v4112
        %v4143 = vadd.f32 %v4104, %v4112
        %v4144 = vadd.f32 %v4105, %v4112
        %v4145 = vadd.f32 %v4106, %v4112
        %v4146 = vmax.f32 %v4114, 0.0
        %v4147 = vmax.f32 %v4115, 0.0
        %v4148 = vmax.f32 %v4116, 0.0
        %v4149 = vmax.f32 %v4117, 0.0
        %v4150 = vmax.f32 %v4118, 0.0
        %v4151 = vmax.f32 %v4119, 0.0
        %v4152 = vmax.f32 %v4120, 0.0
        %v4153 = vmax.f32 %v4121, 0.0
        %v4154 = vmax.f32 %v4122, 0.0
        %v4155 = vmax.f32 %v4123, 0.0
        %v4156 = vmax.f32 %v4124, 0.0
        %v4157 = vmax.f32 %v4125, 0.0
        %v4158 = vmax.f32 %v4126, 0.0
        %v4159 = vmax.f32 %v4127, 0.0
        %v4160 = vmax.f32 %v4128, 0.0
        %v4161 = vmax.f32 %v4129, 0.0
        %v4162 = vmax.f32 %v4130, 0.0
        %v4163 = vmax.f32 %v4131, 0.0
        %v4164 = vmax.f32 %v4132, 0.0
        %v4165 = vmax.f32 %v4133, 0.0
        %v4166 = vmax.f32 %v4134, 0.0
        %v4167 = vmax.f32 %v4135, 0.0
        %v4168 = vmax.f32 %v4136, 0.0
        %v4169 = vmax.f32 %v4137, 0.0
        %v4170 = vmax.f32 %v4138, 0.0
        %v4171 = vmax.f32 %v4139, 0.0
        %v4172 = vmax.f32 %v4140, 0.0
        %v4173 = vmax.f32 %v4141, 0.0
        %v4174 = vmax.f32 %v4142, 0.0
        %v4175 = vmax.f32 %v4143, 0.0
        %v4176 = vmax.f32 %v4144, 0.0
        %v4177 = vmax.f32 %v4145, 0.0
        %v4178 = vpack.c.bf16 %v4147, %v4146
        %v4179 = vpack.c.bf16 %v4149, %v4148
        %v4180 = vpack.c.bf16 %v4151, %v4150
        %v4181 = vpack.c.bf16 %v4153, %v4152
        %v4182 = vpack.c.bf16 %v4155, %v4154
        %v4183 = vpack.c.bf16 %v4157, %v4156
        %v4184 = vpack.c.bf16 %v4159, %v4158
        %v4185 = vpack.c.bf16 %v4161, %v4160
        %v4186 = vpack.c.bf16 %v4163, %v4162
        %v4187 = vpack.c.bf16 %v4165, %v4164
        %v4188 = vpack.c.bf16 %v4167, %v4166
        %v4189 = vpack.c.bf16 %v4169, %v4168
        %v4190 = vpack.c.bf16 %v4171, %v4170
        %v4191 = vpack.c.bf16 %v4173, %v4172
        %v4192 = vpack.c.bf16 %v4175, %v4174
        %v4193 = vpack.c.bf16 %v4177, %v4176
        %v4210 = vrot.slane %v4178, 7
        %v4211 = vrot.slane %v4179, 7
        %v4212 = vrot.slane %v4180, 7
        %v4213 = vrot.slane %v4181, 7
        %v4214 = vrot.slane %v4182, 7
        %v4215 = vrot.slane %v4183, 7
        %v4216 = vrot.slane %v4184, 7
        %v4217 = vrot.slane %v4185, 7
        %v4218 = vrot.slane %v4186, 7
        %v4219 = vrot.slane %v4187, 7
        %v4220 = vrot.slane %v4188, 7
        %v4221 = vrot.slane %v4189, 7
        %v4222 = vrot.slane %v4190, 7
        %v4223 = vrot.slane %v4191, 7
        %v4224 = vrot.slane %v4192, 7
        %v4225 = vrot.slane %v4193, 7
        %s4242 = scalar_lea.vmem [#allocation3], 48
        %4243 = vst.msk [vmem:[%s4242] sm:$0xfe] %vm674, %v4210
        %4244 = vst.msk [vmem:[%s4242 + $0x18] sm:$0xfe] %vm674, %v4211
        %4245 = vst.msk [vmem:[%s4242 + $0x30] sm:$0xfe] %vm674, %v4212
        %4246 = vst.msk [vmem:[%s4242 + $0x48] sm:$0xfe] %vm674, %v4213
        %4247 = vst.msk [vmem:[%s4242 + $0x60] sm:$0xfe] %vm674, %v4214
        %4248 = vst.msk [vmem:[%s4242 + $0x78] sm:$0xfe] %vm674, %v4215
        %4249 = vst.msk [vmem:[%s4242 + $0x90] sm:$0xfe] %vm674, %v4216
        %4250 = vst.msk [vmem:[%s4242 + $0xa8] sm:$0xfe] %vm674, %v4217
        %4251 = vst.msk [vmem:[%s4242 + $0xc0] sm:$0xfe] %vm674, %v4218
        %4252 = vst.msk [vmem:[%s4242 + $0xd8] sm:$0xfe] %vm674, %v4219
        %4253 = vst.msk [vmem:[%s4242 + $0xf0] sm:$0xfe] %vm674, %v4220
        %4254 = vst.msk [vmem:[%s4242 + $0x108] sm:$0xfe] %vm674, %v4221
        %4255 = vst.msk [vmem:[%s4242 + $0x120] sm:$0xfe] %vm674, %v4222
        %4256 = vst.msk [vmem:[%s4242 + $0x138] sm:$0xfe] %vm674, %v4223
        %4257 = vst.msk [vmem:[%s4242 + $0x150] sm:$0xfe] %vm674, %v4224
        %4258 = vst.msk [vmem:[%s4242 + $0x168] sm:$0xfe] %vm674, %v4225
        %v4260 = vshrl.u32 %v4178, 16
        %v4262 = vrot.slane %v4260, 7
        %v4263 = vshll.u32 %v4178, 16
        %v4265 = vor.u32 %v4262, %v4263
        %v4267 = vshrl.u32 %v4179, 16
        %v4269 = vrot.slane %v4267, 7
        %v4270 = vshll.u32 %v4179, 16
        %v4272 = vor.u32 %v4269, %v4270
        %v4274 = vshrl.u32 %v4180, 16
        %v4276 = vrot.slane %v4274, 7
        %v4277 = vshll.u32 %v4180, 16
        %v4279 = vor.u32 %v4276, %v4277
        %v4281 = vshrl.u32 %v4181, 16
        %v4283 = vrot.slane %v4281, 7
        %v4284 = vshll.u32 %v4181, 16
        %v4286 = vor.u32 %v4283, %v4284
        %v4288 = vshrl.u32 %v4182, 16
        %v4290 = vrot.slane %v4288, 7
        %v4291 = vshll.u32 %v4182, 16
        %v4293 = vor.u32 %v4290, %v4291
        %v4295 = vshrl.u32 %v4183, 16
        %v4297 = vrot.slane %v4295, 7
        %v4298 = vshll.u32 %v4183, 16
        %v4300 = vor.u32 %v4297, %v4298
        %v4302 = vshrl.u32 %v4184, 16
        %v4304 = vrot.slane %v4302, 7
        %v4305 = vshll.u32 %v4184, 16
        %v4307 = vor.u32 %v4304, %v4305
        %v4309 = vshrl.u32 %v4185, 16
        %v4311 = vrot.slane %v4309, 7
        %v4312 = vshll.u32 %v4185, 16
        %v4314 = vor.u32 %v4311, %v4312
        %v4316 = vshrl.u32 %v4186, 16
        %v4318 = vrot.slane %v4316, 7
        %v4319 = vshll.u32 %v4186, 16
        %v4321 = vor.u32 %v4318, %v4319
        %v4323 = vshrl.u32 %v4187, 16
        %v4325 = vrot.slane %v4323, 7
        %v4326 = vshll.u32 %v4187, 16
        %v4328 = vor.u32 %v4325, %v4326
        %v4330 = vshrl.u32 %v4188, 16
        %v4332 = vrot.slane %v4330, 7
        %v4333 = vshll.u32 %v4188, 16
        %v4335 = vor.u32 %v4332, %v4333
        %v4337 = vshrl.u32 %v4189, 16
        %v4339 = vrot.slane %v4337, 7
        %v4340 = vshll.u32 %v4189, 16
        %v4342 = vor.u32 %v4339, %v4340
        %v4344 = vshrl.u32 %v4190, 16
        %v4346 = vrot.slane %v4344, 7
        %v4347 = vshll.u32 %v4190, 16
        %v4349 = vor.u32 %v4346, %v4347
        %v4351 = vshrl.u32 %v4191, 16
        %v4353 = vrot.slane %v4351, 7
        %v4354 = vshll.u32 %v4191, 16
        %v4356 = vor.u32 %v4353, %v4354
        %v4358 = vshrl.u32 %v4192, 16
        %v4360 = vrot.slane %v4358, 7
        %v4361 = vshll.u32 %v4192, 16
        %v4363 = vor.u32 %v4360, %v4361
        %v4365 = vshrl.u32 %v4193, 16
        %v4367 = vrot.slane %v4365, 7
        %v4368 = vshll.u32 %v4193, 16
        %v4370 = vor.u32 %v4367, %v4368
        %4371 = vrot.lane.b32.xlu0 %v4265, 64
        %v4372 = vpop.permute.xlu0 %4371
        %4373 = vrot.lane.b32.xlu0 %v4272, 64
        %v4374 = vpop.permute.xlu0 %4373
        %4375 = vrot.lane.b32.xlu0 %v4279, 64
        %v4376 = vpop.permute.xlu0 %4375
        %4377 = vrot.lane.b32.xlu0 %v4286, 64
        %v4378 = vpop.permute.xlu0 %4377
        %4379 = vrot.lane.b32.xlu0 %v4293, 64
        %v4380 = vpop.permute.xlu0 %4379
        %4381 = vrot.lane.b32.xlu0 %v4300, 64
        %v4382 = vpop.permute.xlu0 %4381
        %4383 = vrot.lane.b32.xlu0 %v4307, 64
        %v4384 = vpop.permute.xlu0 %4383
        %4385 = vrot.lane.b32.xlu0 %v4314, 64
        %v4386 = vpop.permute.xlu0 %4385
        %4387 = vrot.lane.b32.xlu0 %v4321, 64
        %v4388 = vpop.permute.xlu0 %4387
        %4389 = vrot.lane.b32.xlu0 %v4328, 64
        %v4390 = vpop.permute.xlu0 %4389
        %4391 = vrot.lane.b32.xlu0 %v4335, 64
        %v4392 = vpop.permute.xlu0 %4391
        %4393 = vrot.lane.b32.xlu0 %v4342, 64
        %v4394 = vpop.permute.xlu0 %4393
        %4395 = vrot.lane.b32.xlu0 %v4349, 64
        %v4396 = vpop.permute.xlu0 %4395
        %4397 = vrot.lane.b32.xlu0 %v4356, 64
        %v4398 = vpop.permute.xlu0 %4397
        %4399 = vrot.lane.b32.xlu0 %v4363, 64
        %v4400 = vpop.permute.xlu0 %4399
        %4401 = vrot.lane.b32.xlu0 %v4370, 64
        %v4402 = vpop.permute.xlu0 %4401
        %v4419 = vld [vmem:[%s4242] sm:$0xff]
        %v4420 = vsel %vm853, %v4372, %v4419
        %4421 = vst [vmem:[%s4242] sm:$0xff] %v4420
        %v4422 = vld [vmem:[%s4242 + $0x18] sm:$0xff]
        %v4423 = vsel %vm853, %v4374, %v4422
        %4424 = vst [vmem:[%s4242 + $0x18] sm:$0xff] %v4423
        %v4425 = vld [vmem:[%s4242 + $0x30] sm:$0xff]
        %v4426 = vsel %vm853, %v4376, %v4425
        %4427 = vst [vmem:[%s4242 + $0x30] sm:$0xff] %v4426
        %v4428 = vld [vmem:[%s4242 + $0x48] sm:$0xff]
        %v4429 = vsel %vm853, %v4378, %v4428
        %4430 = vst [vmem:[%s4242 + $0x48] sm:$0xff] %v4429
        %v4431 = vld [vmem:[%s4242 + $0x60] sm:$0xff]
        %v4432 = vsel %vm853, %v4380, %v4431
        %4433 = vst [vmem:[%s4242 + $0x60] sm:$0xff] %v4432
        %v4434 = vld [vmem:[%s4242 + $0x78] sm:$0xff]
        %v4435 = vsel %vm853, %v4382, %v4434
        %4436 = vst [vmem:[%s4242 + $0x78] sm:$0xff] %v4435
        %v4437 = vld [vmem:[%s4242 + $0x90] sm:$0xff]
        %v4438 = vsel %vm853, %v4384, %v4437
        %4439 = vst [vmem:[%s4242 + $0x90] sm:$0xff] %v4438
        %v4440 = vld [vmem:[%s4242 + $0xa8] sm:$0xff]
        %v4441 = vsel %vm853, %v4386, %v4440
        %4442 = vst [vmem:[%s4242 + $0xa8] sm:$0xff] %v4441
        %v4443 = vld [vmem:[%s4242 + $0xc0] sm:$0xff]
        %v4444 = vsel %vm853, %v4388, %v4443
        %4445 = vst [vmem:[%s4242 + $0xc0] sm:$0xff] %v4444
        %v4446 = vld [vmem:[%s4242 + $0xd8] sm:$0xff]
        %v4447 = vsel %vm853, %v4390, %v4446
        %4448 = vst [vmem:[%s4242 + $0xd8] sm:$0xff] %v4447
        %v4449 = vld [vmem:[%s4242 + $0xf0] sm:$0xff]
        %v4450 = vsel %vm853, %v4392, %v4449
        %4451 = vst [vmem:[%s4242 + $0xf0] sm:$0xff] %v4450
        %v4452 = vld [vmem:[%s4242 + $0x108] sm:$0xff]
        %v4453 = vsel %vm853, %v4394, %v4452
        %4454 = vst [vmem:[%s4242 + $0x108] sm:$0xff] %v4453
        %v4455 = vld [vmem:[%s4242 + $0x120] sm:$0xff]
        %v4456 = vsel %vm853, %v4396, %v4455
        %4457 = vst [vmem:[%s4242 + $0x120] sm:$0xff] %v4456
        %v4458 = vld [vmem:[%s4242 + $0x138] sm:$0xff]
        %v4459 = vsel %vm853, %v4398, %v4458
        %4460 = vst [vmem:[%s4242 + $0x138] sm:$0xff] %v4459
        %v4461 = vld [vmem:[%s4242 + $0x150] sm:$0xff]
        %v4462 = vsel %vm853, %v4400, %v4461
        %4463 = vst [vmem:[%s4242 + $0x150] sm:$0xff] %v4462
        %v4464 = vld [vmem:[%s4242 + $0x168] sm:$0xff]
        %v4465 = vsel %vm853, %v4402, %v4464
        %4466 = vst [vmem:[%s4242 + $0x168] sm:$0xff] %v4465
        %4467 = vst.msk [vmem:[%s4242 + $0x8] sm:$0xff] %vm918, %v4178
        %4468 = vst.msk [vmem:[%s4242 + $0x20] sm:$0xff] %vm918, %v4179
        %4469 = vst.msk [vmem:[%s4242 + $0x38] sm:$0xff] %vm918, %v4180
        %4470 = vst.msk [vmem:[%s4242 + $0x50] sm:$0xff] %vm918, %v4181
        %4471 = vst.msk [vmem:[%s4242 + $0x68] sm:$0xff] %vm918, %v4182
        %4472 = vst.msk [vmem:[%s4242 + $0x80] sm:$0xff] %vm918, %v4183
        %4473 = vst.msk [vmem:[%s4242 + $0x98] sm:$0xff] %vm918, %v4184
        %4474 = vst.msk [vmem:[%s4242 + $0xb0] sm:$0xff] %vm918, %v4185
        %4475 = vst.msk [vmem:[%s4242 + $0xc8] sm:$0xff] %vm918, %v4186
        %4476 = vst.msk [vmem:[%s4242 + $0xe0] sm:$0xff] %vm918, %v4187
        %4477 = vst.msk [vmem:[%s4242 + $0xf8] sm:$0xff] %vm918, %v4188
        %4478 = vst.msk [vmem:[%s4242 + $0x110] sm:$0xff] %vm918, %v4189
        %4479 = vst.msk [vmem:[%s4242 + $0x128] sm:$0xff] %vm918, %v4190
        %4480 = vst.msk [vmem:[%s4242 + $0x140] sm:$0xff] %vm918, %v4191
        %4481 = vst.msk [vmem:[%s4242 + $0x158] sm:$0xff] %vm918, %v4192
        %4482 = vst.msk [vmem:[%s4242 + $0x170] sm:$0xff] %vm918, %v4193
        %v4483 = vrot.slane %v4263, 1
        %v4484 = vor.u32 %v4260, %v4483
        %v4485 = vrot.slane %v4270, 1
        %v4486 = vor.u32 %v4267, %v4485
        %v4487 = vrot.slane %v4277, 1
        %v4488 = vor.u32 %v4274, %v4487
        %v4489 = vrot.slane %v4284, 1
        %v4490 = vor.u32 %v4281, %v4489
        %v4491 = vrot.slane %v4291, 1
        %v4492 = vor.u32 %v4288, %v4491
        %v4493 = vrot.slane %v4298, 1
        %v4494 = vor.u32 %v4295, %v4493
        %v4495 = vrot.slane %v4305, 1
        %v4496 = vor.u32 %v4302, %v4495
        %v4497 = vrot.slane %v4312, 1
        %v4498 = vor.u32 %v4309, %v4497
        %v4499 = vrot.slane %v4319, 1
        %v4500 = vor.u32 %v4316, %v4499
        %v4501 = vrot.slane %v4326, 1
        %v4502 = vor.u32 %v4323, %v4501
        %v4503 = vrot.slane %v4333, 1
        %v4504 = vor.u32 %v4330, %v4503
        %v4505 = vrot.slane %v4340, 1
        %v4506 = vor.u32 %v4337, %v4505
        %v4507 = vrot.slane %v4347, 1
        %v4508 = vor.u32 %v4344, %v4507
        %v4509 = vrot.slane %v4354, 1
        %v4510 = vor.u32 %v4351, %v4509
        %v4511 = vrot.slane %v4361, 1
        %v4512 = vor.u32 %v4358, %v4511
        %v4513 = vrot.slane %v4368, 1
        %v4514 = vor.u32 %v4365, %v4513
        %4515 = vrot.lane.b32.xlu0 %v4484, 64
        %v4516 = vpop.permute.xlu0 %4515
        %4517 = vrot.lane.b32.xlu0 %v4486, 64
        %v4518 = vpop.permute.xlu0 %4517
        %4519 = vrot.lane.b32.xlu0 %v4488, 64
        %v4520 = vpop.permute.xlu0 %4519
        %4521 = vrot.lane.b32.xlu0 %v4490, 64
        %v4522 = vpop.permute.xlu0 %4521
        %4523 = vrot.lane.b32.xlu0 %v4492, 64
        %v4524 = vpop.permute.xlu0 %4523
        %4525 = vrot.lane.b32.xlu0 %v4494, 64
        %v4526 = vpop.permute.xlu0 %4525
        %4527 = vrot.lane.b32.xlu0 %v4496, 64
        %v4528 = vpop.permute.xlu0 %4527
        %4529 = vrot.lane.b32.xlu0 %v4498, 64
        %v4530 = vpop.permute.xlu0 %4529
        %4531 = vrot.lane.b32.xlu0 %v4500, 64
        %v4532 = vpop.permute.xlu0 %4531
        %4533 = vrot.lane.b32.xlu0 %v4502, 64
        %v4534 = vpop.permute.xlu0 %4533
        %4535 = vrot.lane.b32.xlu0 %v4504, 64
        %v4536 = vpop.permute.xlu0 %4535
        %4537 = vrot.lane.b32.xlu0 %v4506, 64
        %v4538 = vpop.permute.xlu0 %4537
        %4539 = vrot.lane.b32.xlu0 %v4508, 64
        %v4540 = vpop.permute.xlu0 %4539
        %4541 = vrot.lane.b32.xlu0 %v4510, 64
        %v4542 = vpop.permute.xlu0 %4541
        %4543 = vrot.lane.b32.xlu0 %v4512, 64
        %v4544 = vpop.permute.xlu0 %4543
        %4545 = vrot.lane.b32.xlu0 %v4514, 64
        %v4546 = vpop.permute.xlu0 %4545
        %v4563 = vld [vmem:[%s4242 + $0x8] sm:$0xff]
        %v4564 = vsel %vm1016, %v4516, %v4563
        %4565 = vst [vmem:[%s4242 + $0x8] sm:$0xff] %v4564
        %v4566 = vld [vmem:[%s4242 + $0x20] sm:$0xff]
        %v4567 = vsel %vm1016, %v4518, %v4566
        %4568 = vst [vmem:[%s4242 + $0x20] sm:$0xff] %v4567
        %v4569 = vld [vmem:[%s4242 + $0x38] sm:$0xff]
        %v4570 = vsel %vm1016, %v4520, %v4569
        %4571 = vst [vmem:[%s4242 + $0x38] sm:$0xff] %v4570
        %v4572 = vld [vmem:[%s4242 + $0x50] sm:$0xff]
        %v4573 = vsel %vm1016, %v4522, %v4572
        %4574 = vst [vmem:[%s4242 + $0x50] sm:$0xff] %v4573
        %v4575 = vld [vmem:[%s4242 + $0x68] sm:$0xff]
        %v4576 = vsel %vm1016, %v4524, %v4575
        %4577 = vst [vmem:[%s4242 + $0x68] sm:$0xff] %v4576
        %v4578 = vld [vmem:[%s4242 + $0x80] sm:$0xff]
        %v4579 = vsel %vm1016, %v4526, %v4578
        %4580 = vst [vmem:[%s4242 + $0x80] sm:$0xff] %v4579
        %v4581 = vld [vmem:[%s4242 + $0x98] sm:$0xff]
        %v4582 = vsel %vm1016, %v4528, %v4581
        %4583 = vst [vmem:[%s4242 + $0x98] sm:$0xff] %v4582
        %v4584 = vld [vmem:[%s4242 + $0xb0] sm:$0xff]
        %v4585 = vsel %vm1016, %v4530, %v4584
        %4586 = vst [vmem:[%s4242 + $0xb0] sm:$0xff] %v4585
        %v4587 = vld [vmem:[%s4242 + $0xc8] sm:$0xff]
        %v4588 = vsel %vm1016, %v4532, %v4587
        %4589 = vst [vmem:[%s4242 + $0xc8] sm:$0xff] %v4588
        %v4590 = vld [vmem:[%s4242 + $0xe0] sm:$0xff]
        %v4591 = vsel %vm1016, %v4534, %v4590
        %4592 = vst [vmem:[%s4242 + $0xe0] sm:$0xff] %v4591
        %v4593 = vld [vmem:[%s4242 + $0xf8] sm:$0xff]
        %v4594 = vsel %vm1016, %v4536, %v4593
        %4595 = vst [vmem:[%s4242 + $0xf8] sm:$0xff] %v4594
        %v4596 = vld [vmem:[%s4242 + $0x110] sm:$0xff]
        %v4597 = vsel %vm1016, %v4538, %v4596
        %4598 = vst [vmem:[%s4242 + $0x110] sm:$0xff] %v4597
        %v4599 = vld [vmem:[%s4242 + $0x128] sm:$0xff]
        %v4600 = vsel %vm1016, %v4540, %v4599
        %4601 = vst [vmem:[%s4242 + $0x128] sm:$0xff] %v4600
        %v4602 = vld [vmem:[%s4242 + $0x140] sm:$0xff]
        %v4603 = vsel %vm1016, %v4542, %v4602
        %4604 = vst [vmem:[%s4242 + $0x140] sm:$0xff] %v4603
        %v4605 = vld [vmem:[%s4242 + $0x158] sm:$0xff]
        %v4606 = vsel %vm1016, %v4544, %v4605
        %4607 = vst [vmem:[%s4242 + $0x158] sm:$0xff] %v4606
        %v4608 = vld [vmem:[%s4242 + $0x170] sm:$0xff]
        %v4609 = vsel %vm1016, %v4546, %v4608
        %4610 = vst [vmem:[%s4242 + $0x170] sm:$0xff] %v4609
        %v4611 = vrot.slane %v4178, 1
        %v4612 = vrot.slane %v4179, 1
        %v4613 = vrot.slane %v4180, 1
        %v4614 = vrot.slane %v4181, 1
        %v4615 = vrot.slane %v4182, 1
        %v4616 = vrot.slane %v4183, 1
        %v4617 = vrot.slane %v4184, 1
        %v4618 = vrot.slane %v4185, 1
        %v4619 = vrot.slane %v4186, 1
        %v4620 = vrot.slane %v4187, 1
        %v4621 = vrot.slane %v4188, 1
        %v4622 = vrot.slane %v4189, 1
        %v4623 = vrot.slane %v4190, 1
        %v4624 = vrot.slane %v4191, 1
        %v4625 = vrot.slane %v4192, 1
        %v4626 = vrot.slane %v4193, 1
        %4643 = vst.msk [vmem:[%s4242 + $0x10] sm:$0x7f] %vm1097, %v4611
        %4644 = vst.msk [vmem:[%s4242 + $0x28] sm:$0x7f] %vm1097, %v4612
        %4645 = vst.msk [vmem:[%s4242 + $0x40] sm:$0x7f] %vm1097, %v4613
        %4646 = vst.msk [vmem:[%s4242 + $0x58] sm:$0x7f] %vm1097, %v4614
        %4647 = vst.msk [vmem:[%s4242 + $0x70] sm:$0x7f] %vm1097, %v4615
        %4648 = vst.msk [vmem:[%s4242 + $0x88] sm:$0x7f] %vm1097, %v4616
        %4649 = vst.msk [vmem:[%s4242 + $0xa0] sm:$0x7f] %vm1097, %v4617
        %4650 = vst.msk [vmem:[%s4242 + $0xb8] sm:$0x7f] %vm1097, %v4618
        %4651 = vst.msk [vmem:[%s4242 + $0xd0] sm:$0x7f] %vm1097, %v4619
        %4652 = vst.msk [vmem:[%s4242 + $0xe8] sm:$0x7f] %vm1097, %v4620
        %4653 = vst.msk [vmem:[%s4242 + $0x100] sm:$0x7f] %vm1097, %v4621
        %4654 = vst.msk [vmem:[%s4242 + $0x118] sm:$0x7f] %vm1097, %v4622
        %4655 = vst.msk [vmem:[%s4242 + $0x130] sm:$0x7f] %vm1097, %v4623
        %4656 = vst.msk [vmem:[%s4242 + $0x148] sm:$0x7f] %vm1097, %v4624
        %4657 = vst.msk [vmem:[%s4242 + $0x160] sm:$0x7f] %vm1097, %v4625
        %4658 = vst.msk [vmem:[%s4242 + $0x178] sm:$0x7f] %vm1097, %v4626
        %v4659 = vld [vmem:[#allocation3] sm:$0xff]
        %v4660 = vld [vmem:[#allocation3 + $0x8] sm:$0xff]
        %v4661 = vld [vmem:[#allocation3 + $0x10] sm:$0xff]
        %v4662 = vld [vmem:[#allocation3 + $0x18] sm:$0xff]
        %v4663 = vld [vmem:[#allocation3 + $0x20] sm:$0xff]
        %v4664 = vld [vmem:[#allocation3 + $0x28] sm:$0xff]
        %v4665 = vld [vmem:[#allocation3 + $0x30] sm:$0xff]
        %v4666 = vld [vmem:[#allocation3 + $0x38] sm:$0xff]
        %v4667 = vld [vmem:[#allocation3 + $0x40] sm:$0xff]
        %v4668 = vld [vmem:[#allocation3 + $0x48] sm:$0xff]
        %v4669 = vld [vmem:[#allocation3 + $0x50] sm:$0xff]
        %v4670 = vld [vmem:[#allocation3 + $0x58] sm:$0xff]
        %v4671 = vld [vmem:[#allocation3 + $0x60] sm:$0xff]
        %v4672 = vld [vmem:[#allocation3 + $0x68] sm:$0xff]
        %v4673 = vld [vmem:[#allocation3 + $0x70] sm:$0xff]
        %v4674 = vld [vmem:[#allocation3 + $0x78] sm:$0xff]
        %v4675 = vld [vmem:[#allocation3 + $0x80] sm:$0xff]
        %v4676 = vld [vmem:[#allocation3 + $0x88] sm:$0xff]
        %v4677 = vld [vmem:[#allocation3 + $0x90] sm:$0xff]
        %v4678 = vld [vmem:[#allocation3 + $0x98] sm:$0xff]
        %v4679 = vld [vmem:[#allocation3 + $0xa0] sm:$0xff]
        %v4680 = vld [vmem:[#allocation3 + $0xa8] sm:$0xff]
        %v4681 = vld [vmem:[#allocation3 + $0xb0] sm:$0xff]
        %v4682 = vld [vmem:[#allocation3 + $0xb8] sm:$0xff]
        %v4683 = vld [vmem:[#allocation3 + $0xc0] sm:$0xff]
        %v4684 = vld [vmem:[#allocation3 + $0xc8] sm:$0xff]
        %v4685 = vld [vmem:[#allocation3 + $0xd0] sm:$0xff]
        %v4686 = vld [vmem:[#allocation3 + $0xd8] sm:$0xff]
        %v4687 = vld [vmem:[#allocation3 + $0xe0] sm:$0xff]
        %v4688 = vld [vmem:[#allocation3 + $0xe8] sm:$0xff]
        %v4689 = vld [vmem:[#allocation3 + $0xf0] sm:$0xff]
        %v4690 = vld [vmem:[#allocation3 + $0xf8] sm:$0xff]
        %v4691 = vld [vmem:[#allocation3 + $0x100] sm:$0xff]
        %v4692 = vld [vmem:[#allocation3 + $0x108] sm:$0xff]
        %v4693 = vld [vmem:[#allocation3 + $0x110] sm:$0xff]
        %v4694 = vld [vmem:[#allocation3 + $0x118] sm:$0xff]
        %v4695 = vld [vmem:[#allocation3 + $0x120] sm:$0xff]
        %v4696 = vld [vmem:[#allocation3 + $0x128] sm:$0xff]
        %v4697 = vld [vmem:[#allocation3 + $0x130] sm:$0xff]
        %v4698 = vld [vmem:[#allocation3 + $0x138] sm:$0xff]
        %v4699 = vld [vmem:[#allocation3 + $0x140] sm:$0xff]
        %v4700 = vld [vmem:[#allocation3 + $0x148] sm:$0xff]
        %v4701 = vld [vmem:[#allocation3 + $0x150] sm:$0xff]
        %v4702 = vld [vmem:[#allocation3 + $0x158] sm:$0xff]
        %v4703 = vld [vmem:[#allocation3 + $0x160] sm:$0xff]
        %v4704 = vld [vmem:[#allocation3 + $0x168] sm:$0xff]
        %v4705 = vld [vmem:[#allocation3 + $0x170] sm:$0xff]
        %v4706 = vld [vmem:[#allocation3 + $0x178] sm:$0xff]
        %v4707 = vld [vmem:[%s3] sm:$0xf]
        %v4708 = vld [vmem:[%s3 + $0x4] sm:$0xf]
        %v4709 = vld [vmem:[%s3 + $0x8] sm:$0xf]
        %v4710 = vld [vmem:[%s3 + $0xc] sm:$0xf]
        %v4711 = vld [vmem:[%s3 + $0x10] sm:$0xf]
        %v4712 = vld [vmem:[%s3 + $0x14] sm:$0xf]
        %v4713 = vld [vmem:[%s3 + $0x18] sm:$0xf]
        %v4714 = vld [vmem:[%s3 + $0x1c] sm:$0xf]
        %v4715 = vld [vmem:[%s3 + $0x20] sm:$0xf]
        %v4716 = vld [vmem:[%s3 + $0x24] sm:$0xf]
        %v4717 = vld [vmem:[%s3 + $0x28] sm:$0xf]
        %v4718 = vld [vmem:[%s3 + $0x2c] sm:$0xf]
        %v4719 = vld [vmem:[%s3 + $0x30] sm:$0xf]
        %v4720 = vld [vmem:[%s3 + $0x34] sm:$0xf]
        %v4721 = vld [vmem:[%s3 + $0x38] sm:$0xf]
        %v4722 = vld [vmem:[%s3 + $0x3c] sm:$0xf]
        %v4723 = vld [vmem:[%s3 + $0x40] sm:$0xf]
        %v4724 = vld [vmem:[%s3 + $0x44] sm:$0xf]
        %v4725 = vld [vmem:[%s3 + $0x48] sm:$0xf]
        %v4726 = vld [vmem:[%s3 + $0x4c] sm:$0xf]
        %v4727 = vld [vmem:[%s3 + $0x50] sm:$0xf]
        %v4728 = vld [vmem:[%s3 + $0x54] sm:$0xf]
        %v4729 = vld [vmem:[%s3 + $0x58] sm:$0xf]
        %v4730 = vld [vmem:[%s3 + $0x5c] sm:$0xf]
        %v4731 = vld [vmem:[%s3 + $0x60] sm:$0xf]
        %v4732 = vld [vmem:[%s3 + $0x64] sm:$0xf]
        %v4733 = vld [vmem:[%s3 + $0x68] sm:$0xf]
        %v4734 = vld [vmem:[%s3 + $0x6c] sm:$0xf]
        %v4735 = vld [vmem:[%s3 + $0x70] sm:$0xf]
        %v4736 = vld [vmem:[%s3 + $0x74] sm:$0xf]
        %v4737 = vld [vmem:[%s3 + $0x78] sm:$0xf]
        %v4738 = vld [vmem:[%s3 + $0x7c] sm:$0xf]
        %v4739 = vld [vmem:[%s3 + $0x80] sm:$0xf]
        %v4740 = vld [vmem:[%s3 + $0x84] sm:$0xf]
        %v4741 = vld [vmem:[%s3 + $0x88] sm:$0xf]
        %v4742 = vld [vmem:[%s3 + $0x8c] sm:$0xf]
        %v4743 = vld [vmem:[%s3 + $0x90] sm:$0xf]
        %v4744 = vld [vmem:[%s3 + $0x94] sm:$0xf]
        %v4745 = vld [vmem:[%s3 + $0x98] sm:$0xf]
        %v4746 = vld [vmem:[%s3 + $0x9c] sm:$0xf]
        %s4747 = scalar_lea.vmem [#allocation3], 24
        %v4748 = vld [vmem:[%s4747] sm:$0xff]
        %v4749 = vld [vmem:[%s4747 + $0x8] sm:$0xff]
        %v4750 = vld [vmem:[%s4747 + $0x10] sm:$0xff]
        %v4751 = vld [vmem:[%s4747 + $0x18] sm:$0xff]
        %v4752 = vld [vmem:[%s4747 + $0x20] sm:$0xff]
        %v4753 = vld [vmem:[%s4747 + $0x28] sm:$0xff]
        %v4754 = vld [vmem:[%s4747 + $0x30] sm:$0xff]
        %v4755 = vld [vmem:[%s4747 + $0x38] sm:$0xff]
        %v4756 = vld [vmem:[%s4747 + $0x40] sm:$0xff]
        %v4757 = vld [vmem:[%s4747 + $0x48] sm:$0xff]
        %v4758 = vld [vmem:[%s4747 + $0x50] sm:$0xff]
        %v4759 = vld [vmem:[%s4747 + $0x58] sm:$0xff]
        %v4760 = vld [vmem:[%s4747 + $0x60] sm:$0xff]
        %v4761 = vld [vmem:[%s4747 + $0x68] sm:$0xff]
        %v4762 = vld [vmem:[%s4747 + $0x70] sm:$0xff]
        %v4763 = vld [vmem:[%s4747 + $0x78] sm:$0xff]
        %v4764 = vld [vmem:[%s4747 + $0x80] sm:$0xff]
        %v4765 = vld [vmem:[%s4747 + $0x88] sm:$0xff]
        %v4766 = vld [vmem:[%s4747 + $0x90] sm:$0xff]
        %v4767 = vld [vmem:[%s4747 + $0x98] sm:$0xff]
        %v4768 = vld [vmem:[%s4747 + $0xa0] sm:$0xff]
        %v4769 = vld [vmem:[%s4747 + $0xa8] sm:$0xff]
        %v4770 = vld [vmem:[%s4747 + $0xb0] sm:$0xff]
        %v4771 = vld [vmem:[%s4747 + $0xb8] sm:$0xff]
        %v4772 = vld [vmem:[%s4747 + $0xc0] sm:$0xff]
        %v4773 = vld [vmem:[%s4747 + $0xc8] sm:$0xff]
        %v4774 = vld [vmem:[%s4747 + $0xd0] sm:$0xff]
        %v4775 = vld [vmem:[%s4747 + $0xd8] sm:$0xff]
        %v4776 = vld [vmem:[%s4747 + $0xe0] sm:$0xff]
        %v4777 = vld [vmem:[%s4747 + $0xe8] sm:$0xff]
        %v4778 = vld [vmem:[%s4747 + $0xf0] sm:$0xff]
        %v4779 = vld [vmem:[%s4747 + $0xf8] sm:$0xff]
        %v4780 = vld [vmem:[%s4747 + $0x100] sm:$0xff]
        %v4781 = vld [vmem:[%s4747 + $0x108] sm:$0xff]
        %v4782 = vld [vmem:[%s4747 + $0x110] sm:$0xff]
        %v4783 = vld [vmem:[%s4747 + $0x118] sm:$0xff]
        %v4784 = vld [vmem:[%s4747 + $0x120] sm:$0xff]
        %v4785 = vld [vmem:[%s4747 + $0x128] sm:$0xff]
        %v4786 = vld [vmem:[%s4747 + $0x130] sm:$0xff]
        %v4787 = vld [vmem:[%s4747 + $0x138] sm:$0xff]
        %v4788 = vld [vmem:[%s4747 + $0x140] sm:$0xff]
        %v4789 = vld [vmem:[%s4747 + $0x148] sm:$0xff]
        %v4790 = vld [vmem:[%s4747 + $0x150] sm:$0xff]
        %v4791 = vld [vmem:[%s4747 + $0x158] sm:$0xff]
        %v4792 = vld [vmem:[%s4747 + $0x160] sm:$0xff]
        %v4793 = vld [vmem:[%s4747 + $0x168] sm:$0xff]
        %v4794 = vld [vmem:[%s4747 + $0x170] sm:$0xff]
        %v4795 = vld [vmem:[%s4747 + $0x178] sm:$0xff]
        %s4796 = scalar_lea.vmem %s3, 160
        %v4797 = vld [vmem:[%s4796] sm:$0xf]
        %v4798 = vld [vmem:[%s4796 + $0x4] sm:$0xf]
        %v4799 = vld [vmem:[%s4796 + $0x8] sm:$0xf]
        %v4800 = vld [vmem:[%s4796 + $0xc] sm:$0xf]
        %v4801 = vld [vmem:[%s4796 + $0x10] sm:$0xf]
        %v4802 = vld [vmem:[%s4796 + $0x14] sm:$0xf]
        %v4803 = vld [vmem:[%s4796 + $0x18] sm:$0xf]
        %v4804 = vld [vmem:[%s4796 + $0x1c] sm:$0xf]
        %v4805 = vld [vmem:[%s4796 + $0x20] sm:$0xf]
        %v4806 = vld [vmem:[%s4796 + $0x24] sm:$0xf]
        %v4807 = vld [vmem:[%s4796 + $0x28] sm:$0xf]
        %v4808 = vld [vmem:[%s4796 + $0x2c] sm:$0xf]
        %v4809 = vld [vmem:[%s4796 + $0x30] sm:$0xf]
        %v4810 = vld [vmem:[%s4796 + $0x34] sm:$0xf]
        %v4811 = vld [vmem:[%s4796 + $0x38] sm:$0xf]
        %v4812 = vld [vmem:[%s4796 + $0x3c] sm:$0xf]
        %v4813 = vld [vmem:[%s4796 + $0x40] sm:$0xf]
        %v4814 = vld [vmem:[%s4796 + $0x44] sm:$0xf]
        %v4815 = vld [vmem:[%s4796 + $0x48] sm:$0xf]
        %v4816 = vld [vmem:[%s4796 + $0x4c] sm:$0xf]
        %v4817 = vld [vmem:[%s4796 + $0x50] sm:$0xf]
        %v4818 = vld [vmem:[%s4796 + $0x54] sm:$0xf]
        %v4819 = vld [vmem:[%s4796 + $0x58] sm:$0xf]
        %v4820 = vld [vmem:[%s4796 + $0x5c] sm:$0xf]
        %v4821 = vld [vmem:[%s4796 + $0x60] sm:$0xf]
        %v4822 = vld [vmem:[%s4796 + $0x64] sm:$0xf]
        %v4823 = vld [vmem:[%s4796 + $0x68] sm:$0xf]
        %v4824 = vld [vmem:[%s4796 + $0x6c] sm:$0xf]
        %v4825 = vld [vmem:[%s4796 + $0x70] sm:$0xf]
        %v4826 = vld [vmem:[%s4796 + $0x74] sm:$0xf]
        %v4827 = vld [vmem:[%s4796 + $0x78] sm:$0xf]
        %v4828 = vld [vmem:[%s4796 + $0x7c] sm:$0xf]
        %v4829 = vld [vmem:[%s4796 + $0x80] sm:$0xf]
        %v4830 = vld [vmem:[%s4796 + $0x84] sm:$0xf]
        %v4831 = vld [vmem:[%s4796 + $0x88] sm:$0xf]
        %v4832 = vld [vmem:[%s4796 + $0x8c] sm:$0xf]
        %v4833 = vld [vmem:[%s4796 + $0x90] sm:$0xf]
        %v4834 = vld [vmem:[%s4796 + $0x94] sm:$0xf]
        %v4835 = vld [vmem:[%s4796 + $0x98] sm:$0xf]
        %v4836 = vld [vmem:[%s4796 + $0x9c] sm:$0xf]
        %v4877 = vunpack.c.l.b16 %v4797
        %v4878 = vunpack.c.l.b16 %v4798
        %v4879 = vunpack.c.l.b16 %v4799
        %v4880 = vunpack.c.l.b16 %v4800
        %v4881 = vunpack.c.l.b16 %v4801
        %v4882 = vunpack.c.l.b16 %v4802
        %v4883 = vunpack.c.l.b16 %v4803
        %v4884 = vunpack.c.l.b16 %v4804
        %v4885 = vunpack.c.l.b16 %v4805
        %v4886 = vunpack.c.l.b16 %v4806
        %v4887 = vunpack.c.l.b16 %v4807
        %v4888 = vunpack.c.l.b16 %v4808
        %v4889 = vunpack.c.l.b16 %v4809
        %v4890 = vunpack.c.l.b16 %v4810
        %v4891 = vunpack.c.l.b16 %v4811
        %v4892 = vunpack.c.l.b16 %v4812
        %v4893 = vunpack.c.l.b16 %v4813
        %v4894 = vunpack.c.l.b16 %v4814
        %v4895 = vunpack.c.l.b16 %v4815
        %v4896 = vunpack.c.l.b16 %v4816
        %v4897 = vunpack.c.l.b16 %v4817
        %v4898 = vunpack.c.l.b16 %v4818
        %v4899 = vunpack.c.l.b16 %v4819
        %v4900 = vunpack.c.l.b16 %v4820
        %v4901 = vunpack.c.l.b16 %v4821
        %v4902 = vunpack.c.l.b16 %v4822
        %v4903 = vunpack.c.l.b16 %v4823
        %v4904 = vunpack.c.l.b16 %v4824
        %v4905 = vunpack.c.l.b16 %v4825
        %v4906 = vunpack.c.l.b16 %v4826
        %v4907 = vunpack.c.l.b16 %v4827
        %v4908 = vunpack.c.l.b16 %v4828
        %v4909 = vunpack.c.l.b16 %v4829
        %v4910 = vunpack.c.l.b16 %v4830
        %v4911 = vunpack.c.l.b16 %v4831
        %v4912 = vunpack.c.l.b16 %v4832
        %v4913 = vunpack.c.l.b16 %v4833
        %v4914 = vunpack.c.l.b16 %v4834
        %v4915 = vunpack.c.l.b16 %v4835
        %v4916 = vunpack.c.l.b16 %v4836
        %v4917 = vpack.c.b16 %v4878, %v4877
        %v4918 = vpack.c.b16 %v4880, %v4879
        %v4919 = vpack.c.b16 %v4882, %v4881
        %v4920 = vpack.c.b16 %v4884, %v4883
        %v4921 = vpack.c.b16 %v4886, %v4885
        %v4922 = vpack.c.b16 %v4888, %v4887
        %v4923 = vpack.c.b16 %v4890, %v4889
        %v4924 = vpack.c.b16 %v4892, %v4891
        %v4925 = vpack.c.b16 %v4894, %v4893
        %v4926 = vpack.c.b16 %v4896, %v4895
        %v4927 = vpack.c.b16 %v4898, %v4897
        %v4928 = vpack.c.b16 %v4900, %v4899
        %v4929 = vpack.c.b16 %v4902, %v4901
        %v4930 = vpack.c.b16 %v4904, %v4903
        %v4931 = vpack.c.b16 %v4906, %v4905
        %v4932 = vpack.c.b16 %v4908, %v4907
        %v4933 = vpack.c.b16 %v4910, %v4909
        %v4934 = vpack.c.b16 %v4912, %v4911
        %v4935 = vpack.c.b16 %v4914, %v4913
        %v4936 = vpack.c.b16 %v4916, %v4915
        %v4958 = vsel %vm918, %v4750, 0
        %v4961 = vsel %vm918, %v4753, 0
        %v4964 = vsel %vm918, %v4756, 0
        %v4967 = vsel %vm918, %v4759, 0
        %v4970 = vsel %vm918, %v4762, 0
        %v4973 = vsel %vm918, %v4765, 0
        %v4976 = vsel %vm918, %v4768, 0
        %v4979 = vsel %vm918, %v4771, 0
        %v4982 = vsel %vm918, %v4774, 0
        %v4985 = vsel %vm918, %v4777, 0
        %v4988 = vsel %vm918, %v4780, 0
        %v4991 = vsel %vm918, %v4783, 0
        %v4994 = vsel %vm918, %v4786, 0
        %v4997 = vsel %vm918, %v4789, 0
        %v5000 = vsel %vm918, %v4792, 0
        %v5003 = vsel %vm918, %v4795, 0
        %5005 = vmatprep.subr.bf16.mxu0 0
        %5006 = vmatpush1.bf16.msra.mxu0 %v4917
        %5007 = vmatprep.subr.bf16.mxu0 0
        %5008 = vmatpush1.bf16.msra.mxu0 %v4918
        %5009 = vmatprep.subr.bf16.mxu0 0
        %5010 = vmatpush1.bf16.msra.mxu0 %v4919
        %5011 = vmatprep.subr.bf16.mxu0 0
        %5012 = vmatpush1.bf16.msra.mxu0 %v4920
        %5013 = vmatprep.subr.bf16.mxu0 0
        %5014 = vmatpush1.bf16.msra.mxu0 %v4921
        %5015 = vmatprep.subr.bf16.mxu0 0
        %5016 = vmatpush1.bf16.msra.mxu0 %v4922
        %5017 = vmatprep.subr.bf16.mxu0 0
        %5018 = vmatpush1.bf16.msra.mxu0 %v4923
        %5019 = vmatprep.subr.bf16.mxu0 0
        %5020 = vmatpush1.bf16.msra.mxu0 %v4924
        %5021 = vmatprep.subr.bf16.mxu0 0
        %5022 = vmatpush1.bf16.msra.mxu0 %v4925
        %5023 = vmatprep.subr.bf16.mxu0 0
        %5024 = vmatpush1.bf16.msra.mxu0 %v4926
        %5025 = vmatprep.subr.bf16.mxu0 0
        %5026 = vmatpush1.bf16.msra.mxu0 %v4927
        %5027 = vmatprep.subr.bf16.mxu0 0
        %5028 = vmatpush1.bf16.msra.mxu0 %v4928
        %5029 = vmatprep.subr.bf16.mxu0 0
        %5030 = vmatpush1.bf16.msra.mxu0 %v4929
        %5031 = vmatprep.subr.bf16.mxu0 0
        %5032 = vmatpush1.bf16.msra.mxu0 %v4930
        %5033 = vmatprep.subr.bf16.mxu0 0
        %5034 = vmatpush1.bf16.msra.mxu0 %v4931
        %5035 = vmatprep.subr.bf16.mxu0 0
        %5036 = vmatpush1.bf16.msra.mxu0 %v4932
        %5037 = vmatprep.mubr.bf16.mxu0 %v4749
        %5038 = vmatmul.mubr.bf16.gmra.mrb[0].mxu0 %v4748
        %v5039 = vpop.f32.mrb[0].mxu0
        %v5040 = vadd.f32 0.0, %v5039
        %v5041 = vpop.f32.mrb[0].mxu0
        %v5042 = vpop.f32.mrb[0].mxu0
        %v5043 = vadd.f32 0.0, %v5042
        %v5044 = vpop.f32.mrb[0].mxu0
        %5045 = vmatprep.mubr.bf16.mxu0 %v4752
        %5046 = vmatmul.mubr.bf16.gmra.mrb[0].mxu0 %v4751
        %v5047 = vpop.f32.mrb[0].mxu0
        %v5048 = vadd.f32 0.0, %v5047
        %v5049 = vpop.f32.mrb[0].mxu0
        %v5050 = vpop.f32.mrb[0].mxu0
        %v5051 = vadd.f32 0.0, %v5050
        %v5052 = vpop.f32.mrb[0].mxu0
        %5053 = vmatprep.mubr.bf16.mxu0 %v4755
        %5054 = vmatmul.mubr.bf16.gmra.mrb[0].mxu0 %v4754
        %v5055 = vpop.f32.mrb[0].mxu0
        %v5056 = vadd.f32 0.0, %v5055
        %v5057 = vpop.f32.mrb[0].mxu0
        %v5058 = vpop.f32.mrb[0].mxu0
        %v5059 = vadd.f32 0.0, %v5058
        %v5060 = vpop.f32.mrb[0].mxu0
        %5061 = vmatprep.mubr.bf16.mxu0 %v4758
        %5062 = vmatmul.mubr.bf16.gmra.mrb[0].mxu0 %v4757
        %v5063 = vpop.f32.mrb[0].mxu0
        %v5064 = vadd.f32 0.0, %v5063
        %v5065 = vpop.f32.mrb[0].mxu0
        %v5066 = vpop.f32.mrb[0].mxu0
        %v5067 = vadd.f32 0.0, %v5066
        %v5068 = vpop.f32.mrb[0].mxu0
        %5069 = vmatprep.mubr.bf16.mxu0 %v4761
        %5070 = vmatmul.mubr.bf16.gmra.mrb[0].mxu0 %v4760
        %v5071 = vpop.f32.mrb[0].mxu0
        %v5072 = vadd.f32 0.0, %v5071
        %v5073 = vpop.f32.mrb[0].mxu0
        %v5074 = vpop.f32.mrb[0].mxu0
        %v5075 = vadd.f32 0.0, %v5074
        %v5076 = vpop.f32.mrb[0].mxu0
        %5077 = vmatprep.mubr.bf16.mxu0 %v4764
        %5078 = vmatmul.mubr.bf16.gmra.mrb[0].mxu0 %v4763
        %v5079 = vpop.f32.mrb[0].mxu0
        %v5080 = vadd.f32 0.0, %v5079
        %v5081 = vpop.f32.mrb[0].mxu0
        %v5082 = vpop.f32.mrb[0].mxu0
        %v5083 = vadd.f32 0.0, %v5082
        %v5084 = vpop.f32.mrb[0].mxu0
        %5085 = vmatprep.mubr.bf16.mxu0 %v4767
        %5086 = vmatmul.mubr.bf16.gmra.mrb[0].mxu0 %v4766
        %v5087 = vpop.f32.mrb[0].mxu0
        %v5088 = vadd.f32 0.0, %v5087
        %v5089 = vpop.f32.mrb[0].mxu0
        %v5090 = vpop.f32.mrb[0].mxu0
        %v5091 = vadd.f32 0.0, %v5090
        %v5092 = vpop.f32.mrb[0].mxu0
        %5093 = vmatprep.mubr.bf16.mxu0 %v4770
        %5094 = vmatmul.mubr.bf16.gmra.mrb[0].mxu0 %v4769
        %v5095 = vpop.f32.mrb[0].mxu0
        %v5096 = vadd.f32 0.0, %v5095
        %v5097 = vpop.f32.mrb[0].mxu0
        %v5098 = vpop.f32.mrb[0].mxu0
        %v5099 = vadd.f32 0.0, %v5098
        %v5100 = vpop.f32.mrb[0].mxu0
        %5101 = vmatprep.mubr.bf16.mxu0 %v4773
        %5102 = vmatmul.mubr.bf16.gmra.mrb[0].mxu0 %v4772
        %v5103 = vpop.f32.mrb[0].mxu0
        %v5104 = vadd.f32 0.0, %v5103
        %v5105 = vpop.f32.mrb[0].mxu0
        %v5106 = vpop.f32.mrb[0].mxu0
        %v5107 = vadd.f32 0.0, %v5106
        %v5108 = vpop.f32.mrb[0].mxu0
        %5109 = vmatprep.mubr.bf16.mxu0 %v4776
        %5110 = vmatmul.mubr.bf16.gmra.mrb[0].mxu0 %v4775
        %v5111 = vpop.f32.mrb[0].mxu0
        %v5112 = vadd.f32 0.0, %v5111
        %v5113 = vpop.f32.mrb[0].mxu0
        %v5114 = vpop.f32.mrb[0].mxu0
        %v5115 = vadd.f32 0.0, %v5114
        %v5116 = vpop.f32.mrb[0].mxu0
        %5117 = vmatprep.mubr.bf16.mxu0 %v4779
        %5118 = vmatmul.mubr.bf16.gmra.mrb[0].mxu0 %v4778
        %v5119 = vpop.f32.mrb[0].mxu0
        %v5120 = vadd.f32 0.0, %v5119
        %v5121 = vpop.f32.mrb[0].mxu0
        %v5122 = vpop.f32.mrb[0].mxu0
        %v5123 = vadd.f32 0.0, %v5122
        %v5124 = vpop.f32.mrb[0].mxu0
        %5125 = vmatprep.mubr.bf16.mxu0 %v4782
        %5126 = vmatmul.mubr.bf16.gmra.mrb[0].mxu0 %v4781
        %v5127 = vpop.f32.mrb[0].mxu0
        %v5128 = vadd.f32 0.0, %v5127
        %v5129 = vpop.f32.mrb[0].mxu0
        %v5130 = vpop.f32.mrb[0].mxu0
        %v5131 = vadd.f32 0.0, %v5130
        %v5132 = vpop.f32.mrb[0].mxu0
        %5133 = vmatprep.mubr.bf16.mxu0 %v4785
        %5134 = vmatmul.mubr.bf16.gmra.mrb[0].mxu0 %v4784
        %v5135 = vpop.f32.mrb[0].mxu0
        %v5136 = vadd.f32 0.0, %v5135
        %v5137 = vpop.f32.mrb[0].mxu0
        %v5138 = vpop.f32.mrb[0].mxu0
        %v5139 = vadd.f32 0.0, %v5138
        %v5140 = vpop.f32.mrb[0].mxu0
        %5141 = vmatprep.mubr.bf16.mxu0 %v4788
        %5142 = vmatmul.mubr.bf16.gmra.mrb[0].mxu0 %v4787
        %v5143 = vpop.f32.mrb[0].mxu0
        %v5144 = vadd.f32 0.0, %v5143
        %v5145 = vpop.f32.mrb[0].mxu0
        %v5146 = vpop.f32.mrb[0].mxu0
        %v5147 = vadd.f32 0.0, %v5146
        %v5148 = vpop.f32.mrb[0].mxu0
        %5149 = vmatprep.mubr.bf16.mxu0 %v4791
        %5150 = vmatmul.mubr.bf16.gmra.mrb[0].mxu0 %v4790
        %v5151 = vpop.f32.mrb[0].mxu0
        %v5152 = vadd.f32 0.0, %v5151
        %v5153 = vpop.f32.mrb[0].mxu0
        %v5154 = vpop.f32.mrb[0].mxu0
        %v5155 = vadd.f32 0.0, %v5154
        %v5156 = vpop.f32.mrb[0].mxu0
        %5157 = vmatprep.mubr.bf16.mxu0 %v4794
        %5158 = vmatmul.mubr.bf16.gmra.mrb[0].mxu0 %v4793
        %v5159 = vpop.f32.mrb[0].mxu0
        %v5160 = vadd.f32 0.0, %v5159
        %v5161 = vpop.f32.mrb[0].mxu0
        %v5162 = vpop.f32.mrb[0].mxu0
        %v5163 = vadd.f32 0.0, %v5162
        %v5164 = vpop.f32.mrb[0].mxu0
        %5165 = vdwg.mxu0
        %5166 = vmatprep.subr.bf16.mxu0 0
        %5167 = vmatpush1.bf16.msra.mxu0 %v4933
        %5168 = vmatprep.subr.bf16.mxu0 0
        %5169 = vmatpush1.bf16.msra.mxu0 %v4934
        %5170 = vmatprep.subr.bf16.mxu0 0
        %5171 = vmatpush1.bf16.msra.mxu0 %v4935
        %5172 = vmatprep.subr.bf16.mxu0 0
        %5173 = vmatpush1.bf16.msra.mxu0 %v4936
        %5174 = vmatprep.subr.bf16.mxu0 0
        %5175 = vmatpush1.bf16.msra.mxu0 0
        %5176 = vmatprep.subr.bf16.mxu0 0
        %5177 = vmatpush1.bf16.msra.mxu0 0
        %5178 = vmatprep.subr.bf16.mxu0 0
        %5179 = vmatpush1.bf16.msra.mxu0 0
        %5180 = vmatprep.subr.bf16.mxu0 0
        %5181 = vmatpush1.bf16.msra.mxu0 0
        %5182 = vmatprep.subr.bf16.mxu0 0
        %5183 = vmatpush1.bf16.msra.mxu0 0
        %5184 = vmatprep.subr.bf16.mxu0 0
        %5185 = vmatpush1.bf16.msra.mxu0 0
        %5186 = vmatprep.subr.bf16.mxu0 0
        %5187 = vmatpush1.bf16.msra.mxu0 0
        %5188 = vmatprep.subr.bf16.mxu0 0
        %5189 = vmatpush1.bf16.msra.mxu0 0
        %5190 = vmatprep.subr.bf16.mxu0 0
        %5191 = vmatpush1.bf16.msra.mxu0 0
        %5192 = vmatprep.subr.bf16.mxu0 0
        %5193 = vmatpush1.bf16.msra.mxu0 0
        %5194 = vmatprep.subr.bf16.mxu0 0
        %5195 = vmatpush1.bf16.msra.mxu0 0
        %5196 = vmatprep.subr.bf16.mxu0 0
        %5197 = vmatpush1.bf16.msra.mxu0 0
        %5198 = vmatprep.mubr.bf16.mxu0 0
        %5199 = vmatmul.mubr.bf16.gmra.mrb[0].mxu0 %v4958
        %v5200 = vpop.f32.mrb[0].mxu0
        %v5201 = vadd.f32 %v5040, %v5200
        %v5202 = vpop.f32.mrb[0].mxu0
        %v5203 = vpop.f32.mrb[0].mxu0
        %v5204 = vadd.f32 %v5043, %v5203
        %v5205 = vpop.f32.mrb[0].mxu0
        %5206 = vmatprep.mubr.bf16.mxu0 0
        %5207 = vmatmul.mubr.bf16.gmra.mrb[0].mxu0 %v4961
        %v5208 = vpop.f32.mrb[0].mxu0
        %v5209 = vadd.f32 %v5048, %v5208
        %v5210 = vpop.f32.mrb[0].mxu0
        %v5211 = vpop.f32.mrb[0].mxu0
        %v5212 = vadd.f32 %v5051, %v5211
        %v5213 = vpop.f32.mrb[0].mxu0
        %5214 = vmatprep.mubr.bf16.mxu0 0
        %5215 = vmatmul.mubr.bf16.gmra.mrb[0].mxu0 %v4964
        %v5216 = vpop.f32.mrb[0].mxu0
        %v5217 = vadd.f32 %v5056, %v5216
        %v5218 = vpop.f32.mrb[0].mxu0
        %v5219 = vpop.f32.mrb[0].mxu0
        %v5220 = vadd.f32 %v5059, %v5219
        %v5221 = vpop.f32.mrb[0].mxu0
        %5222 = vmatprep.mubr.bf16.mxu0 0
        %5223 = vmatmul.mubr.bf16.gmra.mrb[0].mxu0 %v4967
        %v5224 = vpop.f32.mrb[0].mxu0
        %v5225 = vadd.f32 %v5064, %v5224
        %v5226 = vpop.f32.mrb[0].mxu0
        %v5227 = vpop.f32.mrb[0].mxu0
        %v5228 = vadd.f32 %v5067, %v5227
        %v5229 = vpop.f32.mrb[0].mxu0
        %5230 = vmatprep.mubr.bf16.mxu0 0
        %5231 = vmatmul.mubr.bf16.gmra.mrb[0].mxu0 %v4970
        %v5232 = vpop.f32.mrb[0].mxu0
        %v5233 = vadd.f32 %v5072, %v5232
        %v5234 = vpop.f32.mrb[0].mxu0
        %v5235 = vpop.f32.mrb[0].mxu0
        %v5236 = vadd.f32 %v5075, %v5235
        %v5237 = vpop.f32.mrb[0].mxu0
        %5238 = vmatprep.mubr.bf16.mxu0 0
        %5239 = vmatmul.mubr.bf16.gmra.mrb[0].mxu0 %v4973
        %v5240 = vpop.f32.mrb[0].mxu0
        %v5241 = vadd.f32 %v5080, %v5240
        %v5242 = vpop.f32.mrb[0].mxu0
        %v5243 = vpop.f32.mrb[0].mxu0
        %v5244 = vadd.f32 %v5083, %v5243
        %v5245 = vpop.f32.mrb[0].mxu0
        %5246 = vmatprep.mubr.bf16.mxu0 0
        %5247 = vmatmul.mubr.bf16.gmra.mrb[0].mxu0 %v4976
        %v5248 = vpop.f32.mrb[0].mxu0
        %v5249 = vadd.f32 %v5088, %v5248
        %v5250 = vpop.f32.mrb[0].mxu0
        %v5251 = vpop.f32.mrb[0].mxu0
        %v5252 = vadd.f32 %v5091, %v5251
        %v5253 = vpop.f32.mrb[0].mxu0
        %5254 = vmatprep.mubr.bf16.mxu0 0
        %5255 = vmatmul.mubr.bf16.gmra.mrb[0].mxu0 %v4979
        %v5256 = vpop.f32.mrb[0].mxu0
        %v5257 = vadd.f32 %v5096, %v5256
        %v5258 = vpop.f32.mrb[0].mxu0
        %v5259 = vpop.f32.mrb[0].mxu0
        %v5260 = vadd.f32 %v5099, %v5259
        %v5261 = vpop.f32.mrb[0].mxu0
        %5262 = vmatprep.mubr.bf16.mxu0 0
        %5263 = vmatmul.mubr.bf16.gmra.mrb[0].mxu0 %v4982
        %v5264 = vpop.f32.mrb[0].mxu0
        %v5265 = vadd.f32 %v5104, %v5264
        %v5266 = vpop.f32.mrb[0].mxu0
        %v5267 = vpop.f32.mrb[0].mxu0
        %v5268 = vadd.f32 %v5107, %v5267
        %v5269 = vpop.f32.mrb[0].mxu0
        %5270 = vmatprep.mubr.bf16.mxu0 0
        %5271 = vmatmul.mubr.bf16.gmra.mrb[0].mxu0 %v4985
        %v5272 = vpop.f32.mrb[0].mxu0
        %v5273 = vadd.f32 %v5112, %v5272
        %v5274 = vpop.f32.mrb[0].mxu0
        %v5275 = vpop.f32.mrb[0].mxu0
        %v5276 = vadd.f32 %v5115, %v5275
        %v5277 = vpop.f32.mrb[0].mxu0
        %5278 = vmatprep.mubr.bf16.mxu0 0
        %5279 = vmatmul.mubr.bf16.gmra.mrb[0].mxu0 %v4988
        %v5280 = vpop.f32.mrb[0].mxu0
        %v5281 = vadd.f32 %v5120, %v5280
        %v5282 = vpop.f32.mrb[0].mxu0
        %v5283 = vpop.f32.mrb[0].mxu0
        %v5284 = vadd.f32 %v5123, %v5283
        %v5285 = vpop.f32.mrb[0].mxu0
        %5286 = vmatprep.mubr.bf16.mxu0 0
        %5287 = vmatmul.mubr.bf16.gmra.mrb[0].mxu0 %v4991
        %v5288 = vpop.f32.mrb[0].mxu0
        %v5289 = vadd.f32 %v5128, %v5288
        %v5290 = vpop.f32.mrb[0].mxu0
        %v5291 = vpop.f32.mrb[0].mxu0
        %v5292 = vadd.f32 %v5131, %v5291
        %v5293 = vpop.f32.mrb[0].mxu0
        %5294 = vmatprep.mubr.bf16.mxu0 0
        %5295 = vmatmul.mubr.bf16.gmra.mrb[0].mxu0 %v4994
        %v5296 = vpop.f32.mrb[0].mxu0
        %v5297 = vadd.f32 %v5136, %v5296
        %v5298 = vpop.f32.mrb[0].mxu0
        %v5299 = vpop.f32.mrb[0].mxu0
        %v5300 = vadd.f32 %v5139, %v5299
        %v5301 = vpop.f32.mrb[0].mxu0
        %5302 = vmatprep.mubr.bf16.mxu0 0
        %5303 = vmatmul.mubr.bf16.gmra.mrb[0].mxu0 %v4997
        %v5304 = vpop.f32.mrb[0].mxu0
        %v5305 = vadd.f32 %v5144, %v5304
        %v5306 = vpop.f32.mrb[0].mxu0
        %v5307 = vpop.f32.mrb[0].mxu0
        %v5308 = vadd.f32 %v5147, %v5307
        %v5309 = vpop.f32.mrb[0].mxu0
        %5310 = vmatprep.mubr.bf16.mxu0 0
        %5311 = vmatmul.mubr.bf16.gmra.mrb[0].mxu0 %v5000
        %v5312 = vpop.f32.mrb[0].mxu0
        %v5313 = vadd.f32 %v5152, %v5312
        %v5314 = vpop.f32.mrb[0].mxu0
        %v5315 = vpop.f32.mrb[0].mxu0
        %v5316 = vadd.f32 %v5155, %v5315
        %v5317 = vpop.f32.mrb[0].mxu0
        %5318 = vmatprep.mubr.bf16.mxu0 0
        %5319 = vmatmul.mubr.bf16.gmra.mrb[0].mxu0 %v5003
        %v5320 = vpop.f32.mrb[0].mxu0
        %v5321 = vadd.f32 %v5160, %v5320
        %v5322 = vpop.f32.mrb[0].mxu0
        %v5323 = vpop.f32.mrb[0].mxu0
        %v5324 = vadd.f32 %v5163, %v5323
        %v5325 = vpop.f32.mrb[0].mxu0
        %5326 = vdwg.mxu0
        %v5367 = vunpack.c.l.b16 %v4707
        %v5368 = vunpack.c.l.b16 %v4708
        %v5369 = vunpack.c.l.b16 %v4709
        %v5370 = vunpack.c.l.b16 %v4710
        %v5371 = vunpack.c.l.b16 %v4711
        %v5372 = vunpack.c.l.b16 %v4712
        %v5373 = vunpack.c.l.b16 %v4713
        %v5374 = vunpack.c.l.b16 %v4714
        %v5375 = vunpack.c.l.b16 %v4715
        %v5376 = vunpack.c.l.b16 %v4716
        %v5377 = vunpack.c.l.b16 %v4717
        %v5378 = vunpack.c.l.b16 %v4718
        %v5379 = vunpack.c.l.b16 %v4719
        %v5380 = vunpack.c.l.b16 %v4720
        %v5381 = vunpack.c.l.b16 %v4721
        %v5382 = vunpack.c.l.b16 %v4722
        %v5383 = vunpack.c.l.b16 %v4723
        %v5384 = vunpack.c.l.b16 %v4724
        %v5385 = vunpack.c.l.b16 %v4725
        %v5386 = vunpack.c.l.b16 %v4726
        %v5387 = vunpack.c.l.b16 %v4727
        %v5388 = vunpack.c.l.b16 %v4728
        %v5389 = vunpack.c.l.b16 %v4729
        %v5390 = vunpack.c.l.b16 %v4730
        %v5391 = vunpack.c.l.b16 %v4731
        %v5392 = vunpack.c.l.b16 %v4732
        %v5393 = vunpack.c.l.b16 %v4733
        %v5394 = vunpack.c.l.b16 %v4734
        %v5395 = vunpack.c.l.b16 %v4735
        %v5396 = vunpack.c.l.b16 %v4736
        %v5397 = vunpack.c.l.b16 %v4737
        %v5398 = vunpack.c.l.b16 %v4738
        %v5399 = vunpack.c.l.b16 %v4739
        %v5400 = vunpack.c.l.b16 %v4740
        %v5401 = vunpack.c.l.b16 %v4741
        %v5402 = vunpack.c.l.b16 %v4742
        %v5403 = vunpack.c.l.b16 %v4743
        %v5404 = vunpack.c.l.b16 %v4744
        %v5405 = vunpack.c.l.b16 %v4745
        %v5406 = vunpack.c.l.b16 %v4746
        %v5407 = vpack.c.b16 %v5368, %v5367
        %v5408 = vpack.c.b16 %v5370, %v5369
        %v5409 = vpack.c.b16 %v5372, %v5371
        %v5410 = vpack.c.b16 %v5374, %v5373
        %v5411 = vpack.c.b16 %v5376, %v5375
        %v5412 = vpack.c.b16 %v5378, %v5377
        %v5413 = vpack.c.b16 %v5380, %v5379
        %v5414 = vpack.c.b16 %v5382, %v5381
        %v5415 = vpack.c.b16 %v5384, %v5383
        %v5416 = vpack.c.b16 %v5386, %v5385
        %v5417 = vpack.c.b16 %v5388, %v5387
        %v5418 = vpack.c.b16 %v5390, %v5389
        %v5419 = vpack.c.b16 %v5392, %v5391
        %v5420 = vpack.c.b16 %v5394, %v5393
        %v5421 = vpack.c.b16 %v5396, %v5395
        %v5422 = vpack.c.b16 %v5398, %v5397
        %v5423 = vpack.c.b16 %v5400, %v5399
        %v5424 = vpack.c.b16 %v5402, %v5401
        %v5425 = vpack.c.b16 %v5404, %v5403
        %v5426 = vpack.c.b16 %v5406, %v5405
        %v5448 = vsel %vm918, %v4661, 0
        %v5451 = vsel %vm918, %v4664, 0
        %v5454 = vsel %vm918, %v4667, 0
        %v5457 = vsel %vm918, %v4670, 0
        %v5460 = vsel %vm918, %v4673, 0
        %v5463 = vsel %vm918, %v4676, 0
        %v5466 = vsel %vm918, %v4679, 0
        %v5469 = vsel %vm918, %v4682, 0
        %v5472 = vsel %vm918, %v4685, 0
        %v5475 = vsel %vm918, %v4688, 0
        %v5478 = vsel %vm918, %v4691, 0
        %v5481 = vsel %vm918, %v4694, 0
        %v5484 = vsel %vm918, %v4697, 0
        %v5487 = vsel %vm918, %v4700, 0
        %v5490 = vsel %vm918, %v4703, 0
        %v5493 = vsel %vm918, %v4706, 0
        %5495 = vmatprep.subr.bf16.mxu0 0
        %5496 = vmatpush1.bf16.msra.mxu0 %v5407
        %5497 = vmatprep.subr.bf16.mxu0 0
        %5498 = vmatpush1.bf16.msra.mxu0 %v5408
        %5499 = vmatprep.subr.bf16.mxu0 0
        %5500 = vmatpush1.bf16.msra.mxu0 %v5409
        %5501 = vmatprep.subr.bf16.mxu0 0
        %5502 = vmatpush1.bf16.msra.mxu0 %v5410
        %5503 = vmatprep.subr.bf16.mxu0 0
        %5504 = vmatpush1.bf16.msra.mxu0 %v5411
        %5505 = vmatprep.subr.bf16.mxu0 0
        %5506 = vmatpush1.bf16.msra.mxu0 %v5412
        %5507 = vmatprep.subr.bf16.mxu0 0
        %5508 = vmatpush1.bf16.msra.mxu0 %v5413
        %5509 = vmatprep.subr.bf16.mxu0 0
        %5510 = vmatpush1.bf16.msra.mxu0 %v5414
        %5511 = vmatprep.subr.bf16.mxu0 0
        %5512 = vmatpush1.bf16.msra.mxu0 %v5415
        %5513 = vmatprep.subr.bf16.mxu0 0
        %5514 = vmatpush1.bf16.msra.mxu0 %v5416
        %5515 = vmatprep.subr.bf16.mxu0 0
        %5516 = vmatpush1.bf16.msra.mxu0 %v5417
        %5517 = vmatprep.subr.bf16.mxu0 0
        %5518 = vmatpush1.bf16.msra.mxu0 %v5418
        %5519 = vmatprep.subr.bf16.mxu0 0
        %5520 = vmatpush1.bf16.msra.mxu0 %v5419
        %5521 = vmatprep.subr.bf16.mxu0 0
        %5522 = vmatpush1.bf16.msra.mxu0 %v5420
        %5523 = vmatprep.subr.bf16.mxu0 0
        %5524 = vmatpush1.bf16.msra.mxu0 %v5421
        %5525 = vmatprep.subr.bf16.mxu0 0
        %5526 = vmatpush1.bf16.msra.mxu0 %v5422
        %5527 = vmatprep.mubr.bf16.mxu0 %v4660
        %5528 = vmatmul.mubr.bf16.gmra.mrb[0].mxu0 %v4659
        %v5529 = vpop.f32.mrb[0].mxu0
        %v5530 = vadd.f32 %v5201, %v5529
        %v5531 = vpop.f32.mrb[0].mxu0
        %v5532 = vpop.f32.mrb[0].mxu0
        %v5533 = vadd.f32 %v5204, %v5532
        %v5534 = vpop.f32.mrb[0].mxu0
        %5535 = vmatprep.mubr.bf16.mxu0 %v4663
        %5536 = vmatmul.mubr.bf16.gmra.mrb[0].mxu0 %v4662
        %v5537 = vpop.f32.mrb[0].mxu0
        %v5538 = vadd.f32 %v5209, %v5537
        %v5539 = vpop.f32.mrb[0].mxu0
        %v5540 = vpop.f32.mrb[0].mxu0
        %v5541 = vadd.f32 %v5212, %v5540
        %v5542 = vpop.f32.mrb[0].mxu0
        %5543 = vmatprep.mubr.bf16.mxu0 %v4666
        %5544 = vmatmul.mubr.bf16.gmra.mrb[0].mxu0 %v4665
        %v5545 = vpop.f32.mrb[0].mxu0
        %v5546 = vadd.f32 %v5217, %v5545
        %v5547 = vpop.f32.mrb[0].mxu0
        %v5548 = vpop.f32.mrb[0].mxu0
        %v5549 = vadd.f32 %v5220, %v5548
        %v5550 = vpop.f32.mrb[0].mxu0
        %5551 = vmatprep.mubr.bf16.mxu0 %v4669
        %5552 = vmatmul.mubr.bf16.gmra.mrb[0].mxu0 %v4668
        %v5553 = vpop.f32.mrb[0].mxu0
        %v5554 = vadd.f32 %v5225, %v5553
        %v5555 = vpop.f32.mrb[0].mxu0
        %v5556 = vpop.f32.mrb[0].mxu0
        %v5557 = vadd.f32 %v5228, %v5556
        %v5558 = vpop.f32.mrb[0].mxu0
        %5559 = vmatprep.mubr.bf16.mxu0 %v4672
        %5560 = vmatmul.mubr.bf16.gmra.mrb[0].mxu0 %v4671
        %v5561 = vpop.f32.mrb[0].mxu0
        %v5562 = vadd.f32 %v5233, %v5561
        %v5563 = vpop.f32.mrb[0].mxu0
        %v5564 = vpop.f32.mrb[0].mxu0
        %v5565 = vadd.f32 %v5236, %v5564
        %v5566 = vpop.f32.mrb[0].mxu0
        %5567 = vmatprep.mubr.bf16.mxu0 %v4675
        %5568 = vmatmul.mubr.bf16.gmra.mrb[0].mxu0 %v4674
        %v5569 = vpop.f32.mrb[0].mxu0
        %v5570 = vadd.f32 %v5241, %v5569
        %v5571 = vpop.f32.mrb[0].mxu0
        %v5572 = vpop.f32.mrb[0].mxu0
        %v5573 = vadd.f32 %v5244, %v5572
        %v5574 = vpop.f32.mrb[0].mxu0
        %5575 = vmatprep.mubr.bf16.mxu0 %v4678
        %5576 = vmatmul.mubr.bf16.gmra.mrb[0].mxu0 %v4677
        %v5577 = vpop.f32.mrb[0].mxu0
        %v5578 = vadd.f32 %v5249, %v5577
        %v5579 = vpop.f32.mrb[0].mxu0
        %v5580 = vpop.f32.mrb[0].mxu0
        %v5581 = vadd.f32 %v5252, %v5580
        %v5582 = vpop.f32.mrb[0].mxu0
        %5583 = vmatprep.mubr.bf16.mxu0 %v4681
        %5584 = vmatmul.mubr.bf16.gmra.mrb[0].mxu0 %v4680
        %v5585 = vpop.f32.mrb[0].mxu0
        %v5586 = vadd.f32 %v5257, %v5585
        %v5587 = vpop.f32.mrb[0].mxu0
        %v5588 = vpop.f32.mrb[0].mxu0
        %v5589 = vadd.f32 %v5260, %v5588
        %v5590 = vpop.f32.mrb[0].mxu0
        %5591 = vmatprep.mubr.bf16.mxu0 %v4684
        %5592 = vmatmul.mubr.bf16.gmra.mrb[0].mxu0 %v4683
        %v5593 = vpop.f32.mrb[0].mxu0
        %v5594 = vadd.f32 %v5265, %v5593
        %v5595 = vpop.f32.mrb[0].mxu0
        %v5596 = vpop.f32.mrb[0].mxu0
        %v5597 = vadd.f32 %v5268, %v5596
        %v5598 = vpop.f32.mrb[0].mxu0
        %5599 = vmatprep.mubr.bf16.mxu0 %v4687
        %5600 = vmatmul.mubr.bf16.gmra.mrb[0].mxu0 %v4686
        %v5601 = vpop.f32.mrb[0].mxu0
        %v5602 = vadd.f32 %v5273, %v5601
        %v5603 = vpop.f32.mrb[0].mxu0
        %v5604 = vpop.f32.mrb[0].mxu0
        %v5605 = vadd.f32 %v5276, %v5604
        %v5606 = vpop.f32.mrb[0].mxu0
        %5607 = vmatprep.mubr.bf16.mxu0 %v4690
        %5608 = vmatmul.mubr.bf16.gmra.mrb[0].mxu0 %v4689
        %v5609 = vpop.f32.mrb[0].mxu0
        %v5610 = vadd.f32 %v5281, %v5609
        %v5611 = vpop.f32.mrb[0].mxu0
        %v5612 = vpop.f32.mrb[0].mxu0
        %v5613 = vadd.f32 %v5284, %v5612
        %v5614 = vpop.f32.mrb[0].mxu0
        %5615 = vmatprep.mubr.bf16.mxu0 %v4693
        %5616 = vmatmul.mubr.bf16.gmra.mrb[0].mxu0 %v4692
        %v5617 = vpop.f32.mrb[0].mxu0
        %v5618 = vadd.f32 %v5289, %v5617
        %v5619 = vpop.f32.mrb[0].mxu0
        %v5620 = vpop.f32.mrb[0].mxu0
        %v5621 = vadd.f32 %v5292, %v5620
        %v5622 = vpop.f32.mrb[0].mxu0
        %5623 = vmatprep.mubr.bf16.mxu0 %v4696
        %5624 = vmatmul.mubr.bf16.gmra.mrb[0].mxu0 %v4695
        %v5625 = vpop.f32.mrb[0].mxu0
        %v5626 = vadd.f32 %v5297, %v5625
        %v5627 = vpop.f32.mrb[0].mxu0
        %v5628 = vpop.f32.mrb[0].mxu0
        %v5629 = vadd.f32 %v5300, %v5628
        %v5630 = vpop.f32.mrb[0].mxu0
        %5631 = vmatprep.mubr.bf16.mxu0 %v4699
        %5632 = vmatmul.mubr.bf16.gmra.mrb[0].mxu0 %v4698
        %v5633 = vpop.f32.mrb[0].mxu0
        %v5634 = vadd.f32 %v5305, %v5633
        %v5635 = vpop.f32.mrb[0].mxu0
        %v5636 = vpop.f32.mrb[0].mxu0
        %v5637 = vadd.f32 %v5308, %v5636
        %v5638 = vpop.f32.mrb[0].mxu0
        %5639 = vmatprep.mubr.bf16.mxu0 %v4702
        %5640 = vmatmul.mubr.bf16.gmra.mrb[0].mxu0 %v4701
        %v5641 = vpop.f32.mrb[0].mxu0
        %v5642 = vadd.f32 %v5313, %v5641
        %v5643 = vpop.f32.mrb[0].mxu0
        %v5644 = vpop.f32.mrb[0].mxu0
        %v5645 = vadd.f32 %v5316, %v5644
        %v5646 = vpop.f32.mrb[0].mxu0
        %5647 = vmatprep.mubr.bf16.mxu0 %v4705
        %5648 = vmatmul.mubr.bf16.gmra.mrb[0].mxu0 %v4704
        %v5649 = vpop.f32.mrb[0].mxu0
        %v5650 = vadd.f32 %v5321, %v5649
        %v5651 = vpop.f32.mrb[0].mxu0
        %v5652 = vpop.f32.mrb[0].mxu0
        %v5653 = vadd.f32 %v5324, %v5652
        %v5654 = vpop.f32.mrb[0].mxu0
        %5655 = vdwg.mxu0
        %5656 = vmatprep.subr.bf16.mxu0 0
        %5657 = vmatpush1.bf16.msra.mxu0 %v5423
        %5658 = vmatprep.subr.bf16.mxu0 0
        %5659 = vmatpush1.bf16.msra.mxu0 %v5424
        %5660 = vmatprep.subr.bf16.mxu0 0
        %5661 = vmatpush1.bf16.msra.mxu0 %v5425
        %5662 = vmatprep.subr.bf16.mxu0 0
        %5663 = vmatpush1.bf16.msra.mxu0 %v5426
        %5664 = vmatprep.subr.bf16.mxu0 0
        %5665 = vmatpush1.bf16.msra.mxu0 0
        %5666 = vmatprep.subr.bf16.mxu0 0
        %5667 = vmatpush1.bf16.msra.mxu0 0
        %5668 = vmatprep.subr.bf16.mxu0 0
        %5669 = vmatpush1.bf16.msra.mxu0 0
        %5670 = vmatprep.subr.bf16.mxu0 0
        %5671 = vmatpush1.bf16.msra.mxu0 0
        %5672 = vmatprep.subr.bf16.mxu0 0
        %5673 = vmatpush1.bf16.msra.mxu0 0
        %5674 = vmatprep.subr.bf16.mxu0 0
        %5675 = vmatpush1.bf16.msra.mxu0 0
        %5676 = vmatprep.subr.bf16.mxu0 0
        %5677 = vmatpush1.bf16.msra.mxu0 0
        %5678 = vmatprep.subr.bf16.mxu0 0
        %5679 = vmatpush1.bf16.msra.mxu0 0
        %5680 = vmatprep.subr.bf16.mxu0 0
        %5681 = vmatpush1.bf16.msra.mxu0 0
        %5682 = vmatprep.subr.bf16.mxu0 0
        %5683 = vmatpush1.bf16.msra.mxu0 0
        %5684 = vmatprep.subr.bf16.mxu0 0
        %5685 = vmatpush1.bf16.msra.mxu0 0
        %5686 = vmatprep.subr.bf16.mxu0 0
        %5687 = vmatpush1.bf16.msra.mxu0 0
        %5688 = vmatprep.mubr.bf16.mxu0 0
        %5689 = vmatmul.mubr.bf16.gmra.mrb[0].mxu0 %v5448
        %v5690 = vpop.f32.mrb[0].mxu0
        %v5691 = vadd.f32 %v5530, %v5690
        %v5692 = vpop.f32.mrb[0].mxu0
        %v5693 = vpop.f32.mrb[0].mxu0
        %v5694 = vadd.f32 %v5533, %v5693
        %v5695 = vpop.f32.mrb[0].mxu0
        %5696 = vmatprep.mubr.bf16.mxu0 0
        %5697 = vmatmul.mubr.bf16.gmra.mrb[0].mxu0 %v5451
        %v5698 = vpop.f32.mrb[0].mxu0
        %v5699 = vadd.f32 %v5538, %v5698
        %v5700 = vpop.f32.mrb[0].mxu0
        %v5701 = vpop.f32.mrb[0].mxu0
        %v5702 = vadd.f32 %v5541, %v5701
        %v5703 = vpop.f32.mrb[0].mxu0
        %5704 = vmatprep.mubr.bf16.mxu0 0
        %5705 = vmatmul.mubr.bf16.gmra.mrb[0].mxu0 %v5454
        %v5706 = vpop.f32.mrb[0].mxu0
        %v5707 = vadd.f32 %v5546, %v5706
        %v5708 = vpop.f32.mrb[0].mxu0
        %v5709 = vpop.f32.mrb[0].mxu0
        %v5710 = vadd.f32 %v5549, %v5709
        %v5711 = vpop.f32.mrb[0].mxu0
        %5712 = vmatprep.mubr.bf16.mxu0 0
        %5713 = vmatmul.mubr.bf16.gmra.mrb[0].mxu0 %v5457
        %v5714 = vpop.f32.mrb[0].mxu0
        %v5715 = vadd.f32 %v5554, %v5714
        %v5716 = vpop.f32.mrb[0].mxu0
        %v5717 = vpop.f32.mrb[0].mxu0
        %v5718 = vadd.f32 %v5557, %v5717
        %v5719 = vpop.f32.mrb[0].mxu0
        %5720 = vmatprep.mubr.bf16.mxu0 0
        %5721 = vmatmul.mubr.bf16.gmra.mrb[0].mxu0 %v5460
        %v5722 = vpop.f32.mrb[0].mxu0
        %v5723 = vadd.f32 %v5562, %v5722
        %v5724 = vpop.f32.mrb[0].mxu0
        %v5725 = vpop.f32.mrb[0].mxu0
        %v5726 = vadd.f32 %v5565, %v5725
        %v5727 = vpop.f32.mrb[0].mxu0
        %5728 = vmatprep.mubr.bf16.mxu0 0
        %5729 = vmatmul.mubr.bf16.gmra.mrb[0].mxu0 %v5463
        %v5730 = vpop.f32.mrb[0].mxu0
        %v5731 = vadd.f32 %v5570, %v5730
        %v5732 = vpop.f32.mrb[0].mxu0
        %v5733 = vpop.f32.mrb[0].mxu0
        %v5734 = vadd.f32 %v5573, %v5733
        %v5735 = vpop.f32.mrb[0].mxu0
        %5736 = vmatprep.mubr.bf16.mxu0 0
        %5737 = vmatmul.mubr.bf16.gmra.mrb[0].mxu0 %v5466
        %v5738 = vpop.f32.mrb[0].mxu0
        %v5739 = vadd.f32 %v5578, %v5738
        %v5740 = vpop.f32.mrb[0].mxu0
        %v5741 = vpop.f32.mrb[0].mxu0
        %v5742 = vadd.f32 %v5581, %v5741
        %v5743 = vpop.f32.mrb[0].mxu0
        %5744 = vmatprep.mubr.bf16.mxu0 0
        %5745 = vmatmul.mubr.bf16.gmra.mrb[0].mxu0 %v5469
        %v5746 = vpop.f32.mrb[0].mxu0
        %v5747 = vadd.f32 %v5586, %v5746
        %v5748 = vpop.f32.mrb[0].mxu0
        %v5749 = vpop.f32.mrb[0].mxu0
        %v5750 = vadd.f32 %v5589, %v5749
        %v5751 = vpop.f32.mrb[0].mxu0
        %5752 = vmatprep.mubr.bf16.mxu0 0
        %5753 = vmatmul.mubr.bf16.gmra.mrb[0].mxu0 %v5472
        %v5754 = vpop.f32.mrb[0].mxu0
        %v5755 = vadd.f32 %v5594, %v5754
        %v5756 = vpop.f32.mrb[0].mxu0
        %v5757 = vpop.f32.mrb[0].mxu0
        %v5758 = vadd.f32 %v5597, %v5757
        %v5759 = vpop.f32.mrb[0].mxu0
        %5760 = vmatprep.mubr.bf16.mxu0 0
        %5761 = vmatmul.mubr.bf16.gmra.mrb[0].mxu0 %v5475
        %v5762 = vpop.f32.mrb[0].mxu0
        %v5763 = vadd.f32 %v5602, %v5762
        %v5764 = vpop.f32.mrb[0].mxu0
        %v5765 = vpop.f32.mrb[0].mxu0
        %v5766 = vadd.f32 %v5605, %v5765
        %v5767 = vpop.f32.mrb[0].mxu0
        %5768 = vmatprep.mubr.bf16.mxu0 0
        %5769 = vmatmul.mubr.bf16.gmra.mrb[0].mxu0 %v5478
        %v5770 = vpop.f32.mrb[0].mxu0
        %v5771 = vadd.f32 %v5610, %v5770
        %v5772 = vpop.f32.mrb[0].mxu0
        %v5773 = vpop.f32.mrb[0].mxu0
        %v5774 = vadd.f32 %v5613, %v5773
        %v5775 = vpop.f32.mrb[0].mxu0
        %5776 = vmatprep.mubr.bf16.mxu0 0
        %5777 = vmatmul.mubr.bf16.gmra.mrb[0].mxu0 %v5481
        %v5778 = vpop.f32.mrb[0].mxu0
        %v5779 = vadd.f32 %v5618, %v5778
        %v5780 = vpop.f32.mrb[0].mxu0
        %v5781 = vpop.f32.mrb[0].mxu0
        %v5782 = vadd.f32 %v5621, %v5781
        %v5783 = vpop.f32.mrb[0].mxu0
        %5784 = vmatprep.mubr.bf16.mxu0 0
        %5785 = vmatmul.mubr.bf16.gmra.mrb[0].mxu0 %v5484
        %v5786 = vpop.f32.mrb[0].mxu0
        %v5787 = vadd.f32 %v5626, %v5786
        %v5788 = vpop.f32.mrb[0].mxu0
        %v5789 = vpop.f32.mrb[0].mxu0
        %v5790 = vadd.f32 %v5629, %v5789
        %v5791 = vpop.f32.mrb[0].mxu0
        %5792 = vmatprep.mubr.bf16.mxu0 0
        %5793 = vmatmul.mubr.bf16.gmra.mrb[0].mxu0 %v5487
        %v5794 = vpop.f32.mrb[0].mxu0
        %v5795 = vadd.f32 %v5634, %v5794
        %v5796 = vpop.f32.mrb[0].mxu0
        %v5797 = vpop.f32.mrb[0].mxu0
        %v5798 = vadd.f32 %v5637, %v5797
        %v5799 = vpop.f32.mrb[0].mxu0
        %5800 = vmatprep.mubr.bf16.mxu0 0
        %5801 = vmatmul.mubr.bf16.gmra.mrb[0].mxu0 %v5490
        %v5802 = vpop.f32.mrb[0].mxu0
        %v5803 = vadd.f32 %v5642, %v5802
        %v5804 = vpop.f32.mrb[0].mxu0
        %v5805 = vpop.f32.mrb[0].mxu0
        %v5806 = vadd.f32 %v5645, %v5805
        %v5807 = vpop.f32.mrb[0].mxu0
        %5808 = vmatprep.mubr.bf16.mxu0 0
        %5809 = vmatmul.mubr.bf16.gmra.mrb[0].mxu0 %v5493
        %v5810 = vpop.f32.mrb[0].mxu0
        %v5811 = vadd.f32 %v5650, %v5810
        %v5812 = vpop.f32.mrb[0].mxu0
        %v5813 = vpop.f32.mrb[0].mxu0
        %v5814 = vadd.f32 %v5653, %v5813
        %v5815 = vpop.f32.mrb[0].mxu0
        %5816 = vdwg.mxu0
        %v5817 = vld [vmem:[%s4242] sm:$0xff]
        %v5818 = vld [vmem:[%s4242 + $0x8] sm:$0xff]
        %v5819 = vld [vmem:[%s4242 + $0x10] sm:$0xff]
        %v5820 = vld [vmem:[%s4242 + $0x18] sm:$0xff]
        %v5821 = vld [vmem:[%s4242 + $0x20] sm:$0xff]
        %v5822 = vld [vmem:[%s4242 + $0x28] sm:$0xff]
        %v5823 = vld [vmem:[%s4242 + $0x30] sm:$0xff]
        %v5824 = vld [vmem:[%s4242 + $0x38] sm:$0xff]
        %v5825 = vld [vmem:[%s4242 + $0x40] sm:$0xff]
        %v5826 = vld [vmem:[%s4242 + $0x48] sm:$0xff]
        %v5827 = vld [vmem:[%s4242 + $0x50] sm:$0xff]
        %v5828 = vld [vmem:[%s4242 + $0x58] sm:$0xff]
        %v5829 = vld [vmem:[%s4242 + $0x60] sm:$0xff]
        %v5830 = vld [vmem:[%s4242 + $0x68] sm:$0xff]
        %v5831 = vld [vmem:[%s4242 + $0x70] sm:$0xff]
        %v5832 = vld [vmem:[%s4242 + $0x78] sm:$0xff]
        %v5833 = vld [vmem:[%s4242 + $0x80] sm:$0xff]
        %v5834 = vld [vmem:[%s4242 + $0x88] sm:$0xff]
        %v5835 = vld [vmem:[%s4242 + $0x90] sm:$0xff]
        %v5836 = vld [vmem:[%s4242 + $0x98] sm:$0xff]
        %v5837 = vld [vmem:[%s4242 + $0xa0] sm:$0xff]
        %v5838 = vld [vmem:[%s4242 + $0xa8] sm:$0xff]
        %v5839 = vld [vmem:[%s4242 + $0xb0] sm:$0xff]
        %v5840 = vld [vmem:[%s4242 + $0xb8] sm:$0xff]
        %v5841 = vld [vmem:[%s4242 + $0xc0] sm:$0xff]
        %v5842 = vld [vmem:[%s4242 + $0xc8] sm:$0xff]
        %v5843 = vld [vmem:[%s4242 + $0xd0] sm:$0xff]
        %v5844 = vld [vmem:[%s4242 + $0xd8] sm:$0xff]
        %v5845 = vld [vmem:[%s4242 + $0xe0] sm:$0xff]
        %v5846 = vld [vmem:[%s4242 + $0xe8] sm:$0xff]
        %v5847 = vld [vmem:[%s4242 + $0xf0] sm:$0xff]
        %v5848 = vld [vmem:[%s4242 + $0xf8] sm:$0xff]
        %v5849 = vld [vmem:[%s4242 + $0x100] sm:$0xff]
        %v5850 = vld [vmem:[%s4242 + $0x108] sm:$0xff]
        %v5851 = vld [vmem:[%s4242 + $0x110] sm:$0xff]
        %v5852 = vld [vmem:[%s4242 + $0x118] sm:$0xff]
        %v5853 = vld [vmem:[%s4242 + $0x120] sm:$0xff]
        %v5854 = vld [vmem:[%s4242 + $0x128] sm:$0xff]
        %v5855 = vld [vmem:[%s4242 + $0x130] sm:$0xff]
        %v5856 = vld [vmem:[%s4242 + $0x138] sm:$0xff]
        %v5857 = vld [vmem:[%s4242 + $0x140] sm:$0xff]
        %v5858 = vld [vmem:[%s4242 + $0x148] sm:$0xff]
        %v5859 = vld [vmem:[%s4242 + $0x150] sm:$0xff]
        %v5860 = vld [vmem:[%s4242 + $0x158] sm:$0xff]
        %v5861 = vld [vmem:[%s4242 + $0x160] sm:$0xff]
        %v5862 = vld [vmem:[%s4242 + $0x168] sm:$0xff]
        %v5863 = vld [vmem:[%s4242 + $0x170] sm:$0xff]
        %v5864 = vld [vmem:[%s4242 + $0x178] sm:$0xff]
        %s5865 = scalar_lea.vmem %s3, 320
        %v5866 = vld [vmem:[%s5865] sm:$0xf]
        %v5867 = vld [vmem:[%s5865 + $0x4] sm:$0xf]
        %v5868 = vld [vmem:[%s5865 + $0x8] sm:$0xf]
        %v5869 = vld [vmem:[%s5865 + $0xc] sm:$0xf]
        %v5870 = vld [vmem:[%s5865 + $0x10] sm:$0xf]
        %v5871 = vld [vmem:[%s5865 + $0x14] sm:$0xf]
        %v5872 = vld [vmem:[%s5865 + $0x18] sm:$0xf]
        %v5873 = vld [vmem:[%s5865 + $0x1c] sm:$0xf]
        %v5874 = vld [vmem:[%s5865 + $0x20] sm:$0xf]
        %v5875 = vld [vmem:[%s5865 + $0x24] sm:$0xf]
        %v5876 = vld [vmem:[%s5865 + $0x28] sm:$0xf]
        %v5877 = vld [vmem:[%s5865 + $0x2c] sm:$0xf]
        %v5878 = vld [vmem:[%s5865 + $0x30] sm:$0xf]
        %v5879 = vld [vmem:[%s5865 + $0x34] sm:$0xf]
        %v5880 = vld [vmem:[%s5865 + $0x38] sm:$0xf]
        %v5881 = vld [vmem:[%s5865 + $0x3c] sm:$0xf]
        %v5882 = vld [vmem:[%s5865 + $0x40] sm:$0xf]
        %v5883 = vld [vmem:[%s5865 + $0x44] sm:$0xf]
        %v5884 = vld [vmem:[%s5865 + $0x48] sm:$0xf]
        %v5885 = vld [vmem:[%s5865 + $0x4c] sm:$0xf]
        %v5886 = vld [vmem:[%s5865 + $0x50] sm:$0xf]
        %v5887 = vld [vmem:[%s5865 + $0x54] sm:$0xf]
        %v5888 = vld [vmem:[%s5865 + $0x58] sm:$0xf]
        %v5889 = vld [vmem:[%s5865 + $0x5c] sm:$0xf]
        %v5890 = vld [vmem:[%s5865 + $0x60] sm:$0xf]
        %v5891 = vld [vmem:[%s5865 + $0x64] sm:$0xf]
        %v5892 = vld [vmem:[%s5865 + $0x68] sm:$0xf]
        %v5893 = vld [vmem:[%s5865 + $0x6c] sm:$0xf]
        %v5894 = vld [vmem:[%s5865 + $0x70] sm:$0xf]
        %v5895 = vld [vmem:[%s5865 + $0x74] sm:$0xf]
        %v5896 = vld [vmem:[%s5865 + $0x78] sm:$0xf]
        %v5897 = vld [vmem:[%s5865 + $0x7c] sm:$0xf]
        %v5898 = vld [vmem:[%s5865 + $0x80] sm:$0xf]
        %v5899 = vld [vmem:[%s5865 + $0x84] sm:$0xf]
        %v5900 = vld [vmem:[%s5865 + $0x88] sm:$0xf]
        %v5901 = vld [vmem:[%s5865 + $0x8c] sm:$0xf]
        %v5902 = vld [vmem:[%s5865 + $0x90] sm:$0xf]
        %v5903 = vld [vmem:[%s5865 + $0x94] sm:$0xf]
        %v5904 = vld [vmem:[%s5865 + $0x98] sm:$0xf]
        %v5905 = vld [vmem:[%s5865 + $0x9c] sm:$0xf]
        %v5946 = vunpack.c.l.b16 %v5866
        %v5947 = vunpack.c.l.b16 %v5867
        %v5948 = vunpack.c.l.b16 %v5868
        %v5949 = vunpack.c.l.b16 %v5869
        %v5950 = vunpack.c.l.b16 %v5870
        %v5951 = vunpack.c.l.b16 %v5871
        %v5952 = vunpack.c.l.b16 %v5872
        %v5953 = vunpack.c.l.b16 %v5873
        %v5954 = vunpack.c.l.b16 %v5874
        %v5955 = vunpack.c.l.b16 %v5875
        %v5956 = vunpack.c.l.b16 %v5876
        %v5957 = vunpack.c.l.b16 %v5877
        %v5958 = vunpack.c.l.b16 %v5878
        %v5959 = vunpack.c.l.b16 %v5879
        %v5960 = vunpack.c.l.b16 %v5880
        %v5961 = vunpack.c.l.b16 %v5881
        %v5962 = vunpack.c.l.b16 %v5882
        %v5963 = vunpack.c.l.b16 %v5883
        %v5964 = vunpack.c.l.b16 %v5884
        %v5965 = vunpack.c.l.b16 %v5885
        %v5966 = vunpack.c.l.b16 %v5886
        %v5967 = vunpack.c.l.b16 %v5887
        %v5968 = vunpack.c.l.b16 %v5888
        %v5969 = vunpack.c.l.b16 %v5889
        %v5970 = vunpack.c.l.b16 %v5890
        %v5971 = vunpack.c.l.b16 %v5891
        %v5972 = vunpack.c.l.b16 %v5892
        %v5973 = vunpack.c.l.b16 %v5893
        %v5974 = vunpack.c.l.b16 %v5894
        %v5975 = vunpack.c.l.b16 %v5895
        %v5976 = vunpack.c.l.b16 %v5896
        %v5977 = vunpack.c.l.b16 %v5897
        %v5978 = vunpack.c.l.b16 %v5898
        %v5979 = vunpack.c.l.b16 %v5899
        %v5980 = vunpack.c.l.b16 %v5900
        %v5981 = vunpack.c.l.b16 %v5901
        %v5982 = vunpack.c.l.b16 %v5902
        %v5983 = vunpack.c.l.b16 %v5903
        %v5984 = vunpack.c.l.b16 %v5904
        %v5985 = vunpack.c.l.b16 %v5905
        %v5986 = vpack.c.b16 %v5947, %v5946
        %v5987 = vpack.c.b16 %v5949, %v5948
        %v5988 = vpack.c.b16 %v5951, %v5950
        %v5989 = vpack.c.b16 %v5953, %v5952
        %v5990 = vpack.c.b16 %v5955, %v5954
        %v5991 = vpack.c.b16 %v5957, %v5956
        %v5992 = vpack.c.b16 %v5959, %v5958
        %v5993 = vpack.c.b16 %v5961, %v5960
        %v5994 = vpack.c.b16 %v5963, %v5962
        %v5995 = vpack.c.b16 %v5965, %v5964
        %v5996 = vpack.c.b16 %v5967, %v5966
        %v5997 = vpack.c.b16 %v5969, %v5968
        %v5998 = vpack.c.b16 %v5971, %v5970
        %v5999 = vpack.c.b16 %v5973, %v5972
        %v6000 = vpack.c.b16 %v5975, %v5974
        %v6001 = vpack.c.b16 %v5977, %v5976
        %v6002 = vpack.c.b16 %v5979, %v5978
        %v6003 = vpack.c.b16 %v5981, %v5980
        %v6004 = vpack.c.b16 %v5983, %v5982
        %v6005 = vpack.c.b16 %v5985, %v5984
        %v6027 = vsel %vm918, %v5819, 0
        %v6030 = vsel %vm918, %v5822, 0
        %v6033 = vsel %vm918, %v5825, 0
        %v6036 = vsel %vm918, %v5828, 0
        %v6039 = vsel %vm918, %v5831, 0
        %v6042 = vsel %vm918, %v5834, 0
        %v6045 = vsel %vm918, %v5837, 0
        %v6048 = vsel %vm918, %v5840, 0
        %v6051 = vsel %vm918, %v5843, 0
        %v6054 = vsel %vm918, %v5846, 0
        %v6057 = vsel %vm918, %v5849, 0
        %v6060 = vsel %vm918, %v5852, 0
        %v6063 = vsel %vm918, %v5855, 0
        %v6066 = vsel %vm918, %v5858, 0
        %v6069 = vsel %vm918, %v5861, 0
        %v6072 = vsel %vm918, %v5864, 0
        %6074 = vmatprep.subr.bf16.mxu0 0
        %6075 = vmatpush1.bf16.msra.mxu0 %v5986
        %6076 = vmatprep.subr.bf16.mxu0 0
        %6077 = vmatpush1.bf16.msra.mxu0 %v5987
        %6078 = vmatprep.subr.bf16.mxu0 0
        %6079 = vmatpush1.bf16.msra.mxu0 %v5988
        %6080 = vmatprep.subr.bf16.mxu0 0
        %6081 = vmatpush1.bf16.msra.mxu0 %v5989
        %6082 = vmatprep.subr.bf16.mxu0 0
        %6083 = vmatpush1.bf16.msra.mxu0 %v5990
        %6084 = vmatprep.subr.bf16.mxu0 0
        %6085 = vmatpush1.bf16.msra.mxu0 %v5991
        %6086 = vmatprep.subr.bf16.mxu0 0
        %6087 = vmatpush1.bf16.msra.mxu0 %v5992
        %6088 = vmatprep.subr.bf16.mxu0 0
        %6089 = vmatpush1.bf16.msra.mxu0 %v5993
        %6090 = vmatprep.subr.bf16.mxu0 0
        %6091 = vmatpush1.bf16.msra.mxu0 %v5994
        %6092 = vmatprep.subr.bf16.mxu0 0
        %6093 = vmatpush1.bf16.msra.mxu0 %v5995
        %6094 = vmatprep.subr.bf16.mxu0 0
        %6095 = vmatpush1.bf16.msra.mxu0 %v5996
        %6096 = vmatprep.subr.bf16.mxu0 0
        %6097 = vmatpush1.bf16.msra.mxu0 %v5997
        %6098 = vmatprep.subr.bf16.mxu0 0
        %6099 = vmatpush1.bf16.msra.mxu0 %v5998
        %6100 = vmatprep.subr.bf16.mxu0 0
        %6101 = vmatpush1.bf16.msra.mxu0 %v5999
        %6102 = vmatprep.subr.bf16.mxu0 0
        %6103 = vmatpush1.bf16.msra.mxu0 %v6000
        %6104 = vmatprep.subr.bf16.mxu0 0
        %6105 = vmatpush1.bf16.msra.mxu0 %v6001
        %6106 = vmatprep.mubr.bf16.mxu0 %v5818
        %6107 = vmatmul.mubr.bf16.gmra.mrb[0].mxu0 %v5817
        %v6108 = vpop.f32.mrb[0].mxu0
        %v6109 = vadd.f32 0.0, %v6108
        %v6110 = vpop.f32.mrb[0].mxu0
        %v6111 = vpop.f32.mrb[0].mxu0
        %v6112 = vadd.f32 0.0, %v6111
        %v6113 = vpop.f32.mrb[0].mxu0
        %6114 = vmatprep.mubr.bf16.mxu0 %v5821
        %6115 = vmatmul.mubr.bf16.gmra.mrb[0].mxu0 %v5820
        %v6116 = vpop.f32.mrb[0].mxu0
        %v6117 = vadd.f32 0.0, %v6116
        %v6118 = vpop.f32.mrb[0].mxu0
        %v6119 = vpop.f32.mrb[0].mxu0
        %v6120 = vadd.f32 0.0, %v6119
        %v6121 = vpop.f32.mrb[0].mxu0
        %6122 = vmatprep.mubr.bf16.mxu0 %v5824
        %6123 = vmatmul.mubr.bf16.gmra.mrb[0].mxu0 %v5823
        %v6124 = vpop.f32.mrb[0].mxu0
        %v6125 = vadd.f32 0.0, %v6124
        %v6126 = vpop.f32.mrb[0].mxu0
        %v6127 = vpop.f32.mrb[0].mxu0
        %v6128 = vadd.f32 0.0, %v6127
        %v6129 = vpop.f32.mrb[0].mxu0
        %6130 = vmatprep.mubr.bf16.mxu0 %v5827
        %6131 = vmatmul.mubr.bf16.gmra.mrb[0].mxu0 %v5826
        %v6132 = vpop.f32.mrb[0].mxu0
        %v6133 = vadd.f32 0.0, %v6132
        %v6134 = vpop.f32.mrb[0].mxu0
        %v6135 = vpop.f32.mrb[0].mxu0
        %v6136 = vadd.f32 0.0, %v6135
        %v6137 = vpop.f32.mrb[0].mxu0
        %6138 = vmatprep.mubr.bf16.mxu0 %v5830
        %6139 = vmatmul.mubr.bf16.gmra.mrb[0].mxu0 %v5829
        %v6140 = vpop.f32.mrb[0].mxu0
        %v6141 = vadd.f32 0.0, %v6140
        %v6142 = vpop.f32.mrb[0].mxu0
        %v6143 = vpop.f32.mrb[0].mxu0
        %v6144 = vadd.f32 0.0, %v6143
        %v6145 = vpop.f32.mrb[0].mxu0
        %6146 = vmatprep.mubr.bf16.mxu0 %v5833
        %6147 = vmatmul.mubr.bf16.gmra.mrb[0].mxu0 %v5832
        %v6148 = vpop.f32.mrb[0].mxu0
        %v6149 = vadd.f32 0.0, %v6148
        %v6150 = vpop.f32.mrb[0].mxu0
        %v6151 = vpop.f32.mrb[0].mxu0
        %v6152 = vadd.f32 0.0, %v6151
        %v6153 = vpop.f32.mrb[0].mxu0
        %6154 = vmatprep.mubr.bf16.mxu0 %v5836
        %6155 = vmatmul.mubr.bf16.gmra.mrb[0].mxu0 %v5835
        %v6156 = vpop.f32.mrb[0].mxu0
        %v6157 = vadd.f32 0.0, %v6156
        %v6158 = vpop.f32.mrb[0].mxu0
        %v6159 = vpop.f32.mrb[0].mxu0
        %v6160 = vadd.f32 0.0, %v6159
        %v6161 = vpop.f32.mrb[0].mxu0
        %6162 = vmatprep.mubr.bf16.mxu0 %v5839
        %6163 = vmatmul.mubr.bf16.gmra.mrb[0].mxu0 %v5838
        %v6164 = vpop.f32.mrb[0].mxu0
        %v6165 = vadd.f32 0.0, %v6164
        %v6166 = vpop.f32.mrb[0].mxu0
        %v6167 = vpop.f32.mrb[0].mxu0
        %v6168 = vadd.f32 0.0, %v6167
        %v6169 = vpop.f32.mrb[0].mxu0
        %6170 = vmatprep.mubr.bf16.mxu0 %v5842
        %6171 = vmatmul.mubr.bf16.gmra.mrb[0].mxu0 %v5841
        %v6172 = vpop.f32.mrb[0].mxu0
        %v6173 = vadd.f32 0.0, %v6172
        %v6174 = vpop.f32.mrb[0].mxu0
        %v6175 = vpop.f32.mrb[0].mxu0
        %v6176 = vadd.f32 0.0, %v6175
        %v6177 = vpop.f32.mrb[0].mxu0
        %6178 = vmatprep.mubr.bf16.mxu0 %v5845
        %6179 = vmatmul.mubr.bf16.gmra.mrb[0].mxu0 %v5844
        %v6180 = vpop.f32.mrb[0].mxu0
        %v6181 = vadd.f32 0.0, %v6180
        %v6182 = vpop.f32.mrb[0].mxu0
        %v6183 = vpop.f32.mrb[0].mxu0
        %v6184 = vadd.f32 0.0, %v6183
        %v6185 = vpop.f32.mrb[0].mxu0
        %6186 = vmatprep.mubr.bf16.mxu0 %v5848
        %6187 = vmatmul.mubr.bf16.gmra.mrb[0].mxu0 %v5847
        %v6188 = vpop.f32.mrb[0].mxu0
        %v6189 = vadd.f32 0.0, %v6188
        %v6190 = vpop.f32.mrb[0].mxu0
        %v6191 = vpop.f32.mrb[0].mxu0
        %v6192 = vadd.f32 0.0, %v6191
        %v6193 = vpop.f32.mrb[0].mxu0
        %6194 = vmatprep.mubr.bf16.mxu0 %v5851
        %6195 = vmatmul.mubr.bf16.gmra.mrb[0].mxu0 %v5850
        %v6196 = vpop.f32.mrb[0].mxu0
        %v6197 = vadd.f32 0.0, %v6196
        %v6198 = vpop.f32.mrb[0].mxu0
        %v6199 = vpop.f32.mrb[0].mxu0
        %v6200 = vadd.f32 0.0, %v6199
        %v6201 = vpop.f32.mrb[0].mxu0
        %6202 = vmatprep.mubr.bf16.mxu0 %v5854
        %6203 = vmatmul.mubr.bf16.gmra.mrb[0].mxu0 %v5853
        %v6204 = vpop.f32.mrb[0].mxu0
        %v6205 = vadd.f32 0.0, %v6204
        %v6206 = vpop.f32.mrb[0].mxu0
        %v6207 = vpop.f32.mrb[0].mxu0
        %v6208 = vadd.f32 0.0, %v6207
        %v6209 = vpop.f32.mrb[0].mxu0
        %6210 = vmatprep.mubr.bf16.mxu0 %v5857
        %6211 = vmatmul.mubr.bf16.gmra.mrb[0].mxu0 %v5856
        %v6212 = vpop.f32.mrb[0].mxu0
        %v6213 = vadd.f32 0.0, %v6212
        %v6214 = vpop.f32.mrb[0].mxu0
        %v6215 = vpop.f32.mrb[0].mxu0
        %v6216 = vadd.f32 0.0, %v6215
        %v6217 = vpop.f32.mrb[0].mxu0
        %6218 = vmatprep.mubr.bf16.mxu0 %v5860
        %6219 = vmatmul.mubr.bf16.gmra.mrb[0].mxu0 %v5859
        %v6220 = vpop.f32.mrb[0].mxu0
        %v6221 = vadd.f32 0.0, %v6220
        %v6222 = vpop.f32.mrb[0].mxu0
        %v6223 = vpop.f32.mrb[0].mxu0
        %v6224 = vadd.f32 0.0, %v6223
        %v6225 = vpop.f32.mrb[0].mxu0
        %6226 = vmatprep.mubr.bf16.mxu0 %v5863
        %6227 = vmatmul.mubr.bf16.gmra.mrb[0].mxu0 %v5862
        %v6228 = vpop.f32.mrb[0].mxu0
        %v6229 = vadd.f32 0.0, %v6228
        %v6230 = vpop.f32.mrb[0].mxu0
        %v6231 = vpop.f32.mrb[0].mxu0
        %v6232 = vadd.f32 0.0, %v6231
        %v6233 = vpop.f32.mrb[0].mxu0
        %6234 = vdwg.mxu0
        %6235 = vmatprep.subr.bf16.mxu0 0
        %6236 = vmatpush1.bf16.msra.mxu0 %v6002
        %6237 = vmatprep.subr.bf16.mxu0 0
        %6238 = vmatpush1.bf16.msra.mxu0 %v6003
        %6239 = vmatprep.subr.bf16.mxu0 0
        %6240 = vmatpush1.bf16.msra.mxu0 %v6004
        %6241 = vmatprep.subr.bf16.mxu0 0
        %6242 = vmatpush1.bf16.msra.mxu0 %v6005
        %6243 = vmatprep.subr.bf16.mxu0 0
        %6244 = vmatpush1.bf16.msra.mxu0 0
        %6245 = vmatprep.subr.bf16.mxu0 0
        %6246 = vmatpush1.bf16.msra.mxu0 0
        %6247 = vmatprep.subr.bf16.mxu0 0
        %6248 = vmatpush1.bf16.msra.mxu0 0
        %6249 = vmatprep.subr.bf16.mxu0 0
        %6250 = vmatpush1.bf16.msra.mxu0 0
        %6251 = vmatprep.subr.bf16.mxu0 0
        %6252 = vmatpush1.bf16.msra.mxu0 0
        %6253 = vmatprep.subr.bf16.mxu0 0
        %6254 = vmatpush1.bf16.msra.mxu0 0
        %6255 = vmatprep.subr.bf16.mxu0 0
        %6256 = vmatpush1.bf16.msra.mxu0 0
        %6257 = vmatprep.subr.bf16.mxu0 0
        %6258 = vmatpush1.bf16.msra.mxu0 0
        %6259 = vmatprep.subr.bf16.mxu0 0
        %6260 = vmatpush1.bf16.msra.mxu0 0
        %6261 = vmatprep.subr.bf16.mxu0 0
        %6262 = vmatpush1.bf16.msra.mxu0 0
        %6263 = vmatprep.subr.bf16.mxu0 0
        %6264 = vmatpush1.bf16.msra.mxu0 0
        %6265 = vmatprep.subr.bf16.mxu0 0
        %6266 = vmatpush1.bf16.msra.mxu0 0
        %6267 = vmatprep.mubr.bf16.mxu0 0
        %6268 = vmatmul.mubr.bf16.gmra.mrb[0].mxu0 %v6027
        %v6269 = vpop.f32.mrb[0].mxu0
        %v6270 = vadd.f32 %v6109, %v6269
        %v6271 = vpop.f32.mrb[0].mxu0
        %v6272 = vpop.f32.mrb[0].mxu0
        %v6273 = vadd.f32 %v6112, %v6272
        %v6274 = vpop.f32.mrb[0].mxu0
        %6275 = vmatprep.mubr.bf16.mxu0 0
        %6276 = vmatmul.mubr.bf16.gmra.mrb[0].mxu0 %v6030
        %v6277 = vpop.f32.mrb[0].mxu0
        %v6278 = vadd.f32 %v6117, %v6277
        %v6279 = vpop.f32.mrb[0].mxu0
        %v6280 = vpop.f32.mrb[0].mxu0
        %v6281 = vadd.f32 %v6120, %v6280
        %v6282 = vpop.f32.mrb[0].mxu0
        %6283 = vmatprep.mubr.bf16.mxu0 0
        %6284 = vmatmul.mubr.bf16.gmra.mrb[0].mxu0 %v6033
        %v6285 = vpop.f32.mrb[0].mxu0
        %v6286 = vadd.f32 %v6125, %v6285
        %v6287 = vpop.f32.mrb[0].mxu0
        %v6288 = vpop.f32.mrb[0].mxu0
        %v6289 = vadd.f32 %v6128, %v6288
        %v6290 = vpop.f32.mrb[0].mxu0
        %6291 = vmatprep.mubr.bf16.mxu0 0
        %6292 = vmatmul.mubr.bf16.gmra.mrb[0].mxu0 %v6036
        %v6293 = vpop.f32.mrb[0].mxu0
        %v6294 = vadd.f32 %v6133, %v6293
        %v6295 = vpop.f32.mrb[0].mxu0
        %v6296 = vpop.f32.mrb[0].mxu0
        %v6297 = vadd.f32 %v6136, %v6296
        %v6298 = vpop.f32.mrb[0].mxu0
        %6299 = vmatprep.mubr.bf16.mxu0 0
        %6300 = vmatmul.mubr.bf16.gmra.mrb[0].mxu0 %v6039
        %v6301 = vpop.f32.mrb[0].mxu0
        %v6302 = vadd.f32 %v6141, %v6301
        %v6303 = vpop.f32.mrb[0].mxu0
        %v6304 = vpop.f32.mrb[0].mxu0
        %v6305 = vadd.f32 %v6144, %v6304
        %v6306 = vpop.f32.mrb[0].mxu0
        %6307 = vmatprep.mubr.bf16.mxu0 0
        %6308 = vmatmul.mubr.bf16.gmra.mrb[0].mxu0 %v6042
        %v6309 = vpop.f32.mrb[0].mxu0
        %v6310 = vadd.f32 %v6149, %v6309
        %v6311 = vpop.f32.mrb[0].mxu0
        %v6312 = vpop.f32.mrb[0].mxu0
        %v6313 = vadd.f32 %v6152, %v6312
        %v6314 = vpop.f32.mrb[0].mxu0
        %6315 = vmatprep.mubr.bf16.mxu0 0
        %6316 = vmatmul.mubr.bf16.gmra.mrb[0].mxu0 %v6045
        %v6317 = vpop.f32.mrb[0].mxu0
        %v6318 = vadd.f32 %v6157, %v6317
        %v6319 = vpop.f32.mrb[0].mxu0
        %v6320 = vpop.f32.mrb[0].mxu0
        %v6321 = vadd.f32 %v6160, %v6320
        %v6322 = vpop.f32.mrb[0].mxu0
        %6323 = vmatprep.mubr.bf16.mxu0 0
        %6324 = vmatmul.mubr.bf16.gmra.mrb[0].mxu0 %v6048
        %v6325 = vpop.f32.mrb[0].mxu0
        %v6326 = vadd.f32 %v6165, %v6325
        %v6327 = vpop.f32.mrb[0].mxu0
        %v6328 = vpop.f32.mrb[0].mxu0
        %v6329 = vadd.f32 %v6168, %v6328
        %v6330 = vpop.f32.mrb[0].mxu0
        %6331 = vmatprep.mubr.bf16.mxu0 0
        %6332 = vmatmul.mubr.bf16.gmra.mrb[0].mxu0 %v6051
        %v6333 = vpop.f32.mrb[0].mxu0
        %v6334 = vadd.f32 %v6173, %v6333
        %v6335 = vpop.f32.mrb[0].mxu0
        %v6336 = vpop.f32.mrb[0].mxu0
        %v6337 = vadd.f32 %v6176, %v6336
        %v6338 = vpop.f32.mrb[0].mxu0
        %6339 = vmatprep.mubr.bf16.mxu0 0
        %6340 = vmatmul.mubr.bf16.gmra.mrb[0].mxu0 %v6054
        %v6341 = vpop.f32.mrb[0].mxu0
        %v6342 = vadd.f32 %v6181, %v6341
        %v6343 = vpop.f32.mrb[0].mxu0
        %v6344 = vpop.f32.mrb[0].mxu0
        %v6345 = vadd.f32 %v6184, %v6344
        %v6346 = vpop.f32.mrb[0].mxu0
        %6347 = vmatprep.mubr.bf16.mxu0 0
        %6348 = vmatmul.mubr.bf16.gmra.mrb[0].mxu0 %v6057
        %v6349 = vpop.f32.mrb[0].mxu0
        %v6350 = vadd.f32 %v6189, %v6349
        %v6351 = vpop.f32.mrb[0].mxu0
        %v6352 = vpop.f32.mrb[0].mxu0
        %v6353 = vadd.f32 %v6192, %v6352
        %v6354 = vpop.f32.mrb[0].mxu0
        %6355 = vmatprep.mubr.bf16.mxu0 0
        %6356 = vmatmul.mubr.bf16.gmra.mrb[0].mxu0 %v6060
        %v6357 = vpop.f32.mrb[0].mxu0
        %v6358 = vadd.f32 %v6197, %v6357
        %v6359 = vpop.f32.mrb[0].mxu0
        %v6360 = vpop.f32.mrb[0].mxu0
        %v6361 = vadd.f32 %v6200, %v6360
        %v6362 = vpop.f32.mrb[0].mxu0
        %6363 = vmatprep.mubr.bf16.mxu0 0
        %6364 = vmatmul.mubr.bf16.gmra.mrb[0].mxu0 %v6063
        %v6365 = vpop.f32.mrb[0].mxu0
        %v6366 = vadd.f32 %v6205, %v6365
        %v6367 = vpop.f32.mrb[0].mxu0
        %v6368 = vpop.f32.mrb[0].mxu0
        %v6369 = vadd.f32 %v6208, %v6368
        %v6370 = vpop.f32.mrb[0].mxu0
        %6371 = vmatprep.mubr.bf16.mxu0 0
        %6372 = vmatmul.mubr.bf16.gmra.mrb[0].mxu0 %v6066
        %v6373 = vpop.f32.mrb[0].mxu0
        %v6374 = vadd.f32 %v6213, %v6373
        %v6375 = vpop.f32.mrb[0].mxu0
        %v6376 = vpop.f32.mrb[0].mxu0
        %v6377 = vadd.f32 %v6216, %v6376
        %v6378 = vpop.f32.mrb[0].mxu0
        %6379 = vmatprep.mubr.bf16.mxu0 0
        %6380 = vmatmul.mubr.bf16.gmra.mrb[0].mxu0 %v6069
        %v6381 = vpop.f32.mrb[0].mxu0
        %v6382 = vadd.f32 %v6221, %v6381
        %v6383 = vpop.f32.mrb[0].mxu0
        %v6384 = vpop.f32.mrb[0].mxu0
        %v6385 = vadd.f32 %v6224, %v6384
        %v6386 = vpop.f32.mrb[0].mxu0
        %6387 = vmatprep.mubr.bf16.mxu0 0
        %6388 = vmatmul.mubr.bf16.gmra.mrb[0].mxu0 %v6072
        %v6389 = vpop.f32.mrb[0].mxu0
        %v6390 = vadd.f32 %v6229, %v6389
        %v6391 = vpop.f32.mrb[0].mxu0
        %v6392 = vpop.f32.mrb[0].mxu0
        %v6393 = vadd.f32 %v6232, %v6392
        %v6394 = vpop.f32.mrb[0].mxu0
        %6395 = vdwg.mxu0
        %v6396 = vadd.f32 %v5691, %v6270
        %v6397 = vadd.f32 %v5694, %v6273
        %v6398 = vadd.f32 %v5699, %v6278
        %v6399 = vadd.f32 %v5702, %v6281
        %v6400 = vadd.f32 %v5707, %v6286
        %v6401 = vadd.f32 %v5710, %v6289
        %v6402 = vadd.f32 %v5715, %v6294
        %v6403 = vadd.f32 %v5718, %v6297
        %v6404 = vadd.f32 %v5723, %v6302
        %v6405 = vadd.f32 %v5726, %v6305
        %v6406 = vadd.f32 %v5731, %v6310
        %v6407 = vadd.f32 %v5734, %v6313
        %v6408 = vadd.f32 %v5739, %v6318
        %v6409 = vadd.f32 %v5742, %v6321
        %v6410 = vadd.f32 %v5747, %v6326
        %v6411 = vadd.f32 %v5750, %v6329
        %v6412 = vadd.f32 %v5755, %v6334
        %v6413 = vadd.f32 %v5758, %v6337
        %v6414 = vadd.f32 %v5763, %v6342
        %v6415 = vadd.f32 %v5766, %v6345
        %v6416 = vadd.f32 %v5771, %v6350
        %v6417 = vadd.f32 %v5774, %v6353
        %v6418 = vadd.f32 %v5779, %v6358
        %v6419 = vadd.f32 %v5782, %v6361
        %v6420 = vadd.f32 %v5787, %v6366
        %v6421 = vadd.f32 %v5790, %v6369
        %v6422 = vadd.f32 %v5795, %v6374
        %v6423 = vadd.f32 %v5798, %v6377
        %v6424 = vadd.f32 %v5803, %v6382
        %v6425 = vadd.f32 %v5806, %v6385
        %v6426 = vadd.f32 %v5811, %v6390
        %v6427 = vadd.f32 %v5814, %v6393
        %s6428 = scalar_lea.vmem [#allocation3], 72
        %v6429 = vld [vmem:[%s6428] sm:$0xff]
        %v6430 = vld [vmem:[%s6428 + $0x8] sm:$0xff]
        %v6431 = vld [vmem:[%s6428 + $0x10] sm:$0xff]
        %v6432 = vld [vmem:[%s6428 + $0x18] sm:$0xff]
        %v6433 = vld [vmem:[%s6428 + $0x20] sm:$0xff]
        %v6434 = vld [vmem:[%s6428 + $0x28] sm:$0xff]
        %v6435 = vld [vmem:[%s6428 + $0x30] sm:$0xff]
        %v6436 = vld [vmem:[%s6428 + $0x38] sm:$0xff]
        %v6437 = vld [vmem:[%s6428 + $0x40] sm:$0xff]
        %v6438 = vld [vmem:[%s6428 + $0x48] sm:$0xff]
        %v6439 = vld [vmem:[%s6428 + $0x50] sm:$0xff]
        %v6440 = vld [vmem:[%s6428 + $0x58] sm:$0xff]
        %v6441 = vld [vmem:[%s6428 + $0x60] sm:$0xff]
        %v6442 = vld [vmem:[%s6428 + $0x68] sm:$0xff]
        %v6443 = vld [vmem:[%s6428 + $0x70] sm:$0xff]
        %v6444 = vld [vmem:[%s6428 + $0x78] sm:$0xff]
        %v6445 = vld [vmem:[%s6428 + $0x80] sm:$0xff]
        %v6446 = vld [vmem:[%s6428 + $0x88] sm:$0xff]
        %v6447 = vld [vmem:[%s6428 + $0x90] sm:$0xff]
        %v6448 = vld [vmem:[%s6428 + $0x98] sm:$0xff]
        %v6449 = vld [vmem:[%s6428 + $0xa0] sm:$0xff]
        %v6450 = vld [vmem:[%s6428 + $0xa8] sm:$0xff]
        %v6451 = vld [vmem:[%s6428 + $0xb0] sm:$0xff]
        %v6452 = vld [vmem:[%s6428 + $0xb8] sm:$0xff]
        %v6453 = vld [vmem:[%s6428 + $0xc0] sm:$0xff]
        %v6454 = vld [vmem:[%s6428 + $0xc8] sm:$0xff]
        %v6455 = vld [vmem:[%s6428 + $0xd0] sm:$0xff]
        %v6456 = vld [vmem:[%s6428 + $0xd8] sm:$0xff]
        %v6457 = vld [vmem:[%s6428 + $0xe0] sm:$0xff]
        %v6458 = vld [vmem:[%s6428 + $0xe8] sm:$0xff]
        %v6459 = vld [vmem:[%s6428 + $0xf0] sm:$0xff]
        %v6460 = vld [vmem:[%s6428 + $0xf8] sm:$0xff]
        %v6461 = vld [vmem:[%s6428 + $0x100] sm:$0xff]
        %v6462 = vld [vmem:[%s6428 + $0x108] sm:$0xff]
        %v6463 = vld [vmem:[%s6428 + $0x110] sm:$0xff]
        %v6464 = vld [vmem:[%s6428 + $0x118] sm:$0xff]
        %v6465 = vld [vmem:[%s6428 + $0x120] sm:$0xff]
        %v6466 = vld [vmem:[%s6428 + $0x128] sm:$0xff]
        %v6467 = vld [vmem:[%s6428 + $0x130] sm:$0xff]
        %v6468 = vld [vmem:[%s6428 + $0x138] sm:$0xff]
        %v6469 = vld [vmem:[%s6428 + $0x140] sm:$0xff]
        %v6470 = vld [vmem:[%s6428 + $0x148] sm:$0xff]
        %v6471 = vld [vmem:[%s6428 + $0x150] sm:$0xff]
        %v6472 = vld [vmem:[%s6428 + $0x158] sm:$0xff]
        %v6473 = vld [vmem:[%s6428 + $0x160] sm:$0xff]
        %v6474 = vld [vmem:[%s6428 + $0x168] sm:$0xff]
        %v6475 = vld [vmem:[%s6428 + $0x170] sm:$0xff]
        %v6476 = vld [vmem:[%s6428 + $0x178] sm:$0xff]
        %s6477 = scalar_lea.vmem %s3, 480
        %v6478 = vld [vmem:[%s6477] sm:$0xf]
        %v6479 = vld [vmem:[%s6477 + $0x4] sm:$0xf]
        %v6480 = vld [vmem:[%s6477 + $0x8] sm:$0xf]
        %v6481 = vld [vmem:[%s6477 + $0xc] sm:$0xf]
        %v6482 = vld [vmem:[%s6477 + $0x10] sm:$0xf]
        %v6483 = vld [vmem:[%s6477 + $0x14] sm:$0xf]
        %v6484 = vld [vmem:[%s6477 + $0x18] sm:$0xf]
        %v6485 = vld [vmem:[%s6477 + $0x1c] sm:$0xf]
        %v6486 = vld [vmem:[%s6477 + $0x20] sm:$0xf]
        %v6487 = vld [vmem:[%s6477 + $0x24] sm:$0xf]
        %v6488 = vld [vmem:[%s6477 + $0x28] sm:$0xf]
        %v6489 = vld [vmem:[%s6477 + $0x2c] sm:$0xf]
        %v6490 = vld [vmem:[%s6477 + $0x30] sm:$0xf]
        %v6491 = vld [vmem:[%s6477 + $0x34] sm:$0xf]
        %v6492 = vld [vmem:[%s6477 + $0x38] sm:$0xf]
        %v6493 = vld [vmem:[%s6477 + $0x3c] sm:$0xf]
        %v6494 = vld [vmem:[%s6477 + $0x40] sm:$0xf]
        %v6495 = vld [vmem:[%s6477 + $0x44] sm:$0xf]
        %v6496 = vld [vmem:[%s6477 + $0x48] sm:$0xf]
        %v6497 = vld [vmem:[%s6477 + $0x4c] sm:$0xf]
        %v6498 = vld [vmem:[%s6477 + $0x50] sm:$0xf]
        %v6499 = vld [vmem:[%s6477 + $0x54] sm:$0xf]
        %v6500 = vld [vmem:[%s6477 + $0x58] sm:$0xf]
        %v6501 = vld [vmem:[%s6477 + $0x5c] sm:$0xf]
        %v6502 = vld [vmem:[%s6477 + $0x60] sm:$0xf]
        %v6503 = vld [vmem:[%s6477 + $0x64] sm:$0xf]
        %v6504 = vld [vmem:[%s6477 + $0x68] sm:$0xf]
        %v6505 = vld [vmem:[%s6477 + $0x6c] sm:$0xf]
        %v6506 = vld [vmem:[%s6477 + $0x70] sm:$0xf]
        %v6507 = vld [vmem:[%s6477 + $0x74] sm:$0xf]
        %v6508 = vld [vmem:[%s6477 + $0x78] sm:$0xf]
        %v6509 = vld [vmem:[%s6477 + $0x7c] sm:$0xf]
        %v6510 = vld [vmem:[%s6477 + $0x80] sm:$0xf]
        %v6511 = vld [vmem:[%s6477 + $0x84] sm:$0xf]
        %v6512 = vld [vmem:[%s6477 + $0x88] sm:$0xf]
        %v6513 = vld [vmem:[%s6477 + $0x8c] sm:$0xf]
        %v6514 = vld [vmem:[%s6477 + $0x90] sm:$0xf]
        %v6515 = vld [vmem:[%s6477 + $0x94] sm:$0xf]
        %v6516 = vld [vmem:[%s6477 + $0x98] sm:$0xf]
        %v6517 = vld [vmem:[%s6477 + $0x9c] sm:$0xf]
        %v6558 = vunpack.c.l.b16 %v6478
        %v6559 = vunpack.c.l.b16 %v6479
        %v6560 = vunpack.c.l.b16 %v6480
        %v6561 = vunpack.c.l.b16 %v6481
        %v6562 = vunpack.c.l.b16 %v6482
        %v6563 = vunpack.c.l.b16 %v6483
        %v6564 = vunpack.c.l.b16 %v6484
        %v6565 = vunpack.c.l.b16 %v6485
        %v6566 = vunpack.c.l.b16 %v6486
        %v6567 = vunpack.c.l.b16 %v6487
        %v6568 = vunpack.c.l.b16 %v6488
        %v6569 = vunpack.c.l.b16 %v6489
        %v6570 = vunpack.c.l.b16 %v6490
        %v6571 = vunpack.c.l.b16 %v6491
        %v6572 = vunpack.c.l.b16 %v6492
        %v6573 = vunpack.c.l.b16 %v6493
        %v6574 = vunpack.c.l.b16 %v6494
        %v6575 = vunpack.c.l.b16 %v6495
        %v6576 = vunpack.c.l.b16 %v6496
        %v6577 = vunpack.c.l.b16 %v6497
        %v6578 = vunpack.c.l.b16 %v6498
        %v6579 = vunpack.c.l.b16 %v6499
        %v6580 = vunpack.c.l.b16 %v6500
        %v6581 = vunpack.c.l.b16 %v6501
        %v6582 = vunpack.c.l.b16 %v6502
        %v6583 = vunpack.c.l.b16 %v6503
        %v6584 = vunpack.c.l.b16 %v6504
        %v6585 = vunpack.c.l.b16 %v6505
        %v6586 = vunpack.c.l.b16 %v6506
        %v6587 = vunpack.c.l.b16 %v6507
        %v6588 = vunpack.c.l.b16 %v6508
        %v6589 = vunpack.c.l.b16 %v6509
        %v6590 = vunpack.c.l.b16 %v6510
        %v6591 = vunpack.c.l.b16 %v6511
        %v6592 = vunpack.c.l.b16 %v6512
        %v6593 = vunpack.c.l.b16 %v6513
        %v6594 = vunpack.c.l.b16 %v6514
        %v6595 = vunpack.c.l.b16 %v6515
        %v6596 = vunpack.c.l.b16 %v6516
        %v6597 = vunpack.c.l.b16 %v6517
        %v6598 = vpack.c.b16 %v6559, %v6558
        %v6599 = vpack.c.b16 %v6561, %v6560
        %v6600 = vpack.c.b16 %v6563, %v6562
        %v6601 = vpack.c.b16 %v6565, %v6564
        %v6602 = vpack.c.b16 %v6567, %v6566
        %v6603 = vpack.c.b16 %v6569, %v6568
        %v6604 = vpack.c.b16 %v6571, %v6570
        %v6605 = vpack.c.b16 %v6573, %v6572
        %v6606 = vpack.c.b16 %v6575, %v6574
        %v6607 = vpack.c.b16 %v6577, %v6576
        %v6608 = vpack.c.b16 %v6579, %v6578
        %v6609 = vpack.c.b16 %v6581, %v6580
        %v6610 = vpack.c.b16 %v6583, %v6582
        %v6611 = vpack.c.b16 %v6585, %v6584
        %v6612 = vpack.c.b16 %v6587, %v6586
        %v6613 = vpack.c.b16 %v6589, %v6588
        %v6614 = vpack.c.b16 %v6591, %v6590
        %v6615 = vpack.c.b16 %v6593, %v6592
        %v6616 = vpack.c.b16 %v6595, %v6594
        %v6617 = vpack.c.b16 %v6597, %v6596
        %v6639 = vsel %vm918, %v6431, 0
        %v6642 = vsel %vm918, %v6434, 0
        %v6645 = vsel %vm918, %v6437, 0
        %v6648 = vsel %vm918, %v6440, 0
        %v6651 = vsel %vm918, %v6443, 0
        %v6654 = vsel %vm918, %v6446, 0
        %v6657 = vsel %vm918, %v6449, 0
        %v6660 = vsel %vm918, %v6452, 0
        %v6663 = vsel %vm918, %v6455, 0
        %v6666 = vsel %vm918, %v6458, 0
        %v6669 = vsel %vm918, %v6461, 0
        %v6672 = vsel %vm918, %v6464, 0
        %v6675 = vsel %vm918, %v6467, 0
        %v6678 = vsel %vm918, %v6470, 0
        %v6681 = vsel %vm918, %v6473, 0
        %v6684 = vsel %vm918, %v6476, 0
        %6686 = vmatprep.subr.bf16.mxu0 0
        %6687 = vmatpush1.bf16.msra.mxu0 %v6598
        %6688 = vmatprep.subr.bf16.mxu0 0
        %6689 = vmatpush1.bf16.msra.mxu0 %v6599
        %6690 = vmatprep.subr.bf16.mxu0 0
        %6691 = vmatpush1.bf16.msra.mxu0 %v6600
        %6692 = vmatprep.subr.bf16.mxu0 0
        %6693 = vmatpush1.bf16.msra.mxu0 %v6601
        %6694 = vmatprep.subr.bf16.mxu0 0
        %6695 = vmatpush1.bf16.msra.mxu0 %v6602
        %6696 = vmatprep.subr.bf16.mxu0 0
        %6697 = vmatpush1.bf16.msra.mxu0 %v6603
        %6698 = vmatprep.subr.bf16.mxu0 0
        %6699 = vmatpush1.bf16.msra.mxu0 %v6604
        %6700 = vmatprep.subr.bf16.mxu0 0
        %6701 = vmatpush1.bf16.msra.mxu0 %v6605
        %6702 = vmatprep.subr.bf16.mxu0 0
        %6703 = vmatpush1.bf16.msra.mxu0 %v6606
        %6704 = vmatprep.subr.bf16.mxu0 0
        %6705 = vmatpush1.bf16.msra.mxu0 %v6607
        %6706 = vmatprep.subr.bf16.mxu0 0
        %6707 = vmatpush1.bf16.msra.mxu0 %v6608
        %6708 = vmatprep.subr.bf16.mxu0 0
        %6709 = vmatpush1.bf16.msra.mxu0 %v6609
        %6710 = vmatprep.subr.bf16.mxu0 0
        %6711 = vmatpush1.bf16.msra.mxu0 %v6610
        %6712 = vmatprep.subr.bf16.mxu0 0
        %6713 = vmatpush1.bf16.msra.mxu0 %v6611
        %6714 = vmatprep.subr.bf16.mxu0 0
        %6715 = vmatpush1.bf16.msra.mxu0 %v6612
        %6716 = vmatprep.subr.bf16.mxu0 0
        %6717 = vmatpush1.bf16.msra.mxu0 %v6613
        %6718 = vmatprep.mubr.bf16.mxu0 %v6430
        %6719 = vmatmul.mubr.bf16.gmra.mrb[0].mxu0 %v6429
        %v6720 = vpop.f32.mrb[0].mxu0
        %v6721 = vadd.f32 0.0, %v6720
        %v6722 = vpop.f32.mrb[0].mxu0
        %v6723 = vpop.f32.mrb[0].mxu0
        %v6724 = vadd.f32 0.0, %v6723
        %v6725 = vpop.f32.mrb[0].mxu0
        %6726 = vmatprep.mubr.bf16.mxu0 %v6433
        %6727 = vmatmul.mubr.bf16.gmra.mrb[0].mxu0 %v6432
        %v6728 = vpop.f32.mrb[0].mxu0
        %v6729 = vadd.f32 0.0, %v6728
        %v6730 = vpop.f32.mrb[0].mxu0
        %v6731 = vpop.f32.mrb[0].mxu0
        %v6732 = vadd.f32 0.0, %v6731
        %v6733 = vpop.f32.mrb[0].mxu0
        %6734 = vmatprep.mubr.bf16.mxu0 %v6436
        %6735 = vmatmul.mubr.bf16.gmra.mrb[0].mxu0 %v6435
        %v6736 = vpop.f32.mrb[0].mxu0
        %v6737 = vadd.f32 0.0, %v6736
        %v6738 = vpop.f32.mrb[0].mxu0
        %v6739 = vpop.f32.mrb[0].mxu0
        %v6740 = vadd.f32 0.0, %v6739
        %v6741 = vpop.f32.mrb[0].mxu0
        %6742 = vmatprep.mubr.bf16.mxu0 %v6439
        %6743 = vmatmul.mubr.bf16.gmra.mrb[0].mxu0 %v6438
        %v6744 = vpop.f32.mrb[0].mxu0
        %v6745 = vadd.f32 0.0, %v6744
        %v6746 = vpop.f32.mrb[0].mxu0
        %v6747 = vpop.f32.mrb[0].mxu0
        %v6748 = vadd.f32 0.0, %v6747
        %v6749 = vpop.f32.mrb[0].mxu0
        %6750 = vmatprep.mubr.bf16.mxu0 %v6442
        %6751 = vmatmul.mubr.bf16.gmra.mrb[0].mxu0 %v6441
        %v6752 = vpop.f32.mrb[0].mxu0
        %v6753 = vadd.f32 0.0, %v6752
        %v6754 = vpop.f32.mrb[0].mxu0
        %v6755 = vpop.f32.mrb[0].mxu0
        %v6756 = vadd.f32 0.0, %v6755
        %v6757 = vpop.f32.mrb[0].mxu0
        %6758 = vmatprep.mubr.bf16.mxu0 %v6445
        %6759 = vmatmul.mubr.bf16.gmra.mrb[0].mxu0 %v6444
        %v6760 = vpop.f32.mrb[0].mxu0
        %v6761 = vadd.f32 0.0, %v6760
        %v6762 = vpop.f32.mrb[0].mxu0
        %v6763 = vpop.f32.mrb[0].mxu0
        %v6764 = vadd.f32 0.0, %v6763
        %v6765 = vpop.f32.mrb[0].mxu0
        %6766 = vmatprep.mubr.bf16.mxu0 %v6448
        %6767 = vmatmul.mubr.bf16.gmra.mrb[0].mxu0 %v6447
        %v6768 = vpop.f32.mrb[0].mxu0
        %v6769 = vadd.f32 0.0, %v6768
        %v6770 = vpop.f32.mrb[0].mxu0
        %v6771 = vpop.f32.mrb[0].mxu0
        %v6772 = vadd.f32 0.0, %v6771
        %v6773 = vpop.f32.mrb[0].mxu0
        %6774 = vmatprep.mubr.bf16.mxu0 %v6451
        %6775 = vmatmul.mubr.bf16.gmra.mrb[0].mxu0 %v6450
        %v6776 = vpop.f32.mrb[0].mxu0
        %v6777 = vadd.f32 0.0, %v6776
        %v6778 = vpop.f32.mrb[0].mxu0
        %v6779 = vpop.f32.mrb[0].mxu0
        %v6780 = vadd.f32 0.0, %v6779
        %v6781 = vpop.f32.mrb[0].mxu0
        %6782 = vmatprep.mubr.bf16.mxu0 %v6454
        %6783 = vmatmul.mubr.bf16.gmra.mrb[0].mxu0 %v6453
        %v6784 = vpop.f32.mrb[0].mxu0
        %v6785 = vadd.f32 0.0, %v6784
        %v6786 = vpop.f32.mrb[0].mxu0
        %v6787 = vpop.f32.mrb[0].mxu0
        %v6788 = vadd.f32 0.0, %v6787
        %v6789 = vpop.f32.mrb[0].mxu0
        %6790 = vmatprep.mubr.bf16.mxu0 %v6457
        %6791 = vmatmul.mubr.bf16.gmra.mrb[0].mxu0 %v6456
        %v6792 = vpop.f32.mrb[0].mxu0
        %v6793 = vadd.f32 0.0, %v6792
        %v6794 = vpop.f32.mrb[0].mxu0
        %v6795 = vpop.f32.mrb[0].mxu0
        %v6796 = vadd.f32 0.0, %v6795
        %v6797 = vpop.f32.mrb[0].mxu0
        %6798 = vmatprep.mubr.bf16.mxu0 %v6460
        %6799 = vmatmul.mubr.bf16.gmra.mrb[0].mxu0 %v6459
        %v6800 = vpop.f32.mrb[0].mxu0
        %v6801 = vadd.f32 0.0, %v6800
        %v6802 = vpop.f32.mrb[0].mxu0
        %v6803 = vpop.f32.mrb[0].mxu0
        %v6804 = vadd.f32 0.0, %v6803
        %v6805 = vpop.f32.mrb[0].mxu0
        %6806 = vmatprep.mubr.bf16.mxu0 %v6463
        %6807 = vmatmul.mubr.bf16.gmra.mrb[0].mxu0 %v6462
        %v6808 = vpop.f32.mrb[0].mxu0
        %v6809 = vadd.f32 0.0, %v6808
        %v6810 = vpop.f32.mrb[0].mxu0
        %v6811 = vpop.f32.mrb[0].mxu0
        %v6812 = vadd.f32 0.0, %v6811
        %v6813 = vpop.f32.mrb[0].mxu0
        %6814 = vmatprep.mubr.bf16.mxu0 %v6466
        %6815 = vmatmul.mubr.bf16.gmra.mrb[0].mxu0 %v6465
        %v6816 = vpop.f32.mrb[0].mxu0
        %v6817 = vadd.f32 0.0, %v6816
        %v6818 = vpop.f32.mrb[0].mxu0
        %v6819 = vpop.f32.mrb[0].mxu0
        %v6820 = vadd.f32 0.0, %v6819
        %v6821 = vpop.f32.mrb[0].mxu0
        %6822 = vmatprep.mubr.bf16.mxu0 %v6469
        %6823 = vmatmul.mubr.bf16.gmra.mrb[0].mxu0 %v6468
        %v6824 = vpop.f32.mrb[0].mxu0
        %v6825 = vadd.f32 0.0, %v6824
        %v6826 = vpop.f32.mrb[0].mxu0
        %v6827 = vpop.f32.mrb[0].mxu0
        %v6828 = vadd.f32 0.0, %v6827
        %v6829 = vpop.f32.mrb[0].mxu0
        %6830 = vmatprep.mubr.bf16.mxu0 %v6472
        %6831 = vmatmul.mubr.bf16.gmra.mrb[0].mxu0 %v6471
        %v6832 = vpop.f32.mrb[0].mxu0
        %v6833 = vadd.f32 0.0, %v6832
        %v6834 = vpop.f32.mrb[0].mxu0
        %v6835 = vpop.f32.mrb[0].mxu0
        %v6836 = vadd.f32 0.0, %v6835
        %v6837 = vpop.f32.mrb[0].mxu0
        %6838 = vmatprep.mubr.bf16.mxu0 %v6475
        %6839 = vmatmul.mubr.bf16.gmra.mrb[0].mxu0 %v6474
        %v6840 = vpop.f32.mrb[0].mxu0
        %v6841 = vadd.f32 0.0, %v6840
        %v6842 = vpop.f32.mrb[0].mxu0
        %v6843 = vpop.f32.mrb[0].mxu0
        %v6844 = vadd.f32 0.0, %v6843
        %v6845 = vpop.f32.mrb[0].mxu0
        %6846 = vdwg.mxu0
        %6847 = vmatprep.subr.bf16.mxu0 0
        %6848 = vmatpush1.bf16.msra.mxu0 %v6614
        %6849 = vmatprep.subr.bf16.mxu0 0
        %6850 = vmatpush1.bf16.msra.mxu0 %v6615
        %6851 = vmatprep.subr.bf16.mxu0 0
        %6852 = vmatpush1.bf16.msra.mxu0 %v6616
        %6853 = vmatprep.subr.bf16.mxu0 0
        %6854 = vmatpush1.bf16.msra.mxu0 %v6617
        %6855 = vmatprep.subr.bf16.mxu0 0
        %6856 = vmatpush1.bf16.msra.mxu0 0
        %6857 = vmatprep.subr.bf16.mxu0 0
        %6858 = vmatpush1.bf16.msra.mxu0 0
        %6859 = vmatprep.subr.bf16.mxu0 0
        %6860 = vmatpush1.bf16.msra.mxu0 0
        %6861 = vmatprep.subr.bf16.mxu0 0
        %6862 = vmatpush1.bf16.msra.mxu0 0
        %6863 = vmatprep.subr.bf16.mxu0 0
        %6864 = vmatpush1.bf16.msra.mxu0 0
        %6865 = vmatprep.subr.bf16.mxu0 0
        %6866 = vmatpush1.bf16.msra.mxu0 0
        %6867 = vmatprep.subr.bf16.mxu0 0
        %6868 = vmatpush1.bf16.msra.mxu0 0
        %6869 = vmatprep.subr.bf16.mxu0 0
        %6870 = vmatpush1.bf16.msra.mxu0 0
        %6871 = vmatprep.subr.bf16.mxu0 0
        %6872 = vmatpush1.bf16.msra.mxu0 0
        %6873 = vmatprep.subr.bf16.mxu0 0
        %6874 = vmatpush1.bf16.msra.mxu0 0
        %6875 = vmatprep.subr.bf16.mxu0 0
        %6876 = vmatpush1.bf16.msra.mxu0 0
        %6877 = vmatprep.subr.bf16.mxu0 0
        %6878 = vmatpush1.bf16.msra.mxu0 0
        %6879 = vmatprep.mubr.bf16.mxu0 0
        %6880 = vmatmul.mubr.bf16.gmra.mrb[0].mxu0 %v6639
        %v6881 = vpop.f32.mrb[0].mxu0
        %v6882 = vadd.f32 %v6721, %v6881
        %v6883 = vpop.f32.mrb[0].mxu0
        %v6884 = vpop.f32.mrb[0].mxu0
        %v6885 = vadd.f32 %v6724, %v6884
        %v6886 = vpop.f32.mrb[0].mxu0
        %6887 = vmatprep.mubr.bf16.mxu0 0
        %6888 = vmatmul.mubr.bf16.gmra.mrb[0].mxu0 %v6642
        %v6889 = vpop.f32.mrb[0].mxu0
        %v6890 = vadd.f32 %v6729, %v6889
        %v6891 = vpop.f32.mrb[0].mxu0
        %v6892 = vpop.f32.mrb[0].mxu0
        %v6893 = vadd.f32 %v6732, %v6892
        %v6894 = vpop.f32.mrb[0].mxu0
        %6895 = vmatprep.mubr.bf16.mxu0 0
        %6896 = vmatmul.mubr.bf16.gmra.mrb[0].mxu0 %v6645
        %v6897 = vpop.f32.mrb[0].mxu0
        %v6898 = vadd.f32 %v6737, %v6897
        %v6899 = vpop.f32.mrb[0].mxu0
        %v6900 = vpop.f32.mrb[0].mxu0
        %v6901 = vadd.f32 %v6740, %v6900
        %v6902 = vpop.f32.mrb[0].mxu0
        %6903 = vmatprep.mubr.bf16.mxu0 0
        %6904 = vmatmul.mubr.bf16.gmra.mrb[0].mxu0 %v6648
        %v6905 = vpop.f32.mrb[0].mxu0
        %v6906 = vadd.f32 %v6745, %v6905
        %v6907 = vpop.f32.mrb[0].mxu0
        %v6908 = vpop.f32.mrb[0].mxu0
        %v6909 = vadd.f32 %v6748, %v6908
        %v6910 = vpop.f32.mrb[0].mxu0
        %6911 = vmatprep.mubr.bf16.mxu0 0
        %6912 = vmatmul.mubr.bf16.gmra.mrb[0].mxu0 %v6651
        %v6913 = vpop.f32.mrb[0].mxu0
        %v6914 = vadd.f32 %v6753, %v6913
        %v6915 = vpop.f32.mrb[0].mxu0
        %v6916 = vpop.f32.mrb[0].mxu0
        %v6917 = vadd.f32 %v6756, %v6916
        %v6918 = vpop.f32.mrb[0].mxu0
        %6919 = vmatprep.mubr.bf16.mxu0 0
        %6920 = vmatmul.mubr.bf16.gmra.mrb[0].mxu0 %v6654
        %v6921 = vpop.f32.mrb[0].mxu0
        %v6922 = vadd.f32 %v6761, %v6921
        %v6923 = vpop.f32.mrb[0].mxu0
        %v6924 = vpop.f32.mrb[0].mxu0
        %v6925 = vadd.f32 %v6764, %v6924
        %v6926 = vpop.f32.mrb[0].mxu0
        %6927 = vmatprep.mubr.bf16.mxu0 0
        %6928 = vmatmul.mubr.bf16.gmra.mrb[0].mxu0 %v6657
        %v6929 = vpop.f32.mrb[0].mxu0
        %v6930 = vadd.f32 %v6769, %v6929
        %v6931 = vpop.f32.mrb[0].mxu0
        %v6932 = vpop.f32.mrb[0].mxu0
        %v6933 = vadd.f32 %v6772, %v6932
        %v6934 = vpop.f32.mrb[0].mxu0
        %6935 = vmatprep.mubr.bf16.mxu0 0
        %6936 = vmatmul.mubr.bf16.gmra.mrb[0].mxu0 %v6660
        %v6937 = vpop.f32.mrb[0].mxu0
        %v6938 = vadd.f32 %v6777, %v6937
        %v6939 = vpop.f32.mrb[0].mxu0
        %v6940 = vpop.f32.mrb[0].mxu0
        %v6941 = vadd.f32 %v6780, %v6940
        %v6942 = vpop.f32.mrb[0].mxu0
        %6943 = vmatprep.mubr.bf16.mxu0 0
        %6944 = vmatmul.mubr.bf16.gmra.mrb[0].mxu0 %v6663
        %v6945 = vpop.f32.mrb[0].mxu0
        %v6946 = vadd.f32 %v6785, %v6945
        %v6947 = vpop.f32.mrb[0].mxu0
        %v6948 = vpop.f32.mrb[0].mxu0
        %v6949 = vadd.f32 %v6788, %v6948
        %v6950 = vpop.f32.mrb[0].mxu0
        %6951 = vmatprep.mubr.bf16.mxu0 0
        %6952 = vmatmul.mubr.bf16.gmra.mrb[0].mxu0 %v6666
        %v6953 = vpop.f32.mrb[0].mxu0
        %v6954 = vadd.f32 %v6793, %v6953
        %v6955 = vpop.f32.mrb[0].mxu0
        %v6956 = vpop.f32.mrb[0].mxu0
        %v6957 = vadd.f32 %v6796, %v6956
        %v6958 = vpop.f32.mrb[0].mxu0
        %6959 = vmatprep.mubr.bf16.mxu0 0
        %6960 = vmatmul.mubr.bf16.gmra.mrb[0].mxu0 %v6669
        %v6961 = vpop.f32.mrb[0].mxu0
        %v6962 = vadd.f32 %v6801, %v6961
        %v6963 = vpop.f32.mrb[0].mxu0
        %v6964 = vpop.f32.mrb[0].mxu0
        %v6965 = vadd.f32 %v6804, %v6964
        %v6966 = vpop.f32.mrb[0].mxu0
        %6967 = vmatprep.mubr.bf16.mxu0 0
        %6968 = vmatmul.mubr.bf16.gmra.mrb[0].mxu0 %v6672
        %v6969 = vpop.f32.mrb[0].mxu0
        %v6970 = vadd.f32 %v6809, %v6969
        %v6971 = vpop.f32.mrb[0].mxu0
        %v6972 = vpop.f32.mrb[0].mxu0
        %v6973 = vadd.f32 %v6812, %v6972
        %v6974 = vpop.f32.mrb[0].mxu0
        %6975 = vmatprep.mubr.bf16.mxu0 0
        %6976 = vmatmul.mubr.bf16.gmra.mrb[0].mxu0 %v6675
        %v6977 = vpop.f32.mrb[0].mxu0
        %v6978 = vadd.f32 %v6817, %v6977
        %v6979 = vpop.f32.mrb[0].mxu0
        %v6980 = vpop.f32.mrb[0].mxu0
        %v6981 = vadd.f32 %v6820, %v6980
        %v6982 = vpop.f32.mrb[0].mxu0
        %6983 = vmatprep.mubr.bf16.mxu0 0
        %6984 = vmatmul.mubr.bf16.gmra.mrb[0].mxu0 %v6678
        %v6985 = vpop.f32.mrb[0].mxu0
        %v6986 = vadd.f32 %v6825, %v6985
        %v6987 = vpop.f32.mrb[0].mxu0
        %v6988 = vpop.f32.mrb[0].mxu0
        %v6989 = vadd.f32 %v6828, %v6988
        %v6990 = vpop.f32.mrb[0].mxu0
        %6991 = vmatprep.mubr.bf16.mxu0 0
        %6992 = vmatmul.mubr.bf16.gmra.mrb[0].mxu0 %v6681
        %v6993 = vpop.f32.mrb[0].mxu0
        %v6994 = vadd.f32 %v6833, %v6993
        %v6995 = vpop.f32.mrb[0].mxu0
        %v6996 = vpop.f32.mrb[0].mxu0
        %v6997 = vadd.f32 %v6836, %v6996
        %v6998 = vpop.f32.mrb[0].mxu0
        %6999 = vmatprep.mubr.bf16.mxu0 0
        %7000 = vmatmul.mubr.bf16.gmra.mrb[0].mxu0 %v6684
        %v7001 = vpop.f32.mrb[0].mxu0
        %v7002 = vadd.f32 %v6841, %v7001
        %v7003 = vpop.f32.mrb[0].mxu0
        %v7004 = vpop.f32.mrb[0].mxu0
        %v7005 = vadd.f32 %v6844, %v7004
        %v7006 = vpop.f32.mrb[0].mxu0
        %7007 = vdwg.mxu0
        %v7008 = vadd.f32 %v6396, %v6882
        %v7009 = vadd.f32 %v6397, %v6885
        %v7010 = vadd.f32 %v6398, %v6890
        %v7011 = vadd.f32 %v6399, %v6893
        %v7012 = vadd.f32 %v6400, %v6898
        %v7013 = vadd.f32 %v6401, %v6901
        %v7014 = vadd.f32 %v6402, %v6906
        %v7015 = vadd.f32 %v6403, %v6909
        %v7016 = vadd.f32 %v6404, %v6914
        %v7017 = vadd.f32 %v6405, %v6917
        %v7018 = vadd.f32 %v6406, %v6922
        %v7019 = vadd.f32 %v6407, %v6925
        %v7020 = vadd.f32 %v6408, %v6930
        %v7021 = vadd.f32 %v6409, %v6933
        %v7022 = vadd.f32 %v6410, %v6938
        %v7023 = vadd.f32 %v6411, %v6941
        %v7024 = vadd.f32 %v6412, %v6946
        %v7025 = vadd.f32 %v6413, %v6949
        %v7026 = vadd.f32 %v6414, %v6954
        %v7027 = vadd.f32 %v6415, %v6957
        %v7028 = vadd.f32 %v6416, %v6962
        %v7029 = vadd.f32 %v6417, %v6965
        %v7030 = vadd.f32 %v6418, %v6970
        %v7031 = vadd.f32 %v6419, %v6973
        %v7032 = vadd.f32 %v6420, %v6978
        %v7033 = vadd.f32 %v6421, %v6981
        %v7034 = vadd.f32 %v6422, %v6986
        %v7035 = vadd.f32 %v6423, %v6989
        %v7036 = vadd.f32 %v6424, %v6994
        %v7037 = vadd.f32 %v6425, %v6997
        %v7038 = vadd.f32 %v6426, %v7002
        %v7039 = vadd.f32 %v6427, %v7005
        %s7040 = scalar_lea.vmem [#allocation3], 96
        %v7041 = vld [vmem:[%s7040] sm:$0xff]
        %v7042 = vld [vmem:[%s7040 + $0x8] sm:$0xff]
        %v7043 = vld [vmem:[%s7040 + $0x10] sm:$0xff]
        %v7044 = vld [vmem:[%s7040 + $0x18] sm:$0xff]
        %v7045 = vld [vmem:[%s7040 + $0x20] sm:$0xff]
        %v7046 = vld [vmem:[%s7040 + $0x28] sm:$0xff]
        %v7047 = vld [vmem:[%s7040 + $0x30] sm:$0xff]
        %v7048 = vld [vmem:[%s7040 + $0x38] sm:$0xff]
        %v7049 = vld [vmem:[%s7040 + $0x40] sm:$0xff]
        %v7050 = vld [vmem:[%s7040 + $0x48] sm:$0xff]
        %v7051 = vld [vmem:[%s7040 + $0x50] sm:$0xff]
        %v7052 = vld [vmem:[%s7040 + $0x58] sm:$0xff]
        %v7053 = vld [vmem:[%s7040 + $0x60] sm:$0xff]
        %v7054 = vld [vmem:[%s7040 + $0x68] sm:$0xff]
        %v7055 = vld [vmem:[%s7040 + $0x70] sm:$0xff]
        %v7056 = vld [vmem:[%s7040 + $0x78] sm:$0xff]
        %v7057 = vld [vmem:[%s7040 + $0x80] sm:$0xff]
        %v7058 = vld [vmem:[%s7040 + $0x88] sm:$0xff]
        %v7059 = vld [vmem:[%s7040 + $0x90] sm:$0xff]
        %v7060 = vld [vmem:[%s7040 + $0x98] sm:$0xff]
        %v7061 = vld [vmem:[%s7040 + $0xa0] sm:$0xff]
        %v7062 = vld [vmem:[%s7040 + $0xa8] sm:$0xff]
        %v7063 = vld [vmem:[%s7040 + $0xb0] sm:$0xff]
        %v7064 = vld [vmem:[%s7040 + $0xb8] sm:$0xff]
        %v7065 = vld [vmem:[%s7040 + $0xc0] sm:$0xff]
        %v7066 = vld [vmem:[%s7040 + $0xc8] sm:$0xff]
        %v7067 = vld [vmem:[%s7040 + $0xd0] sm:$0xff]
        %v7068 = vld [vmem:[%s7040 + $0xd8] sm:$0xff]
        %v7069 = vld [vmem:[%s7040 + $0xe0] sm:$0xff]
        %v7070 = vld [vmem:[%s7040 + $0xe8] sm:$0xff]
        %v7071 = vld [vmem:[%s7040 + $0xf0] sm:$0xff]
        %v7072 = vld [vmem:[%s7040 + $0xf8] sm:$0xff]
        %v7073 = vld [vmem:[%s7040 + $0x100] sm:$0xff]
        %v7074 = vld [vmem:[%s7040 + $0x108] sm:$0xff]
        %v7075 = vld [vmem:[%s7040 + $0x110] sm:$0xff]
        %v7076 = vld [vmem:[%s7040 + $0x118] sm:$0xff]
        %v7077 = vld [vmem:[%s7040 + $0x120] sm:$0xff]
        %v7078 = vld [vmem:[%s7040 + $0x128] sm:$0xff]
        %v7079 = vld [vmem:[%s7040 + $0x130] sm:$0xff]
        %v7080 = vld [vmem:[%s7040 + $0x138] sm:$0xff]
        %v7081 = vld [vmem:[%s7040 + $0x140] sm:$0xff]
        %v7082 = vld [vmem:[%s7040 + $0x148] sm:$0xff]
        %v7083 = vld [vmem:[%s7040 + $0x150] sm:$0xff]
        %v7084 = vld [vmem:[%s7040 + $0x158] sm:$0xff]
        %v7085 = vld [vmem:[%s7040 + $0x160] sm:$0xff]
        %v7086 = vld [vmem:[%s7040 + $0x168] sm:$0xff]
        %v7087 = vld [vmem:[%s7040 + $0x170] sm:$0xff]
        %v7088 = vld [vmem:[%s7040 + $0x178] sm:$0xff]
        %s7089 = scalar_lea.vmem %s3, 640
        %v7090 = vld [vmem:[%s7089] sm:$0xf]
        %v7091 = vld [vmem:[%s7089 + $0x4] sm:$0xf]
        %v7092 = vld [vmem:[%s7089 + $0x8] sm:$0xf]
        %v7093 = vld [vmem:[%s7089 + $0xc] sm:$0xf]
        %v7094 = vld [vmem:[%s7089 + $0x10] sm:$0xf]
        %v7095 = vld [vmem:[%s7089 + $0x14] sm:$0xf]
        %v7096 = vld [vmem:[%s7089 + $0x18] sm:$0xf]
        %v7097 = vld [vmem:[%s7089 + $0x1c] sm:$0xf]
        %v7098 = vld [vmem:[%s7089 + $0x20] sm:$0xf]
        %v7099 = vld [vmem:[%s7089 + $0x24] sm:$0xf]
        %v7100 = vld [vmem:[%s7089 + $0x28] sm:$0xf]
        %v7101 = vld [vmem:[%s7089 + $0x2c] sm:$0xf]
        %v7102 = vld [vmem:[%s7089 + $0x30] sm:$0xf]
        %v7103 = vld [vmem:[%s7089 + $0x34] sm:$0xf]
        %v7104 = vld [vmem:[%s7089 + $0x38] sm:$0xf]
        %v7105 = vld [vmem:[%s7089 + $0x3c] sm:$0xf]
        %v7106 = vld [vmem:[%s7089 + $0x40] sm:$0xf]
        %v7107 = vld [vmem:[%s7089 + $0x44] sm:$0xf]
        %v7108 = vld [vmem:[%s7089 + $0x48] sm:$0xf]
        %v7109 = vld [vmem:[%s7089 + $0x4c] sm:$0xf]
        %v7110 = vld [vmem:[%s7089 + $0x50] sm:$0xf]
        %v7111 = vld [vmem:[%s7089 + $0x54] sm:$0xf]
        %v7112 = vld [vmem:[%s7089 + $0x58] sm:$0xf]
        %v7113 = vld [vmem:[%s7089 + $0x5c] sm:$0xf]
        %v7114 = vld [vmem:[%s7089 + $0x60] sm:$0xf]
        %v7115 = vld [vmem:[%s7089 + $0x64] sm:$0xf]
        %v7116 = vld [vmem:[%s7089 + $0x68] sm:$0xf]
        %v7117 = vld [vmem:[%s7089 + $0x6c] sm:$0xf]
        %v7118 = vld [vmem:[%s7089 + $0x70] sm:$0xf]
        %v7119 = vld [vmem:[%s7089 + $0x74] sm:$0xf]
        %v7120 = vld [vmem:[%s7089 + $0x78] sm:$0xf]
        %v7121 = vld [vmem:[%s7089 + $0x7c] sm:$0xf]
        %v7122 = vld [vmem:[%s7089 + $0x80] sm:$0xf]
        %v7123 = vld [vmem:[%s7089 + $0x84] sm:$0xf]
        %v7124 = vld [vmem:[%s7089 + $0x88] sm:$0xf]
        %v7125 = vld [vmem:[%s7089 + $0x8c] sm:$0xf]
        %v7126 = vld [vmem:[%s7089 + $0x90] sm:$0xf]
        %v7127 = vld [vmem:[%s7089 + $0x94] sm:$0xf]
        %v7128 = vld [vmem:[%s7089 + $0x98] sm:$0xf]
        %v7129 = vld [vmem:[%s7089 + $0x9c] sm:$0xf]
        %v7170 = vunpack.c.l.b16 %v7090
        %v7171 = vunpack.c.l.b16 %v7091
        %v7172 = vunpack.c.l.b16 %v7092
        %v7173 = vunpack.c.l.b16 %v7093
        %v7174 = vunpack.c.l.b16 %v7094
        %v7175 = vunpack.c.l.b16 %v7095
        %v7176 = vunpack.c.l.b16 %v7096
        %v7177 = vunpack.c.l.b16 %v7097
        %v7178 = vunpack.c.l.b16 %v7098
        %v7179 = vunpack.c.l.b16 %v7099
        %v7180 = vunpack.c.l.b16 %v7100
        %v7181 = vunpack.c.l.b16 %v7101
        %v7182 = vunpack.c.l.b16 %v7102
        %v7183 = vunpack.c.l.b16 %v7103
        %v7184 = vunpack.c.l.b16 %v7104
        %v7185 = vunpack.c.l.b16 %v7105
        %v7186 = vunpack.c.l.b16 %v7106
        %v7187 = vunpack.c.l.b16 %v7107
        %v7188 = vunpack.c.l.b16 %v7108
        %v7189 = vunpack.c.l.b16 %v7109
        %v7190 = vunpack.c.l.b16 %v7110
        %v7191 = vunpack.c.l.b16 %v7111
        %v7192 = vunpack.c.l.b16 %v7112
        %v7193 = vunpack.c.l.b16 %v7113
        %v7194 = vunpack.c.l.b16 %v7114
        %v7195 = vunpack.c.l.b16 %v7115
        %v7196 = vunpack.c.l.b16 %v7116
        %v7197 = vunpack.c.l.b16 %v7117
        %v7198 = vunpack.c.l.b16 %v7118
        %v7199 = vunpack.c.l.b16 %v7119
        %v7200 = vunpack.c.l.b16 %v7120
        %v7201 = vunpack.c.l.b16 %v7121
        %v7202 = vunpack.c.l.b16 %v7122
        %v7203 = vunpack.c.l.b16 %v7123
        %v7204 = vunpack.c.l.b16 %v7124
        %v7205 = vunpack.c.l.b16 %v7125
        %v7206 = vunpack.c.l.b16 %v7126
        %v7207 = vunpack.c.l.b16 %v7127
        %v7208 = vunpack.c.l.b16 %v7128
        %v7209 = vunpack.c.l.b16 %v7129
        %v7210 = vpack.c.b16 %v7171, %v7170
        %v7211 = vpack.c.b16 %v7173, %v7172
        %v7212 = vpack.c.b16 %v7175, %v7174
        %v7213 = vpack.c.b16 %v7177, %v7176
        %v7214 = vpack.c.b16 %v7179, %v7178
        %v7215 = vpack.c.b16 %v7181, %v7180
        %v7216 = vpack.c.b16 %v7183, %v7182
        %v7217 = vpack.c.b16 %v7185, %v7184
        %v7218 = vpack.c.b16 %v7187, %v7186
        %v7219 = vpack.c.b16 %v7189, %v7188
        %v7220 = vpack.c.b16 %v7191, %v7190
        %v7221 = vpack.c.b16 %v7193, %v7192
        %v7222 = vpack.c.b16 %v7195, %v7194
        %v7223 = vpack.c.b16 %v7197, %v7196
        %v7224 = vpack.c.b16 %v7199, %v7198
        %v7225 = vpack.c.b16 %v7201, %v7200
        %v7226 = vpack.c.b16 %v7203, %v7202
        %v7227 = vpack.c.b16 %v7205, %v7204
        %v7228 = vpack.c.b16 %v7207, %v7206
        %v7229 = vpack.c.b16 %v7209, %v7208
        %v7251 = vsel %vm918, %v7043, 0
        %v7254 = vsel %vm918, %v7046, 0
        %v7257 = vsel %vm918, %v7049, 0
        %v7260 = vsel %vm918, %v7052, 0
        %v7263 = vsel %vm918, %v7055, 0
        %v7266 = vsel %vm918, %v7058, 0
        %v7269 = vsel %vm918, %v7061, 0
        %v7272 = vsel %vm918, %v7064, 0
        %v7275 = vsel %vm918, %v7067, 0
        %v7278 = vsel %vm918, %v7070, 0
        %v7281 = vsel %vm918, %v7073, 0
        %v7284 = vsel %vm918, %v7076, 0
        %v7287 = vsel %vm918, %v7079, 0
        %v7290 = vsel %vm918, %v7082, 0
        %v7293 = vsel %vm918, %v7085, 0
        %v7296 = vsel %vm918, %v7088, 0
        %7298 = vmatprep.subr.bf16.mxu0 0
        %7299 = vmatpush1.bf16.msra.mxu0 %v7210
        %7300 = vmatprep.subr.bf16.mxu0 0
        %7301 = vmatpush1.bf16.msra.mxu0 %v7211
        %7302 = vmatprep.subr.bf16.mxu0 0
        %7303 = vmatpush1.bf16.msra.mxu0 %v7212
        %7304 = vmatprep.subr.bf16.mxu0 0
        %7305 = vmatpush1.bf16.msra.mxu0 %v7213
        %7306 = vmatprep.subr.bf16.mxu0 0
        %7307 = vmatpush1.bf16.msra.mxu0 %v7214
        %7308 = vmatprep.subr.bf16.mxu0 0
        %7309 = vmatpush1.bf16.msra.mxu0 %v7215
        %7310 = vmatprep.subr.bf16.mxu0 0
        %7311 = vmatpush1.bf16.msra.mxu0 %v7216
        %7312 = vmatprep.subr.bf16.mxu0 0
        %7313 = vmatpush1.bf16.msra.mxu0 %v7217
        %7314 = vmatprep.subr.bf16.mxu0 0
        %7315 = vmatpush1.bf16.msra.mxu0 %v7218
        %7316 = vmatprep.subr.bf16.mxu0 0
        %7317 = vmatpush1.bf16.msra.mxu0 %v7219
        %7318 = vmatprep.subr.bf16.mxu0 0
        %7319 = vmatpush1.bf16.msra.mxu0 %v7220
        %7320 = vmatprep.subr.bf16.mxu0 0
        %7321 = vmatpush1.bf16.msra.mxu0 %v7221
        %7322 = vmatprep.subr.bf16.mxu0 0
        %7323 = vmatpush1.bf16.msra.mxu0 %v7222
        %7324 = vmatprep.subr.bf16.mxu0 0
        %7325 = vmatpush1.bf16.msra.mxu0 %v7223
        %7326 = vmatprep.subr.bf16.mxu0 0
        %7327 = vmatpush1.bf16.msra.mxu0 %v7224
        %7328 = vmatprep.subr.bf16.mxu0 0
        %7329 = vmatpush1.bf16.msra.mxu0 %v7225
        %7330 = vmatprep.mubr.bf16.mxu0 %v7042
        %7331 = vmatmul.mubr.bf16.gmra.mrb[0].mxu0 %v7041
        %v7332 = vpop.f32.mrb[0].mxu0
        %v7333 = vadd.f32 0.0, %v7332
        %v7334 = vpop.f32.mrb[0].mxu0
        %v7335 = vpop.f32.mrb[0].mxu0
        %v7336 = vadd.f32 0.0, %v7335
        %v7337 = vpop.f32.mrb[0].mxu0
        %7338 = vmatprep.mubr.bf16.mxu0 %v7045
        %7339 = vmatmul.mubr.bf16.gmra.mrb[0].mxu0 %v7044
        %v7340 = vpop.f32.mrb[0].mxu0
        %v7341 = vadd.f32 0.0, %v7340
        %v7342 = vpop.f32.mrb[0].mxu0
        %v7343 = vpop.f32.mrb[0].mxu0
        %v7344 = vadd.f32 0.0, %v7343
        %v7345 = vpop.f32.mrb[0].mxu0
        %7346 = vmatprep.mubr.bf16.mxu0 %v7048
        %7347 = vmatmul.mubr.bf16.gmra.mrb[0].mxu0 %v7047
        %v7348 = vpop.f32.mrb[0].mxu0
        %v7349 = vadd.f32 0.0, %v7348
        %v7350 = vpop.f32.mrb[0].mxu0
        %v7351 = vpop.f32.mrb[0].mxu0
        %v7352 = vadd.f32 0.0, %v7351
        %v7353 = vpop.f32.mrb[0].mxu0
        %7354 = vmatprep.mubr.bf16.mxu0 %v7051
        %7355 = vmatmul.mubr.bf16.gmra.mrb[0].mxu0 %v7050
        %v7356 = vpop.f32.mrb[0].mxu0
        %v7357 = vadd.f32 0.0, %v7356
        %v7358 = vpop.f32.mrb[0].mxu0
        %v7359 = vpop.f32.mrb[0].mxu0
        %v7360 = vadd.f32 0.0, %v7359
        %v7361 = vpop.f32.mrb[0].mxu0
        %7362 = vmatprep.mubr.bf16.mxu0 %v7054
        %7363 = vmatmul.mubr.bf16.gmra.mrb[0].mxu0 %v7053
        %v7364 = vpop.f32.mrb[0].mxu0
        %v7365 = vadd.f32 0.0, %v7364
        %v7366 = vpop.f32.mrb[0].mxu0
        %v7367 = vpop.f32.mrb[0].mxu0
        %v7368 = vadd.f32 0.0, %v7367
        %v7369 = vpop.f32.mrb[0].mxu0
        %7370 = vmatprep.mubr.bf16.mxu0 %v7057
        %7371 = vmatmul.mubr.bf16.gmra.mrb[0].mxu0 %v7056
        %v7372 = vpop.f32.mrb[0].mxu0
        %v7373 = vadd.f32 0.0, %v7372
        %v7374 = vpop.f32.mrb[0].mxu0
        %v7375 = vpop.f32.mrb[0].mxu0
        %v7376 = vadd.f32 0.0, %v7375
        %v7377 = vpop.f32.mrb[0].mxu0
        %7378 = vmatprep.mubr.bf16.mxu0 %v7060
        %7379 = vmatmul.mubr.bf16.gmra.mrb[0].mxu0 %v7059
        %v7380 = vpop.f32.mrb[0].mxu0
        %v7381 = vadd.f32 0.0, %v7380
        %v7382 = vpop.f32.mrb[0].mxu0
        %v7383 = vpop.f32.mrb[0].mxu0
        %v7384 = vadd.f32 0.0, %v7383
        %v7385 = vpop.f32.mrb[0].mxu0
        %7386 = vmatprep.mubr.bf16.mxu0 %v7063
        %7387 = vmatmul.mubr.bf16.gmra.mrb[0].mxu0 %v7062
        %v7388 = vpop.f32.mrb[0].mxu0
        %v7389 = vadd.f32 0.0, %v7388
        %v7390 = vpop.f32.mrb[0].mxu0
        %v7391 = vpop.f32.mrb[0].mxu0
        %v7392 = vadd.f32 0.0, %v7391
        %v7393 = vpop.f32.mrb[0].mxu0
        %7394 = vmatprep.mubr.bf16.mxu0 %v7066
        %7395 = vmatmul.mubr.bf16.gmra.mrb[0].mxu0 %v7065
        %v7396 = vpop.f32.mrb[0].mxu0
        %v7397 = vadd.f32 0.0, %v7396
        %v7398 = vpop.f32.mrb[0].mxu0
        %v7399 = vpop.f32.mrb[0].mxu0
        %v7400 = vadd.f32 0.0, %v7399
        %v7401 = vpop.f32.mrb[0].mxu0
        %7402 = vmatprep.mubr.bf16.mxu0 %v7069
        %7403 = vmatmul.mubr.bf16.gmra.mrb[0].mxu0 %v7068
        %v7404 = vpop.f32.mrb[0].mxu0
        %v7405 = vadd.f32 0.0, %v7404
        %v7406 = vpop.f32.mrb[0].mxu0
        %v7407 = vpop.f32.mrb[0].mxu0
        %v7408 = vadd.f32 0.0, %v7407
        %v7409 = vpop.f32.mrb[0].mxu0
        %7410 = vmatprep.mubr.bf16.mxu0 %v7072
        %7411 = vmatmul.mubr.bf16.gmra.mrb[0].mxu0 %v7071
        %v7412 = vpop.f32.mrb[0].mxu0
        %v7413 = vadd.f32 0.0, %v7412
        %v7414 = vpop.f32.mrb[0].mxu0
        %v7415 = vpop.f32.mrb[0].mxu0
        %v7416 = vadd.f32 0.0, %v7415
        %v7417 = vpop.f32.mrb[0].mxu0
        %7418 = vmatprep.mubr.bf16.mxu0 %v7075
        %7419 = vmatmul.mubr.bf16.gmra.mrb[0].mxu0 %v7074
        %v7420 = vpop.f32.mrb[0].mxu0
        %v7421 = vadd.f32 0.0, %v7420
        %v7422 = vpop.f32.mrb[0].mxu0
        %v7423 = vpop.f32.mrb[0].mxu0
        %v7424 = vadd.f32 0.0, %v7423
        %v7425 = vpop.f32.mrb[0].mxu0
        %7426 = vmatprep.mubr.bf16.mxu0 %v7078
        %7427 = vmatmul.mubr.bf16.gmra.mrb[0].mxu0 %v7077
        %v7428 = vpop.f32.mrb[0].mxu0
        %v7429 = vadd.f32 0.0, %v7428
        %v7430 = vpop.f32.mrb[0].mxu0
        %v7431 = vpop.f32.mrb[0].mxu0
        %v7432 = vadd.f32 0.0, %v7431
        %v7433 = vpop.f32.mrb[0].mxu0
        %7434 = vmatprep.mubr.bf16.mxu0 %v7081
        %7435 = vmatmul.mubr.bf16.gmra.mrb[0].mxu0 %v7080
        %v7436 = vpop.f32.mrb[0].mxu0
        %v7437 = vadd.f32 0.0, %v7436
        %v7438 = vpop.f32.mrb[0].mxu0
        %v7439 = vpop.f32.mrb[0].mxu0
        %v7440 = vadd.f32 0.0, %v7439
        %v7441 = vpop.f32.mrb[0].mxu0
        %7442 = vmatprep.mubr.bf16.mxu0 %v7084
        %7443 = vmatmul.mubr.bf16.gmra.mrb[0].mxu0 %v7083
        %v7444 = vpop.f32.mrb[0].mxu0
        %v7445 = vadd.f32 0.0, %v7444
        %v7446 = vpop.f32.mrb[0].mxu0
        %v7447 = vpop.f32.mrb[0].mxu0
        %v7448 = vadd.f32 0.0, %v7447
        %v7449 = vpop.f32.mrb[0].mxu0
        %7450 = vmatprep.mubr.bf16.mxu0 %v7087
        %7451 = vmatmul.mubr.bf16.gmra.mrb[0].mxu0 %v7086
        %v7452 = vpop.f32.mrb[0].mxu0
        %v7453 = vadd.f32 0.0, %v7452
        %v7454 = vpop.f32.mrb[0].mxu0
        %v7455 = vpop.f32.mrb[0].mxu0
        %v7456 = vadd.f32 0.0, %v7455
        %v7457 = vpop.f32.mrb[0].mxu0
        %7458 = vdwg.mxu0
        %7459 = vmatprep.subr.bf16.mxu0 0
        %7460 = vmatpush1.bf16.msra.mxu0 %v7226
        %7461 = vmatprep.subr.bf16.mxu0 0
        %7462 = vmatpush1.bf16.msra.mxu0 %v7227
        %7463 = vmatprep.subr.bf16.mxu0 0
        %7464 = vmatpush1.bf16.msra.mxu0 %v7228
        %7465 = vmatprep.subr.bf16.mxu0 0
        %7466 = vmatpush1.bf16.msra.mxu0 %v7229
        %7467 = vmatprep.subr.bf16.mxu0 0
        %7468 = vmatpush1.bf16.msra.mxu0 0
        %7469 = vmatprep.subr.bf16.mxu0 0
        %7470 = vmatpush1.bf16.msra.mxu0 0
        %7471 = vmatprep.subr.bf16.mxu0 0
        %7472 = vmatpush1.bf16.msra.mxu0 0
        %7473 = vmatprep.subr.bf16.mxu0 0
        %7474 = vmatpush1.bf16.msra.mxu0 0
        %7475 = vmatprep.subr.bf16.mxu0 0
        %7476 = vmatpush1.bf16.msra.mxu0 0
        %7477 = vmatprep.subr.bf16.mxu0 0
        %7478 = vmatpush1.bf16.msra.mxu0 0
        %7479 = vmatprep.subr.bf16.mxu0 0
        %7480 = vmatpush1.bf16.msra.mxu0 0
        %7481 = vmatprep.subr.bf16.mxu0 0
        %7482 = vmatpush1.bf16.msra.mxu0 0
        %7483 = vmatprep.subr.bf16.mxu0 0
        %7484 = vmatpush1.bf16.msra.mxu0 0
        %7485 = vmatprep.subr.bf16.mxu0 0
        %7486 = vmatpush1.bf16.msra.mxu0 0
        %7487 = vmatprep.subr.bf16.mxu0 0
        %7488 = vmatpush1.bf16.msra.mxu0 0
        %7489 = vmatprep.subr.bf16.mxu0 0
        %7490 = vmatpush1.bf16.msra.mxu0 0
        %7491 = vmatprep.mubr.bf16.mxu0 0
        %7492 = vmatmul.mubr.bf16.gmra.mrb[0].mxu0 %v7251
        %v7493 = vpop.f32.mrb[0].mxu0
        %v7494 = vadd.f32 %v7333, %v7493
        %v7495 = vpop.f32.mrb[0].mxu0
        %v7496 = vpop.f32.mrb[0].mxu0
        %v7497 = vadd.f32 %v7336, %v7496
        %v7498 = vpop.f32.mrb[0].mxu0
        %7499 = vmatprep.mubr.bf16.mxu0 0
        %7500 = vmatmul.mubr.bf16.gmra.mrb[0].mxu0 %v7254
        %v7501 = vpop.f32.mrb[0].mxu0
        %v7502 = vadd.f32 %v7341, %v7501
        %v7503 = vpop.f32.mrb[0].mxu0
        %v7504 = vpop.f32.mrb[0].mxu0
        %v7505 = vadd.f32 %v7344, %v7504
        %v7506 = vpop.f32.mrb[0].mxu0
        %7507 = vmatprep.mubr.bf16.mxu0 0
        %7508 = vmatmul.mubr.bf16.gmra.mrb[0].mxu0 %v7257
        %v7509 = vpop.f32.mrb[0].mxu0
        %v7510 = vadd.f32 %v7349, %v7509
        %v7511 = vpop.f32.mrb[0].mxu0
        %v7512 = vpop.f32.mrb[0].mxu0
        %v7513 = vadd.f32 %v7352, %v7512
        %v7514 = vpop.f32.mrb[0].mxu0
        %7515 = vmatprep.mubr.bf16.mxu0 0
        %7516 = vmatmul.mubr.bf16.gmra.mrb[0].mxu0 %v7260
        %v7517 = vpop.f32.mrb[0].mxu0
        %v7518 = vadd.f32 %v7357, %v7517
        %v7519 = vpop.f32.mrb[0].mxu0
        %v7520 = vpop.f32.mrb[0].mxu0
        %v7521 = vadd.f32 %v7360, %v7520
        %v7522 = vpop.f32.mrb[0].mxu0
        %7523 = vmatprep.mubr.bf16.mxu0 0
        %7524 = vmatmul.mubr.bf16.gmra.mrb[0].mxu0 %v7263
        %v7525 = vpop.f32.mrb[0].mxu0
        %v7526 = vadd.f32 %v7365, %v7525
        %v7527 = vpop.f32.mrb[0].mxu0
        %v7528 = vpop.f32.mrb[0].mxu0
        %v7529 = vadd.f32 %v7368, %v7528
        %v7530 = vpop.f32.mrb[0].mxu0
        %7531 = vmatprep.mubr.bf16.mxu0 0
        %7532 = vmatmul.mubr.bf16.gmra.mrb[0].mxu0 %v7266
        %v7533 = vpop.f32.mrb[0].mxu0
        %v7534 = vadd.f32 %v7373, %v7533
        %v7535 = vpop.f32.mrb[0].mxu0
        %v7536 = vpop.f32.mrb[0].mxu0
        %v7537 = vadd.f32 %v7376, %v7536
        %v7538 = vpop.f32.mrb[0].mxu0
        %7539 = vmatprep.mubr.bf16.mxu0 0
        %7540 = vmatmul.mubr.bf16.gmra.mrb[0].mxu0 %v7269
        %v7541 = vpop.f32.mrb[0].mxu0
        %v7542 = vadd.f32 %v7381, %v7541
        %v7543 = vpop.f32.mrb[0].mxu0
        %v7544 = vpop.f32.mrb[0].mxu0
        %v7545 = vadd.f32 %v7384, %v7544
        %v7546 = vpop.f32.mrb[0].mxu0
        %7547 = vmatprep.mubr.bf16.mxu0 0
        %7548 = vmatmul.mubr.bf16.gmra.mrb[0].mxu0 %v7272
        %v7549 = vpop.f32.mrb[0].mxu0
        %v7550 = vadd.f32 %v7389, %v7549
        %v7551 = vpop.f32.mrb[0].mxu0
        %v7552 = vpop.f32.mrb[0].mxu0
        %v7553 = vadd.f32 %v7392, %v7552
        %v7554 = vpop.f32.mrb[0].mxu0
        %7555 = vmatprep.mubr.bf16.mxu0 0
        %7556 = vmatmul.mubr.bf16.gmra.mrb[0].mxu0 %v7275
        %v7557 = vpop.f32.mrb[0].mxu0
        %v7558 = vadd.f32 %v7397, %v7557
        %v7559 = vpop.f32.mrb[0].mxu0
        %v7560 = vpop.f32.mrb[0].mxu0
        %v7561 = vadd.f32 %v7400, %v7560
        %v7562 = vpop.f32.mrb[0].mxu0
        %7563 = vmatprep.mubr.bf16.mxu0 0
        %7564 = vmatmul.mubr.bf16.gmra.mrb[0].mxu0 %v7278
        %v7565 = vpop.f32.mrb[0].mxu0
        %v7566 = vadd.f32 %v7405, %v7565
        %v7567 = vpop.f32.mrb[0].mxu0
        %v7568 = vpop.f32.mrb[0].mxu0
        %v7569 = vadd.f32 %v7408, %v7568
        %v7570 = vpop.f32.mrb[0].mxu0
        %7571 = vmatprep.mubr.bf16.mxu0 0
        %7572 = vmatmul.mubr.bf16.gmra.mrb[0].mxu0 %v7281
        %v7573 = vpop.f32.mrb[0].mxu0
        %v7574 = vadd.f32 %v7413, %v7573
        %v7575 = vpop.f32.mrb[0].mxu0
        %v7576 = vpop.f32.mrb[0].mxu0
        %v7577 = vadd.f32 %v7416, %v7576
        %v7578 = vpop.f32.mrb[0].mxu0
        %7579 = vmatprep.mubr.bf16.mxu0 0
        %7580 = vmatmul.mubr.bf16.gmra.mrb[0].mxu0 %v7284
        %v7581 = vpop.f32.mrb[0].mxu0
        %v7582 = vadd.f32 %v7421, %v7581
        %v7583 = vpop.f32.mrb[0].mxu0
        %v7584 = vpop.f32.mrb[0].mxu0
        %v7585 = vadd.f32 %v7424, %v7584
        %v7586 = vpop.f32.mrb[0].mxu0
        %7587 = vmatprep.mubr.bf16.mxu0 0
        %7588 = vmatmul.mubr.bf16.gmra.mrb[0].mxu0 %v7287
        %v7589 = vpop.f32.mrb[0].mxu0
        %v7590 = vadd.f32 %v7429, %v7589
        %v7591 = vpop.f32.mrb[0].mxu0
        %v7592 = vpop.f32.mrb[0].mxu0
        %v7593 = vadd.f32 %v7432, %v7592
        %v7594 = vpop.f32.mrb[0].mxu0
        %7595 = vmatprep.mubr.bf16.mxu0 0
        %7596 = vmatmul.mubr.bf16.gmra.mrb[0].mxu0 %v7290
        %v7597 = vpop.f32.mrb[0].mxu0
        %v7598 = vadd.f32 %v7437, %v7597
        %v7599 = vpop.f32.mrb[0].mxu0
        %v7600 = vpop.f32.mrb[0].mxu0
        %v7601 = vadd.f32 %v7440, %v7600
        %v7602 = vpop.f32.mrb[0].mxu0
        %7603 = vmatprep.mubr.bf16.mxu0 0
        %7604 = vmatmul.mubr.bf16.gmra.mrb[0].mxu0 %v7293
        %v7605 = vpop.f32.mrb[0].mxu0
        %v7606 = vadd.f32 %v7445, %v7605
        %v7607 = vpop.f32.mrb[0].mxu0
        %v7608 = vpop.f32.mrb[0].mxu0
        %v7609 = vadd.f32 %v7448, %v7608
        %v7610 = vpop.f32.mrb[0].mxu0
        %7611 = vmatprep.mubr.bf16.mxu0 0
        %7612 = vmatmul.mubr.bf16.gmra.mrb[0].mxu0 %v7296
        %v7613 = vpop.f32.mrb[0].mxu0
        %v7614 = vadd.f32 %v7453, %v7613
        %v7615 = vpop.f32.mrb[0].mxu0
        %v7616 = vpop.f32.mrb[0].mxu0
        %v7617 = vadd.f32 %v7456, %v7616
        %v7618 = vpop.f32.mrb[0].mxu0
        %7619 = vdwg.mxu0
        %v7620 = vadd.f32 %v7008, %v7494
        %v7621 = vadd.f32 %v7009, %v7497
        %v7622 = vadd.f32 %v7010, %v7502
        %v7623 = vadd.f32 %v7011, %v7505
        %v7624 = vadd.f32 %v7012, %v7510
        %v7625 = vadd.f32 %v7013, %v7513
        %v7626 = vadd.f32 %v7014, %v7518
        %v7627 = vadd.f32 %v7015, %v7521
        %v7628 = vadd.f32 %v7016, %v7526
        %v7629 = vadd.f32 %v7017, %v7529
        %v7630 = vadd.f32 %v7018, %v7534
        %v7631 = vadd.f32 %v7019, %v7537
        %v7632 = vadd.f32 %v7020, %v7542
        %v7633 = vadd.f32 %v7021, %v7545
        %v7634 = vadd.f32 %v7022, %v7550
        %v7635 = vadd.f32 %v7023, %v7553
        %v7636 = vadd.f32 %v7024, %v7558
        %v7637 = vadd.f32 %v7025, %v7561
        %v7638 = vadd.f32 %v7026, %v7566
        %v7639 = vadd.f32 %v7027, %v7569
        %v7640 = vadd.f32 %v7028, %v7574
        %v7641 = vadd.f32 %v7029, %v7577
        %v7642 = vadd.f32 %v7030, %v7582
        %v7643 = vadd.f32 %v7031, %v7585
        %v7644 = vadd.f32 %v7032, %v7590
        %v7645 = vadd.f32 %v7033, %v7593
        %v7646 = vadd.f32 %v7034, %v7598
        %v7647 = vadd.f32 %v7035, %v7601
        %v7648 = vadd.f32 %v7036, %v7606
        %v7649 = vadd.f32 %v7037, %v7609
        %v7650 = vadd.f32 %v7038, %v7614
        %v7651 = vadd.f32 %v7039, %v7617
        %v7652 = vld [vmem:[%s4] sm:$0x1]
        %v7654 = vlaneseq
        %v7655 = vshrl.u32 %v7654, 7
        %v7656 = vsub.s32 0, %v7655
        %v7657 = vrot.slane %v7652, %v7656
        %v7659 = vadd.f32 %v7620, %v7657
        %v7660 = vadd.f32 %v7621, %v7657
        %v7661 = vadd.f32 %v7622, %v7657
        %v7662 = vadd.f32 %v7623, %v7657
        %v7663 = vadd.f32 %v7624, %v7657
        %v7664 = vadd.f32 %v7625, %v7657
        %v7665 = vadd.f32 %v7626, %v7657
        %v7666 = vadd.f32 %v7627, %v7657
        %v7667 = vadd.f32 %v7628, %v7657
        %v7668 = vadd.f32 %v7629, %v7657
        %v7669 = vadd.f32 %v7630, %v7657
        %v7670 = vadd.f32 %v7631, %v7657
        %v7671 = vadd.f32 %v7632, %v7657
        %v7672 = vadd.f32 %v7633, %v7657
        %v7673 = vadd.f32 %v7634, %v7657
        %v7674 = vadd.f32 %v7635, %v7657
        %v7675 = vadd.f32 %v7636, %v7657
        %v7676 = vadd.f32 %v7637, %v7657
        %v7677 = vadd.f32 %v7638, %v7657
        %v7678 = vadd.f32 %v7639, %v7657
        %v7679 = vadd.f32 %v7640, %v7657
        %v7680 = vadd.f32 %v7641, %v7657
        %v7681 = vadd.f32 %v7642, %v7657
        %v7682 = vadd.f32 %v7643, %v7657
        %v7683 = vadd.f32 %v7644, %v7657
        %v7684 = vadd.f32 %v7645, %v7657
        %v7685 = vadd.f32 %v7646, %v7657
        %v7686 = vadd.f32 %v7647, %v7657
        %v7687 = vadd.f32 %v7648, %v7657
        %v7688 = vadd.f32 %v7649, %v7657
        %v7689 = vadd.f32 %v7650, %v7657
        %v7690 = vadd.f32 %v7651, %v7657
        %v7691 = vmax.f32 %v7659, 0.0
        %v7692 = vmax.f32 %v7660, 0.0
        %v7693 = vmax.f32 %v7661, 0.0
        %v7694 = vmax.f32 %v7662, 0.0
        %v7695 = vmax.f32 %v7663, 0.0
        %v7696 = vmax.f32 %v7664, 0.0
        %v7697 = vmax.f32 %v7665, 0.0
        %v7698 = vmax.f32 %v7666, 0.0
        %v7699 = vmax.f32 %v7667, 0.0
        %v7700 = vmax.f32 %v7668, 0.0
        %v7701 = vmax.f32 %v7669, 0.0
        %v7702 = vmax.f32 %v7670, 0.0
        %v7703 = vmax.f32 %v7671, 0.0
        %v7704 = vmax.f32 %v7672, 0.0
        %v7705 = vmax.f32 %v7673, 0.0
        %v7706 = vmax.f32 %v7674, 0.0
        %v7707 = vmax.f32 %v7675, 0.0
        %v7708 = vmax.f32 %v7676, 0.0
        %v7709 = vmax.f32 %v7677, 0.0
        %v7710 = vmax.f32 %v7678, 0.0
        %v7711 = vmax.f32 %v7679, 0.0
        %v7712 = vmax.f32 %v7680, 0.0
        %v7713 = vmax.f32 %v7681, 0.0
        %v7714 = vmax.f32 %v7682, 0.0
        %v7715 = vmax.f32 %v7683, 0.0
        %v7716 = vmax.f32 %v7684, 0.0
        %v7717 = vmax.f32 %v7685, 0.0
        %v7718 = vmax.f32 %v7686, 0.0
        %v7719 = vmax.f32 %v7687, 0.0
        %v7720 = vmax.f32 %v7688, 0.0
        %v7721 = vmax.f32 %v7689, 0.0
        %v7722 = vmax.f32 %v7690, 0.0
        %v7723 = vpack.c.bf16 %v7692, %v7691
        %v7724 = vpack.c.bf16 %v7694, %v7693
        %v7725 = vpack.c.bf16 %v7696, %v7695
        %v7726 = vpack.c.bf16 %v7698, %v7697
        %v7727 = vpack.c.bf16 %v7700, %v7699
        %v7728 = vpack.c.bf16 %v7702, %v7701
        %v7729 = vpack.c.bf16 %v7704, %v7703
        %v7730 = vpack.c.bf16 %v7706, %v7705
        %v7731 = vpack.c.bf16 %v7708, %v7707
        %v7732 = vpack.c.bf16 %v7710, %v7709
        %v7733 = vpack.c.bf16 %v7712, %v7711
        %v7734 = vpack.c.bf16 %v7714, %v7713
        %v7735 = vpack.c.bf16 %v7716, %v7715
        %v7736 = vpack.c.bf16 %v7718, %v7717
        %v7737 = vpack.c.bf16 %v7720, %v7719
        %v7738 = vpack.c.bf16 %v7722, %v7721
        %v7740 = vshrl.u32 %v7723, 16
        %v7742 = vrot.slane %v7740, 7
        %v7743 = vshll.u32 %v7723, 16
        %v7745 = vor.u32 %v7742, %v7743
        %v7747 = vshrl.u32 %v7724, 16
        %v7749 = vrot.slane %v7747, 7
        %v7750 = vshll.u32 %v7724, 16
        %v7752 = vor.u32 %v7749, %v7750
        %v7754 = vshrl.u32 %v7725, 16
        %v7756 = vrot.slane %v7754, 7
        %v7757 = vshll.u32 %v7725, 16
        %v7759 = vor.u32 %v7756, %v7757
        %v7761 = vshrl.u32 %v7726, 16
        %v7763 = vrot.slane %v7761, 7
        %v7764 = vshll.u32 %v7726, 16
        %v7766 = vor.u32 %v7763, %v7764
        %v7768 = vshrl.u32 %v7727, 16
        %v7770 = vrot.slane %v7768, 7
        %v7771 = vshll.u32 %v7727, 16
        %v7773 = vor.u32 %v7770, %v7771
        %v7775 = vshrl.u32 %v7728, 16
        %v7777 = vrot.slane %v7775, 7
        %v7778 = vshll.u32 %v7728, 16
        %v7780 = vor.u32 %v7777, %v7778
        %v7782 = vshrl.u32 %v7729, 16
        %v7784 = vrot.slane %v7782, 7
        %v7785 = vshll.u32 %v7729, 16
        %v7787 = vor.u32 %v7784, %v7785
        %v7789 = vshrl.u32 %v7730, 16
        %v7791 = vrot.slane %v7789, 7
        %v7792 = vshll.u32 %v7730, 16
        %v7794 = vor.u32 %v7791, %v7792
        %v7796 = vshrl.u32 %v7731, 16
        %v7798 = vrot.slane %v7796, 7
        %v7799 = vshll.u32 %v7731, 16
        %v7801 = vor.u32 %v7798, %v7799
        %v7803 = vshrl.u32 %v7732, 16
        %v7805 = vrot.slane %v7803, 7
        %v7806 = vshll.u32 %v7732, 16
        %v7808 = vor.u32 %v7805, %v7806
        %v7810 = vshrl.u32 %v7733, 16
        %v7812 = vrot.slane %v7810, 7
        %v7813 = vshll.u32 %v7733, 16
        %v7815 = vor.u32 %v7812, %v7813
        %v7817 = vshrl.u32 %v7734, 16
        %v7819 = vrot.slane %v7817, 7
        %v7820 = vshll.u32 %v7734, 16
        %v7822 = vor.u32 %v7819, %v7820
        %v7824 = vshrl.u32 %v7735, 16
        %v7826 = vrot.slane %v7824, 7
        %v7827 = vshll.u32 %v7735, 16
        %v7829 = vor.u32 %v7826, %v7827
        %v7831 = vshrl.u32 %v7736, 16
        %v7833 = vrot.slane %v7831, 7
        %v7834 = vshll.u32 %v7736, 16
        %v7836 = vor.u32 %v7833, %v7834
        %v7838 = vshrl.u32 %v7737, 16
        %v7840 = vrot.slane %v7838, 7
        %v7841 = vshll.u32 %v7737, 16
        %v7843 = vor.u32 %v7840, %v7841
        %v7845 = vshrl.u32 %v7738, 16
        %v7847 = vrot.slane %v7845, 7
        %v7848 = vshll.u32 %v7738, 16
        %v7850 = vor.u32 %v7847, %v7848
        %s7867 = scalar_lea.vmem [#allocation4], 16
        %vm7868 = vcmask 523264
        %vm7869 = vmand %vm7868, %vm852
        %v7870 = vld [vmem:[%s7867] sm:$0xff]
        %v7871 = vsel %vm7869, %v7745, %v7870
        %7872 = vst [vmem:[%s7867] sm:$0xff] %v7871
        %v7873 = vld [vmem:[%s7867 + $0x10] sm:$0xff]
        %v7874 = vsel %vm7869, %v7752, %v7873
        %7875 = vst [vmem:[%s7867 + $0x10] sm:$0xff] %v7874
        %v7876 = vld [vmem:[%s7867 + $0x20] sm:$0xff]
        %v7877 = vsel %vm7869, %v7759, %v7876
        %7878 = vst [vmem:[%s7867 + $0x20] sm:$0xff] %v7877
        %v7879 = vld [vmem:[%s7867 + $0x30] sm:$0xff]
        %v7880 = vsel %vm7869, %v7766, %v7879
        %7881 = vst [vmem:[%s7867 + $0x30] sm:$0xff] %v7880
        %v7882 = vld [vmem:[%s7867 + $0x40] sm:$0xff]
        %v7883 = vsel %vm7869, %v7773, %v7882
        %7884 = vst [vmem:[%s7867 + $0x40] sm:$0xff] %v7883
        %v7885 = vld [vmem:[%s7867 + $0x50] sm:$0xff]
        %v7886 = vsel %vm7869, %v7780, %v7885
        %7887 = vst [vmem:[%s7867 + $0x50] sm:$0xff] %v7886
        %v7888 = vld [vmem:[%s7867 + $0x60] sm:$0xff]
        %v7889 = vsel %vm7869, %v7787, %v7888
        %7890 = vst [vmem:[%s7867 + $0x60] sm:$0xff] %v7889
        %v7891 = vld [vmem:[%s7867 + $0x70] sm:$0xff]
        %v7892 = vsel %vm7869, %v7794, %v7891
        %7893 = vst [vmem:[%s7867 + $0x70] sm:$0xff] %v7892
        %v7894 = vld [vmem:[%s7867 + $0x80] sm:$0xff]
        %v7895 = vsel %vm7869, %v7801, %v7894
        %7896 = vst [vmem:[%s7867 + $0x80] sm:$0xff] %v7895
        %v7897 = vld [vmem:[%s7867 + $0x90] sm:$0xff]
        %v7898 = vsel %vm7869, %v7808, %v7897
        %7899 = vst [vmem:[%s7867 + $0x90] sm:$0xff] %v7898
        %v7900 = vld [vmem:[%s7867 + $0xa0] sm:$0xff]
        %v7901 = vsel %vm7869, %v7815, %v7900
        %7902 = vst [vmem:[%s7867 + $0xa0] sm:$0xff] %v7901
        %v7903 = vld [vmem:[%s7867 + $0xb0] sm:$0xff]
        %v7904 = vsel %vm7869, %v7822, %v7903
        %7905 = vst [vmem:[%s7867 + $0xb0] sm:$0xff] %v7904
        %v7906 = vld [vmem:[%s7867 + $0xc0] sm:$0xff]
        %v7907 = vsel %vm7869, %v7829, %v7906
        %7908 = vst [vmem:[%s7867 + $0xc0] sm:$0xff] %v7907
        %v7909 = vld [vmem:[%s7867 + $0xd0] sm:$0xff]
        %v7910 = vsel %vm7869, %v7836, %v7909
        %7911 = vst [vmem:[%s7867 + $0xd0] sm:$0xff] %v7910
        %v7912 = vld [vmem:[%s7867 + $0xe0] sm:$0xff]
        %v7913 = vsel %vm7869, %v7843, %v7912
        %7914 = vst [vmem:[%s7867 + $0xe0] sm:$0xff] %v7913
        %v7915 = vld [vmem:[%s7867 + $0xf0] sm:$0xff]
        %v7916 = vsel %vm7869, %v7850, %v7915
        %7917 = vst [vmem:[%s7867 + $0xf0] sm:$0xff] %v7916
        %7934 = vrot.lane.b32.xlu0 %v7723, 64
        %v7935 = vpop.permute.xlu0 %7934
        %7936 = vrot.lane.b32.xlu0 %v7724, 64
        %v7937 = vpop.permute.xlu0 %7936
        %7938 = vrot.lane.b32.xlu0 %v7725, 64
        %v7939 = vpop.permute.xlu0 %7938
        %7940 = vrot.lane.b32.xlu0 %v7726, 64
        %v7941 = vpop.permute.xlu0 %7940
        %7942 = vrot.lane.b32.xlu0 %v7727, 64
        %v7943 = vpop.permute.xlu0 %7942
        %7944 = vrot.lane.b32.xlu0 %v7728, 64
        %v7945 = vpop.permute.xlu0 %7944
        %7946 = vrot.lane.b32.xlu0 %v7729, 64
        %v7947 = vpop.permute.xlu0 %7946
        %7948 = vrot.lane.b32.xlu0 %v7730, 64
        %v7949 = vpop.permute.xlu0 %7948
        %7950 = vrot.lane.b32.xlu0 %v7731, 64
        %v7951 = vpop.permute.xlu0 %7950
        %7952 = vrot.lane.b32.xlu0 %v7732, 64
        %v7953 = vpop.permute.xlu0 %7952
        %7954 = vrot.lane.b32.xlu0 %v7733, 64
        %v7955 = vpop.permute.xlu0 %7954
        %7956 = vrot.lane.b32.xlu0 %v7734, 64
        %v7957 = vpop.permute.xlu0 %7956
        %7958 = vrot.lane.b32.xlu0 %v7735, 64
        %v7959 = vpop.permute.xlu0 %7958
        %7960 = vrot.lane.b32.xlu0 %v7736, 64
        %v7961 = vpop.permute.xlu0 %7960
        %7962 = vrot.lane.b32.xlu0 %v7737, 64
        %v7963 = vpop.permute.xlu0 %7962
        %7964 = vrot.lane.b32.xlu0 %v7738, 64
        %v7965 = vpop.permute.xlu0 %7964
        %vm7982 = vcmask 1048064
        %7983 = vst.msk [vmem:[%s7867] sm:$0xff] %vm7982, %v7935
        %7984 = vst.msk [vmem:[%s7867 + $0x10] sm:$0xff] %vm7982, %v7937
        %7985 = vst.msk [vmem:[%s7867 + $0x20] sm:$0xff] %vm7982, %v7939
        %7986 = vst.msk [vmem:[%s7867 + $0x30] sm:$0xff] %vm7982, %v7941
        %7987 = vst.msk [vmem:[%s7867 + $0x40] sm:$0xff] %vm7982, %v7943
        %7988 = vst.msk [vmem:[%s7867 + $0x50] sm:$0xff] %vm7982, %v7945
        %7989 = vst.msk [vmem:[%s7867 + $0x60] sm:$0xff] %vm7982, %v7947
        %7990 = vst.msk [vmem:[%s7867 + $0x70] sm:$0xff] %vm7982, %v7949
        %7991 = vst.msk [vmem:[%s7867 + $0x80] sm:$0xff] %vm7982, %v7951
        %7992 = vst.msk [vmem:[%s7867 + $0x90] sm:$0xff] %vm7982, %v7953
        %7993 = vst.msk [vmem:[%s7867 + $0xa0] sm:$0xff] %vm7982, %v7955
        %7994 = vst.msk [vmem:[%s7867 + $0xb0] sm:$0xff] %vm7982, %v7957
        %7995 = vst.msk [vmem:[%s7867 + $0xc0] sm:$0xff] %vm7982, %v7959
        %7996 = vst.msk [vmem:[%s7867 + $0xd0] sm:$0xff] %vm7982, %v7961
        %7997 = vst.msk [vmem:[%s7867 + $0xe0] sm:$0xff] %vm7982, %v7963
        %7998 = vst.msk [vmem:[%s7867 + $0xf0] sm:$0xff] %vm7982, %v7965
        %v7999 = vrot.slane %v7743, 1
        %v8000 = vor.u32 %v7740, %v7999
        %v8001 = vrot.slane %v7750, 1
        %v8002 = vor.u32 %v7747, %v8001
        %v8003 = vrot.slane %v7757, 1
        %v8004 = vor.u32 %v7754, %v8003
        %v8005 = vrot.slane %v7764, 1
        %v8006 = vor.u32 %v7761, %v8005
        %v8007 = vrot.slane %v7771, 1
        %v8008 = vor.u32 %v7768, %v8007
        %v8009 = vrot.slane %v7778, 1
        %v8010 = vor.u32 %v7775, %v8009
        %v8011 = vrot.slane %v7785, 1
        %v8012 = vor.u32 %v7782, %v8011
        %v8013 = vrot.slane %v7792, 1
        %v8014 = vor.u32 %v7789, %v8013
        %v8015 = vrot.slane %v7799, 1
        %v8016 = vor.u32 %v7796, %v8015
        %v8017 = vrot.slane %v7806, 1
        %v8018 = vor.u32 %v7803, %v8017
        %v8019 = vrot.slane %v7813, 1
        %v8020 = vor.u32 %v7810, %v8019
        %v8021 = vrot.slane %v7820, 1
        %v8022 = vor.u32 %v7817, %v8021
        %v8023 = vrot.slane %v7827, 1
        %v8024 = vor.u32 %v7824, %v8023
        %v8025 = vrot.slane %v7834, 1
        %v8026 = vor.u32 %v7831, %v8025
        %v8027 = vrot.slane %v7841, 1
        %v8028 = vor.u32 %v7838, %v8027
        %v8029 = vrot.slane %v7848, 1
        %v8030 = vor.u32 %v7845, %v8029
        %vm8047 = vmand %vm7868, %vm1015
        %v8048 = vld [vmem:[%s7867 + $0x8] sm:$0xff]
        %v8049 = vsel %vm8047, %v8000, %v8048
        %8050 = vst [vmem:[%s7867 + $0x8] sm:$0xff] %v8049
        %v8051 = vld [vmem:[%s7867 + $0x18] sm:$0xff]
        %v8052 = vsel %vm8047, %v8002, %v8051
        %8053 = vst [vmem:[%s7867 + $0x18] sm:$0xff] %v8052
        %v8054 = vld [vmem:[%s7867 + $0x28] sm:$0xff]
        %v8055 = vsel %vm8047, %v8004, %v8054
        %8056 = vst [vmem:[%s7867 + $0x28] sm:$0xff] %v8055
        %v8057 = vld [vmem:[%s7867 + $0x38] sm:$0xff]
        %v8058 = vsel %vm8047, %v8006, %v8057
        %8059 = vst [vmem:[%s7867 + $0x38] sm:$0xff] %v8058
        %v8060 = vld [vmem:[%s7867 + $0x48] sm:$0xff]
        %v8061 = vsel %vm8047, %v8008, %v8060
        %8062 = vst [vmem:[%s7867 + $0x48] sm:$0xff] %v8061
        %v8063 = vld [vmem:[%s7867 + $0x58] sm:$0xff]
        %v8064 = vsel %vm8047, %v8010, %v8063
        %8065 = vst [vmem:[%s7867 + $0x58] sm:$0xff] %v8064
        %v8066 = vld [vmem:[%s7867 + $0x68] sm:$0xff]
        %v8067 = vsel %vm8047, %v8012, %v8066
        %8068 = vst [vmem:[%s7867 + $0x68] sm:$0xff] %v8067
        %v8069 = vld [vmem:[%s7867 + $0x78] sm:$0xff]
        %v8070 = vsel %vm8047, %v8014, %v8069
        %8071 = vst [vmem:[%s7867 + $0x78] sm:$0xff] %v8070
        %v8072 = vld [vmem:[%s7867 + $0x88] sm:$0xff]
        %v8073 = vsel %vm8047, %v8016, %v8072
        %8074 = vst [vmem:[%s7867 + $0x88] sm:$0xff] %v8073
        %v8075 = vld [vmem:[%s7867 + $0x98] sm:$0xff]
        %v8076 = vsel %vm8047, %v8018, %v8075
        %8077 = vst [vmem:[%s7867 + $0x98] sm:$0xff] %v8076
        %v8078 = vld [vmem:[%s7867 + $0xa8] sm:$0xff]
        %v8079 = vsel %vm8047, %v8020, %v8078
        %8080 = vst [vmem:[%s7867 + $0xa8] sm:$0xff] %v8079
        %v8081 = vld [vmem:[%s7867 + $0xb8] sm:$0xff]
        %v8082 = vsel %vm8047, %v8022, %v8081
        %8083 = vst [vmem:[%s7867 + $0xb8] sm:$0xff] %v8082
        %v8084 = vld [vmem:[%s7867 + $0xc8] sm:$0xff]
        %v8085 = vsel %vm8047, %v8024, %v8084
        %8086 = vst [vmem:[%s7867 + $0xc8] sm:$0xff] %v8085
        %v8087 = vld [vmem:[%s7867 + $0xd8] sm:$0xff]
        %v8088 = vsel %vm8047, %v8026, %v8087
        %8089 = vst [vmem:[%s7867 + $0xd8] sm:$0xff] %v8088
        %v8090 = vld [vmem:[%s7867 + $0xe8] sm:$0xff]
        %v8091 = vsel %vm8047, %v8028, %v8090
        %8092 = vst [vmem:[%s7867 + $0xe8] sm:$0xff] %v8091
        %v8093 = vld [vmem:[%s7867 + $0xf8] sm:$0xff]
        %v8094 = vsel %vm8047, %v8030, %v8093
        %8095 = vst [vmem:[%s7867 + $0xf8] sm:$0xff] %v8094
        %v8096 = vld [vmem:[#allocation4] sm:$0xff]
        %v8097 = vld [vmem:[#allocation4 + $0x8] sm:$0xff]
        %v8098 = vld [vmem:[#allocation4 + $0x10] sm:$0xff]
        %v8099 = vld [vmem:[#allocation4 + $0x18] sm:$0xff]
        %v8100 = vld [vmem:[#allocation4 + $0x20] sm:$0xff]
        %v8101 = vld [vmem:[#allocation4 + $0x28] sm:$0xff]
        %v8102 = vld [vmem:[#allocation4 + $0x30] sm:$0xff]
        %v8103 = vld [vmem:[#allocation4 + $0x38] sm:$0xff]
        %v8104 = vld [vmem:[#allocation4 + $0x40] sm:$0xff]
        %v8105 = vld [vmem:[#allocation4 + $0x48] sm:$0xff]
        %v8106 = vld [vmem:[#allocation4 + $0x50] sm:$0xff]
        %v8107 = vld [vmem:[#allocation4 + $0x58] sm:$0xff]
        %v8108 = vld [vmem:[#allocation4 + $0x60] sm:$0xff]
        %v8109 = vld [vmem:[#allocation4 + $0x68] sm:$0xff]
        %v8110 = vld [vmem:[#allocation4 + $0x70] sm:$0xff]
        %v8111 = vld [vmem:[#allocation4 + $0x78] sm:$0xff]
        %v8112 = vld [vmem:[#allocation4 + $0x80] sm:$0xff]
        %v8113 = vld [vmem:[#allocation4 + $0x88] sm:$0xff]
        %v8114 = vld [vmem:[#allocation4 + $0x90] sm:$0xff]
        %v8115 = vld [vmem:[#allocation4 + $0x98] sm:$0xff]
        %v8116 = vld [vmem:[#allocation4 + $0xa0] sm:$0xff]
        %v8117 = vld [vmem:[#allocation4 + $0xa8] sm:$0xff]
        %v8118 = vld [vmem:[#allocation4 + $0xb0] sm:$0xff]
        %v8119 = vld [vmem:[#allocation4 + $0xb8] sm:$0xff]
        %v8120 = vld [vmem:[#allocation4 + $0xc0] sm:$0xff]
        %v8121 = vld [vmem:[#allocation4 + $0xc8] sm:$0xff]
        %v8122 = vld [vmem:[#allocation4 + $0xd0] sm:$0xff]
        %v8123 = vld [vmem:[#allocation4 + $0xd8] sm:$0xff]
        %v8124 = vld [vmem:[#allocation4 + $0xe0] sm:$0xff]
        %v8125 = vld [vmem:[#allocation4 + $0xe8] sm:$0xff]
        %v8126 = vld [vmem:[#allocation4 + $0xf0] sm:$0xff]
        %v8127 = vld [vmem:[#allocation4 + $0xf8] sm:$0xff]
        %v8128 = vld [vmem:[%s5] sm:$0xf]
        %v8129 = vld [vmem:[%s5 + $0x4] sm:$0xf]
        %v8130 = vld [vmem:[%s5 + $0x8] sm:$0xf]
        %v8131 = vld [vmem:[%s5 + $0xc] sm:$0xf]
        %v8132 = vld [vmem:[%s5 + $0x10] sm:$0xf]
        %v8133 = vld [vmem:[%s5 + $0x14] sm:$0xf]
        %v8134 = vld [vmem:[%s5 + $0x18] sm:$0xf]
        %v8135 = vld [vmem:[%s5 + $0x1c] sm:$0xf]
        %v8136 = vld [vmem:[%s5 + $0x20] sm:$0xf]
        %v8137 = vld [vmem:[%s5 + $0x24] sm:$0xf]
        %v8138 = vld [vmem:[%s5 + $0x28] sm:$0xf]
        %v8139 = vld [vmem:[%s5 + $0x2c] sm:$0xf]
        %v8140 = vld [vmem:[%s5 + $0x30] sm:$0xf]
        %v8141 = vld [vmem:[%s5 + $0x34] sm:$0xf]
        %v8142 = vld [vmem:[%s5 + $0x38] sm:$0xf]
        %v8143 = vld [vmem:[%s5 + $0x3c] sm:$0xf]
        %v8144 = vld [vmem:[%s5 + $0x40] sm:$0xf]
        %v8145 = vld [vmem:[%s5 + $0x44] sm:$0xf]
        %v8146 = vld [vmem:[%s5 + $0x48] sm:$0xf]
        %v8147 = vld [vmem:[%s5 + $0x4c] sm:$0xf]
        %v8148 = vld [vmem:[%s5 + $0x50] sm:$0xf]
        %v8149 = vld [vmem:[%s5 + $0x54] sm:$0xf]
        %v8150 = vld [vmem:[%s5 + $0x58] sm:$0xf]
        %v8151 = vld [vmem:[%s5 + $0x5c] sm:$0xf]
        %v8152 = vld [vmem:[%s7867] sm:$0xff]
        %v8153 = vld [vmem:[%s7867 + $0x8] sm:$0xff]
        %v8154 = vld [vmem:[%s7867 + $0x10] sm:$0xff]
        %v8155 = vld [vmem:[%s7867 + $0x18] sm:$0xff]
        %v8156 = vld [vmem:[%s7867 + $0x20] sm:$0xff]
        %v8157 = vld [vmem:[%s7867 + $0x28] sm:$0xff]
        %v8158 = vld [vmem:[%s7867 + $0x30] sm:$0xff]
        %v8159 = vld [vmem:[%s7867 + $0x38] sm:$0xff]
        %v8160 = vld [vmem:[%s7867 + $0x40] sm:$0xff]
        %v8161 = vld [vmem:[%s7867 + $0x48] sm:$0xff]
        %v8162 = vld [vmem:[%s7867 + $0x50] sm:$0xff]
        %v8163 = vld [vmem:[%s7867 + $0x58] sm:$0xff]
        %v8164 = vld [vmem:[%s7867 + $0x60] sm:$0xff]
        %v8165 = vld [vmem:[%s7867 + $0x68] sm:$0xff]
        %v8166 = vld [vmem:[%s7867 + $0x70] sm:$0xff]
        %v8167 = vld [vmem:[%s7867 + $0x78] sm:$0xff]
        %v8168 = vld [vmem:[%s7867 + $0x80] sm:$0xff]
        %v8169 = vld [vmem:[%s7867 + $0x88] sm:$0xff]
        %v8170 = vld [vmem:[%s7867 + $0x90] sm:$0xff]
        %v8171 = vld [vmem:[%s7867 + $0x98] sm:$0xff]
        %v8172 = vld [vmem:[%s7867 + $0xa0] sm:$0xff]
        %v8173 = vld [vmem:[%s7867 + $0xa8] sm:$0xff]
        %v8174 = vld [vmem:[%s7867 + $0xb0] sm:$0xff]
        %v8175 = vld [vmem:[%s7867 + $0xb8] sm:$0xff]
        %v8176 = vld [vmem:[%s7867 + $0xc0] sm:$0xff]
        %v8177 = vld [vmem:[%s7867 + $0xc8] sm:$0xff]
        %v8178 = vld [vmem:[%s7867 + $0xd0] sm:$0xff]
        %v8179 = vld [vmem:[%s7867 + $0xd8] sm:$0xff]
        %v8180 = vld [vmem:[%s7867 + $0xe0] sm:$0xff]
        %v8181 = vld [vmem:[%s7867 + $0xe8] sm:$0xff]
        %v8182 = vld [vmem:[%s7867 + $0xf0] sm:$0xff]
        %v8183 = vld [vmem:[%s7867 + $0xf8] sm:$0xff]
        %s8184 = scalar_lea.vmem %s5, 96
        %v8185 = vld [vmem:[%s8184] sm:$0xf]
        %v8186 = vld [vmem:[%s8184 + $0x4] sm:$0xf]
        %v8187 = vld [vmem:[%s8184 + $0x8] sm:$0xf]
        %v8188 = vld [vmem:[%s8184 + $0xc] sm:$0xf]
        %v8189 = vld [vmem:[%s8184 + $0x10] sm:$0xf]
        %v8190 = vld [vmem:[%s8184 + $0x14] sm:$0xf]
        %v8191 = vld [vmem:[%s8184 + $0x18] sm:$0xf]
        %v8192 = vld [vmem:[%s8184 + $0x1c] sm:$0xf]
        %v8193 = vld [vmem:[%s8184 + $0x20] sm:$0xf]
        %v8194 = vld [vmem:[%s8184 + $0x24] sm:$0xf]
        %v8195 = vld [vmem:[%s8184 + $0x28] sm:$0xf]
        %v8196 = vld [vmem:[%s8184 + $0x2c] sm:$0xf]
        %v8197 = vld [vmem:[%s8184 + $0x30] sm:$0xf]
        %v8198 = vld [vmem:[%s8184 + $0x34] sm:$0xf]
        %v8199 = vld [vmem:[%s8184 + $0x38] sm:$0xf]
        %v8200 = vld [vmem:[%s8184 + $0x3c] sm:$0xf]
        %v8201 = vld [vmem:[%s8184 + $0x40] sm:$0xf]
        %v8202 = vld [vmem:[%s8184 + $0x44] sm:$0xf]
        %v8203 = vld [vmem:[%s8184 + $0x48] sm:$0xf]
        %v8204 = vld [vmem:[%s8184 + $0x4c] sm:$0xf]
        %v8205 = vld [vmem:[%s8184 + $0x50] sm:$0xf]
        %v8206 = vld [vmem:[%s8184 + $0x54] sm:$0xf]
        %v8207 = vld [vmem:[%s8184 + $0x58] sm:$0xf]
        %v8208 = vld [vmem:[%s8184 + $0x5c] sm:$0xf]
        %v8233 = vunpack.c.l.b16 %v8185
        %v8234 = vunpack.c.l.b16 %v8186
        %v8235 = vunpack.c.l.b16 %v8187
        %v8236 = vunpack.c.l.b16 %v8188
        %v8237 = vunpack.c.l.b16 %v8189
        %v8238 = vunpack.c.l.b16 %v8190
        %v8239 = vunpack.c.l.b16 %v8191
        %v8240 = vunpack.c.l.b16 %v8192
        %v8241 = vunpack.c.l.b16 %v8193
        %v8242 = vunpack.c.l.b16 %v8194
        %v8243 = vunpack.c.l.b16 %v8195
        %v8244 = vunpack.c.l.b16 %v8196
        %v8245 = vunpack.c.l.b16 %v8197
        %v8246 = vunpack.c.l.b16 %v8198
        %v8247 = vunpack.c.l.b16 %v8199
        %v8248 = vunpack.c.l.b16 %v8200
        %v8249 = vunpack.c.l.b16 %v8201
        %v8250 = vunpack.c.l.b16 %v8202
        %v8251 = vunpack.c.l.b16 %v8203
        %v8252 = vunpack.c.l.b16 %v8204
        %v8253 = vunpack.c.l.b16 %v8205
        %v8254 = vunpack.c.l.b16 %v8206
        %v8255 = vunpack.c.l.b16 %v8207
        %v8256 = vunpack.c.l.b16 %v8208
        %v8257 = vpack.c.b16 %v8234, %v8233
        %v8258 = vpack.c.b16 %v8236, %v8235
        %v8259 = vpack.c.b16 %v8238, %v8237
        %v8260 = vpack.c.b16 %v8240, %v8239
        %v8261 = vpack.c.b16 %v8242, %v8241
        %v8262 = vpack.c.b16 %v8244, %v8243
        %v8263 = vpack.c.b16 %v8246, %v8245
        %v8264 = vpack.c.b16 %v8248, %v8247
        %v8265 = vpack.c.b16 %v8250, %v8249
        %v8266 = vpack.c.b16 %v8252, %v8251
        %v8267 = vpack.c.b16 %v8254, %v8253
        %v8268 = vpack.c.b16 %v8256, %v8255
        %v8282 = vsel %vm918, %v8153, 0
        %v8285 = vsel %vm918, %v8155, 0
        %v8288 = vsel %vm918, %v8157, 0
        %v8291 = vsel %vm918, %v8159, 0
        %v8294 = vsel %vm918, %v8161, 0
        %v8297 = vsel %vm918, %v8163, 0
        %v8300 = vsel %vm918, %v8165, 0
        %v8303 = vsel %vm918, %v8167, 0
        %v8306 = vsel %vm918, %v8169, 0
        %v8309 = vsel %vm918, %v8171, 0
        %v8312 = vsel %vm918, %v8173, 0
        %v8315 = vsel %vm918, %v8175, 0
        %v8318 = vsel %vm918, %v8177, 0
        %v8321 = vsel %vm918, %v8179, 0
        %v8324 = vsel %vm918, %v8181, 0
        %v8327 = vsel %vm918, %v8183, 0
        %8329 = vmatprep.subr.bf16.mxu0 0
        %8330 = vmatpush1.bf16.msra.mxu0 %v8257
        %8331 = vmatprep.subr.bf16.mxu0 0
        %8332 = vmatpush1.bf16.msra.mxu0 %v8258
        %8333 = vmatprep.subr.bf16.mxu0 0
        %8334 = vmatpush1.bf16.msra.mxu0 %v8259
        %8335 = vmatprep.subr.bf16.mxu0 0
        %8336 = vmatpush1.bf16.msra.mxu0 %v8260
        %8337 = vmatprep.subr.bf16.mxu0 0
        %8338 = vmatpush1.bf16.msra.mxu0 %v8261
        %8339 = vmatprep.subr.bf16.mxu0 0
        %8340 = vmatpush1.bf16.msra.mxu0 %v8262
        %8341 = vmatprep.subr.bf16.mxu0 0
        %8342 = vmatpush1.bf16.msra.mxu0 %v8263
        %8343 = vmatprep.subr.bf16.mxu0 0
        %8344 = vmatpush1.bf16.msra.mxu0 %v8264
        %8345 = vmatprep.subr.bf16.mxu0 0
        %8346 = vmatpush1.bf16.msra.mxu0 %v8265
        %8347 = vmatprep.subr.bf16.mxu0 0
        %8348 = vmatpush1.bf16.msra.mxu0 %v8266
        %8349 = vmatprep.subr.bf16.mxu0 0
        %8350 = vmatpush1.bf16.msra.mxu0 %v8267
        %8351 = vmatprep.subr.bf16.mxu0 0
        %8352 = vmatpush1.bf16.msra.mxu0 %v8268
        %8353 = vmatprep.subr.bf16.mxu0 0
        %8354 = vmatpush1.bf16.msra.mxu0 0
        %8355 = vmatprep.subr.bf16.mxu0 0
        %8356 = vmatpush1.bf16.msra.mxu0 0
        %8357 = vmatprep.subr.bf16.mxu0 0
        %8358 = vmatpush1.bf16.msra.mxu0 0
        %8359 = vmatprep.subr.bf16.mxu0 0
        %8360 = vmatpush1.bf16.msra.mxu0 0
        %8361 = vmatprep.mubr.bf16.mxu0 %v8282
        %8362 = vmatmul.mubr.bf16.gmra.mrb[0].mxu0 %v8152
        %v8363 = vpop.f32.mrb[0].mxu0
        %v8364 = vadd.f32 0.0, %v8363
        %v8365 = vpop.f32.mrb[0].mxu0
        %v8366 = vpop.f32.mrb[0].mxu0
        %v8367 = vadd.f32 0.0, %v8366
        %v8368 = vpop.f32.mrb[0].mxu0
        %8369 = vmatprep.mubr.bf16.mxu0 %v8285
        %8370 = vmatmul.mubr.bf16.gmra.mrb[0].mxu0 %v8154
        %v8371 = vpop.f32.mrb[0].mxu0
        %v8372 = vadd.f32 0.0, %v8371
        %v8373 = vpop.f32.mrb[0].mxu0
        %v8374 = vpop.f32.mrb[0].mxu0
        %v8375 = vadd.f32 0.0, %v8374
        %v8376 = vpop.f32.mrb[0].mxu0
        %8377 = vmatprep.mubr.bf16.mxu0 %v8288
        %8378 = vmatmul.mubr.bf16.gmra.mrb[0].mxu0 %v8156
        %v8379 = vpop.f32.mrb[0].mxu0
        %v8380 = vadd.f32 0.0, %v8379
        %v8381 = vpop.f32.mrb[0].mxu0
        %v8382 = vpop.f32.mrb[0].mxu0
        %v8383 = vadd.f32 0.0, %v8382
        %v8384 = vpop.f32.mrb[0].mxu0
        %8385 = vmatprep.mubr.bf16.mxu0 %v8291
        %8386 = vmatmul.mubr.bf16.gmra.mrb[0].mxu0 %v8158
        %v8387 = vpop.f32.mrb[0].mxu0
        %v8388 = vadd.f32 0.0, %v8387
        %v8389 = vpop.f32.mrb[0].mxu0
        %v8390 = vpop.f32.mrb[0].mxu0
        %v8391 = vadd.f32 0.0, %v8390
        %v8392 = vpop.f32.mrb[0].mxu0
        %8393 = vmatprep.mubr.bf16.mxu0 %v8294
        %8394 = vmatmul.mubr.bf16.gmra.mrb[0].mxu0 %v8160
        %v8395 = vpop.f32.mrb[0].mxu0
        %v8396 = vadd.f32 0.0, %v8395
        %v8397 = vpop.f32.mrb[0].mxu0
        %v8398 = vpop.f32.mrb[0].mxu0
        %v8399 = vadd.f32 0.0, %v8398
        %v8400 = vpop.f32.mrb[0].mxu0
        %8401 = vmatprep.mubr.bf16.mxu0 %v8297
        %8402 = vmatmul.mubr.bf16.gmra.mrb[0].mxu0 %v8162
        %v8403 = vpop.f32.mrb[0].mxu0
        %v8404 = vadd.f32 0.0, %v8403
        %v8405 = vpop.f32.mrb[0].mxu0
        %v8406 = vpop.f32.mrb[0].mxu0
        %v8407 = vadd.f32 0.0, %v8406
        %v8408 = vpop.f32.mrb[0].mxu0
        %8409 = vmatprep.mubr.bf16.mxu0 %v8300
        %8410 = vmatmul.mubr.bf16.gmra.mrb[0].mxu0 %v8164
        %v8411 = vpop.f32.mrb[0].mxu0
        %v8412 = vadd.f32 0.0, %v8411
        %v8413 = vpop.f32.mrb[0].mxu0
        %v8414 = vpop.f32.mrb[0].mxu0
        %v8415 = vadd.f32 0.0, %v8414
        %v8416 = vpop.f32.mrb[0].mxu0
        %8417 = vmatprep.mubr.bf16.mxu0 %v8303
        %8418 = vmatmul.mubr.bf16.gmra.mrb[0].mxu0 %v8166
        %v8419 = vpop.f32.mrb[0].mxu0
        %v8420 = vadd.f32 0.0, %v8419
        %v8421 = vpop.f32.mrb[0].mxu0
        %v8422 = vpop.f32.mrb[0].mxu0
        %v8423 = vadd.f32 0.0, %v8422
        %v8424 = vpop.f32.mrb[0].mxu0
        %8425 = vmatprep.mubr.bf16.mxu0 %v8306
        %8426 = vmatmul.mubr.bf16.gmra.mrb[0].mxu0 %v8168
        %v8427 = vpop.f32.mrb[0].mxu0
        %v8428 = vadd.f32 0.0, %v8427
        %v8429 = vpop.f32.mrb[0].mxu0
        %v8430 = vpop.f32.mrb[0].mxu0
        %v8431 = vadd.f32 0.0, %v8430
        %v8432 = vpop.f32.mrb[0].mxu0
        %8433 = vmatprep.mubr.bf16.mxu0 %v8309
        %8434 = vmatmul.mubr.bf16.gmra.mrb[0].mxu0 %v8170
        %v8435 = vpop.f32.mrb[0].mxu0
        %v8436 = vadd.f32 0.0, %v8435
        %v8437 = vpop.f32.mrb[0].mxu0
        %v8438 = vpop.f32.mrb[0].mxu0
        %v8439 = vadd.f32 0.0, %v8438
        %v8440 = vpop.f32.mrb[0].mxu0
        %8441 = vmatprep.mubr.bf16.mxu0 %v8312
        %8442 = vmatmul.mubr.bf16.gmra.mrb[0].mxu0 %v8172
        %v8443 = vpop.f32.mrb[0].mxu0
        %v8444 = vadd.f32 0.0, %v8443
        %v8445 = vpop.f32.mrb[0].mxu0
        %v8446 = vpop.f32.mrb[0].mxu0
        %v8447 = vadd.f32 0.0, %v8446
        %v8448 = vpop.f32.mrb[0].mxu0
        %8449 = vmatprep.mubr.bf16.mxu0 %v8315
        %8450 = vmatmul.mubr.bf16.gmra.mrb[0].mxu0 %v8174
        %v8451 = vpop.f32.mrb[0].mxu0
        %v8452 = vadd.f32 0.0, %v8451
        %v8453 = vpop.f32.mrb[0].mxu0
        %v8454 = vpop.f32.mrb[0].mxu0
        %v8455 = vadd.f32 0.0, %v8454
        %v8456 = vpop.f32.mrb[0].mxu0
        %8457 = vmatprep.mubr.bf16.mxu0 %v8318
        %8458 = vmatmul.mubr.bf16.gmra.mrb[0].mxu0 %v8176
        %v8459 = vpop.f32.mrb[0].mxu0
        %v8460 = vadd.f32 0.0, %v8459
        %v8461 = vpop.f32.mrb[0].mxu0
        %v8462 = vpop.f32.mrb[0].mxu0
        %v8463 = vadd.f32 0.0, %v8462
        %v8464 = vpop.f32.mrb[0].mxu0
        %8465 = vmatprep.mubr.bf16.mxu0 %v8321
        %8466 = vmatmul.mubr.bf16.gmra.mrb[0].mxu0 %v8178
        %v8467 = vpop.f32.mrb[0].mxu0
        %v8468 = vadd.f32 0.0, %v8467
        %v8469 = vpop.f32.mrb[0].mxu0
        %v8470 = vpop.f32.mrb[0].mxu0
        %v8471 = vadd.f32 0.0, %v8470
        %v8472 = vpop.f32.mrb[0].mxu0
        %8473 = vmatprep.mubr.bf16.mxu0 %v8324
        %8474 = vmatmul.mubr.bf16.gmra.mrb[0].mxu0 %v8180
        %v8475 = vpop.f32.mrb[0].mxu0
        %v8476 = vadd.f32 0.0, %v8475
        %v8477 = vpop.f32.mrb[0].mxu0
        %v8478 = vpop.f32.mrb[0].mxu0
        %v8479 = vadd.f32 0.0, %v8478
        %v8480 = vpop.f32.mrb[0].mxu0
        %8481 = vmatprep.mubr.bf16.mxu0 %v8327
        %8482 = vmatmul.mubr.bf16.gmra.mrb[0].mxu0 %v8182
        %v8483 = vpop.f32.mrb[0].mxu0
        %v8484 = vadd.f32 0.0, %v8483
        %v8485 = vpop.f32.mrb[0].mxu0
        %v8486 = vpop.f32.mrb[0].mxu0
        %v8487 = vadd.f32 0.0, %v8486
        %v8488 = vpop.f32.mrb[0].mxu0
        %8489 = vdwg.mxu0
        %v8514 = vunpack.c.l.b16 %v8128
        %v8515 = vunpack.c.l.b16 %v8129
        %v8516 = vunpack.c.l.b16 %v8130
        %v8517 = vunpack.c.l.b16 %v8131
        %v8518 = vunpack.c.l.b16 %v8132
        %v8519 = vunpack.c.l.b16 %v8133
        %v8520 = vunpack.c.l.b16 %v8134
        %v8521 = vunpack.c.l.b16 %v8135
        %v8522 = vunpack.c.l.b16 %v8136
        %v8523 = vunpack.c.l.b16 %v8137
        %v8524 = vunpack.c.l.b16 %v8138
        %v8525 = vunpack.c.l.b16 %v8139
        %v8526 = vunpack.c.l.b16 %v8140
        %v8527 = vunpack.c.l.b16 %v8141
        %v8528 = vunpack.c.l.b16 %v8142
        %v8529 = vunpack.c.l.b16 %v8143
        %v8530 = vunpack.c.l.b16 %v8144
        %v8531 = vunpack.c.l.b16 %v8145
        %v8532 = vunpack.c.l.b16 %v8146
        %v8533 = vunpack.c.l.b16 %v8147
        %v8534 = vunpack.c.l.b16 %v8148
        %v8535 = vunpack.c.l.b16 %v8149
        %v8536 = vunpack.c.l.b16 %v8150
        %v8537 = vunpack.c.l.b16 %v8151
        %v8538 = vpack.c.b16 %v8515, %v8514
        %v8539 = vpack.c.b16 %v8517, %v8516
        %v8540 = vpack.c.b16 %v8519, %v8518
        %v8541 = vpack.c.b16 %v8521, %v8520
        %v8542 = vpack.c.b16 %v8523, %v8522
        %v8543 = vpack.c.b16 %v8525, %v8524
        %v8544 = vpack.c.b16 %v8527, %v8526
        %v8545 = vpack.c.b16 %v8529, %v8528
        %v8546 = vpack.c.b16 %v8531, %v8530
        %v8547 = vpack.c.b16 %v8533, %v8532
        %v8548 = vpack.c.b16 %v8535, %v8534
        %v8549 = vpack.c.b16 %v8537, %v8536
        %v8563 = vsel %vm918, %v8097, 0
        %v8566 = vsel %vm918, %v8099, 0
        %v8569 = vsel %vm918, %v8101, 0
        %v8572 = vsel %vm918, %v8103, 0
        %v8575 = vsel %vm918, %v8105, 0
        %v8578 = vsel %vm918, %v8107, 0
        %v8581 = vsel %vm918, %v8109, 0
        %v8584 = vsel %vm918, %v8111, 0
        %v8587 = vsel %vm918, %v8113, 0
        %v8590 = vsel %vm918, %v8115, 0
        %v8593 = vsel %vm918, %v8117, 0
        %v8596 = vsel %vm918, %v8119, 0
        %v8599 = vsel %vm918, %v8121, 0
        %v8602 = vsel %vm918, %v8123, 0
        %v8605 = vsel %vm918, %v8125, 0
        %v8608 = vsel %vm918, %v8127, 0
        %8610 = vmatprep.subr.bf16.mxu0 0
        %8611 = vmatpush1.bf16.msra.mxu0 %v8538
        %8612 = vmatprep.subr.bf16.mxu0 0
        %8613 = vmatpush1.bf16.msra.mxu0 %v8539
        %8614 = vmatprep.subr.bf16.mxu0 0
        %8615 = vmatpush1.bf16.msra.mxu0 %v8540
        %8616 = vmatprep.subr.bf16.mxu0 0
        %8617 = vmatpush1.bf16.msra.mxu0 %v8541
        %8618 = vmatprep.subr.bf16.mxu0 0
        %8619 = vmatpush1.bf16.msra.mxu0 %v8542
        %8620 = vmatprep.subr.bf16.mxu0 0
        %8621 = vmatpush1.bf16.msra.mxu0 %v8543
        %8622 = vmatprep.subr.bf16.mxu0 0
        %8623 = vmatpush1.bf16.msra.mxu0 %v8544
        %8624 = vmatprep.subr.bf16.mxu0 0
        %8625 = vmatpush1.bf16.msra.mxu0 %v8545
        %8626 = vmatprep.subr.bf16.mxu0 0
        %8627 = vmatpush1.bf16.msra.mxu0 %v8546
        %8628 = vmatprep.subr.bf16.mxu0 0
        %8629 = vmatpush1.bf16.msra.mxu0 %v8547
        %8630 = vmatprep.subr.bf16.mxu0 0
        %8631 = vmatpush1.bf16.msra.mxu0 %v8548
        %8632 = vmatprep.subr.bf16.mxu0 0
        %8633 = vmatpush1.bf16.msra.mxu0 %v8549
        %8634 = vmatprep.subr.bf16.mxu0 0
        %8635 = vmatpush1.bf16.msra.mxu0 0
        %8636 = vmatprep.subr.bf16.mxu0 0
        %8637 = vmatpush1.bf16.msra.mxu0 0
        %8638 = vmatprep.subr.bf16.mxu0 0
        %8639 = vmatpush1.bf16.msra.mxu0 0
        %8640 = vmatprep.subr.bf16.mxu0 0
        %8641 = vmatpush1.bf16.msra.mxu0 0
        %8642 = vmatprep.mubr.bf16.mxu0 %v8563
        %8643 = vmatmul.mubr.bf16.gmra.mrb[0].mxu0 %v8096
        %v8644 = vpop.f32.mrb[0].mxu0
        %v8645 = vadd.f32 %v8364, %v8644
        %v8646 = vpop.f32.mrb[0].mxu0
        %v8647 = vpop.f32.mrb[0].mxu0
        %v8648 = vadd.f32 %v8367, %v8647
        %v8649 = vpop.f32.mrb[0].mxu0
        %8650 = vmatprep.mubr.bf16.mxu0 %v8566
        %8651 = vmatmul.mubr.bf16.gmra.mrb[0].mxu0 %v8098
        %v8652 = vpop.f32.mrb[0].mxu0
        %v8653 = vadd.f32 %v8372, %v8652
        %v8654 = vpop.f32.mrb[0].mxu0
        %v8655 = vpop.f32.mrb[0].mxu0
        %v8656 = vadd.f32 %v8375, %v8655
        %v8657 = vpop.f32.mrb[0].mxu0
        %8658 = vmatprep.mubr.bf16.mxu0 %v8569
        %8659 = vmatmul.mubr.bf16.gmra.mrb[0].mxu0 %v8100
        %v8660 = vpop.f32.mrb[0].mxu0
        %v8661 = vadd.f32 %v8380, %v8660
        %v8662 = vpop.f32.mrb[0].mxu0
        %v8663 = vpop.f32.mrb[0].mxu0
        %v8664 = vadd.f32 %v8383, %v8663
        %v8665 = vpop.f32.mrb[0].mxu0
        %8666 = vmatprep.mubr.bf16.mxu0 %v8572
        %8667 = vmatmul.mubr.bf16.gmra.mrb[0].mxu0 %v8102
        %v8668 = vpop.f32.mrb[0].mxu0
        %v8669 = vadd.f32 %v8388, %v8668
        %v8670 = vpop.f32.mrb[0].mxu0
        %v8671 = vpop.f32.mrb[0].mxu0
        %v8672 = vadd.f32 %v8391, %v8671
        %v8673 = vpop.f32.mrb[0].mxu0
        %8674 = vmatprep.mubr.bf16.mxu0 %v8575
        %8675 = vmatmul.mubr.bf16.gmra.mrb[0].mxu0 %v8104
        %v8676 = vpop.f32.mrb[0].mxu0
        %v8677 = vadd.f32 %v8396, %v8676
        %v8678 = vpop.f32.mrb[0].mxu0
        %v8679 = vpop.f32.mrb[0].mxu0
        %v8680 = vadd.f32 %v8399, %v8679
        %v8681 = vpop.f32.mrb[0].mxu0
        %8682 = vmatprep.mubr.bf16.mxu0 %v8578
        %8683 = vmatmul.mubr.bf16.gmra.mrb[0].mxu0 %v8106
        %v8684 = vpop.f32.mrb[0].mxu0
        %v8685 = vadd.f32 %v8404, %v8684
        %v8686 = vpop.f32.mrb[0].mxu0
        %v8687 = vpop.f32.mrb[0].mxu0
        %v8688 = vadd.f32 %v8407, %v8687
        %v8689 = vpop.f32.mrb[0].mxu0
        %8690 = vmatprep.mubr.bf16.mxu0 %v8581
        %8691 = vmatmul.mubr.bf16.gmra.mrb[0].mxu0 %v8108
        %v8692 = vpop.f32.mrb[0].mxu0
        %v8693 = vadd.f32 %v8412, %v8692
        %v8694 = vpop.f32.mrb[0].mxu0
        %v8695 = vpop.f32.mrb[0].mxu0
        %v8696 = vadd.f32 %v8415, %v8695
        %v8697 = vpop.f32.mrb[0].mxu0
        %8698 = vmatprep.mubr.bf16.mxu0 %v8584
        %8699 = vmatmul.mubr.bf16.gmra.mrb[0].mxu0 %v8110
        %v8700 = vpop.f32.mrb[0].mxu0
        %v8701 = vadd.f32 %v8420, %v8700
        %v8702 = vpop.f32.mrb[0].mxu0
        %v8703 = vpop.f32.mrb[0].mxu0
        %v8704 = vadd.f32 %v8423, %v8703
        %v8705 = vpop.f32.mrb[0].mxu0
        %8706 = vmatprep.mubr.bf16.mxu0 %v8587
        %8707 = vmatmul.mubr.bf16.gmra.mrb[0].mxu0 %v8112
        %v8708 = vpop.f32.mrb[0].mxu0
        %v8709 = vadd.f32 %v8428, %v8708
        %v8710 = vpop.f32.mrb[0].mxu0
        %v8711 = vpop.f32.mrb[0].mxu0
        %v8712 = vadd.f32 %v8431, %v8711
        %v8713 = vpop.f32.mrb[0].mxu0
        %8714 = vmatprep.mubr.bf16.mxu0 %v8590
        %8715 = vmatmul.mubr.bf16.gmra.mrb[0].mxu0 %v8114
        %v8716 = vpop.f32.mrb[0].mxu0
        %v8717 = vadd.f32 %v8436, %v8716
        %v8718 = vpop.f32.mrb[0].mxu0
        %v8719 = vpop.f32.mrb[0].mxu0
        %v8720 = vadd.f32 %v8439, %v8719
        %v8721 = vpop.f32.mrb[0].mxu0
        %8722 = vmatprep.mubr.bf16.mxu0 %v8593
        %8723 = vmatmul.mubr.bf16.gmra.mrb[0].mxu0 %v8116
        %v8724 = vpop.f32.mrb[0].mxu0
        %v8725 = vadd.f32 %v8444, %v8724
        %v8726 = vpop.f32.mrb[0].mxu0
        %v8727 = vpop.f32.mrb[0].mxu0
        %v8728 = vadd.f32 %v8447, %v8727
        %v8729 = vpop.f32.mrb[0].mxu0
        %8730 = vmatprep.mubr.bf16.mxu0 %v8596
        %8731 = vmatmul.mubr.bf16.gmra.mrb[0].mxu0 %v8118
        %v8732 = vpop.f32.mrb[0].mxu0
        %v8733 = vadd.f32 %v8452, %v8732
        %v8734 = vpop.f32.mrb[0].mxu0
        %v8735 = vpop.f32.mrb[0].mxu0
        %v8736 = vadd.f32 %v8455, %v8735
        %v8737 = vpop.f32.mrb[0].mxu0
        %8738 = vmatprep.mubr.bf16.mxu0 %v8599
        %8739 = vmatmul.mubr.bf16.gmra.mrb[0].mxu0 %v8120
        %v8740 = vpop.f32.mrb[0].mxu0
        %v8741 = vadd.f32 %v8460, %v8740
        %v8742 = vpop.f32.mrb[0].mxu0
        %v8743 = vpop.f32.mrb[0].mxu0
        %v8744 = vadd.f32 %v8463, %v8743
        %v8745 = vpop.f32.mrb[0].mxu0
        %8746 = vmatprep.mubr.bf16.mxu0 %v8602
        %8747 = vmatmul.mubr.bf16.gmra.mrb[0].mxu0 %v8122
        %v8748 = vpop.f32.mrb[0].mxu0
        %v8749 = vadd.f32 %v8468, %v8748
        %v8750 = vpop.f32.mrb[0].mxu0
        %v8751 = vpop.f32.mrb[0].mxu0
        %v8752 = vadd.f32 %v8471, %v8751
        %v8753 = vpop.f32.mrb[0].mxu0
        %8754 = vmatprep.mubr.bf16.mxu0 %v8605
        %8755 = vmatmul.mubr.bf16.gmra.mrb[0].mxu0 %v8124
        %v8756 = vpop.f32.mrb[0].mxu0
        %v8757 = vadd.f32 %v8476, %v8756
        %v8758 = vpop.f32.mrb[0].mxu0
        %v8759 = vpop.f32.mrb[0].mxu0
        %v8760 = vadd.f32 %v8479, %v8759
        %v8761 = vpop.f32.mrb[0].mxu0
        %8762 = vmatprep.mubr.bf16.mxu0 %v8608
        %8763 = vmatmul.mubr.bf16.gmra.mrb[0].mxu0 %v8126
        %v8764 = vpop.f32.mrb[0].mxu0
        %v8765 = vadd.f32 %v8484, %v8764
        %v8766 = vpop.f32.mrb[0].mxu0
        %v8767 = vpop.f32.mrb[0].mxu0
        %v8768 = vadd.f32 %v8487, %v8767
        %v8769 = vpop.f32.mrb[0].mxu0
        %8770 = vdwg.mxu0
        %s8771 = scalar_lea.vmem [#allocation4], 32
        %v8772 = vld [vmem:[%s8771] sm:$0xff]
        %v8773 = vld [vmem:[%s8771 + $0x8] sm:$0xff]
        %v8774 = vld [vmem:[%s8771 + $0x10] sm:$0xff]
        %v8775 = vld [vmem:[%s8771 + $0x18] sm:$0xff]
        %v8776 = vld [vmem:[%s8771 + $0x20] sm:$0xff]
        %v8777 = vld [vmem:[%s8771 + $0x28] sm:$0xff]
        %v8778 = vld [vmem:[%s8771 + $0x30] sm:$0xff]
        %v8779 = vld [vmem:[%s8771 + $0x38] sm:$0xff]
        %v8780 = vld [vmem:[%s8771 + $0x40] sm:$0xff]
        %v8781 = vld [vmem:[%s8771 + $0x48] sm:$0xff]
        %v8782 = vld [vmem:[%s8771 + $0x50] sm:$0xff]
        %v8783 = vld [vmem:[%s8771 + $0x58] sm:$0xff]
        %v8784 = vld [vmem:[%s8771 + $0x60] sm:$0xff]
        %v8785 = vld [vmem:[%s8771 + $0x68] sm:$0xff]
        %v8786 = vld [vmem:[%s8771 + $0x70] sm:$0xff]
        %v8787 = vld [vmem:[%s8771 + $0x78] sm:$0xff]
        %v8788 = vld [vmem:[%s8771 + $0x80] sm:$0xff]
        %v8789 = vld [vmem:[%s8771 + $0x88] sm:$0xff]
        %v8790 = vld [vmem:[%s8771 + $0x90] sm:$0xff]
        %v8791 = vld [vmem:[%s8771 + $0x98] sm:$0xff]
        %v8792 = vld [vmem:[%s8771 + $0xa0] sm:$0xff]
        %v8793 = vld [vmem:[%s8771 + $0xa8] sm:$0xff]
        %v8794 = vld [vmem:[%s8771 + $0xb0] sm:$0xff]
        %v8795 = vld [vmem:[%s8771 + $0xb8] sm:$0xff]
        %v8796 = vld [vmem:[%s8771 + $0xc0] sm:$0xff]
        %v8797 = vld [vmem:[%s8771 + $0xc8] sm:$0xff]
        %v8798 = vld [vmem:[%s8771 + $0xd0] sm:$0xff]
        %v8799 = vld [vmem:[%s8771 + $0xd8] sm:$0xff]
        %v8800 = vld [vmem:[%s8771 + $0xe0] sm:$0xff]
        %v8801 = vld [vmem:[%s8771 + $0xe8] sm:$0xff]
        %v8802 = vld [vmem:[%s8771 + $0xf0] sm:$0xff]
        %v8803 = vld [vmem:[%s8771 + $0xf8] sm:$0xff]
        %s8804 = scalar_lea.vmem %s5, 192
        %v8805 = vld [vmem:[%s8804] sm:$0xf]
        %v8806 = vld [vmem:[%s8804 + $0x4] sm:$0xf]
        %v8807 = vld [vmem:[%s8804 + $0x8] sm:$0xf]
        %v8808 = vld [vmem:[%s8804 + $0xc] sm:$0xf]
        %v8809 = vld [vmem:[%s8804 + $0x10] sm:$0xf]
        %v8810 = vld [vmem:[%s8804 + $0x14] sm:$0xf]
        %v8811 = vld [vmem:[%s8804 + $0x18] sm:$0xf]
        %v8812 = vld [vmem:[%s8804 + $0x1c] sm:$0xf]
        %v8813 = vld [vmem:[%s8804 + $0x20] sm:$0xf]
        %v8814 = vld [vmem:[%s8804 + $0x24] sm:$0xf]
        %v8815 = vld [vmem:[%s8804 + $0x28] sm:$0xf]
        %v8816 = vld [vmem:[%s8804 + $0x2c] sm:$0xf]
        %v8817 = vld [vmem:[%s8804 + $0x30] sm:$0xf]
        %v8818 = vld [vmem:[%s8804 + $0x34] sm:$0xf]
        %v8819 = vld [vmem:[%s8804 + $0x38] sm:$0xf]
        %v8820 = vld [vmem:[%s8804 + $0x3c] sm:$0xf]
        %v8821 = vld [vmem:[%s8804 + $0x40] sm:$0xf]
        %v8822 = vld [vmem:[%s8804 + $0x44] sm:$0xf]
        %v8823 = vld [vmem:[%s8804 + $0x48] sm:$0xf]
        %v8824 = vld [vmem:[%s8804 + $0x4c] sm:$0xf]
        %v8825 = vld [vmem:[%s8804 + $0x50] sm:$0xf]
        %v8826 = vld [vmem:[%s8804 + $0x54] sm:$0xf]
        %v8827 = vld [vmem:[%s8804 + $0x58] sm:$0xf]
        %v8828 = vld [vmem:[%s8804 + $0x5c] sm:$0xf]
        %v8853 = vunpack.c.l.b16 %v8805
        %v8854 = vunpack.c.l.b16 %v8806
        %v8855 = vunpack.c.l.b16 %v8807
        %v8856 = vunpack.c.l.b16 %v8808
        %v8857 = vunpack.c.l.b16 %v8809
        %v8858 = vunpack.c.l.b16 %v8810
        %v8859 = vunpack.c.l.b16 %v8811
        %v8860 = vunpack.c.l.b16 %v8812
        %v8861 = vunpack.c.l.b16 %v8813
        %v8862 = vunpack.c.l.b16 %v8814
        %v8863 = vunpack.c.l.b16 %v8815
        %v8864 = vunpack.c.l.b16 %v8816
        %v8865 = vunpack.c.l.b16 %v8817
        %v8866 = vunpack.c.l.b16 %v8818
        %v8867 = vunpack.c.l.b16 %v8819
        %v8868 = vunpack.c.l.b16 %v8820
        %v8869 = vunpack.c.l.b16 %v8821
        %v8870 = vunpack.c.l.b16 %v8822
        %v8871 = vunpack.c.l.b16 %v8823
        %v8872 = vunpack.c.l.b16 %v8824
        %v8873 = vunpack.c.l.b16 %v8825
        %v8874 = vunpack.c.l.b16 %v8826
        %v8875 = vunpack.c.l.b16 %v8827
        %v8876 = vunpack.c.l.b16 %v8828
        %v8877 = vpack.c.b16 %v8854, %v8853
        %v8878 = vpack.c.b16 %v8856, %v8855
        %v8879 = vpack.c.b16 %v8858, %v8857
        %v8880 = vpack.c.b16 %v8860, %v8859
        %v8881 = vpack.c.b16 %v8862, %v8861
        %v8882 = vpack.c.b16 %v8864, %v8863
        %v8883 = vpack.c.b16 %v8866, %v8865
        %v8884 = vpack.c.b16 %v8868, %v8867
        %v8885 = vpack.c.b16 %v8870, %v8869
        %v8886 = vpack.c.b16 %v8872, %v8871
        %v8887 = vpack.c.b16 %v8874, %v8873
        %v8888 = vpack.c.b16 %v8876, %v8875
        %v8902 = vsel %vm918, %v8773, 0
        %v8905 = vsel %vm918, %v8775, 0
        %v8908 = vsel %vm918, %v8777, 0
        %v8911 = vsel %vm918, %v8779, 0
        %v8914 = vsel %vm918, %v8781, 0
        %v8917 = vsel %vm918, %v8783, 0
        %v8920 = vsel %vm918, %v8785, 0
        %v8923 = vsel %vm918, %v8787, 0
        %v8926 = vsel %vm918, %v8789, 0
        %v8929 = vsel %vm918, %v8791, 0
        %v8932 = vsel %vm918, %v8793, 0
        %v8935 = vsel %vm918, %v8795, 0
        %v8938 = vsel %vm918, %v8797, 0
        %v8941 = vsel %vm918, %v8799, 0
        %v8944 = vsel %vm918, %v8801, 0
        %v8947 = vsel %vm918, %v8803, 0
        %8949 = vmatprep.subr.bf16.mxu0 0
        %8950 = vmatpush1.bf16.msra.mxu0 %v8877
        %8951 = vmatprep.subr.bf16.mxu0 0
        %8952 = vmatpush1.bf16.msra.mxu0 %v8878
        %8953 = vmatprep.subr.bf16.mxu0 0
        %8954 = vmatpush1.bf16.msra.mxu0 %v8879
        %8955 = vmatprep.subr.bf16.mxu0 0
        %8956 = vmatpush1.bf16.msra.mxu0 %v8880
        %8957 = vmatprep.subr.bf16.mxu0 0
        %8958 = vmatpush1.bf16.msra.mxu0 %v8881
        %8959 = vmatprep.subr.bf16.mxu0 0
        %8960 = vmatpush1.bf16.msra.mxu0 %v8882
        %8961 = vmatprep.subr.bf16.mxu0 0
        %8962 = vmatpush1.bf16.msra.mxu0 %v8883
        %8963 = vmatprep.subr.bf16.mxu0 0
        %8964 = vmatpush1.bf16.msra.mxu0 %v8884
        %8965 = vmatprep.subr.bf16.mxu0 0
        %8966 = vmatpush1.bf16.msra.mxu0 %v8885
        %8967 = vmatprep.subr.bf16.mxu0 0
        %8968 = vmatpush1.bf16.msra.mxu0 %v8886
        %8969 = vmatprep.subr.bf16.mxu0 0
        %8970 = vmatpush1.bf16.msra.mxu0 %v8887
        %8971 = vmatprep.subr.bf16.mxu0 0
        %8972 = vmatpush1.bf16.msra.mxu0 %v8888
        %8973 = vmatprep.subr.bf16.mxu0 0
        %8974 = vmatpush1.bf16.msra.mxu0 0
        %8975 = vmatprep.subr.bf16.mxu0 0
        %8976 = vmatpush1.bf16.msra.mxu0 0
        %8977 = vmatprep.subr.bf16.mxu0 0
        %8978 = vmatpush1.bf16.msra.mxu0 0
        %8979 = vmatprep.subr.bf16.mxu0 0
        %8980 = vmatpush1.bf16.msra.mxu0 0
        %8981 = vmatprep.mubr.bf16.mxu0 %v8902
        %8982 = vmatmul.mubr.bf16.gmra.mrb[0].mxu0 %v8772
        %v8983 = vpop.f32.mrb[0].mxu0
        %v8984 = vadd.f32 0.0, %v8983
        %v8985 = vpop.f32.mrb[0].mxu0
        %v8986 = vpop.f32.mrb[0].mxu0
        %v8987 = vadd.f32 0.0, %v8986
        %v8988 = vpop.f32.mrb[0].mxu0
        %8989 = vmatprep.mubr.bf16.mxu0 %v8905
        %8990 = vmatmul.mubr.bf16.gmra.mrb[0].mxu0 %v8774
        %v8991 = vpop.f32.mrb[0].mxu0
        %v8992 = vadd.f32 0.0, %v8991
        %v8993 = vpop.f32.mrb[0].mxu0
        %v8994 = vpop.f32.mrb[0].mxu0
        %v8995 = vadd.f32 0.0, %v8994
        %v8996 = vpop.f32.mrb[0].mxu0
        %8997 = vmatprep.mubr.bf16.mxu0 %v8908
        %8998 = vmatmul.mubr.bf16.gmra.mrb[0].mxu0 %v8776
        %v8999 = vpop.f32.mrb[0].mxu0
        %v9000 = vadd.f32 0.0, %v8999
        %v9001 = vpop.f32.mrb[0].mxu0
        %v9002 = vpop.f32.mrb[0].mxu0
        %v9003 = vadd.f32 0.0, %v9002
        %v9004 = vpop.f32.mrb[0].mxu0
        %9005 = vmatprep.mubr.bf16.mxu0 %v8911
        %9006 = vmatmul.mubr.bf16.gmra.mrb[0].mxu0 %v8778
        %v9007 = vpop.f32.mrb[0].mxu0
        %v9008 = vadd.f32 0.0, %v9007
        %v9009 = vpop.f32.mrb[0].mxu0
        %v9010 = vpop.f32.mrb[0].mxu0
        %v9011 = vadd.f32 0.0, %v9010
        %v9012 = vpop.f32.mrb[0].mxu0
        %9013 = vmatprep.mubr.bf16.mxu0 %v8914
        %9014 = vmatmul.mubr.bf16.gmra.mrb[0].mxu0 %v8780
        %v9015 = vpop.f32.mrb[0].mxu0
        %v9016 = vadd.f32 0.0, %v9015
        %v9017 = vpop.f32.mrb[0].mxu0
        %v9018 = vpop.f32.mrb[0].mxu0
        %v9019 = vadd.f32 0.0, %v9018
        %v9020 = vpop.f32.mrb[0].mxu0
        %9021 = vmatprep.mubr.bf16.mxu0 %v8917
        %9022 = vmatmul.mubr.bf16.gmra.mrb[0].mxu0 %v8782
        %v9023 = vpop.f32.mrb[0].mxu0
        %v9024 = vadd.f32 0.0, %v9023
        %v9025 = vpop.f32.mrb[0].mxu0
        %v9026 = vpop.f32.mrb[0].mxu0
        %v9027 = vadd.f32 0.0, %v9026
        %v9028 = vpop.f32.mrb[0].mxu0
        %9029 = vmatprep.mubr.bf16.mxu0 %v8920
        %9030 = vmatmul.mubr.bf16.gmra.mrb[0].mxu0 %v8784
        %v9031 = vpop.f32.mrb[0].mxu0
        %v9032 = vadd.f32 0.0, %v9031
        %v9033 = vpop.f32.mrb[0].mxu0
        %v9034 = vpop.f32.mrb[0].mxu0
        %v9035 = vadd.f32 0.0, %v9034
        %v9036 = vpop.f32.mrb[0].mxu0
        %9037 = vmatprep.mubr.bf16.mxu0 %v8923
        %9038 = vmatmul.mubr.bf16.gmra.mrb[0].mxu0 %v8786
        %v9039 = vpop.f32.mrb[0].mxu0
        %v9040 = vadd.f32 0.0, %v9039
        %v9041 = vpop.f32.mrb[0].mxu0
        %v9042 = vpop.f32.mrb[0].mxu0
        %v9043 = vadd.f32 0.0, %v9042
        %v9044 = vpop.f32.mrb[0].mxu0
        %9045 = vmatprep.mubr.bf16.mxu0 %v8926
        %9046 = vmatmul.mubr.bf16.gmra.mrb[0].mxu0 %v8788
        %v9047 = vpop.f32.mrb[0].mxu0
        %v9048 = vadd.f32 0.0, %v9047
        %v9049 = vpop.f32.mrb[0].mxu0
        %v9050 = vpop.f32.mrb[0].mxu0
        %v9051 = vadd.f32 0.0, %v9050
        %v9052 = vpop.f32.mrb[0].mxu0
        %9053 = vmatprep.mubr.bf16.mxu0 %v8929
        %9054 = vmatmul.mubr.bf16.gmra.mrb[0].mxu0 %v8790
        %v9055 = vpop.f32.mrb[0].mxu0
        %v9056 = vadd.f32 0.0, %v9055
        %v9057 = vpop.f32.mrb[0].mxu0
        %v9058 = vpop.f32.mrb[0].mxu0
        %v9059 = vadd.f32 0.0, %v9058
        %v9060 = vpop.f32.mrb[0].mxu0
        %9061 = vmatprep.mubr.bf16.mxu0 %v8932
        %9062 = vmatmul.mubr.bf16.gmra.mrb[0].mxu0 %v8792
        %v9063 = vpop.f32.mrb[0].mxu0
        %v9064 = vadd.f32 0.0, %v9063
        %v9065 = vpop.f32.mrb[0].mxu0
        %v9066 = vpop.f32.mrb[0].mxu0
        %v9067 = vadd.f32 0.0, %v9066
        %v9068 = vpop.f32.mrb[0].mxu0
        %9069 = vmatprep.mubr.bf16.mxu0 %v8935
        %9070 = vmatmul.mubr.bf16.gmra.mrb[0].mxu0 %v8794
        %v9071 = vpop.f32.mrb[0].mxu0
        %v9072 = vadd.f32 0.0, %v9071
        %v9073 = vpop.f32.mrb[0].mxu0
        %v9074 = vpop.f32.mrb[0].mxu0
        %v9075 = vadd.f32 0.0, %v9074
        %v9076 = vpop.f32.mrb[0].mxu0
        %9077 = vmatprep.mubr.bf16.mxu0 %v8938
        %9078 = vmatmul.mubr.bf16.gmra.mrb[0].mxu0 %v8796
        %v9079 = vpop.f32.mrb[0].mxu0
        %v9080 = vadd.f32 0.0, %v9079
        %v9081 = vpop.f32.mrb[0].mxu0
        %v9082 = vpop.f32.mrb[0].mxu0
        %v9083 = vadd.f32 0.0, %v9082
        %v9084 = vpop.f32.mrb[0].mxu0
        %9085 = vmatprep.mubr.bf16.mxu0 %v8941
        %9086 = vmatmul.mubr.bf16.gmra.mrb[0].mxu0 %v8798
        %v9087 = vpop.f32.mrb[0].mxu0
        %v9088 = vadd.f32 0.0, %v9087
        %v9089 = vpop.f32.mrb[0].mxu0
        %v9090 = vpop.f32.mrb[0].mxu0
        %v9091 = vadd.f32 0.0, %v9090
        %v9092 = vpop.f32.mrb[0].mxu0
        %9093 = vmatprep.mubr.bf16.mxu0 %v8944
        %9094 = vmatmul.mubr.bf16.gmra.mrb[0].mxu0 %v8800
        %v9095 = vpop.f32.mrb[0].mxu0
        %v9096 = vadd.f32 0.0, %v9095
        %v9097 = vpop.f32.mrb[0].mxu0
        %v9098 = vpop.f32.mrb[0].mxu0
        %v9099 = vadd.f32 0.0, %v9098
        %v9100 = vpop.f32.mrb[0].mxu0
        %9101 = vmatprep.mubr.bf16.mxu0 %v8947
        %9102 = vmatmul.mubr.bf16.gmra.mrb[0].mxu0 %v8802
        %v9103 = vpop.f32.mrb[0].mxu0
        %v9104 = vadd.f32 0.0, %v9103
        %v9105 = vpop.f32.mrb[0].mxu0
        %v9106 = vpop.f32.mrb[0].mxu0
        %v9107 = vadd.f32 0.0, %v9106
        %v9108 = vpop.f32.mrb[0].mxu0
        %9109 = vdwg.mxu0
        %v9110 = vadd.f32 %v8645, %v8984
        %v9111 = vadd.f32 %v8648, %v8987
        %v9112 = vadd.f32 %v8653, %v8992
        %v9113 = vadd.f32 %v8656, %v8995
        %v9114 = vadd.f32 %v8661, %v9000
        %v9115 = vadd.f32 %v8664, %v9003
        %v9116 = vadd.f32 %v8669, %v9008
        %v9117 = vadd.f32 %v8672, %v9011
        %v9118 = vadd.f32 %v8677, %v9016
        %v9119 = vadd.f32 %v8680, %v9019
        %v9120 = vadd.f32 %v8685, %v9024
        %v9121 = vadd.f32 %v8688, %v9027
        %v9122 = vadd.f32 %v8693, %v9032
        %v9123 = vadd.f32 %v8696, %v9035
        %v9124 = vadd.f32 %v8701, %v9040
        %v9125 = vadd.f32 %v8704, %v9043
        %v9126 = vadd.f32 %v8709, %v9048
        %v9127 = vadd.f32 %v8712, %v9051
        %v9128 = vadd.f32 %v8717, %v9056
        %v9129 = vadd.f32 %v8720, %v9059
        %v9130 = vadd.f32 %v8725, %v9064
        %v9131 = vadd.f32 %v8728, %v9067
        %v9132 = vadd.f32 %v8733, %v9072
        %v9133 = vadd.f32 %v8736, %v9075
        %v9134 = vadd.f32 %v8741, %v9080
        %v9135 = vadd.f32 %v8744, %v9083
        %v9136 = vadd.f32 %v8749, %v9088
        %v9137 = vadd.f32 %v8752, %v9091
        %v9138 = vadd.f32 %v8757, %v9096
        %v9139 = vadd.f32 %v8760, %v9099
        %v9140 = vadd.f32 %v8765, %v9104
        %v9141 = vadd.f32 %v8768, %v9107
        %v9142 = vld [vmem:[%s6] sm:$0x1]
        %v9144 = vlaneseq
        %v9145 = vshrl.u32 %v9144, 7
        %v9146 = vsub.s32 0, %v9145
        %v9147 = vrot.slane %v9142, %v9146
        %v9149 = vadd.f32 %v9110, %v9147
        %v9150 = vadd.f32 %v9111, %v9147
        %v9151 = vadd.f32 %v9112, %v9147
        %v9152 = vadd.f32 %v9113, %v9147
        %v9153 = vadd.f32 %v9114, %v9147
        %v9154 = vadd.f32 %v9115, %v9147
        %v9155 = vadd.f32 %v9116, %v9147
        %v9156 = vadd.f32 %v9117, %v9147
        %v9157 = vadd.f32 %v9118, %v9147
        %v9158 = vadd.f32 %v9119, %v9147
        %v9159 = vadd.f32 %v9120, %v9147
        %v9160 = vadd.f32 %v9121, %v9147
        %v9161 = vadd.f32 %v9122, %v9147
        %v9162 = vadd.f32 %v9123, %v9147
        %v9163 = vadd.f32 %v9124, %v9147
        %v9164 = vadd.f32 %v9125, %v9147
        %v9165 = vadd.f32 %v9126, %v9147
        %v9166 = vadd.f32 %v9127, %v9147
        %v9167 = vadd.f32 %v9128, %v9147
        %v9168 = vadd.f32 %v9129, %v9147
        %v9169 = vadd.f32 %v9130, %v9147
        %v9170 = vadd.f32 %v9131, %v9147
        %v9171 = vadd.f32 %v9132, %v9147
        %v9172 = vadd.f32 %v9133, %v9147
        %v9173 = vadd.f32 %v9134, %v9147
        %v9174 = vadd.f32 %v9135, %v9147
        %v9175 = vadd.f32 %v9136, %v9147
        %v9176 = vadd.f32 %v9137, %v9147
        %v9177 = vadd.f32 %v9138, %v9147
        %v9178 = vadd.f32 %v9139, %v9147
        %v9179 = vadd.f32 %v9140, %v9147
        %v9180 = vadd.f32 %v9141, %v9147
        %v9181 = vmax.f32 %v9149, 0.0
        %v9182 = vmax.f32 %v9150, 0.0
        %v9183 = vmax.f32 %v9151, 0.0
        %v9184 = vmax.f32 %v9152, 0.0
        %v9185 = vmax.f32 %v9153, 0.0
        %v9186 = vmax.f32 %v9154, 0.0
        %v9187 = vmax.f32 %v9155, 0.0
        %v9188 = vmax.f32 %v9156, 0.0
        %v9189 = vmax.f32 %v9157, 0.0
        %v9190 = vmax.f32 %v9158, 0.0
        %v9191 = vmax.f32 %v9159, 0.0
        %v9192 = vmax.f32 %v9160, 0.0
        %v9193 = vmax.f32 %v9161, 0.0
        %v9194 = vmax.f32 %v9162, 0.0
        %v9195 = vmax.f32 %v9163, 0.0
        %v9196 = vmax.f32 %v9164, 0.0
        %v9197 = vmax.f32 %v9165, 0.0
        %v9198 = vmax.f32 %v9166, 0.0
        %v9199 = vmax.f32 %v9167, 0.0
        %v9200 = vmax.f32 %v9168, 0.0
        %v9201 = vmax.f32 %v9169, 0.0
        %v9202 = vmax.f32 %v9170, 0.0
        %v9203 = vmax.f32 %v9171, 0.0
        %v9204 = vmax.f32 %v9172, 0.0
        %v9205 = vmax.f32 %v9173, 0.0
        %v9206 = vmax.f32 %v9174, 0.0
        %v9207 = vmax.f32 %v9175, 0.0
        %v9208 = vmax.f32 %v9176, 0.0
        %v9209 = vmax.f32 %v9177, 0.0
        %v9210 = vmax.f32 %v9178, 0.0
        %v9211 = vmax.f32 %v9179, 0.0
        %v9212 = vmax.f32 %v9180, 0.0
        %v9213 = vpack.c.bf16 %v9182, %v9181
        %v9214 = vpack.c.bf16 %v9184, %v9183
        %v9215 = vpack.c.bf16 %v9186, %v9185
        %v9216 = vpack.c.bf16 %v9188, %v9187
        %v9217 = vpack.c.bf16 %v9190, %v9189
        %v9218 = vpack.c.bf16 %v9192, %v9191
        %v9219 = vpack.c.bf16 %v9194, %v9193
        %v9220 = vpack.c.bf16 %v9196, %v9195
        %v9221 = vpack.c.bf16 %v9198, %v9197
        %v9222 = vpack.c.bf16 %v9200, %v9199
        %v9223 = vpack.c.bf16 %v9202, %v9201
        %v9224 = vpack.c.bf16 %v9204, %v9203
        %v9225 = vpack.c.bf16 %v9206, %v9205
        %v9226 = vpack.c.bf16 %v9208, %v9207
        %v9227 = vpack.c.bf16 %v9210, %v9209
        %v9228 = vpack.c.bf16 %v9212, %v9211
        %v9230 = vshrl.u32 %v9213, 16
        %v9232 = vrot.slane %v9230, 7
        %v9233 = vshll.u32 %v9213, 16
        %v9235 = vor.u32 %v9232, %v9233
        %v9237 = vshrl.u32 %v9214, 16
        %v9239 = vrot.slane %v9237, 7
        %v9240 = vshll.u32 %v9214, 16
        %v9242 = vor.u32 %v9239, %v9240
        %v9244 = vshrl.u32 %v9215, 16
        %v9246 = vrot.slane %v9244, 7
        %v9247 = vshll.u32 %v9215, 16
        %v9249 = vor.u32 %v9246, %v9247
        %v9251 = vshrl.u32 %v9216, 16
        %v9253 = vrot.slane %v9251, 7
        %v9254 = vshll.u32 %v9216, 16
        %v9256 = vor.u32 %v9253, %v9254
        %v9258 = vshrl.u32 %v9217, 16
        %v9260 = vrot.slane %v9258, 7
        %v9261 = vshll.u32 %v9217, 16
        %v9263 = vor.u32 %v9260, %v9261
        %v9265 = vshrl.u32 %v9218, 16
        %v9267 = vrot.slane %v9265, 7
        %v9268 = vshll.u32 %v9218, 16
        %v9270 = vor.u32 %v9267, %v9268
        %v9272 = vshrl.u32 %v9219, 16
        %v9274 = vrot.slane %v9272, 7
        %v9275 = vshll.u32 %v9219, 16
        %v9277 = vor.u32 %v9274, %v9275
        %v9279 = vshrl.u32 %v9220, 16
        %v9281 = vrot.slane %v9279, 7
        %v9282 = vshll.u32 %v9220, 16
        %v9284 = vor.u32 %v9281, %v9282
        %v9286 = vshrl.u32 %v9221, 16
        %v9288 = vrot.slane %v9286, 7
        %v9289 = vshll.u32 %v9221, 16
        %v9291 = vor.u32 %v9288, %v9289
        %v9293 = vshrl.u32 %v9222, 16
        %v9295 = vrot.slane %v9293, 7
        %v9296 = vshll.u32 %v9222, 16
        %v9298 = vor.u32 %v9295, %v9296
        %v9300 = vshrl.u32 %v9223, 16
        %v9302 = vrot.slane %v9300, 7
        %v9303 = vshll.u32 %v9223, 16
        %v9305 = vor.u32 %v9302, %v9303
        %v9307 = vshrl.u32 %v9224, 16
        %v9309 = vrot.slane %v9307, 7
        %v9310 = vshll.u32 %v9224, 16
        %v9312 = vor.u32 %v9309, %v9310
        %v9314 = vshrl.u32 %v9225, 16
        %v9316 = vrot.slane %v9314, 7
        %v9317 = vshll.u32 %v9225, 16
        %v9319 = vor.u32 %v9316, %v9317
        %v9321 = vshrl.u32 %v9226, 16
        %v9323 = vrot.slane %v9321, 7
        %v9324 = vshll.u32 %v9226, 16
        %v9326 = vor.u32 %v9323, %v9324
        %v9328 = vshrl.u32 %v9227, 16
        %v9330 = vrot.slane %v9328, 7
        %v9331 = vshll.u32 %v9227, 16
        %v9333 = vor.u32 %v9330, %v9331
        %v9335 = vshrl.u32 %v9228, 16
        %v9337 = vrot.slane %v9335, 7
        %v9338 = vshll.u32 %v9228, 16
        %v9340 = vor.u32 %v9337, %v9338
        %s9357 = scalar_lea.vmem [#allocation5], 16
        %v9358 = vld [vmem:[%s9357] sm:$0xff]
        %v9359 = vsel %vm7869, %v9235, %v9358
        %9360 = vst [vmem:[%s9357] sm:$0xff] %v9359
        %v9361 = vld [vmem:[%s9357 + $0x10] sm:$0xff]
        %v9362 = vsel %vm7869, %v9242, %v9361
        %9363 = vst [vmem:[%s9357 + $0x10] sm:$0xff] %v9362
        %v9364 = vld [vmem:[%s9357 + $0x20] sm:$0xff]
        %v9365 = vsel %vm7869, %v9249, %v9364
        %9366 = vst [vmem:[%s9357 + $0x20] sm:$0xff] %v9365
        %v9367 = vld [vmem:[%s9357 + $0x30] sm:$0xff]
        %v9368 = vsel %vm7869, %v9256, %v9367
        %9369 = vst [vmem:[%s9357 + $0x30] sm:$0xff] %v9368
        %v9370 = vld [vmem:[%s9357 + $0x40] sm:$0xff]
        %v9371 = vsel %vm7869, %v9263, %v9370
        %9372 = vst [vmem:[%s9357 + $0x40] sm:$0xff] %v9371
        %v9373 = vld [vmem:[%s9357 + $0x50] sm:$0xff]
        %v9374 = vsel %vm7869, %v9270, %v9373
        %9375 = vst [vmem:[%s9357 + $0x50] sm:$0xff] %v9374
        %v9376 = vld [vmem:[%s9357 + $0x60] sm:$0xff]
        %v9377 = vsel %vm7869, %v9277, %v9376
        %9378 = vst [vmem:[%s9357 + $0x60] sm:$0xff] %v9377
        %v9379 = vld [vmem:[%s9357 + $0x70] sm:$0xff]
        %v9380 = vsel %vm7869, %v9284, %v9379
        %9381 = vst [vmem:[%s9357 + $0x70] sm:$0xff] %v9380
        %v9382 = vld [vmem:[%s9357 + $0x80] sm:$0xff]
        %v9383 = vsel %vm7869, %v9291, %v9382
        %9384 = vst [vmem:[%s9357 + $0x80] sm:$0xff] %v9383
        %v9385 = vld [vmem:[%s9357 + $0x90] sm:$0xff]
        %v9386 = vsel %vm7869, %v9298, %v9385
        %9387 = vst [vmem:[%s9357 + $0x90] sm:$0xff] %v9386
        %v9388 = vld [vmem:[%s9357 + $0xa0] sm:$0xff]
        %v9389 = vsel %vm7869, %v9305, %v9388
        %9390 = vst [vmem:[%s9357 + $0xa0] sm:$0xff] %v9389
        %v9391 = vld [vmem:[%s9357 + $0xb0] sm:$0xff]
        %v9392 = vsel %vm7869, %v9312, %v9391
        %9393 = vst [vmem:[%s9357 + $0xb0] sm:$0xff] %v9392
        %v9394 = vld [vmem:[%s9357 + $0xc0] sm:$0xff]
        %v9395 = vsel %vm7869, %v9319, %v9394
        %9396 = vst [vmem:[%s9357 + $0xc0] sm:$0xff] %v9395
        %v9397 = vld [vmem:[%s9357 + $0xd0] sm:$0xff]
        %v9398 = vsel %vm7869, %v9326, %v9397
        %9399 = vst [vmem:[%s9357 + $0xd0] sm:$0xff] %v9398
        %v9400 = vld [vmem:[%s9357 + $0xe0] sm:$0xff]
        %v9401 = vsel %vm7869, %v9333, %v9400
        %9402 = vst [vmem:[%s9357 + $0xe0] sm:$0xff] %v9401
        %v9403 = vld [vmem:[%s9357 + $0xf0] sm:$0xff]
        %v9404 = vsel %vm7869, %v9340, %v9403
        %9405 = vst [vmem:[%s9357 + $0xf0] sm:$0xff] %v9404
        %9422 = vrot.lane.b32.xlu0 %v9213, 64
        %v9423 = vpop.permute.xlu0 %9422
        %9424 = vrot.lane.b32.xlu0 %v9214, 64
        %v9425 = vpop.permute.xlu0 %9424
        %9426 = vrot.lane.b32.xlu0 %v9215, 64
        %v9427 = vpop.permute.xlu0 %9426
        %9428 = vrot.lane.b32.xlu0 %v9216, 64
        %v9429 = vpop.permute.xlu0 %9428
        %9430 = vrot.lane.b32.xlu0 %v9217, 64
        %v9431 = vpop.permute.xlu0 %9430
        %9432 = vrot.lane.b32.xlu0 %v9218, 64
        %v9433 = vpop.permute.xlu0 %9432
        %9434 = vrot.lane.b32.xlu0 %v9219, 64
        %v9435 = vpop.permute.xlu0 %9434
        %9436 = vrot.lane.b32.xlu0 %v9220, 64
        %v9437 = vpop.permute.xlu0 %9436
        %9438 = vrot.lane.b32.xlu0 %v9221, 64
        %v9439 = vpop.permute.xlu0 %9438
        %9440 = vrot.lane.b32.xlu0 %v9222, 64
        %v9441 = vpop.permute.xlu0 %9440
        %9442 = vrot.lane.b32.xlu0 %v9223, 64
        %v9443 = vpop.permute.xlu0 %9442
        %9444 = vrot.lane.b32.xlu0 %v9224, 64
        %v9445 = vpop.permute.xlu0 %9444
        %9446 = vrot.lane.b32.xlu0 %v9225, 64
        %v9447 = vpop.permute.xlu0 %9446
        %9448 = vrot.lane.b32.xlu0 %v9226, 64
        %v9449 = vpop.permute.xlu0 %9448
        %9450 = vrot.lane.b32.xlu0 %v9227, 64
        %v9451 = vpop.permute.xlu0 %9450
        %9452 = vrot.lane.b32.xlu0 %v9228, 64
        %v9453 = vpop.permute.xlu0 %9452
        %9470 = vst.msk [vmem:[%s9357] sm:$0xff] %vm7982, %v9423
        %9471 = vst.msk [vmem:[%s9357 + $0x10] sm:$0xff] %vm7982, %v9425
        %9472 = vst.msk [vmem:[%s9357 + $0x20] sm:$0xff] %vm7982, %v9427
        %9473 = vst.msk [vmem:[%s9357 + $0x30] sm:$0xff] %vm7982, %v9429
        %9474 = vst.msk [vmem:[%s9357 + $0x40] sm:$0xff] %vm7982, %v9431
        %9475 = vst.msk [vmem:[%s9357 + $0x50] sm:$0xff] %vm7982, %v9433
        %9476 = vst.msk [vmem:[%s9357 + $0x60] sm:$0xff] %vm7982, %v9435
        %9477 = vst.msk [vmem:[%s9357 + $0x70] sm:$0xff] %vm7982, %v9437
        %9478 = vst.msk [vmem:[%s9357 + $0x80] sm:$0xff] %vm7982, %v9439
        %9479 = vst.msk [vmem:[%s9357 + $0x90] sm:$0xff] %vm7982, %v9441
        %9480 = vst.msk [vmem:[%s9357 + $0xa0] sm:$0xff] %vm7982, %v9443
        %9481 = vst.msk [vmem:[%s9357 + $0xb0] sm:$0xff] %vm7982, %v9445
        %9482 = vst.msk [vmem:[%s9357 + $0xc0] sm:$0xff] %vm7982, %v9447
        %9483 = vst.msk [vmem:[%s9357 + $0xd0] sm:$0xff] %vm7982, %v9449
        %9484 = vst.msk [vmem:[%s9357 + $0xe0] sm:$0xff] %vm7982, %v9451
        %9485 = vst.msk [vmem:[%s9357 + $0xf0] sm:$0xff] %vm7982, %v9453
        %v9486 = vrot.slane %v9233, 1
        %v9487 = vor.u32 %v9230, %v9486
        %v9488 = vrot.slane %v9240, 1
        %v9489 = vor.u32 %v9237, %v9488
        %v9490 = vrot.slane %v9247, 1
        %v9491 = vor.u32 %v9244, %v9490
        %v9492 = vrot.slane %v9254, 1
        %v9493 = vor.u32 %v9251, %v9492
        %v9494 = vrot.slane %v9261, 1
        %v9495 = vor.u32 %v9258, %v9494
        %v9496 = vrot.slane %v9268, 1
        %v9497 = vor.u32 %v9265, %v9496
        %v9498 = vrot.slane %v9275, 1
        %v9499 = vor.u32 %v9272, %v9498
        %v9500 = vrot.slane %v9282, 1
        %v9501 = vor.u32 %v9279, %v9500
        %v9502 = vrot.slane %v9289, 1
        %v9503 = vor.u32 %v9286, %v9502
        %v9504 = vrot.slane %v9296, 1
        %v9505 = vor.u32 %v9293, %v9504
        %v9506 = vrot.slane %v9303, 1
        %v9507 = vor.u32 %v9300, %v9506
        %v9508 = vrot.slane %v9310, 1
        %v9509 = vor.u32 %v9307, %v9508
        %v9510 = vrot.slane %v9317, 1
        %v9511 = vor.u32 %v9314, %v9510
        %v9512 = vrot.slane %v9324, 1
        %v9513 = vor.u32 %v9321, %v9512
        %v9514 = vrot.slane %v9331, 1
        %v9515 = vor.u32 %v9328, %v9514
        %v9516 = vrot.slane %v9338, 1
        %v9517 = vor.u32 %v9335, %v9516
        %v9534 = vld [vmem:[%s9357 + $0x8] sm:$0xff]
        %v9535 = vsel %vm8047, %v9487, %v9534
        %9536 = vst [vmem:[%s9357 + $0x8] sm:$0xff] %v9535
        %v9537 = vld [vmem:[%s9357 + $0x18] sm:$0xff]
        %v9538 = vsel %vm8047, %v9489, %v9537
        %9539 = vst [vmem:[%s9357 + $0x18] sm:$0xff] %v9538
        %v9540 = vld [vmem:[%s9357 + $0x28] sm:$0xff]
        %v9541 = vsel %vm8047, %v9491, %v9540
        %9542 = vst [vmem:[%s9357 + $0x28] sm:$0xff] %v9541
        %v9543 = vld [vmem:[%s9357 + $0x38] sm:$0xff]
        %v9544 = vsel %vm8047, %v9493, %v9543
        %9545 = vst [vmem:[%s9357 + $0x38] sm:$0xff] %v9544
        %v9546 = vld [vmem:[%s9357 + $0x48] sm:$0xff]
        %v9547 = vsel %vm8047, %v9495, %v9546
        %9548 = vst [vmem:[%s9357 + $0x48] sm:$0xff] %v9547
        %v9549 = vld [vmem:[%s9357 + $0x58] sm:$0xff]
        %v9550 = vsel %vm8047, %v9497, %v9549
        %9551 = vst [vmem:[%s9357 + $0x58] sm:$0xff] %v9550
        %v9552 = vld [vmem:[%s9357 + $0x68] sm:$0xff]
        %v9553 = vsel %vm8047, %v9499, %v9552
        %9554 = vst [vmem:[%s9357 + $0x68] sm:$0xff] %v9553
        %v9555 = vld [vmem:[%s9357 + $0x78] sm:$0xff]
        %v9556 = vsel %vm8047, %v9501, %v9555
        %9557 = vst [vmem:[%s9357 + $0x78] sm:$0xff] %v9556
        %v9558 = vld [vmem:[%s9357 + $0x88] sm:$0xff]
        %v9559 = vsel %vm8047, %v9503, %v9558
        %9560 = vst [vmem:[%s9357 + $0x88] sm:$0xff] %v9559
        %v9561 = vld [vmem:[%s9357 + $0x98] sm:$0xff]
        %v9562 = vsel %vm8047, %v9505, %v9561
        %9563 = vst [vmem:[%s9357 + $0x98] sm:$0xff] %v9562
        %v9564 = vld [vmem:[%s9357 + $0xa8] sm:$0xff]
        %v9565 = vsel %vm8047, %v9507, %v9564
        %9566 = vst [vmem:[%s9357 + $0xa8] sm:$0xff] %v9565
        %v9567 = vld [vmem:[%s9357 + $0xb8] sm:$0xff]
        %v9568 = vsel %vm8047, %v9509, %v9567
        %9569 = vst [vmem:[%s9357 + $0xb8] sm:$0xff] %v9568
        %v9570 = vld [vmem:[%s9357 + $0xc8] sm:$0xff]
        %v9571 = vsel %vm8047, %v9511, %v9570
        %9572 = vst [vmem:[%s9357 + $0xc8] sm:$0xff] %v9571
        %v9573 = vld [vmem:[%s9357 + $0xd8] sm:$0xff]
        %v9574 = vsel %vm8047, %v9513, %v9573
        %9575 = vst [vmem:[%s9357 + $0xd8] sm:$0xff] %v9574
        %v9576 = vld [vmem:[%s9357 + $0xe8] sm:$0xff]
        %v9577 = vsel %vm8047, %v9515, %v9576
        %9578 = vst [vmem:[%s9357 + $0xe8] sm:$0xff] %v9577
        %v9579 = vld [vmem:[%s9357 + $0xf8] sm:$0xff]
        %v9580 = vsel %vm8047, %v9517, %v9579
        %9581 = vst [vmem:[%s9357 + $0xf8] sm:$0xff] %v9580
        %v9582 = vld [vmem:[#allocation5] sm:$0xff]
        %v9583 = vld [vmem:[#allocation5 + $0x8] sm:$0xff]
        %v9584 = vld [vmem:[#allocation5 + $0x10] sm:$0xff]
        %v9585 = vld [vmem:[#allocation5 + $0x18] sm:$0xff]
        %v9586 = vld [vmem:[#allocation5 + $0x20] sm:$0xff]
        %v9587 = vld [vmem:[#allocation5 + $0x28] sm:$0xff]
        %v9588 = vld [vmem:[#allocation5 + $0x30] sm:$0xff]
        %v9589 = vld [vmem:[#allocation5 + $0x38] sm:$0xff]
        %v9590 = vld [vmem:[#allocation5 + $0x40] sm:$0xff]
        %v9591 = vld [vmem:[#allocation5 + $0x48] sm:$0xff]
        %v9592 = vld [vmem:[#allocation5 + $0x50] sm:$0xff]
        %v9593 = vld [vmem:[#allocation5 + $0x58] sm:$0xff]
        %v9594 = vld [vmem:[#allocation5 + $0x60] sm:$0xff]
        %v9595 = vld [vmem:[#allocation5 + $0x68] sm:$0xff]
        %v9596 = vld [vmem:[#allocation5 + $0x70] sm:$0xff]
        %v9597 = vld [vmem:[#allocation5 + $0x78] sm:$0xff]
        %v9598 = vld [vmem:[#allocation5 + $0x80] sm:$0xff]
        %v9599 = vld [vmem:[#allocation5 + $0x88] sm:$0xff]
        %v9600 = vld [vmem:[#allocation5 + $0x90] sm:$0xff]
        %v9601 = vld [vmem:[#allocation5 + $0x98] sm:$0xff]
        %v9602 = vld [vmem:[#allocation5 + $0xa0] sm:$0xff]
        %v9603 = vld [vmem:[#allocation5 + $0xa8] sm:$0xff]
        %v9604 = vld [vmem:[#allocation5 + $0xb0] sm:$0xff]
        %v9605 = vld [vmem:[#allocation5 + $0xb8] sm:$0xff]
        %v9606 = vld [vmem:[#allocation5 + $0xc0] sm:$0xff]
        %v9607 = vld [vmem:[#allocation5 + $0xc8] sm:$0xff]
        %v9608 = vld [vmem:[#allocation5 + $0xd0] sm:$0xff]
        %v9609 = vld [vmem:[#allocation5 + $0xd8] sm:$0xff]
        %v9610 = vld [vmem:[#allocation5 + $0xe0] sm:$0xff]
        %v9611 = vld [vmem:[#allocation5 + $0xe8] sm:$0xff]
        %v9612 = vld [vmem:[#allocation5 + $0xf0] sm:$0xff]
        %v9613 = vld [vmem:[#allocation5 + $0xf8] sm:$0xff]
        %v9614 = vld [vmem:[%s7] sm:$0xf]
        %v9615 = vld [vmem:[%s7 + $0x4] sm:$0xf]
        %v9616 = vld [vmem:[%s7 + $0x8] sm:$0xf]
        %v9617 = vld [vmem:[%s7 + $0xc] sm:$0xf]
        %v9618 = vld [vmem:[%s7 + $0x10] sm:$0xf]
        %v9619 = vld [vmem:[%s7 + $0x14] sm:$0xf]
        %v9620 = vld [vmem:[%s7 + $0x18] sm:$0xf]
        %v9621 = vld [vmem:[%s7 + $0x1c] sm:$0xf]
        %v9622 = vld [vmem:[%s7 + $0x20] sm:$0xf]
        %v9623 = vld [vmem:[%s7 + $0x24] sm:$0xf]
        %v9624 = vld [vmem:[%s7 + $0x28] sm:$0xf]
        %v9625 = vld [vmem:[%s7 + $0x2c] sm:$0xf]
        %v9626 = vld [vmem:[%s7 + $0x30] sm:$0xf]
        %v9627 = vld [vmem:[%s7 + $0x34] sm:$0xf]
        %v9628 = vld [vmem:[%s7 + $0x38] sm:$0xf]
        %v9629 = vld [vmem:[%s7 + $0x3c] sm:$0xf]
        %v9630 = vld [vmem:[%s7 + $0x40] sm:$0xf]
        %v9631 = vld [vmem:[%s7 + $0x44] sm:$0xf]
        %v9632 = vld [vmem:[%s7 + $0x48] sm:$0xf]
        %v9633 = vld [vmem:[%s7 + $0x4c] sm:$0xf]
        %v9634 = vld [vmem:[%s7 + $0x50] sm:$0xf]
        %v9635 = vld [vmem:[%s7 + $0x54] sm:$0xf]
        %v9636 = vld [vmem:[%s7 + $0x58] sm:$0xf]
        %v9637 = vld [vmem:[%s7 + $0x5c] sm:$0xf]
        %v9638 = vld [vmem:[%s9357] sm:$0xff]
        %v9639 = vld [vmem:[%s9357 + $0x8] sm:$0xff]
        %v9640 = vld [vmem:[%s9357 + $0x10] sm:$0xff]
        %v9641 = vld [vmem:[%s9357 + $0x18] sm:$0xff]
        %v9642 = vld [vmem:[%s9357 + $0x20] sm:$0xff]
        %v9643 = vld [vmem:[%s9357 + $0x28] sm:$0xff]
        %v9644 = vld [vmem:[%s9357 + $0x30] sm:$0xff]
        %v9645 = vld [vmem:[%s9357 + $0x38] sm:$0xff]
        %v9646 = vld [vmem:[%s9357 + $0x40] sm:$0xff]
        %v9647 = vld [vmem:[%s9357 + $0x48] sm:$0xff]
        %v9648 = vld [vmem:[%s9357 + $0x50] sm:$0xff]
        %v9649 = vld [vmem:[%s9357 + $0x58] sm:$0xff]
        %v9650 = vld [vmem:[%s9357 + $0x60] sm:$0xff]
        %v9651 = vld [vmem:[%s9357 + $0x68] sm:$0xff]
        %v9652 = vld [vmem:[%s9357 + $0x70] sm:$0xff]
        %v9653 = vld [vmem:[%s9357 + $0x78] sm:$0xff]
        %v9654 = vld [vmem:[%s9357 + $0x80] sm:$0xff]
        %v9655 = vld [vmem:[%s9357 + $0x88] sm:$0xff]
        %v9656 = vld [vmem:[%s9357 + $0x90] sm:$0xff]
        %v9657 = vld [vmem:[%s9357 + $0x98] sm:$0xff]
        %v9658 = vld [vmem:[%s9357 + $0xa0] sm:$0xff]
        %v9659 = vld [vmem:[%s9357 + $0xa8] sm:$0xff]
        %v9660 = vld [vmem:[%s9357 + $0xb0] sm:$0xff]
        %v9661 = vld [vmem:[%s9357 + $0xb8] sm:$0xff]
        %v9662 = vld [vmem:[%s9357 + $0xc0] sm:$0xff]
        %v9663 = vld [vmem:[%s9357 + $0xc8] sm:$0xff]
        %v9664 = vld [vmem:[%s9357 + $0xd0] sm:$0xff]
        %v9665 = vld [vmem:[%s9357 + $0xd8] sm:$0xff]
        %v9666 = vld [vmem:[%s9357 + $0xe0] sm:$0xff]
        %v9667 = vld [vmem:[%s9357 + $0xe8] sm:$0xff]
        %v9668 = vld [vmem:[%s9357 + $0xf0] sm:$0xff]
        %v9669 = vld [vmem:[%s9357 + $0xf8] sm:$0xff]
        %s9670 = scalar_lea.vmem %s7, 96
        %v9671 = vld [vmem:[%s9670] sm:$0xf]
        %v9672 = vld [vmem:[%s9670 + $0x4] sm:$0xf]
        %v9673 = vld [vmem:[%s9670 + $0x8] sm:$0xf]
        %v9674 = vld [vmem:[%s9670 + $0xc] sm:$0xf]
        %v9675 = vld [vmem:[%s9670 + $0x10] sm:$0xf]
        %v9676 = vld [vmem:[%s9670 + $0x14] sm:$0xf]
        %v9677 = vld [vmem:[%s9670 + $0x18] sm:$0xf]
        %v9678 = vld [vmem:[%s9670 + $0x1c] sm:$0xf]
        %v9679 = vld [vmem:[%s9670 + $0x20] sm:$0xf]
        %v9680 = vld [vmem:[%s9670 + $0x24] sm:$0xf]
        %v9681 = vld [vmem:[%s9670 + $0x28] sm:$0xf]
        %v9682 = vld [vmem:[%s9670 + $0x2c] sm:$0xf]
        %v9683 = vld [vmem:[%s9670 + $0x30] sm:$0xf]
        %v9684 = vld [vmem:[%s9670 + $0x34] sm:$0xf]
        %v9685 = vld [vmem:[%s9670 + $0x38] sm:$0xf]
        %v9686 = vld [vmem:[%s9670 + $0x3c] sm:$0xf]
        %v9687 = vld [vmem:[%s9670 + $0x40] sm:$0xf]
        %v9688 = vld [vmem:[%s9670 + $0x44] sm:$0xf]
        %v9689 = vld [vmem:[%s9670 + $0x48] sm:$0xf]
        %v9690 = vld [vmem:[%s9670 + $0x4c] sm:$0xf]
        %v9691 = vld [vmem:[%s9670 + $0x50] sm:$0xf]
        %v9692 = vld [vmem:[%s9670 + $0x54] sm:$0xf]
        %v9693 = vld [vmem:[%s9670 + $0x58] sm:$0xf]
        %v9694 = vld [vmem:[%s9670 + $0x5c] sm:$0xf]
        %v9719 = vunpack.c.l.b16 %v9671
        %v9720 = vunpack.c.l.b16 %v9672
        %v9721 = vunpack.c.l.b16 %v9673
        %v9722 = vunpack.c.l.b16 %v9674
        %v9723 = vunpack.c.l.b16 %v9675
        %v9724 = vunpack.c.l.b16 %v9676
        %v9725 = vunpack.c.l.b16 %v9677
        %v9726 = vunpack.c.l.b16 %v9678
        %v9727 = vunpack.c.l.b16 %v9679
        %v9728 = vunpack.c.l.b16 %v9680
        %v9729 = vunpack.c.l.b16 %v9681
        %v9730 = vunpack.c.l.b16 %v9682
        %v9731 = vunpack.c.l.b16 %v9683
        %v9732 = vunpack.c.l.b16 %v9684
        %v9733 = vunpack.c.l.b16 %v9685
        %v9734 = vunpack.c.l.b16 %v9686
        %v9735 = vunpack.c.l.b16 %v9687
        %v9736 = vunpack.c.l.b16 %v9688
        %v9737 = vunpack.c.l.b16 %v9689
        %v9738 = vunpack.c.l.b16 %v9690
        %v9739 = vunpack.c.l.b16 %v9691
        %v9740 = vunpack.c.l.b16 %v9692
        %v9741 = vunpack.c.l.b16 %v9693
        %v9742 = vunpack.c.l.b16 %v9694
        %v9743 = vpack.c.b16 %v9720, %v9719
        %v9744 = vpack.c.b16 %v9722, %v9721
        %v9745 = vpack.c.b16 %v9724, %v9723
        %v9746 = vpack.c.b16 %v9726, %v9725
        %v9747 = vpack.c.b16 %v9728, %v9727
        %v9748 = vpack.c.b16 %v9730, %v9729
        %v9749 = vpack.c.b16 %v9732, %v9731
        %v9750 = vpack.c.b16 %v9734, %v9733
        %v9751 = vpack.c.b16 %v9736, %v9735
        %v9752 = vpack.c.b16 %v9738, %v9737
        %v9753 = vpack.c.b16 %v9740, %v9739
        %v9754 = vpack.c.b16 %v9742, %v9741
        %v9768 = vsel %vm918, %v9639, 0
        %v9771 = vsel %vm918, %v9641, 0
        %v9774 = vsel %vm918, %v9643, 0
        %v9777 = vsel %vm918, %v9645, 0
        %v9780 = vsel %vm918, %v9647, 0
        %v9783 = vsel %vm918, %v9649, 0
        %v9786 = vsel %vm918, %v9651, 0
        %v9789 = vsel %vm918, %v9653, 0
        %v9792 = vsel %vm918, %v9655, 0
        %v9795 = vsel %vm918, %v9657, 0
        %v9798 = vsel %vm918, %v9659, 0
        %v9801 = vsel %vm918, %v9661, 0
        %v9804 = vsel %vm918, %v9663, 0
        %v9807 = vsel %vm918, %v9665, 0
        %v9810 = vsel %vm918, %v9667, 0
        %v9813 = vsel %vm918, %v9669, 0
        %9815 = vmatprep.subr.bf16.mxu0 0
        %9816 = vmatpush1.bf16.msra.mxu0 %v9743
        %9817 = vmatprep.subr.bf16.mxu0 0
        %9818 = vmatpush1.bf16.msra.mxu0 %v9744
        %9819 = vmatprep.subr.bf16.mxu0 0
        %9820 = vmatpush1.bf16.msra.mxu0 %v9745
        %9821 = vmatprep.subr.bf16.mxu0 0
        %9822 = vmatpush1.bf16.msra.mxu0 %v9746
        %9823 = vmatprep.subr.bf16.mxu0 0
        %9824 = vmatpush1.bf16.msra.mxu0 %v9747
        %9825 = vmatprep.subr.bf16.mxu0 0
        %9826 = vmatpush1.bf16.msra.mxu0 %v9748
        %9827 = vmatprep.subr.bf16.mxu0 0
        %9828 = vmatpush1.bf16.msra.mxu0 %v9749
        %9829 = vmatprep.subr.bf16.mxu0 0
        %9830 = vmatpush1.bf16.msra.mxu0 %v9750
        %9831 = vmatprep.subr.bf16.mxu0 0
        %9832 = vmatpush1.bf16.msra.mxu0 %v9751
        %9833 = vmatprep.subr.bf16.mxu0 0
        %9834 = vmatpush1.bf16.msra.mxu0 %v9752
        %9835 = vmatprep.subr.bf16.mxu0 0
        %9836 = vmatpush1.bf16.msra.mxu0 %v9753
        %9837 = vmatprep.subr.bf16.mxu0 0
        %9838 = vmatpush1.bf16.msra.mxu0 %v9754
        %9839 = vmatprep.subr.bf16.mxu0 0
        %9840 = vmatpush1.bf16.msra.mxu0 0
        %9841 = vmatprep.subr.bf16.mxu0 0
        %9842 = vmatpush1.bf16.msra.mxu0 0
        %9843 = vmatprep.subr.bf16.mxu0 0
        %9844 = vmatpush1.bf16.msra.mxu0 0
        %9845 = vmatprep.subr.bf16.mxu0 0
        %9846 = vmatpush1.bf16.msra.mxu0 0
        %9847 = vmatprep.mubr.bf16.mxu0 %v9768
        %9848 = vmatmul.mubr.bf16.gmra.mrb[0].mxu0 %v9638
        %v9849 = vpop.f32.mrb[0].mxu0
        %v9850 = vadd.f32 0.0, %v9849
        %v9851 = vpop.f32.mrb[0].mxu0
        %v9852 = vpop.f32.mrb[0].mxu0
        %v9853 = vadd.f32 0.0, %v9852
        %v9854 = vpop.f32.mrb[0].mxu0
        %9855 = vmatprep.mubr.bf16.mxu0 %v9771
        %9856 = vmatmul.mubr.bf16.gmra.mrb[0].mxu0 %v9640
        %v9857 = vpop.f32.mrb[0].mxu0
        %v9858 = vadd.f32 0.0, %v9857
        %v9859 = vpop.f32.mrb[0].mxu0
        %v9860 = vpop.f32.mrb[0].mxu0
        %v9861 = vadd.f32 0.0, %v9860
        %v9862 = vpop.f32.mrb[0].mxu0
        %9863 = vmatprep.mubr.bf16.mxu0 %v9774
        %9864 = vmatmul.mubr.bf16.gmra.mrb[0].mxu0 %v9642
        %v9865 = vpop.f32.mrb[0].mxu0
        %v9866 = vadd.f32 0.0, %v9865
        %v9867 = vpop.f32.mrb[0].mxu0
        %v9868 = vpop.f32.mrb[0].mxu0
        %v9869 = vadd.f32 0.0, %v9868
        %v9870 = vpop.f32.mrb[0].mxu0
        %9871 = vmatprep.mubr.bf16.mxu0 %v9777
        %9872 = vmatmul.mubr.bf16.gmra.mrb[0].mxu0 %v9644
        %v9873 = vpop.f32.mrb[0].mxu0
        %v9874 = vadd.f32 0.0, %v9873
        %v9875 = vpop.f32.mrb[0].mxu0
        %v9876 = vpop.f32.mrb[0].mxu0
        %v9877 = vadd.f32 0.0, %v9876
        %v9878 = vpop.f32.mrb[0].mxu0
        %9879 = vmatprep.mubr.bf16.mxu0 %v9780
        %9880 = vmatmul.mubr.bf16.gmra.mrb[0].mxu0 %v9646
        %v9881 = vpop.f32.mrb[0].mxu0
        %v9882 = vadd.f32 0.0, %v9881
        %v9883 = vpop.f32.mrb[0].mxu0
        %v9884 = vpop.f32.mrb[0].mxu0
        %v9885 = vadd.f32 0.0, %v9884
        %v9886 = vpop.f32.mrb[0].mxu0
        %9887 = vmatprep.mubr.bf16.mxu0 %v9783
        %9888 = vmatmul.mubr.bf16.gmra.mrb[0].mxu0 %v9648
        %v9889 = vpop.f32.mrb[0].mxu0
        %v9890 = vadd.f32 0.0, %v9889
        %v9891 = vpop.f32.mrb[0].mxu0
        %v9892 = vpop.f32.mrb[0].mxu0
        %v9893 = vadd.f32 0.0, %v9892
        %v9894 = vpop.f32.mrb[0].mxu0
        %9895 = vmatprep.mubr.bf16.mxu0 %v9786
        %9896 = vmatmul.mubr.bf16.gmra.mrb[0].mxu0 %v9650
        %v9897 = vpop.f32.mrb[0].mxu0
        %v9898 = vadd.f32 0.0, %v9897
        %v9899 = vpop.f32.mrb[0].mxu0
        %v9900 = vpop.f32.mrb[0].mxu0
        %v9901 = vadd.f32 0.0, %v9900
        %v9902 = vpop.f32.mrb[0].mxu0
        %9903 = vmatprep.mubr.bf16.mxu0 %v9789
        %9904 = vmatmul.mubr.bf16.gmra.mrb[0].mxu0 %v9652
        %v9905 = vpop.f32.mrb[0].mxu0
        %v9906 = vadd.f32 0.0, %v9905
        %v9907 = vpop.f32.mrb[0].mxu0
        %v9908 = vpop.f32.mrb[0].mxu0
        %v9909 = vadd.f32 0.0, %v9908
        %v9910 = vpop.f32.mrb[0].mxu0
        %9911 = vmatprep.mubr.bf16.mxu0 %v9792
        %9912 = vmatmul.mubr.bf16.gmra.mrb[0].mxu0 %v9654
        %v9913 = vpop.f32.mrb[0].mxu0
        %v9914 = vadd.f32 0.0, %v9913
        %v9915 = vpop.f32.mrb[0].mxu0
        %v9916 = vpop.f32.mrb[0].mxu0
        %v9917 = vadd.f32 0.0, %v9916
        %v9918 = vpop.f32.mrb[0].mxu0
        %9919 = vmatprep.mubr.bf16.mxu0 %v9795
        %9920 = vmatmul.mubr.bf16.gmra.mrb[0].mxu0 %v9656
        %v9921 = vpop.f32.mrb[0].mxu0
        %v9922 = vadd.f32 0.0, %v9921
        %v9923 = vpop.f32.mrb[0].mxu0
        %v9924 = vpop.f32.mrb[0].mxu0
        %v9925 = vadd.f32 0.0, %v9924
        %v9926 = vpop.f32.mrb[0].mxu0
        %9927 = vmatprep.mubr.bf16.mxu0 %v9798
        %9928 = vmatmul.mubr.bf16.gmra.mrb[0].mxu0 %v9658
        %v9929 = vpop.f32.mrb[0].mxu0
        %v9930 = vadd.f32 0.0, %v9929
        %v9931 = vpop.f32.mrb[0].mxu0
        %v9932 = vpop.f32.mrb[0].mxu0
        %v9933 = vadd.f32 0.0, %v9932
        %v9934 = vpop.f32.mrb[0].mxu0
        %9935 = vmatprep.mubr.bf16.mxu0 %v9801
        %9936 = vmatmul.mubr.bf16.gmra.mrb[0].mxu0 %v9660
        %v9937 = vpop.f32.mrb[0].mxu0
        %v9938 = vadd.f32 0.0, %v9937
        %v9939 = vpop.f32.mrb[0].mxu0
        %v9940 = vpop.f32.mrb[0].mxu0
        %v9941 = vadd.f32 0.0, %v9940
        %v9942 = vpop.f32.mrb[0].mxu0
        %9943 = vmatprep.mubr.bf16.mxu0 %v9804
        %9944 = vmatmul.mubr.bf16.gmra.mrb[0].mxu0 %v9662
        %v9945 = vpop.f32.mrb[0].mxu0
        %v9946 = vadd.f32 0.0, %v9945
        %v9947 = vpop.f32.mrb[0].mxu0
        %v9948 = vpop.f32.mrb[0].mxu0
        %v9949 = vadd.f32 0.0, %v9948
        %v9950 = vpop.f32.mrb[0].mxu0
        %9951 = vmatprep.mubr.bf16.mxu0 %v9807
        %9952 = vmatmul.mubr.bf16.gmra.mrb[0].mxu0 %v9664
        %v9953 = vpop.f32.mrb[0].mxu0
        %v9954 = vadd.f32 0.0, %v9953
        %v9955 = vpop.f32.mrb[0].mxu0
        %v9956 = vpop.f32.mrb[0].mxu0
        %v9957 = vadd.f32 0.0, %v9956
        %v9958 = vpop.f32.mrb[0].mxu0
        %9959 = vmatprep.mubr.bf16.mxu0 %v9810
        %9960 = vmatmul.mubr.bf16.gmra.mrb[0].mxu0 %v9666
        %v9961 = vpop.f32.mrb[0].mxu0
        %v9962 = vadd.f32 0.0, %v9961
        %v9963 = vpop.f32.mrb[0].mxu0
        %v9964 = vpop.f32.mrb[0].mxu0
        %v9965 = vadd.f32 0.0, %v9964
        %v9966 = vpop.f32.mrb[0].mxu0
        %9967 = vmatprep.mubr.bf16.mxu0 %v9813
        %9968 = vmatmul.mubr.bf16.gmra.mrb[0].mxu0 %v9668
        %v9969 = vpop.f32.mrb[0].mxu0
        %v9970 = vadd.f32 0.0, %v9969
        %v9971 = vpop.f32.mrb[0].mxu0
        %v9972 = vpop.f32.mrb[0].mxu0
        %v9973 = vadd.f32 0.0, %v9972
        %v9974 = vpop.f32.mrb[0].mxu0
        %9975 = vdwg.mxu0
        %v10000 = vunpack.c.l.b16 %v9614
        %v10001 = vunpack.c.l.b16 %v9615
        %v10002 = vunpack.c.l.b16 %v9616
        %v10003 = vunpack.c.l.b16 %v9617
        %v10004 = vunpack.c.l.b16 %v9618
        %v10005 = vunpack.c.l.b16 %v9619
        %v10006 = vunpack.c.l.b16 %v9620
        %v10007 = vunpack.c.l.b16 %v9621
        %v10008 = vunpack.c.l.b16 %v9622
        %v10009 = vunpack.c.l.b16 %v9623
        %v10010 = vunpack.c.l.b16 %v9624
        %v10011 = vunpack.c.l.b16 %v9625
        %v10012 = vunpack.c.l.b16 %v9626
        %v10013 = vunpack.c.l.b16 %v9627
        %v10014 = vunpack.c.l.b16 %v9628
        %v10015 = vunpack.c.l.b16 %v9629
        %v10016 = vunpack.c.l.b16 %v9630
        %v10017 = vunpack.c.l.b16 %v9631
        %v10018 = vunpack.c.l.b16 %v9632
        %v10019 = vunpack.c.l.b16 %v9633
        %v10020 = vunpack.c.l.b16 %v9634
        %v10021 = vunpack.c.l.b16 %v9635
        %v10022 = vunpack.c.l.b16 %v9636
        %v10023 = vunpack.c.l.b16 %v9637
        %v10024 = vpack.c.b16 %v10001, %v10000
        %v10025 = vpack.c.b16 %v10003, %v10002
        %v10026 = vpack.c.b16 %v10005, %v10004
        %v10027 = vpack.c.b16 %v10007, %v10006
        %v10028 = vpack.c.b16 %v10009, %v10008
        %v10029 = vpack.c.b16 %v10011, %v10010
        %v10030 = vpack.c.b16 %v10013, %v10012
        %v10031 = vpack.c.b16 %v10015, %v10014
        %v10032 = vpack.c.b16 %v10017, %v10016
        %v10033 = vpack.c.b16 %v10019, %v10018
        %v10034 = vpack.c.b16 %v10021, %v10020
        %v10035 = vpack.c.b16 %v10023, %v10022
        %v10049 = vsel %vm918, %v9583, 0
        %v10052 = vsel %vm918, %v9585, 0
        %v10055 = vsel %vm918, %v9587, 0
        %v10058 = vsel %vm918, %v9589, 0
        %v10061 = vsel %vm918, %v9591, 0
        %v10064 = vsel %vm918, %v9593, 0
        %v10067 = vsel %vm918, %v9595, 0
        %v10070 = vsel %vm918, %v9597, 0
        %v10073 = vsel %vm918, %v9599, 0
        %v10076 = vsel %vm918, %v9601, 0
        %v10079 = vsel %vm918, %v9603, 0
        %v10082 = vsel %vm918, %v9605, 0
        %v10085 = vsel %vm918, %v9607, 0
        %v10088 = vsel %vm918, %v9609, 0
        %v10091 = vsel %vm918, %v9611, 0
        %v10094 = vsel %vm918, %v9613, 0
        %10096 = vmatprep.subr.bf16.mxu0 0
        %10097 = vmatpush1.bf16.msra.mxu0 %v10024
        %10098 = vmatprep.subr.bf16.mxu0 0
        %10099 = vmatpush1.bf16.msra.mxu0 %v10025
        %10100 = vmatprep.subr.bf16.mxu0 0
        %10101 = vmatpush1.bf16.msra.mxu0 %v10026
        %10102 = vmatprep.subr.bf16.mxu0 0
        %10103 = vmatpush1.bf16.msra.mxu0 %v10027
        %10104 = vmatprep.subr.bf16.mxu0 0
        %10105 = vmatpush1.bf16.msra.mxu0 %v10028
        %10106 = vmatprep.subr.bf16.mxu0 0
        %10107 = vmatpush1.bf16.msra.mxu0 %v10029
        %10108 = vmatprep.subr.bf16.mxu0 0
        %10109 = vmatpush1.bf16.msra.mxu0 %v10030
        %10110 = vmatprep.subr.bf16.mxu0 0
        %10111 = vmatpush1.bf16.msra.mxu0 %v10031
        %10112 = vmatprep.subr.bf16.mxu0 0
        %10113 = vmatpush1.bf16.msra.mxu0 %v10032
        %10114 = vmatprep.subr.bf16.mxu0 0
        %10115 = vmatpush1.bf16.msra.mxu0 %v10033
        %10116 = vmatprep.subr.bf16.mxu0 0
        %10117 = vmatpush1.bf16.msra.mxu0 %v10034
        %10118 = vmatprep.subr.bf16.mxu0 0
        %10119 = vmatpush1.bf16.msra.mxu0 %v10035
        %10120 = vmatprep.subr.bf16.mxu0 0
        %10121 = vmatpush1.bf16.msra.mxu0 0
        %10122 = vmatprep.subr.bf16.mxu0 0
        %10123 = vmatpush1.bf16.msra.mxu0 0
        %10124 = vmatprep.subr.bf16.mxu0 0
        %10125 = vmatpush1.bf16.msra.mxu0 0
        %10126 = vmatprep.subr.bf16.mxu0 0
        %10127 = vmatpush1.bf16.msra.mxu0 0
        %10128 = vmatprep.mubr.bf16.mxu0 %v10049
        %10129 = vmatmul.mubr.bf16.gmra.mrb[0].mxu0 %v9582
        %v10130 = vpop.f32.mrb[0].mxu0
        %v10131 = vadd.f32 %v9850, %v10130
        %v10132 = vpop.f32.mrb[0].mxu0
        %v10133 = vpop.f32.mrb[0].mxu0
        %v10134 = vadd.f32 %v9853, %v10133
        %v10135 = vpop.f32.mrb[0].mxu0
        %10136 = vmatprep.mubr.bf16.mxu0 %v10052
        %10137 = vmatmul.mubr.bf16.gmra.mrb[0].mxu0 %v9584
        %v10138 = vpop.f32.mrb[0].mxu0
        %v10139 = vadd.f32 %v9858, %v10138
        %v10140 = vpop.f32.mrb[0].mxu0
        %v10141 = vpop.f32.mrb[0].mxu0
        %v10142 = vadd.f32 %v9861, %v10141
        %v10143 = vpop.f32.mrb[0].mxu0
        %10144 = vmatprep.mubr.bf16.mxu0 %v10055
        %10145 = vmatmul.mubr.bf16.gmra.mrb[0].mxu0 %v9586
        %v10146 = vpop.f32.mrb[0].mxu0
        %v10147 = vadd.f32 %v9866, %v10146
        %v10148 = vpop.f32.mrb[0].mxu0
        %v10149 = vpop.f32.mrb[0].mxu0
        %v10150 = vadd.f32 %v9869, %v10149
        %v10151 = vpop.f32.mrb[0].mxu0
        %10152 = vmatprep.mubr.bf16.mxu0 %v10058
        %10153 = vmatmul.mubr.bf16.gmra.mrb[0].mxu0 %v9588
        %v10154 = vpop.f32.mrb[0].mxu0
        %v10155 = vadd.f32 %v9874, %v10154
        %v10156 = vpop.f32.mrb[0].mxu0
        %v10157 = vpop.f32.mrb[0].mxu0
        %v10158 = vadd.f32 %v9877, %v10157
        %v10159 = vpop.f32.mrb[0].mxu0
        %10160 = vmatprep.mubr.bf16.mxu0 %v10061
        %10161 = vmatmul.mubr.bf16.gmra.mrb[0].mxu0 %v9590
        %v10162 = vpop.f32.mrb[0].mxu0
        %v10163 = vadd.f32 %v9882, %v10162
        %v10164 = vpop.f32.mrb[0].mxu0
        %v10165 = vpop.f32.mrb[0].mxu0
        %v10166 = vadd.f32 %v9885, %v10165
        %v10167 = vpop.f32.mrb[0].mxu0
        %10168 = vmatprep.mubr.bf16.mxu0 %v10064
        %10169 = vmatmul.mubr.bf16.gmra.mrb[0].mxu0 %v9592
        %v10170 = vpop.f32.mrb[0].mxu0
        %v10171 = vadd.f32 %v9890, %v10170
        %v10172 = vpop.f32.mrb[0].mxu0
        %v10173 = vpop.f32.mrb[0].mxu0
        %v10174 = vadd.f32 %v9893, %v10173
        %v10175 = vpop.f32.mrb[0].mxu0
        %10176 = vmatprep.mubr.bf16.mxu0 %v10067
        %10177 = vmatmul.mubr.bf16.gmra.mrb[0].mxu0 %v9594
        %v10178 = vpop.f32.mrb[0].mxu0
        %v10179 = vadd.f32 %v9898, %v10178
        %v10180 = vpop.f32.mrb[0].mxu0
        %v10181 = vpop.f32.mrb[0].mxu0
        %v10182 = vadd.f32 %v9901, %v10181
        %v10183 = vpop.f32.mrb[0].mxu0
        %10184 = vmatprep.mubr.bf16.mxu0 %v10070
        %10185 = vmatmul.mubr.bf16.gmra.mrb[0].mxu0 %v9596
        %v10186 = vpop.f32.mrb[0].mxu0
        %v10187 = vadd.f32 %v9906, %v10186
        %v10188 = vpop.f32.mrb[0].mxu0
        %v10189 = vpop.f32.mrb[0].mxu0
        %v10190 = vadd.f32 %v9909, %v10189
        %v10191 = vpop.f32.mrb[0].mxu0
        %10192 = vmatprep.mubr.bf16.mxu0 %v10073
        %10193 = vmatmul.mubr.bf16.gmra.mrb[0].mxu0 %v9598
        %v10194 = vpop.f32.mrb[0].mxu0
        %v10195 = vadd.f32 %v9914, %v10194
        %v10196 = vpop.f32.mrb[0].mxu0
        %v10197 = vpop.f32.mrb[0].mxu0
        %v10198 = vadd.f32 %v9917, %v10197
        %v10199 = vpop.f32.mrb[0].mxu0
        %10200 = vmatprep.mubr.bf16.mxu0 %v10076
        %10201 = vmatmul.mubr.bf16.gmra.mrb[0].mxu0 %v9600
        %v10202 = vpop.f32.mrb[0].mxu0
        %v10203 = vadd.f32 %v9922, %v10202
        %v10204 = vpop.f32.mrb[0].mxu0
        %v10205 = vpop.f32.mrb[0].mxu0
        %v10206 = vadd.f32 %v9925, %v10205
        %v10207 = vpop.f32.mrb[0].mxu0
        %10208 = vmatprep.mubr.bf16.mxu0 %v10079
        %10209 = vmatmul.mubr.bf16.gmra.mrb[0].mxu0 %v9602
        %v10210 = vpop.f32.mrb[0].mxu0
        %v10211 = vadd.f32 %v9930, %v10210
        %v10212 = vpop.f32.mrb[0].mxu0
        %v10213 = vpop.f32.mrb[0].mxu0
        %v10214 = vadd.f32 %v9933, %v10213
        %v10215 = vpop.f32.mrb[0].mxu0
        %10216 = vmatprep.mubr.bf16.mxu0 %v10082
        %10217 = vmatmul.mubr.bf16.gmra.mrb[0].mxu0 %v9604
        %v10218 = vpop.f32.mrb[0].mxu0
        %v10219 = vadd.f32 %v9938, %v10218
        %v10220 = vpop.f32.mrb[0].mxu0
        %v10221 = vpop.f32.mrb[0].mxu0
        %v10222 = vadd.f32 %v9941, %v10221
        %v10223 = vpop.f32.mrb[0].mxu0
        %10224 = vmatprep.mubr.bf16.mxu0 %v10085
        %10225 = vmatmul.mubr.bf16.gmra.mrb[0].mxu0 %v9606
        %v10226 = vpop.f32.mrb[0].mxu0
        %v10227 = vadd.f32 %v9946, %v10226
        %v10228 = vpop.f32.mrb[0].mxu0
        %v10229 = vpop.f32.mrb[0].mxu0
        %v10230 = vadd.f32 %v9949, %v10229
        %v10231 = vpop.f32.mrb[0].mxu0
        %10232 = vmatprep.mubr.bf16.mxu0 %v10088
        %10233 = vmatmul.mubr.bf16.gmra.mrb[0].mxu0 %v9608
        %v10234 = vpop.f32.mrb[0].mxu0
        %v10235 = vadd.f32 %v9954, %v10234
        %v10236 = vpop.f32.mrb[0].mxu0
        %v10237 = vpop.f32.mrb[0].mxu0
        %v10238 = vadd.f32 %v9957, %v10237
        %v10239 = vpop.f32.mrb[0].mxu0
        %10240 = vmatprep.mubr.bf16.mxu0 %v10091
        %10241 = vmatmul.mubr.bf16.gmra.mrb[0].mxu0 %v9610
        %v10242 = vpop.f32.mrb[0].mxu0
        %v10243 = vadd.f32 %v9962, %v10242
        %v10244 = vpop.f32.mrb[0].mxu0
        %v10245 = vpop.f32.mrb[0].mxu0
        %v10246 = vadd.f32 %v9965, %v10245
        %v10247 = vpop.f32.mrb[0].mxu0
        %10248 = vmatprep.mubr.bf16.mxu0 %v10094
        %10249 = vmatmul.mubr.bf16.gmra.mrb[0].mxu0 %v9612
        %v10250 = vpop.f32.mrb[0].mxu0
        %v10251 = vadd.f32 %v9970, %v10250
        %v10252 = vpop.f32.mrb[0].mxu0
        %v10253 = vpop.f32.mrb[0].mxu0
        %v10254 = vadd.f32 %v9973, %v10253
        %v10255 = vpop.f32.mrb[0].mxu0
        %10256 = vdwg.mxu0
        %s10257 = scalar_lea.vmem [#allocation5], 32
        %v10258 = vld [vmem:[%s10257] sm:$0xff]
        %v10259 = vld [vmem:[%s10257 + $0x8] sm:$0xff]
        %v10260 = vld [vmem:[%s10257 + $0x10] sm:$0xff]
        %v10261 = vld [vmem:[%s10257 + $0x18] sm:$0xff]
        %v10262 = vld [vmem:[%s10257 + $0x20] sm:$0xff]
        %v10263 = vld [vmem:[%s10257 + $0x28] sm:$0xff]
        %v10264 = vld [vmem:[%s10257 + $0x30] sm:$0xff]
        %v10265 = vld [vmem:[%s10257 + $0x38] sm:$0xff]
        %v10266 = vld [vmem:[%s10257 + $0x40] sm:$0xff]
        %v10267 = vld [vmem:[%s10257 + $0x48] sm:$0xff]
        %v10268 = vld [vmem:[%s10257 + $0x50] sm:$0xff]
        %v10269 = vld [vmem:[%s10257 + $0x58] sm:$0xff]
        %v10270 = vld [vmem:[%s10257 + $0x60] sm:$0xff]
        %v10271 = vld [vmem:[%s10257 + $0x68] sm:$0xff]
        %v10272 = vld [vmem:[%s10257 + $0x70] sm:$0xff]
        %v10273 = vld [vmem:[%s10257 + $0x78] sm:$0xff]
        %v10274 = vld [vmem:[%s10257 + $0x80] sm:$0xff]
        %v10275 = vld [vmem:[%s10257 + $0x88] sm:$0xff]
        %v10276 = vld [vmem:[%s10257 + $0x90] sm:$0xff]
        %v10277 = vld [vmem:[%s10257 + $0x98] sm:$0xff]
        %v10278 = vld [vmem:[%s10257 + $0xa0] sm:$0xff]
        %v10279 = vld [vmem:[%s10257 + $0xa8] sm:$0xff]
        %v10280 = vld [vmem:[%s10257 + $0xb0] sm:$0xff]
        %v10281 = vld [vmem:[%s10257 + $0xb8] sm:$0xff]
        %v10282 = vld [vmem:[%s10257 + $0xc0] sm:$0xff]
        %v10283 = vld [vmem:[%s10257 + $0xc8] sm:$0xff]
        %v10284 = vld [vmem:[%s10257 + $0xd0] sm:$0xff]
        %v10285 = vld [vmem:[%s10257 + $0xd8] sm:$0xff]
        %v10286 = vld [vmem:[%s10257 + $0xe0] sm:$0xff]
        %v10287 = vld [vmem:[%s10257 + $0xe8] sm:$0xff]
        %v10288 = vld [vmem:[%s10257 + $0xf0] sm:$0xff]
        %v10289 = vld [vmem:[%s10257 + $0xf8] sm:$0xff]
        %s10290 = scalar_lea.vmem %s7, 192
        %v10291 = vld [vmem:[%s10290] sm:$0xf]
        %v10292 = vld [vmem:[%s10290 + $0x4] sm:$0xf]
        %v10293 = vld [vmem:[%s10290 + $0x8] sm:$0xf]
        %v10294 = vld [vmem:[%s10290 + $0xc] sm:$0xf]
        %v10295 = vld [vmem:[%s10290 + $0x10] sm:$0xf]
        %v10296 = vld [vmem:[%s10290 + $0x14] sm:$0xf]
        %v10297 = vld [vmem:[%s10290 + $0x18] sm:$0xf]
        %v10298 = vld [vmem:[%s10290 + $0x1c] sm:$0xf]
        %v10299 = vld [vmem:[%s10290 + $0x20] sm:$0xf]
        %v10300 = vld [vmem:[%s10290 + $0x24] sm:$0xf]
        %v10301 = vld [vmem:[%s10290 + $0x28] sm:$0xf]
        %v10302 = vld [vmem:[%s10290 + $0x2c] sm:$0xf]
        %v10303 = vld [vmem:[%s10290 + $0x30] sm:$0xf]
        %v10304 = vld [vmem:[%s10290 + $0x34] sm:$0xf]
        %v10305 = vld [vmem:[%s10290 + $0x38] sm:$0xf]
        %v10306 = vld [vmem:[%s10290 + $0x3c] sm:$0xf]
        %v10307 = vld [vmem:[%s10290 + $0x40] sm:$0xf]
        %v10308 = vld [vmem:[%s10290 + $0x44] sm:$0xf]
        %v10309 = vld [vmem:[%s10290 + $0x48] sm:$0xf]
        %v10310 = vld [vmem:[%s10290 + $0x4c] sm:$0xf]
        %v10311 = vld [vmem:[%s10290 + $0x50] sm:$0xf]
        %v10312 = vld [vmem:[%s10290 + $0x54] sm:$0xf]
        %v10313 = vld [vmem:[%s10290 + $0x58] sm:$0xf]
        %v10314 = vld [vmem:[%s10290 + $0x5c] sm:$0xf]
        %v10339 = vunpack.c.l.b16 %v10291
        %v10340 = vunpack.c.l.b16 %v10292
        %v10341 = vunpack.c.l.b16 %v10293
        %v10342 = vunpack.c.l.b16 %v10294
        %v10343 = vunpack.c.l.b16 %v10295
        %v10344 = vunpack.c.l.b16 %v10296
        %v10345 = vunpack.c.l.b16 %v10297
        %v10346 = vunpack.c.l.b16 %v10298
        %v10347 = vunpack.c.l.b16 %v10299
        %v10348 = vunpack.c.l.b16 %v10300
        %v10349 = vunpack.c.l.b16 %v10301
        %v10350 = vunpack.c.l.b16 %v10302
        %v10351 = vunpack.c.l.b16 %v10303
        %v10352 = vunpack.c.l.b16 %v10304
        %v10353 = vunpack.c.l.b16 %v10305
        %v10354 = vunpack.c.l.b16 %v10306
        %v10355 = vunpack.c.l.b16 %v10307
        %v10356 = vunpack.c.l.b16 %v10308
        %v10357 = vunpack.c.l.b16 %v10309
        %v10358 = vunpack.c.l.b16 %v10310
        %v10359 = vunpack.c.l.b16 %v10311
        %v10360 = vunpack.c.l.b16 %v10312
        %v10361 = vunpack.c.l.b16 %v10313
        %v10362 = vunpack.c.l.b16 %v10314
        %v10363 = vpack.c.b16 %v10340, %v10339
        %v10364 = vpack.c.b16 %v10342, %v10341
        %v10365 = vpack.c.b16 %v10344, %v10343
        %v10366 = vpack.c.b16 %v10346, %v10345
        %v10367 = vpack.c.b16 %v10348, %v10347
        %v10368 = vpack.c.b16 %v10350, %v10349
        %v10369 = vpack.c.b16 %v10352, %v10351
        %v10370 = vpack.c.b16 %v10354, %v10353
        %v10371 = vpack.c.b16 %v10356, %v10355
        %v10372 = vpack.c.b16 %v10358, %v10357
        %v10373 = vpack.c.b16 %v10360, %v10359
        %v10374 = vpack.c.b16 %v10362, %v10361
        %v10388 = vsel %vm918, %v10259, 0
        %v10391 = vsel %vm918, %v10261, 0
        %v10394 = vsel %vm918, %v10263, 0
        %v10397 = vsel %vm918, %v10265, 0
        %v10400 = vsel %vm918, %v10267, 0
        %v10403 = vsel %vm918, %v10269, 0
        %v10406 = vsel %vm918, %v10271, 0
        %v10409 = vsel %vm918, %v10273, 0
        %v10412 = vsel %vm918, %v10275, 0
        %v10415 = vsel %vm918, %v10277, 0
        %v10418 = vsel %vm918, %v10279, 0
        %v10421 = vsel %vm918, %v10281, 0
        %v10424 = vsel %vm918, %v10283, 0
        %v10427 = vsel %vm918, %v10285, 0
        %v10430 = vsel %vm918, %v10287, 0
        %v10433 = vsel %vm918, %v10289, 0
        %10435 = vmatprep.subr.bf16.mxu0 0
        %10436 = vmatpush1.bf16.msra.mxu0 %v10363
        %10437 = vmatprep.subr.bf16.mxu0 0
        %10438 = vmatpush1.bf16.msra.mxu0 %v10364
        %10439 = vmatprep.subr.bf16.mxu0 0
        %10440 = vmatpush1.bf16.msra.mxu0 %v10365
        %10441 = vmatprep.subr.bf16.mxu0 0
        %10442 = vmatpush1.bf16.msra.mxu0 %v10366
        %10443 = vmatprep.subr.bf16.mxu0 0
        %10444 = vmatpush1.bf16.msra.mxu0 %v10367
        %10445 = vmatprep.subr.bf16.mxu0 0
        %10446 = vmatpush1.bf16.msra.mxu0 %v10368
        %10447 = vmatprep.subr.bf16.mxu0 0
        %10448 = vmatpush1.bf16.msra.mxu0 %v10369
        %10449 = vmatprep.subr.bf16.mxu0 0
        %10450 = vmatpush1.bf16.msra.mxu0 %v10370
        %10451 = vmatprep.subr.bf16.mxu0 0
        %10452 = vmatpush1.bf16.msra.mxu0 %v10371
        %10453 = vmatprep.subr.bf16.mxu0 0
        %10454 = vmatpush1.bf16.msra.mxu0 %v10372
        %10455 = vmatprep.subr.bf16.mxu0 0
        %10456 = vmatpush1.bf16.msra.mxu0 %v10373
        %10457 = vmatprep.subr.bf16.mxu0 0
        %10458 = vmatpush1.bf16.msra.mxu0 %v10374
        %10459 = vmatprep.subr.bf16.mxu0 0
        %10460 = vmatpush1.bf16.msra.mxu0 0
        %10461 = vmatprep.subr.bf16.mxu0 0
        %10462 = vmatpush1.bf16.msra.mxu0 0
        %10463 = vmatprep.subr.bf16.mxu0 0
        %10464 = vmatpush1.bf16.msra.mxu0 0
        %10465 = vmatprep.subr.bf16.mxu0 0
        %10466 = vmatpush1.bf16.msra.mxu0 0
        %10467 = vmatprep.mubr.bf16.mxu0 %v10388
        %10468 = vmatmul.mubr.bf16.gmra.mrb[0].mxu0 %v10258
        %v10469 = vpop.f32.mrb[0].mxu0
        %v10470 = vadd.f32 0.0, %v10469
        %v10471 = vpop.f32.mrb[0].mxu0
        %v10472 = vpop.f32.mrb[0].mxu0
        %v10473 = vadd.f32 0.0, %v10472
        %v10474 = vpop.f32.mrb[0].mxu0
        %10475 = vmatprep.mubr.bf16.mxu0 %v10391
        %10476 = vmatmul.mubr.bf16.gmra.mrb[0].mxu0 %v10260
        %v10477 = vpop.f32.mrb[0].mxu0
        %v10478 = vadd.f32 0.0, %v10477
        %v10479 = vpop.f32.mrb[0].mxu0
        %v10480 = vpop.f32.mrb[0].mxu0
        %v10481 = vadd.f32 0.0, %v10480
        %v10482 = vpop.f32.mrb[0].mxu0
        %10483 = vmatprep.mubr.bf16.mxu0 %v10394
        %10484 = vmatmul.mubr.bf16.gmra.mrb[0].mxu0 %v10262
        %v10485 = vpop.f32.mrb[0].mxu0
        %v10486 = vadd.f32 0.0, %v10485
        %v10487 = vpop.f32.mrb[0].mxu0
        %v10488 = vpop.f32.mrb[0].mxu0
        %v10489 = vadd.f32 0.0, %v10488
        %v10490 = vpop.f32.mrb[0].mxu0
        %10491 = vmatprep.mubr.bf16.mxu0 %v10397
        %10492 = vmatmul.mubr.bf16.gmra.mrb[0].mxu0 %v10264
        %v10493 = vpop.f32.mrb[0].mxu0
        %v10494 = vadd.f32 0.0, %v10493
        %v10495 = vpop.f32.mrb[0].mxu0
        %v10496 = vpop.f32.mrb[0].mxu0
        %v10497 = vadd.f32 0.0, %v10496
        %v10498 = vpop.f32.mrb[0].mxu0
        %10499 = vmatprep.mubr.bf16.mxu0 %v10400
        %10500 = vmatmul.mubr.bf16.gmra.mrb[0].mxu0 %v10266
        %v10501 = vpop.f32.mrb[0].mxu0
        %v10502 = vadd.f32 0.0, %v10501
        %v10503 = vpop.f32.mrb[0].mxu0
        %v10504 = vpop.f32.mrb[0].mxu0
        %v10505 = vadd.f32 0.0, %v10504
        %v10506 = vpop.f32.mrb[0].mxu0
        %10507 = vmatprep.mubr.bf16.mxu0 %v10403
        %10508 = vmatmul.mubr.bf16.gmra.mrb[0].mxu0 %v10268
        %v10509 = vpop.f32.mrb[0].mxu0
        %v10510 = vadd.f32 0.0, %v10509
        %v10511 = vpop.f32.mrb[0].mxu0
        %v10512 = vpop.f32.mrb[0].mxu0
        %v10513 = vadd.f32 0.0, %v10512
        %v10514 = vpop.f32.mrb[0].mxu0
        %10515 = vmatprep.mubr.bf16.mxu0 %v10406
        %10516 = vmatmul.mubr.bf16.gmra.mrb[0].mxu0 %v10270
        %v10517 = vpop.f32.mrb[0].mxu0
        %v10518 = vadd.f32 0.0, %v10517
        %v10519 = vpop.f32.mrb[0].mxu0
        %v10520 = vpop.f32.mrb[0].mxu0
        %v10521 = vadd.f32 0.0, %v10520
        %v10522 = vpop.f32.mrb[0].mxu0
        %10523 = vmatprep.mubr.bf16.mxu0 %v10409
        %10524 = vmatmul.mubr.bf16.gmra.mrb[0].mxu0 %v10272
        %v10525 = vpop.f32.mrb[0].mxu0
        %v10526 = vadd.f32 0.0, %v10525
        %v10527 = vpop.f32.mrb[0].mxu0
        %v10528 = vpop.f32.mrb[0].mxu0
        %v10529 = vadd.f32 0.0, %v10528
        %v10530 = vpop.f32.mrb[0].mxu0
        %10531 = vmatprep.mubr.bf16.mxu0 %v10412
        %10532 = vmatmul.mubr.bf16.gmra.mrb[0].mxu0 %v10274
        %v10533 = vpop.f32.mrb[0].mxu0
        %v10534 = vadd.f32 0.0, %v10533
        %v10535 = vpop.f32.mrb[0].mxu0
        %v10536 = vpop.f32.mrb[0].mxu0
        %v10537 = vadd.f32 0.0, %v10536
        %v10538 = vpop.f32.mrb[0].mxu0
        %10539 = vmatprep.mubr.bf16.mxu0 %v10415
        %10540 = vmatmul.mubr.bf16.gmra.mrb[0].mxu0 %v10276
        %v10541 = vpop.f32.mrb[0].mxu0
        %v10542 = vadd.f32 0.0, %v10541
        %v10543 = vpop.f32.mrb[0].mxu0
        %v10544 = vpop.f32.mrb[0].mxu0
        %v10545 = vadd.f32 0.0, %v10544
        %v10546 = vpop.f32.mrb[0].mxu0
        %10547 = vmatprep.mubr.bf16.mxu0 %v10418
        %10548 = vmatmul.mubr.bf16.gmra.mrb[0].mxu0 %v10278
        %v10549 = vpop.f32.mrb[0].mxu0
        %v10550 = vadd.f32 0.0, %v10549
        %v10551 = vpop.f32.mrb[0].mxu0
        %v10552 = vpop.f32.mrb[0].mxu0
        %v10553 = vadd.f32 0.0, %v10552
        %v10554 = vpop.f32.mrb[0].mxu0
        %10555 = vmatprep.mubr.bf16.mxu0 %v10421
        %10556 = vmatmul.mubr.bf16.gmra.mrb[0].mxu0 %v10280
        %v10557 = vpop.f32.mrb[0].mxu0
        %v10558 = vadd.f32 0.0, %v10557
        %v10559 = vpop.f32.mrb[0].mxu0
        %v10560 = vpop.f32.mrb[0].mxu0
        %v10561 = vadd.f32 0.0, %v10560
        %v10562 = vpop.f32.mrb[0].mxu0
        %10563 = vmatprep.mubr.bf16.mxu0 %v10424
        %10564 = vmatmul.mubr.bf16.gmra.mrb[0].mxu0 %v10282
        %v10565 = vpop.f32.mrb[0].mxu0
        %v10566 = vadd.f32 0.0, %v10565
        %v10567 = vpop.f32.mrb[0].mxu0
        %v10568 = vpop.f32.mrb[0].mxu0
        %v10569 = vadd.f32 0.0, %v10568
        %v10570 = vpop.f32.mrb[0].mxu0
        %10571 = vmatprep.mubr.bf16.mxu0 %v10427
        %10572 = vmatmul.mubr.bf16.gmra.mrb[0].mxu0 %v10284
        %v10573 = vpop.f32.mrb[0].mxu0
        %v10574 = vadd.f32 0.0, %v10573
        %v10575 = vpop.f32.mrb[0].mxu0
        %v10576 = vpop.f32.mrb[0].mxu0
        %v10577 = vadd.f32 0.0, %v10576
        %v10578 = vpop.f32.mrb[0].mxu0
        %10579 = vmatprep.mubr.bf16.mxu0 %v10430
        %10580 = vmatmul.mubr.bf16.gmra.mrb[0].mxu0 %v10286
        %v10581 = vpop.f32.mrb[0].mxu0
        %v10582 = vadd.f32 0.0, %v10581
        %v10583 = vpop.f32.mrb[0].mxu0
        %v10584 = vpop.f32.mrb[0].mxu0
        %v10585 = vadd.f32 0.0, %v10584
        %v10586 = vpop.f32.mrb[0].mxu0
        %10587 = vmatprep.mubr.bf16.mxu0 %v10433
        %10588 = vmatmul.mubr.bf16.gmra.mrb[0].mxu0 %v10288
        %v10589 = vpop.f32.mrb[0].mxu0
        %v10590 = vadd.f32 0.0, %v10589
        %v10591 = vpop.f32.mrb[0].mxu0
        %v10592 = vpop.f32.mrb[0].mxu0
        %v10593 = vadd.f32 0.0, %v10592
        %v10594 = vpop.f32.mrb[0].mxu0
        %10595 = vdwg.mxu0
        %v10596 = vadd.f32 %v10131, %v10470
        %v10597 = vadd.f32 %v10134, %v10473
        %v10598 = vadd.f32 %v10139, %v10478
        %v10599 = vadd.f32 %v10142, %v10481
        %v10600 = vadd.f32 %v10147, %v10486
        %v10601 = vadd.f32 %v10150, %v10489
        %v10602 = vadd.f32 %v10155, %v10494
        %v10603 = vadd.f32 %v10158, %v10497
        %v10604 = vadd.f32 %v10163, %v10502
        %v10605 = vadd.f32 %v10166, %v10505
        %v10606 = vadd.f32 %v10171, %v10510
        %v10607 = vadd.f32 %v10174, %v10513
        %v10608 = vadd.f32 %v10179, %v10518
        %v10609 = vadd.f32 %v10182, %v10521
        %v10610 = vadd.f32 %v10187, %v10526
        %v10611 = vadd.f32 %v10190, %v10529
        %v10612 = vadd.f32 %v10195, %v10534
        %v10613 = vadd.f32 %v10198, %v10537
        %v10614 = vadd.f32 %v10203, %v10542
        %v10615 = vadd.f32 %v10206, %v10545
        %v10616 = vadd.f32 %v10211, %v10550
        %v10617 = vadd.f32 %v10214, %v10553
        %v10618 = vadd.f32 %v10219, %v10558
        %v10619 = vadd.f32 %v10222, %v10561
        %v10620 = vadd.f32 %v10227, %v10566
        %v10621 = vadd.f32 %v10230, %v10569
        %v10622 = vadd.f32 %v10235, %v10574
        %v10623 = vadd.f32 %v10238, %v10577
        %v10624 = vadd.f32 %v10243, %v10582
        %v10625 = vadd.f32 %v10246, %v10585
        %v10626 = vadd.f32 %v10251, %v10590
        %v10627 = vadd.f32 %v10254, %v10593
        %v10628 = vld [vmem:[%s8] sm:$0x1]
        %v10630 = vlaneseq
        %v10631 = vshrl.u32 %v10630, 7
        %v10632 = vsub.s32 0, %v10631
        %v10633 = vrot.slane %v10628, %v10632
        %v10635 = vadd.f32 %v10596, %v10633
        %v10636 = vadd.f32 %v10597, %v10633
        %v10637 = vadd.f32 %v10598, %v10633
        %v10638 = vadd.f32 %v10599, %v10633
        %v10639 = vadd.f32 %v10600, %v10633
        %v10640 = vadd.f32 %v10601, %v10633
        %v10641 = vadd.f32 %v10602, %v10633
        %v10642 = vadd.f32 %v10603, %v10633
        %v10643 = vadd.f32 %v10604, %v10633
        %v10644 = vadd.f32 %v10605, %v10633
        %v10645 = vadd.f32 %v10606, %v10633
        %v10646 = vadd.f32 %v10607, %v10633
        %v10647 = vadd.f32 %v10608, %v10633
        %v10648 = vadd.f32 %v10609, %v10633
        %v10649 = vadd.f32 %v10610, %v10633
        %v10650 = vadd.f32 %v10611, %v10633
        %v10651 = vadd.f32 %v10612, %v10633
        %v10652 = vadd.f32 %v10613, %v10633
        %v10653 = vadd.f32 %v10614, %v10633
        %v10654 = vadd.f32 %v10615, %v10633
        %v10655 = vadd.f32 %v10616, %v10633
        %v10656 = vadd.f32 %v10617, %v10633
        %v10657 = vadd.f32 %v10618, %v10633
        %v10658 = vadd.f32 %v10619, %v10633
        %v10659 = vadd.f32 %v10620, %v10633
        %v10660 = vadd.f32 %v10621, %v10633
        %v10661 = vadd.f32 %v10622, %v10633
        %v10662 = vadd.f32 %v10623, %v10633
        %v10663 = vadd.f32 %v10624, %v10633
        %v10664 = vadd.f32 %v10625, %v10633
        %v10665 = vadd.f32 %v10626, %v10633
        %v10666 = vadd.f32 %v10627, %v10633
        %v10667 = vmax.f32 %v10635, 0.0
        %v10668 = vmax.f32 %v10636, 0.0
        %v10669 = vmax.f32 %v10637, 0.0
        %v10670 = vmax.f32 %v10638, 0.0
        %v10671 = vmax.f32 %v10639, 0.0
        %v10672 = vmax.f32 %v10640, 0.0
        %v10673 = vmax.f32 %v10641, 0.0
        %v10674 = vmax.f32 %v10642, 0.0
        %v10675 = vmax.f32 %v10643, 0.0
        %v10676 = vmax.f32 %v10644, 0.0
        %v10677 = vmax.f32 %v10645, 0.0
        %v10678 = vmax.f32 %v10646, 0.0
        %v10679 = vmax.f32 %v10647, 0.0
        %v10680 = vmax.f32 %v10648, 0.0
        %v10681 = vmax.f32 %v10649, 0.0
        %v10682 = vmax.f32 %v10650, 0.0
        %v10683 = vmax.f32 %v10651, 0.0
        %v10684 = vmax.f32 %v10652, 0.0
        %v10685 = vmax.f32 %v10653, 0.0
        %v10686 = vmax.f32 %v10654, 0.0
        %v10687 = vmax.f32 %v10655, 0.0
        %v10688 = vmax.f32 %v10656, 0.0
        %v10689 = vmax.f32 %v10657, 0.0
        %v10690 = vmax.f32 %v10658, 0.0
        %v10691 = vmax.f32 %v10659, 0.0
        %v10692 = vmax.f32 %v10660, 0.0
        %v10693 = vmax.f32 %v10661, 0.0
        %v10694 = vmax.f32 %v10662, 0.0
        %v10695 = vmax.f32 %v10663, 0.0
        %v10696 = vmax.f32 %v10664, 0.0
        %v10697 = vmax.f32 %v10665, 0.0
        %v10698 = vmax.f32 %v10666, 0.0
        %10699 = vst.msk [vmem:[%s325] sm:$0xff] %vm918, %v10667
        %10700 = vst.msk [vmem:[%s325 + $0x8] sm:$0xff] %vm918, %v10668
        %10701 = vst.msk [vmem:[%s325 + $0x10] sm:$0xff] %vm918, %v10669
        %10702 = vst.msk [vmem:[%s325 + $0x18] sm:$0xff] %vm918, %v10670
        %10703 = vst.msk [vmem:[%s325 + $0x20] sm:$0xff] %vm918, %v10671
        %10704 = vst.msk [vmem:[%s325 + $0x28] sm:$0xff] %vm918, %v10672
        %10705 = vst.msk [vmem:[%s325 + $0x30] sm:$0xff] %vm918, %v10673
        %10706 = vst.msk [vmem:[%s325 + $0x38] sm:$0xff] %vm918, %v10674
        %10707 = vst.msk [vmem:[%s325 + $0x40] sm:$0xff] %vm918, %v10675
        %10708 = vst.msk [vmem:[%s325 + $0x48] sm:$0xff] %vm918, %v10676
        %10709 = vst.msk [vmem:[%s325 + $0x50] sm:$0xff] %vm918, %v10677
        %10710 = vst.msk [vmem:[%s325 + $0x58] sm:$0xff] %vm918, %v10678
        %10711 = vst.msk [vmem:[%s325 + $0x60] sm:$0xff] %vm918, %v10679
        %10712 = vst.msk [vmem:[%s325 + $0x68] sm:$0xff] %vm918, %v10680
        %10713 = vst.msk [vmem:[%s325 + $0x70] sm:$0xff] %vm918, %v10681
        %10714 = vst.msk [vmem:[%s325 + $0x78] sm:$0xff] %vm918, %v10682
        %10715 = vst.msk [vmem:[%s325 + $0x80] sm:$0xff] %vm918, %v10683
        %10716 = vst.msk [vmem:[%s325 + $0x88] sm:$0xff] %vm918, %v10684
        %10717 = vst.msk [vmem:[%s325 + $0x90] sm:$0xff] %vm918, %v10685
        %10718 = vst.msk [vmem:[%s325 + $0x98] sm:$0xff] %vm918, %v10686
        %10719 = vst.msk [vmem:[%s325 + $0xa0] sm:$0xff] %vm918, %v10687
        %10720 = vst.msk [vmem:[%s325 + $0xa8] sm:$0xff] %vm918, %v10688
        %10721 = vst.msk [vmem:[%s325 + $0xb0] sm:$0xff] %vm918, %v10689
        %10722 = vst.msk [vmem:[%s325 + $0xb8] sm:$0xff] %vm918, %v10690
        %10723 = vst.msk [vmem:[%s325 + $0xc0] sm:$0xff] %vm918, %v10691
        %10724 = vst.msk [vmem:[%s325 + $0xc8] sm:$0xff] %vm918, %v10692
        %10725 = vst.msk [vmem:[%s325 + $0xd0] sm:$0xff] %vm918, %v10693
        %10726 = vst.msk [vmem:[%s325 + $0xd8] sm:$0xff] %vm918, %v10694
        %10727 = vst.msk [vmem:[%s325 + $0xe0] sm:$0xff] %vm918, %v10695
        %10728 = vst.msk [vmem:[%s325 + $0xe8] sm:$0xff] %vm918, %v10696
        %10729 = vst.msk [vmem:[%s325 + $0xf0] sm:$0xff] %vm918, %v10697
        %10730 = vst.msk [vmem:[%s325 + $0xf8] sm:$0xff] %vm918, %v10698
        %s10731 = sand.u32 %s225, 1
        %s10732 = scalar_lea.sflag [#allocation7], %s10731
        %s10733 = sand.u32 %s225, 1
        %s10734 = smul.addr %s10733, 256
        %s10735 = scalar_lea.vmem [#allocation6], %s10734
        // Predicated region
        $region61: #{group2_forward.1} parent=55 // pred_check
          %p10736 = pneg %p235
        $region62: #{group2_forward.1} parent=55 // pred_check_branch
          %10738 = sbr.rel (%p10736) target = $region64
        $region63: #{group2_forward.1} parent=55 // pred_region
          %s10740 = ssub.s32 4096, 4096
          %10741 = vsyncadd %s10732, %s10740
          %s10742 = smul.addr %s23, 32
          %s10743 = smul.addr %s10742, 128
          %s10744 = scalar_lea.hbm %s9, %s10743
          %s10745 = sshll.u32 %s10735, 4
          %s10746 = int_to_ptr.vmem [resolvable:$true] %s10745
          %10751 = dma.vmem_to_hbm [thread:$0]  %s10746, 4096, %s10744, %s10732, 128, 128, 8
        $region64: #{group2_forward.1} parent=55 // pred_fallthru
          _
      $region56: #{group2_forward.1} parent=5 // pred_fallthru
        _
      %p10752 = scmp.le.s32.totalorder 2, %s18
      // Predicated region
      $region65: #{group2_forward.1} parent=5 // pred_check
        %p10753 = pneg %p10752
      $region66: #{group2_forward.1} parent=5 // pred_check_branch
        %10755 = sbr.rel (%p10753) target = $region68
      $region67: #{group2_forward.1} parent=5 // pred_region
        %s10756 = ssub.s32 %s18, 2
        // Predicated region
        $region69: #{group2_forward.1} parent=67 // pred_check
          %p10757 = pneg %p241
        $region70: #{group2_forward.1} parent=67 // pred_check_branch
          %10759 = sbr.rel (%p10757) target = $region72
        $region71: #{group2_forward.1} parent=67 // pred_region
          %s10760 = sand.u32 %s226, 1
          %s10761 = scalar_lea.sflag [#allocation7], %s10760
          %s10762 = sand.u32 %s226, 1
          %s10763 = smul.addr %s10762, 256
          %s10764 = scalar_lea.vmem [#allocation6], %s10763
          %10765 = dma.done %s10761, 4096
        $region72: #{group2_forward.1} parent=67 // pred_fallthru
          _
      $region68: #{group2_forward.1} parent=5 // pred_fallthru
        _
    $region6: #{group2_forward.1} parent=1 // loop_footer
      %s22 = sadd.s32 1, %s18
    $region7: #{group2_forward.1} parent=1 // loop_footer_branch
      %17 = sbr.rel target = $region3
    $region8: #{group2_forward.1} parent=1 // loop_exit
      _
    %10766 = vsyncpa [#allocation7], 1
    %s10767 = scalar_lea.sflag [#allocation7], 1
    %10768 = vsyncpa %s10767, 1

</llo_original>
